<compile_context>
chip_gen: v7x
topology: tpu7x:2x2x1
jax: 0.10.0
libtpu: 0.0.40
codegen_flags: <defaults>
</compile_context>

<pallas_src>
import numpy as np
import jax
import jax.numpy as jnp
from jax.experimental import pallas as pl
from jax.experimental.pallas import tpu as pltpu

ENC_CHS = (3, 32, 64, 128, 256)
DEC_CHS = (256, 128, 64, 32)
NUM_CLASS = 3
N_ENC = len(ENC_CHS) - 1
N_DEC = len(DEC_CHS) - 1


def _silu(v):
    return v * jax.nn.sigmoid(v)


# --------------------------------------------------------------------------- #
# fused U-Net kernel: one grid step == one full sequence (L rows, stride layout)
# --------------------------------------------------------------------------- #
def _unet_kernel(*refs):
    it = iter(refs)
    x_ref = next(it)
    enc = [tuple(next(it) for _ in range(4)) for _ in range(N_ENC)]   # w13, b13, w2, b2
    ups = [tuple(next(it) for _ in range(2)) for _ in range(N_DEC)]   # wu, bu
    dec = [tuple(next(it) for _ in range(4)) for _ in range(N_DEC)]   # w13, b13, w2, b2
    head_w_ref = next(it)
    head_b_ref = next(it)
    o_ref = next(it)

    x = x_ref[...]                                   # (L, 3) f32
    L = x.shape[0]
    row = jax.lax.broadcasted_iota(jnp.int32, (L, 1), 0)

    # Hoisted per-stride masks (computed once; JAX does not CSE repeated compares).
    strides = (1, 2, 4, 8)
    mask_lo = {s: row < s for s in strides}          # no left neighbor in-sequence
    mask_hi = {s: row >= L - s for s in strides}     # no right neighbor in-sequence
    up_sel = {s: (row % (2 * s)) < s for s in (1, 2, 4)}   # even-output rows

    def roll_rows(v, k):
        # out[i] = v[(i - k) % L]  (== jnp.roll(v, k, axis=0)); XLU sublane rotate.
        return pltpu.roll(v, k % L, axis=0)

    def conv_k3(v, w_ref, b_ref, s):
        """Conv1d(k=3, pad=1) at row-stride s as ONE matmul:
        [x_{l-1} | x_l | x_{l+1}]  (L, 3*Cin)  @  (3*Cin, Cout)."""
        vl = jnp.where(mask_lo[s], 0.0, roll_rows(v, s))
        vr = jnp.where(mask_hi[s], 0.0, roll_rows(v, -s))
        vin = jnp.concatenate([vl, v, vr], axis=1).astype(jnp.bfloat16)
        return jnp.dot(vin, w_ref[...],
                       preferred_element_type=jnp.float32) + b_ref[...]

    def block(v, w13_ref, b13_ref, w2_ref, b2_ref, s):
        """Block: SiLU(conv2(SiLU(conv1(v)))) + conv3(v); conv1/conv3 weight-fused."""
        cout = w2_ref.shape[1]
        y = conv_k3(v, w13_ref, b13_ref, s)          # (L, 2*Cout) = [conv1 | conv3]
        h = _silu(y[:, :cout])
        h2 = conv_k3(h, w2_ref, b2_ref, s)
        return _silu(h2) + y[:, cout:]

    # ----- encoder: valid rows of level i sit at multiples of stride 2**i -----
    s = 1
    h = x
    skips = []
    for i in range(N_ENC):
        h = block(h, *enc[i], s)
        skips.append(h)
        if i < N_ENC - 1:                            # pool after last block is unused
            h = jnp.maximum(h, roll_rows(h, -s))     # MaxPool1d(2), in place
            s *= 2

    # ----- decoder -----
    d = skips[-1]                                    # deepest features (stride 8)
    for i in range(N_DEC):
        wu_ref, bu_ref = ups[i]
        cout = wu_ref.shape[1] // 2
        # ConvTranspose1d(k=2, stride=2): both taps in one matmul, bias added once
        # after the even/odd interleave (per-channel bias commutes with row roll).
        y = jnp.dot(d.astype(jnp.bfloat16), wu_ref[...],
                    preferred_element_type=jnp.float32)          # (L, 2*Cout)
        s //= 2
        d = jnp.where(up_sel[s], y[:, :cout],
                      roll_rows(y[:, cout:], s)) + bu_ref[...]
        # Block on cat([d, skip], channels): a lane-concat feeding one fused matmul.
        skip = skips[N_DEC - 1 - i]
        d = block(jnp.concatenate([d, skip], axis=1), *dec[i], s)

    # ----- 1x1 head + residual (torch .squeeze(1) is a no-op: channel dim = 3) ----
    out = (jnp.dot(d.astype(jnp.bfloat16), head_w_ref[...],
                   preferred_element_type=jnp.float32) + head_b_ref[...] + x)
    o_ref[...] = out


# --------------------------------------------------------------------------- #
# wrapper
# --------------------------------------------------------------------------- #
def unet_forward(packed, x_ncl):
    """x_ncl: (B, 3, L) as in PyTorch.  Returns (B, NUM_CLASS, L)."""
    B, C, L = x_ncl.shape
    assert C == ENC_CHS[0]
    assert L % 8 == 0, "L must be divisible by 2**(num_pool_levels) = 8"
    x_flat = jnp.transpose(x_ncl, (0, 2, 1)).reshape(B * L, C).astype(jnp.float32)

    args = [x_flat]
    specs = [pl.BlockSpec((L, C), lambda b: (b, 0),
                          memory_space=pltpu.MemorySpace.VMEM)]

    def add_resident(a):                     # weight: full array, VMEM-resident
        args.append(a)
        specs.append(pl.BlockSpec(a.shape, lambda b: (0, 0),
                                  memory_space=pltpu.MemorySpace.VMEM))

    for blk in packed["enc"]:
        for a in (blk["w13"], blk["b13"], blk["w2"], blk["b2"]):
            add_resident(a)
    for wu, bu in packed["ups"]:
        add_resident(wu)
        add_resident(bu)
    for blk in packed["dec"]:
        for a in (blk["w13"], blk["b13"], blk["w2"], blk["b2"]):
            add_resident(a)
    add_resident(packed["head_w"])
    add_resident(packed["head_b"])

    out_flat = pl.pallas_call(
        _unet_kernel,
        out_shape=jax.ShapeDtypeStruct((B * L, NUM_CLASS), jnp.float32),
        grid=(B,),
        in_specs=specs,
        out_specs=pl.BlockSpec((L, NUM_CLASS), lambda b: (b, 0),
                               memory_space=pltpu.MemorySpace.VMEM),
        compiler_params=pltpu.CompilerParams(
            dimension_semantics=("parallel",)),
    )(*args)
    return jnp.transpose(out_flat.reshape(B, L, NUM_CLASS), (0, 2, 1))


# --------------------------------------------------------------------------- #
# parameters
# --------------------------------------------------------------------------- #
def init_params(key):
    keys = iter(jax.random.split(key, 64))

    def conv_p(cin, cout, k):
        scale = 1.0 / np.sqrt(cin * k)
        w = jax.random.uniform(next(keys), (k, cin, cout), jnp.float32, -scale, scale)
        b = jax.random.uniform(next(keys), (cout,), jnp.float32, -scale, scale)
        return w, b

    def block_p(cin, cout):
        return {"c1": conv_p(cin, cout, 3),
                "c2": conv_p(cout, cout, 3),
                "c3": conv_p(cin, cout, 3)}

    return {
        "enc": [block_p(ENC_CHS[i], ENC_CHS[i + 1]) for i in range(N_ENC)],
        "ups": [conv_p(DEC_CHS[i], DEC_CHS[i + 1], 2) for i in range(N_DEC)],
        "dec": [block_p(DEC_CHS[i], DEC_CHS[i + 1]) for i in range(N_DEC)],
        "head": conv_p(DEC_CHS[-1], NUM_CLASS, 1),
    }


def pack_params(raw):
    """Repack raw (k, Cin, Cout) conv weights into the fused single-matmul layout.
    Done once, outside the jitted forward."""
    bf16, f32 = jnp.bfloat16, jnp.float32

    def fuse_k3(w):            # (3, Cin, Cout) -> (3*Cin, Cout): rows = [tap-1;tap0;tap+1]
        k, cin, cout = w.shape
        return w.reshape(k * cin, cout)

    def pack_block(bp):
        w1, b1 = bp["c1"]
        w2, b2 = bp["c2"]
        w3, b3 = bp["c3"]
        w13 = fuse_k3(jnp.concatenate([w1, w3], axis=2))       # (3*Cin, 2*Cout)
        b13 = jnp.concatenate([b1, b3], axis=0)[None, :]       # (1, 2*Cout)
        return {"w13": w13.astype(bf16), "b13": b13.astype(f32),
                "w2": fuse_k3(w2).astype(bf16), "b2": b2[None, :].astype(f32)}

    return {
        "enc": [pack_block(bp) for bp in raw["enc"]],
        "ups": [(jnp.concatenate([w[0], w[1]], axis=1).astype(bf16),   # (Cin, 2*Cout)
                 b[None, :].astype(f32)) for (w, b) in raw["ups"]],
        "dec": [pack_block(bp) for bp in raw["dec"]],
        "head_w": raw["head"][0][0].astype(bf16),               # (32, NUM_CLASS)
        "head_b": raw["head"][1][None, :].astype(f32),          # (1, NUM_CLASS)
    }


# --------------------------------------------------------------------------- #
# pure-JAX reference (same bf16 matmul operands) for the correctness check
# --------------------------------------------------------------------------- #
def _ref_conv_k3(x, w, b):
    B, L, Cin = x.shape
    z = jnp.zeros((B, 1, Cin), x.dtype)
    xl = jnp.concatenate([z, x[:, :-1]], axis=1)
    xr = jnp.concatenate([x[:, 1:], z], axis=1)

    def mm(a, wk):
        y = jnp.dot(a.reshape(B * L, Cin).astype(jnp.bfloat16),
                    wk.astype(jnp.bfloat16), preferred_element_type=jnp.float32)
        return y.reshape(B, L, -1)

    return mm(xl, w[0]) + mm(x, w[1]) + mm(xr, w[2]) + b[None, None, :]


def _ref_block(x, bp):
    h = jax.nn.silu(_ref_conv_k3(x, *bp["c1"]))
    h = jax.nn.silu(_ref_conv_k3(h, *bp["c2"]))
    return h + _ref_conv_k3(x, *bp["c3"])


def reference_forward(raw, x_ncl):
    x = jnp.transpose(x_ncl, (0, 2, 1)).astype(jnp.float32)
    B = x.shape[0]
    ftrs, h = [], x
    for i, bp in enumerate(raw["enc"]):
        h = _ref_block(h, bp)
        ftrs.append(h)
        if i < len(raw["enc"]) - 1:
            h = jnp.max(h.reshape(B, h.shape[1] // 2, 2, h.shape[2]), axis=2)
    d = ftrs[-1]
    skips = ftrs[:-1][::-1]
    for i, ((wu, bu), bp) in enumerate(zip(raw["ups"], raw["dec"])):
        Bq, Lq, Cin = d.shape
        d2 = d.reshape(Bq * Lq, Cin).astype(jnp.bfloat16)
        y0 = jnp.dot(d2, wu[0].astype(jnp.bfloat16),
                     preferred_element_type=jnp.float32).reshape(Bq, Lq, -1) + bu
        y1 = jnp.dot(d2, wu[1].astype(jnp.bfloat16),
                     preferred_element_type=jnp.float32).reshape(Bq, Lq, -1) + bu
        d = jnp.stack([y0, y1], axis=2).reshape(Bq, 2 * Lq, -1)
        d = jnp.concatenate([d, skips[i]], axis=-1)
        d = _ref_block(d, bp)
    hw, hb = raw["head"]
    Bq, Lq, Cin = d.shape
    out = jnp.dot(d.reshape(Bq * Lq, Cin).astype(jnp.bfloat16),
                  hw[0].astype(jnp.bfloat16),
                  preferred_element_type=jnp.float32).reshape(Bq, Lq, -1) + hb
    return jnp.transpose(out + x, (0, 2, 1))


# --------------------------------------------------------------------------- #
if __name__ == "__main__":
    key = jax.random.PRNGKey(0)
    pk, xk = jax.random.split(key)
    raw = init_params(pk)
    packed = pack_params(raw)

    x = jax.random.normal(xk, (2, ENC_CHS[0], 16), jnp.float32)   # (B=2, C=3, L=16)

    out = jax.block_until_ready(jax.jit(unet_forward)(packed, x))
    assert out.shape == (2, NUM_CLASS, 16) and out.dtype == jnp.float32

    ref = jax.block_until_ready(reference_forward(raw, x))
    np.testing.assert_allclose(np.asarray(out), np.asarray(ref), rtol=5e-2, atol=5e-2)
    print("KERNEL_OK")
</pallas_src>

<mosaic_0001>
module attributes {stable_mosaic.version = 11 : i64} {
  func.func @_unet_kernel(%arg0: i32, %arg1: memref<16x3xf32, #tpu.memory_space<vmem>>, %arg2: memref<9x64xbf16, #tpu.memory_space<vmem>>, %arg3: memref<1x64xf32, #tpu.memory_space<vmem>>, %arg4: memref<96x32xbf16, #tpu.memory_space<vmem>>, %arg5: memref<1x32xf32, #tpu.memory_space<vmem>>, %arg6: memref<96x128xbf16, #tpu.memory_space<vmem>>, %arg7: memref<1x128xf32, #tpu.memory_space<vmem>>, %arg8: memref<192x64xbf16, #tpu.memory_space<vmem>>, %arg9: memref<1x64xf32, #tpu.memory_space<vmem>>, %arg10: memref<192x256xbf16, #tpu.memory_space<vmem>>, %arg11: memref<1x256xf32, #tpu.memory_space<vmem>>, %arg12: memref<384x128xbf16, #tpu.memory_space<vmem>>, %arg13: memref<1x128xf32, #tpu.memory_space<vmem>>, %arg14: memref<384x512xbf16, #tpu.memory_space<vmem>>, %arg15: memref<1x512xf32, #tpu.memory_space<vmem>>, %arg16: memref<768x256xbf16, #tpu.memory_space<vmem>>, %arg17: memref<1x256xf32, #tpu.memory_space<vmem>>, %arg18: memref<256x256xbf16, #tpu.memory_space<vmem>>, %arg19: memref<1x128xf32, #tpu.memory_space<vmem>>, %arg20: memref<128x128xbf16, #tpu.memory_space<vmem>>, %arg21: memref<1x64xf32, #tpu.memory_space<vmem>>, %arg22: memref<64x64xbf16, #tpu.memory_space<vmem>>, %arg23: memref<1x32xf32, #tpu.memory_space<vmem>>, %arg24: memref<768x256xbf16, #tpu.memory_space<vmem>>, %arg25: memref<1x256xf32, #tpu.memory_space<vmem>>, %arg26: memref<384x128xbf16, #tpu.memory_space<vmem>>, %arg27: memref<1x128xf32, #tpu.memory_space<vmem>>, %arg28: memref<384x128xbf16, #tpu.memory_space<vmem>>, %arg29: memref<1x128xf32, #tpu.memory_space<vmem>>, %arg30: memref<192x64xbf16, #tpu.memory_space<vmem>>, %arg31: memref<1x64xf32, #tpu.memory_space<vmem>>, %arg32: memref<192x64xbf16, #tpu.memory_space<vmem>>, %arg33: memref<1x64xf32, #tpu.memory_space<vmem>>, %arg34: memref<96x32xbf16, #tpu.memory_space<vmem>>, %arg35: memref<1x32xf32, #tpu.memory_space<vmem>>, %arg36: memref<32x3xbf16, #tpu.memory_space<vmem>>, %arg37: memref<1x3xf32, #tpu.memory_space<vmem>>, %arg38: memref<16x3xf32, #tpu.memory_space<vmem>>) attributes {dimension_semantics = [#tpu.dimension_semantics<parallel>], iteration_bounds = array<i64: 2>, scalar_prefetch = 0 : i64, scratch_operands = 0 : i64, tpu.core_type = #tpu.core_type<tc>, window_params = [{transform_indices = @transform_0, window_bounds = array<i64: 16, 3>}, {pipeline_mode = #tpu.pipeline_mode<synchronous>, transform_indices = @transform_1, window_bounds = array<i64: 9, 64>}, {pipeline_mode = #tpu.pipeline_mode<synchronous>, transform_indices = @transform_2, window_bounds = array<i64: 1, 64>}, {pipeline_mode = #tpu.pipeline_mode<synchronous>, transform_indices = @transform_3, window_bounds = array<i64: 96, 32>}, {pipeline_mode = #tpu.pipeline_mode<synchronous>, transform_indices = @transform_4, window_bounds = array<i64: 1, 32>}, {pipeline_mode = #tpu.pipeline_mode<synchronous>, transform_indices = @transform_5, window_bounds = array<i64: 96, 128>}, {pipeline_mode = #tpu.pipeline_mode<synchronous>, transform_indices = @transform_6, window_bounds = array<i64: 1, 128>}, {pipeline_mode = #tpu.pipeline_mode<synchronous>, transform_indices = @transform_7, window_bounds = array<i64: 192, 64>}, {pipeline_mode = #tpu.pipeline_mode<synchronous>, transform_indices = @transform_8, window_bounds = array<i64: 1, 64>}, {pipeline_mode = #tpu.pipeline_mode<synchronous>, transform_indices = @transform_9, window_bounds = array<i64: 192, 256>}, {pipeline_mode = #tpu.pipeline_mode<synchronous>, transform_indices = @transform_10, window_bounds = array<i64: 1, 256>}, {pipeline_mode = #tpu.pipeline_mode<synchronous>, transform_indices = @transform_11, window_bounds = array<i64: 384, 128>}, {pipeline_mode = #tpu.pipeline_mode<synchronous>, transform_indices = @transform_12, window_bounds = array<i64: 1, 128>}, {pipeline_mode = #tpu.pipeline_mode<synchronous>, transform_indices = @transform_13, window_bounds = array<i64: 384, 512>}, {pipeline_mode = #tpu.pipeline_mode<synchronous>, transform_indices = @transform_14, window_bounds = array<i64: 1, 512>}, {pipeline_mode = #tpu.pipeline_mode<synchronous>, transform_indices = @transform_15, window_bounds = array<i64: 768, 256>}, {pipeline_mode = #tpu.pipeline_mode<synchronous>, transform_indices = @transform_16, window_bounds = array<i64: 1, 256>}, {pipeline_mode = #tpu.pipeline_mode<synchronous>, transform_indices = @transform_17, window_bounds = array<i64: 256, 256>}, {pipeline_mode = #tpu.pipeline_mode<synchronous>, transform_indices = @transform_18, window_bounds = array<i64: 1, 128>}, {pipeline_mode = #tpu.pipeline_mode<synchronous>, transform_indices = @transform_19, window_bounds = array<i64: 128, 128>}, {pipeline_mode = #tpu.pipeline_mode<synchronous>, transform_indices = @transform_20, window_bounds = array<i64: 1, 64>}, {pipeline_mode = #tpu.pipeline_mode<synchronous>, transform_indices = @transform_21, window_bounds = array<i64: 64, 64>}, {pipeline_mode = #tpu.pipeline_mode<synchronous>, transform_indices = @transform_22, window_bounds = array<i64: 1, 32>}, {pipeline_mode = #tpu.pipeline_mode<synchronous>, transform_indices = @transform_23, window_bounds = array<i64: 768, 256>}, {pipeline_mode = #tpu.pipeline_mode<synchronous>, transform_indices = @transform_24, window_bounds = array<i64: 1, 256>}, {pipeline_mode = #tpu.pipeline_mode<synchronous>, transform_indices = @transform_25, window_bounds = array<i64: 384, 128>}, {pipeline_mode = #tpu.pipeline_mode<synchronous>, transform_indices = @transform_26, window_bounds = array<i64: 1, 128>}, {pipeline_mode = #tpu.pipeline_mode<synchronous>, transform_indices = @transform_27, window_bounds = array<i64: 384, 128>}, {pipeline_mode = #tpu.pipeline_mode<synchronous>, transform_indices = @transform_28, window_bounds = array<i64: 1, 128>}, {pipeline_mode = #tpu.pipeline_mode<synchronous>, transform_indices = @transform_29, window_bounds = array<i64: 192, 64>}, {pipeline_mode = #tpu.pipeline_mode<synchronous>, transform_indices = @transform_30, window_bounds = array<i64: 1, 64>}, {pipeline_mode = #tpu.pipeline_mode<synchronous>, transform_indices = @transform_31, window_bounds = array<i64: 192, 64>}, {pipeline_mode = #tpu.pipeline_mode<synchronous>, transform_indices = @transform_32, window_bounds = array<i64: 1, 64>}, {pipeline_mode = #tpu.pipeline_mode<synchronous>, transform_indices = @transform_33, window_bounds = array<i64: 96, 32>}, {pipeline_mode = #tpu.pipeline_mode<synchronous>, transform_indices = @transform_34, window_bounds = array<i64: 1, 32>}, {pipeline_mode = #tpu.pipeline_mode<synchronous>, transform_indices = @transform_35, window_bounds = array<i64: 32, 3>}, {pipeline_mode = #tpu.pipeline_mode<synchronous>, transform_indices = @transform_36, window_bounds = array<i64: 1, 3>}, {transform_indices = @transform_37, window_bounds = array<i64: 16, 3>}]} {
    %c0 = arith.constant 0 : index
    %c0_0 = arith.constant 0 : index
    %0 = vector.load %arg1[%c0, %c0_0] : memref<16x3xf32, #tpu.memory_space<vmem>>, vector<16x3xf32>
    %1 = tpu.iota {dimensions = array<i32: 0>} : vector<16x1xi32>
    %c1_i32 = arith.constant 1 : i32
    %2 = vector.broadcast %c1_i32 : i32 to vector<16x1xi32>
    %3 = arith.cmpi slt, %1, %2 : vector<16x1xi32>
    %c2_i32 = arith.constant 2 : i32
    %4 = vector.broadcast %c2_i32 : i32 to vector<16x1xi32>
    %5 = arith.cmpi slt, %1, %4 : vector<16x1xi32>
    %c4_i32 = arith.constant 4 : i32
    %6 = vector.broadcast %c4_i32 : i32 to vector<16x1xi32>
    %7 = arith.cmpi slt, %1, %6 : vector<16x1xi32>
    %c8_i32 = arith.constant 8 : i32
    %8 = vector.broadcast %c8_i32 : i32 to vector<16x1xi32>
    %9 = arith.cmpi slt, %1, %8 : vector<16x1xi32>
    %c15_i32 = arith.constant 15 : i32
    %10 = vector.broadcast %c15_i32 : i32 to vector<16x1xi32>
    %11 = arith.cmpi sge, %1, %10 : vector<16x1xi32>
    %c14_i32 = arith.constant 14 : i32
    %12 = vector.broadcast %c14_i32 : i32 to vector<16x1xi32>
    %13 = arith.cmpi sge, %1, %12 : vector<16x1xi32>
    %c12_i32 = arith.constant 12 : i32
    %14 = vector.broadcast %c12_i32 : i32 to vector<16x1xi32>
    %15 = arith.cmpi sge, %1, %14 : vector<16x1xi32>
    %c8_i32_1 = arith.constant 8 : i32
    %16 = vector.broadcast %c8_i32_1 : i32 to vector<16x1xi32>
    %17 = arith.cmpi sge, %1, %16 : vector<16x1xi32>
    %c2_i32_2 = arith.constant 2 : i32
    %c0_i32 = arith.constant 0 : i32
    %18 = arith.cmpi eq, %c2_i32_2, %c0_i32 : i32
    %c1_i32_3 = arith.constant 1 : i32
    %19 = arith.select %18, %c1_i32_3, %c2_i32_2 : i32
    %20 = vector.broadcast %19 : i32 to vector<16x1xi32>
    %21 = arith.remsi %1, %20 : vector<16x1xi32>
    %c0_i32_4 = arith.constant 0 : i32
    %22 = vector.broadcast %c0_i32_4 : i32 to vector<16x1xi32>
    %23 = arith.cmpi ne, %21, %22 : vector<16x1xi32>
    %c0_i32_5 = arith.constant 0 : i32
    %24 = vector.broadcast %c0_i32_5 : i32 to vector<16x1xi32>
    %25 = arith.cmpi slt, %21, %24 : vector<16x1xi32>
    %c0_i32_6 = arith.constant 0 : i32
    %26 = arith.cmpi slt, %19, %c0_i32_6 : i32
    %27 = vector.broadcast %26 : i1 to vector<16x1xi1>
    %28 = vector.broadcast %27 : vector<16x1xi1> to vector<16x1xi1>
    %29 = arith.xori %25, %28 : vector<16x1xi1>
    %30 = arith.andi %29, %23 : vector<16x1xi1>
    %31 = vector.broadcast %19 : i32 to vector<16x1xi32>
    %32 = arith.addi %21, %31 : vector<16x1xi32>
    %33 = arith.select %30, %32, %21 : vector<16x1xi1>, vector<16x1xi32>
    %c1_i32_7 = arith.constant 1 : i32
    %34 = vector.broadcast %c1_i32_7 : i32 to vector<16x1xi32>
    %35 = arith.cmpi slt, %33, %34 : vector<16x1xi32>
    %c4_i32_8 = arith.constant 4 : i32
    %c0_i32_9 = arith.constant 0 : i32
    %36 = arith.cmpi eq, %c4_i32_8, %c0_i32_9 : i32
    %c1_i32_10 = arith.constant 1 : i32
    %37 = arith.select %36, %c1_i32_10, %c4_i32_8 : i32
    %38 = vector.broadcast %37 : i32 to vector<16x1xi32>
    %39 = arith.remsi %1, %38 : vector<16x1xi32>
    %c0_i32_11 = arith.constant 0 : i32
    %40 = vector.broadcast %c0_i32_11 : i32 to vector<16x1xi32>
    %41 = arith.cmpi ne, %39, %40 : vector<16x1xi32>
    %c0_i32_12 = arith.constant 0 : i32
    %42 = vector.broadcast %c0_i32_12 : i32 to vector<16x1xi32>
    %43 = arith.cmpi slt, %39, %42 : vector<16x1xi32>
    %c0_i32_13 = arith.constant 0 : i32
    %44 = arith.cmpi slt, %37, %c0_i32_13 : i32
    %45 = vector.broadcast %44 : i1 to vector<16x1xi1>
    %46 = vector.broadcast %45 : vector<16x1xi1> to vector<16x1xi1>
    %47 = arith.xori %43, %46 : vector<16x1xi1>
    %48 = arith.andi %47, %41 : vector<16x1xi1>
    %49 = vector.broadcast %37 : i32 to vector<16x1xi32>
    %50 = arith.addi %39, %49 : vector<16x1xi32>
    %51 = arith.select %48, %50, %39 : vector<16x1xi1>, vector<16x1xi32>
    %c2_i32_14 = arith.constant 2 : i32
    %52 = vector.broadcast %c2_i32_14 : i32 to vector<16x1xi32>
    %53 = arith.cmpi slt, %51, %52 : vector<16x1xi32>
    %c8_i32_15 = arith.constant 8 : i32
    %c0_i32_16 = arith.constant 0 : i32
    %54 = arith.cmpi eq, %c8_i32_15, %c0_i32_16 : i32
    %c1_i32_17 = arith.constant 1 : i32
    %55 = arith.select %54, %c1_i32_17, %c8_i32_15 : i32
    %56 = vector.broadcast %55 : i32 to vector<16x1xi32>
    %57 = arith.remsi %1, %56 : vector<16x1xi32>
    %c0_i32_18 = arith.constant 0 : i32
    %58 = vector.broadcast %c0_i32_18 : i32 to vector<16x1xi32>
    %59 = arith.cmpi ne, %57, %58 : vector<16x1xi32>
    %c0_i32_19 = arith.constant 0 : i32
    %60 = vector.broadcast %c0_i32_19 : i32 to vector<16x1xi32>
    %61 = arith.cmpi slt, %57, %60 : vector<16x1xi32>
    %c0_i32_20 = arith.constant 0 : i32
    %62 = arith.cmpi slt, %55, %c0_i32_20 : i32
    %63 = vector.broadcast %62 : i1 to vector<16x1xi1>
    %64 = vector.broadcast %63 : vector<16x1xi1> to vector<16x1xi1>
    %65 = arith.xori %61, %64 : vector<16x1xi1>
    %66 = arith.andi %65, %59 : vector<16x1xi1>
    %67 = vector.broadcast %55 : i32 to vector<16x1xi32>
    %68 = arith.addi %57, %67 : vector<16x1xi32>
    %69 = arith.select %66, %68, %57 : vector<16x1xi1>, vector<16x1xi32>
    %c4_i32_21 = arith.constant 4 : i32
    %70 = vector.broadcast %c4_i32_21 : i32 to vector<16x1xi32>
    %71 = arith.cmpi slt, %69, %70 : vector<16x1xi32>
    %c1_i32_22 = arith.constant 1 : i32
    %72 = tpu.dynamic_rotate %0 by %c1_i32_22 dim 0 : vector<16x3xf32>, i32 -> vector<16x3xf32>
    %cst = arith.constant 0.000000e+00 : f32
    %73 = vector.shape_cast %3 : vector<16x1xi1> to vector<16x1xi1>
    %74 = vector.broadcast %73 : vector<16x1xi1> to vector<16x3xi1>
    %75 = vector.broadcast %cst : f32 to vector<16x3xf32>
    %76 = arith.select %74, %75, %72 : vector<16x3xi1>, vector<16x3xf32>
    %c15_i32_23 = arith.constant 15 : i32
    %77 = tpu.dynamic_rotate %0 by %c15_i32_23 dim 0 : vector<16x3xf32>, i32 -> vector<16x3xf32>
    %cst_24 = arith.constant 0.000000e+00 : f32
    %78 = vector.shape_cast %11 : vector<16x1xi1> to vector<16x1xi1>
    %79 = vector.broadcast %78 : vector<16x1xi1> to vector<16x3xi1>
    %80 = vector.broadcast %cst_24 : f32 to vector<16x3xf32>
    %81 = arith.select %79, %80, %77 : vector<16x3xi1>, vector<16x3xf32>
    %82 = tpu.concatenate %76, %0, %81 in 1 : vector<16x3xf32>, vector<16x3xf32>, vector<16x3xf32> -> vector<16x9xf32>
    %83 = arith.truncf %82 : vector<16x9xf32> to vector<16x9xbf16>
    %c0_25 = arith.constant 0 : index
    %c0_26 = arith.constant 0 : index
    %84 = vector.load %arg2[%c0_25, %c0_26] : memref<9x64xbf16, #tpu.memory_space<vmem>>, vector<9x64xbf16>
    %cst_27 = arith.constant dense<0.000000e+00> : vector<16x64xf32>
    %85 = tpu.matmul %83, %84, %cst_27 {dimension_numbers = #tpu.dot_dimension_numbers<[1], [0], [0], [1], [0, 0, 1, 1], [], []>} : vector<16x9xbf16>, vector<9x64xbf16>, vector<16x64xf32> -> vector<16x64xf32>
    %c0_28 = arith.constant 0 : index
    %c0_29 = arith.constant 0 : index
    %86 = vector.load %arg3[%c0_28, %c0_29] : memref<1x64xf32, #tpu.memory_space<vmem>>, vector<1x64xf32>
    %87 = vector.broadcast %86 : vector<1x64xf32> to vector<16x64xf32>
    %88 = arith.addf %85, %87 : vector<16x64xf32>
    %89 = vector.extract_strided_slice %88 {offsets = [0, 0], sizes = [16, 32], strides = [1, 1]} : vector<16x64xf32> to vector<16x32xf32>
    %90 = arith.negf %89 : vector<16x32xf32>
    %91 = math.exp %90 : vector<16x32xf32>
    %cst_30 = arith.constant 1.000000e+00 : f32
    %92 = vector.broadcast %cst_30 : f32 to vector<16x32xf32>
    %93 = arith.addf %92, %91 : vector<16x32xf32>
    %94 = arith.divf %92, %93 : vector<16x32xf32>
    %95 = arith.mulf %89, %94 : vector<16x32xf32>
    %c1_i32_31 = arith.constant 1 : i32
    %96 = tpu.dynamic_rotate %95 by %c1_i32_31 dim 0 : vector<16x32xf32>, i32 -> vector<16x32xf32>
    %cst_32 = arith.constant 0.000000e+00 : f32
    %97 = vector.shape_cast %3 : vector<16x1xi1> to vector<16x1xi1>
    %98 = vector.broadcast %97 : vector<16x1xi1> to vector<16x32xi1>
    %99 = vector.broadcast %cst_32 : f32 to vector<16x32xf32>
    %100 = arith.select %98, %99, %96 : vector<16x32xi1>, vector<16x32xf32>
    %c15_i32_33 = arith.constant 15 : i32
    %101 = tpu.dynamic_rotate %95 by %c15_i32_33 dim 0 : vector<16x32xf32>, i32 -> vector<16x32xf32>
    %cst_34 = arith.constant 0.000000e+00 : f32
    %102 = vector.shape_cast %11 : vector<16x1xi1> to vector<16x1xi1>
    %103 = vector.broadcast %102 : vector<16x1xi1> to vector<16x32xi1>
    %104 = vector.broadcast %cst_34 : f32 to vector<16x32xf32>
    %105 = arith.select %103, %104, %101 : vector<16x32xi1>, vector<16x32xf32>
    %106 = tpu.concatenate %100, %95, %105 in 1 : vector<16x32xf32>, vector<16x32xf32>, vector<16x32xf32> -> vector<16x96xf32>
    %107 = arith.truncf %106 : vector<16x96xf32> to vector<16x96xbf16>
    %c0_35 = arith.constant 0 : index
    %c0_36 = arith.constant 0 : index
    %108 = vector.load %arg4[%c0_35, %c0_36] : memref<96x32xbf16, #tpu.memory_space<vmem>>, vector<96x32xbf16>
    %cst_37 = arith.constant dense<0.000000e+00> : vector<16x32xf32>
    %109 = tpu.matmul %107, %108, %cst_37 {dimension_numbers = #tpu.dot_dimension_numbers<[1], [0], [0], [1], [0, 0, 1, 1], [], []>} : vector<16x96xbf16>, vector<96x32xbf16>, vector<16x32xf32> -> vector<16x32xf32>
    %c0_38 = arith.constant 0 : index
    %c0_39 = arith.constant 0 : index
    %110 = vector.load %arg5[%c0_38, %c0_39] : memref<1x32xf32, #tpu.memory_space<vmem>>, vector<1x32xf32>
    %111 = vector.broadcast %110 : vector<1x32xf32> to vector<16x32xf32>
    %112 = arith.addf %109, %111 : vector<16x32xf32>
    %113 = arith.negf %112 : vector<16x32xf32>
    %114 = math.exp %113 : vector<16x32xf32>
    %cst_40 = arith.constant 1.000000e+00 : f32
    %115 = vector.broadcast %cst_40 : f32 to vector<16x32xf32>
    %116 = arith.addf %115, %114 : vector<16x32xf32>
    %117 = arith.divf %115, %116 : vector<16x32xf32>
    %118 = arith.mulf %112, %117 : vector<16x32xf32>
    %119 = vector.extract_strided_slice %88 {offsets = [0, 32], sizes = [16, 32], strides = [1, 1]} : vector<16x64xf32> to vector<16x32xf32>
    %120 = arith.addf %118, %119 : vector<16x32xf32>
    %c15_i32_41 = arith.constant 15 : i32
    %121 = tpu.dynamic_rotate %120 by %c15_i32_41 dim 0 : vector<16x32xf32>, i32 -> vector<16x32xf32>
    %122 = arith.maximumf %120, %121 : vector<16x32xf32>
    %c2_i32_42 = arith.constant 2 : i32
    %123 = tpu.dynamic_rotate %122 by %c2_i32_42 dim 0 : vector<16x32xf32>, i32 -> vector<16x32xf32>
    %cst_43 = arith.constant 0.000000e+00 : f32
    %124 = vector.shape_cast %5 : vector<16x1xi1> to vector<16x1xi1>
    %125 = vector.broadcast %124 : vector<16x1xi1> to vector<16x32xi1>
    %126 = vector.broadcast %cst_43 : f32 to vector<16x32xf32>
    %127 = arith.select %125, %126, %123 : vector<16x32xi1>, vector<16x32xf32>
    %c14_i32_44 = arith.constant 14 : i32
    %128 = tpu.dynamic_rotate %122 by %c14_i32_44 dim 0 : vector<16x32xf32>, i32 -> vector<16x32xf32>
    %cst_45 = arith.constant 0.000000e+00 : f32
    %129 = vector.shape_cast %13 : vector<16x1xi1> to vector<16x1xi1>
    %130 = vector.broadcast %129 : vector<16x1xi1> to vector<16x32xi1>
    %131 = vector.broadcast %cst_45 : f32 to vector<16x32xf32>
    %132 = arith.select %130, %131, %128 : vector<16x32xi1>, vector<16x32xf32>
    %133 = tpu.concatenate %127, %122, %132 in 1 : vector<16x32xf32>, vector<16x32xf32>, vector<16x32xf32> -> vector<16x96xf32>
    %134 = arith.truncf %133 : vector<16x96xf32> to vector<16x96xbf16>
    %c0_46 = arith.constant 0 : index
    %c0_47 = arith.constant 0 : index
    %135 = vector.load %arg6[%c0_46, %c0_47] : memref<96x128xbf16, #tpu.memory_space<vmem>>, vector<96x128xbf16>
    %cst_48 = arith.constant dense<0.000000e+00> : vector<16x128xf32>
    %136 = tpu.matmul %134, %135, %cst_48 {dimension_numbers = #tpu.dot_dimension_numbers<[1], [0], [0], [1], [0, 0, 1, 1], [], []>} : vector<16x96xbf16>, vector<96x128xbf16>, vector<16x128xf32> -> vector<16x128xf32>
    %c0_49 = arith.constant 0 : index
    %c0_50 = arith.constant 0 : index
    %137 = vector.load %arg7[%c0_49, %c0_50] : memref<1x128xf32, #tpu.memory_space<vmem>>, vector<1x128xf32>
    %138 = vector.broadcast %137 : vector<1x128xf32> to vector<16x128xf32>
    %139 = arith.addf %136, %138 : vector<16x128xf32>
    %140 = vector.extract_strided_slice %139 {offsets = [0, 0], sizes = [16, 64], strides = [1, 1]} : vector<16x128xf32> to vector<16x64xf32>
    %141 = arith.negf %140 : vector<16x64xf32>
    %142 = math.exp %141 : vector<16x64xf32>
    %cst_51 = arith.constant 1.000000e+00 : f32
    %143 = vector.broadcast %cst_51 : f32 to vector<16x64xf32>
    %144 = arith.addf %143, %142 : vector<16x64xf32>
    %145 = arith.divf %143, %144 : vector<16x64xf32>
    %146 = arith.mulf %140, %145 : vector<16x64xf32>
    %c2_i32_52 = arith.constant 2 : i32
    %147 = tpu.dynamic_rotate %146 by %c2_i32_52 dim 0 : vector<16x64xf32>, i32 -> vector<16x64xf32>
    %cst_53 = arith.constant 0.000000e+00 : f32
    %148 = vector.shape_cast %5 : vector<16x1xi1> to vector<16x1xi1>
    %149 = vector.broadcast %148 : vector<16x1xi1> to vector<16x64xi1>
    %150 = vector.broadcast %cst_53 : f32 to vector<16x64xf32>
    %151 = arith.select %149, %150, %147 : vector<16x64xi1>, vector<16x64xf32>
    %c14_i32_54 = arith.constant 14 : i32
    %152 = tpu.dynamic_rotate %146 by %c14_i32_54 dim 0 : vector<16x64xf32>, i32 -> vector<16x64xf32>
    %cst_55 = arith.constant 0.000000e+00 : f32
    %153 = vector.shape_cast %13 : vector<16x1xi1> to vector<16x1xi1>
    %154 = vector.broadcast %153 : vector<16x1xi1> to vector<16x64xi1>
    %155 = vector.broadcast %cst_55 : f32 to vector<16x64xf32>
    %156 = arith.select %154, %155, %152 : vector<16x64xi1>, vector<16x64xf32>
    %157 = tpu.concatenate %151, %146, %156 in 1 : vector<16x64xf32>, vector<16x64xf32>, vector<16x64xf32> -> vector<16x192xf32>
    %158 = arith.truncf %157 : vector<16x192xf32> to vector<16x192xbf16>
    %c0_56 = arith.constant 0 : index
    %c0_57 = arith.constant 0 : index
    %159 = vector.load %arg8[%c0_56, %c0_57] : memref<192x64xbf16, #tpu.memory_space<vmem>>, vector<192x64xbf16>
    %cst_58 = arith.constant dense<0.000000e+00> : vector<16x64xf32>
    %160 = tpu.matmul %158, %159, %cst_58 {dimension_numbers = #tpu.dot_dimension_numbers<[1], [0], [0], [1], [0, 0, 1, 1], [], []>} : vector<16x192xbf16>, vector<192x64xbf16>, vector<16x64xf32> -> vector<16x64xf32>
    %c0_59 = arith.constant 0 : index
    %c0_60 = arith.constant 0 : index
    %161 = vector.load %arg9[%c0_59, %c0_60] : memref<1x64xf32, #tpu.memory_space<vmem>>, vector<1x64xf32>
    %162 = vector.broadcast %161 : vector<1x64xf32> to vector<16x64xf32>
    %163 = arith.addf %160, %162 : vector<16x64xf32>
    %164 = arith.negf %163 : vector<16x64xf32>
    %165 = math.exp %164 : vector<16x64xf32>
    %cst_61 = arith.constant 1.000000e+00 : f32
    %166 = vector.broadcast %cst_61 : f32 to vector<16x64xf32>
    %167 = arith.addf %166, %165 : vector<16x64xf32>
    %168 = arith.divf %166, %167 : vector<16x64xf32>
    %169 = arith.mulf %163, %168 : vector<16x64xf32>
    %170 = vector.extract_strided_slice %139 {offsets = [0, 64], sizes = [16, 64], strides = [1, 1]} : vector<16x128xf32> to vector<16x64xf32>
    %171 = arith.addf %169, %170 : vector<16x64xf32>
    %c14_i32_62 = arith.constant 14 : i32
    %172 = tpu.dynamic_rotate %171 by %c14_i32_62 dim 0 : vector<16x64xf32>, i32 -> vector<16x64xf32>
    %173 = arith.maximumf %171, %172 : vector<16x64xf32>
    %c4_i32_63 = arith.constant 4 : i32
    %174 = tpu.dynamic_rotate %173 by %c4_i32_63 dim 0 : vector<16x64xf32>, i32 -> vector<16x64xf32>
    %cst_64 = arith.constant 0.000000e+00 : f32
    %175 = vector.shape_cast %7 : vector<16x1xi1> to vector<16x1xi1>
    %176 = vector.broadcast %175 : vector<16x1xi1> to vector<16x64xi1>
    %177 = vector.broadcast %cst_64 : f32 to vector<16x64xf32>
    %178 = arith.select %176, %177, %174 : vector<16x64xi1>, vector<16x64xf32>
    %c12_i32_65 = arith.constant 12 : i32
    %179 = tpu.dynamic_rotate %173 by %c12_i32_65 dim 0 : vector<16x64xf32>, i32 -> vector<16x64xf32>
    %cst_66 = arith.constant 0.000000e+00 : f32
    %180 = vector.shape_cast %15 : vector<16x1xi1> to vector<16x1xi1>
    %181 = vector.broadcast %180 : vector<16x1xi1> to vector<16x64xi1>
    %182 = vector.broadcast %cst_66 : f32 to vector<16x64xf32>
    %183 = arith.select %181, %182, %179 : vector<16x64xi1>, vector<16x64xf32>
    %184 = tpu.concatenate %178, %173, %183 in 1 : vector<16x64xf32>, vector<16x64xf32>, vector<16x64xf32> -> vector<16x192xf32>
    %185 = arith.truncf %184 : vector<16x192xf32> to vector<16x192xbf16>
    %c0_67 = arith.constant 0 : index
    %c0_68 = arith.constant 0 : index
    %186 = vector.load %arg10[%c0_67, %c0_68] : memref<192x256xbf16, #tpu.memory_space<vmem>>, vector<192x256xbf16>
    %cst_69 = arith.constant dense<0.000000e+00> : vector<16x256xf32>
    %187 = tpu.matmul %185, %186, %cst_69 {dimension_numbers = #tpu.dot_dimension_numbers<[1], [0], [0], [1], [0, 0, 1, 1], [], []>} : vector<16x192xbf16>, vector<192x256xbf16>, vector<16x256xf32> -> vector<16x256xf32>
    %c0_70 = arith.constant 0 : index
    %c0_71 = arith.constant 0 : index
    %188 = vector.load %arg11[%c0_70, %c0_71] : memref<1x256xf32, #tpu.memory_space<vmem>>, vector<1x256xf32>
    %189 = vector.broadcast %188 : vector<1x256xf32> to vector<16x256xf32>
    %190 = arith.addf %187, %189 : vector<16x256xf32>
    %191 = vector.extract_strided_slice %190 {offsets = [0, 0], sizes = [16, 128], strides = [1, 1]} : vector<16x256xf32> to vector<16x128xf32>
    %192 = arith.negf %191 : vector<16x128xf32>
    %193 = math.exp %192 : vector<16x128xf32>
    %cst_72 = arith.constant 1.000000e+00 : f32
    %194 = vector.broadcast %cst_72 : f32 to vector<16x128xf32>
    %195 = arith.addf %194, %193 : vector<16x128xf32>
    %196 = arith.divf %194, %195 : vector<16x128xf32>
    %197 = arith.mulf %191, %196 : vector<16x128xf32>
    %c4_i32_73 = arith.constant 4 : i32
    %198 = tpu.dynamic_rotate %197 by %c4_i32_73 dim 0 : vector<16x128xf32>, i32 -> vector<16x128xf32>
    %cst_74 = arith.constant 0.000000e+00 : f32
    %199 = vector.shape_cast %7 : vector<16x1xi1> to vector<16x1xi1>
    %200 = vector.broadcast %199 : vector<16x1xi1> to vector<16x128xi1>
    %201 = vector.broadcast %cst_74 : f32 to vector<16x128xf32>
    %202 = arith.select %200, %201, %198 : vector<16x128xi1>, vector<16x128xf32>
    %c12_i32_75 = arith.constant 12 : i32
    %203 = tpu.dynamic_rotate %197 by %c12_i32_75 dim 0 : vector<16x128xf32>, i32 -> vector<16x128xf32>
    %cst_76 = arith.constant 0.000000e+00 : f32
    %204 = vector.shape_cast %15 : vector<16x1xi1> to vector<16x1xi1>
    %205 = vector.broadcast %204 : vector<16x1xi1> to vector<16x128xi1>
    %206 = vector.broadcast %cst_76 : f32 to vector<16x128xf32>
    %207 = arith.select %205, %206, %203 : vector<16x128xi1>, vector<16x128xf32>
    %208 = tpu.concatenate %202, %197, %207 in 1 : vector<16x128xf32>, vector<16x128xf32>, vector<16x128xf32> -> vector<16x384xf32>
    %209 = arith.truncf %208 : vector<16x384xf32> to vector<16x384xbf16>
    %c0_77 = arith.constant 0 : index
    %c0_78 = arith.constant 0 : index
    %210 = vector.load %arg12[%c0_77, %c0_78] : memref<384x128xbf16, #tpu.memory_space<vmem>>, vector<384x128xbf16>
    %cst_79 = arith.constant dense<0.000000e+00> : vector<16x128xf32>
    %211 = tpu.matmul %209, %210, %cst_79 {dimension_numbers = #tpu.dot_dimension_numbers<[1], [0], [0], [1], [0, 0, 1, 1], [], []>} : vector<16x384xbf16>, vector<384x128xbf16>, vector<16x128xf32> -> vector<16x128xf32>
    %c0_80 = arith.constant 0 : index
    %c0_81 = arith.constant 0 : index
    %212 = vector.load %arg13[%c0_80, %c0_81] : memref<1x128xf32, #tpu.memory_space<vmem>>, vector<1x128xf32>
    %213 = vector.broadcast %212 : vector<1x128xf32> to vector<16x128xf32>
    %214 = arith.addf %211, %213 : vector<16x128xf32>
    %215 = arith.negf %214 : vector<16x128xf32>
    %216 = math.exp %215 : vector<16x128xf32>
    %cst_82 = arith.constant 1.000000e+00 : f32
    %217 = vector.broadcast %cst_82 : f32 to vector<16x128xf32>
    %218 = arith.addf %217, %216 : vector<16x128xf32>
    %219 = arith.divf %217, %218 : vector<16x128xf32>
    %220 = arith.mulf %214, %219 : vector<16x128xf32>
    %221 = vector.extract_strided_slice %190 {offsets = [0, 128], sizes = [16, 128], strides = [1, 1]} : vector<16x256xf32> to vector<16x128xf32>
    %222 = arith.addf %220, %221 : vector<16x128xf32>
    %c12_i32_83 = arith.constant 12 : i32
    %223 = tpu.dynamic_rotate %222 by %c12_i32_83 dim 0 : vector<16x128xf32>, i32 -> vector<16x128xf32>
    %224 = arith.maximumf %222, %223 : vector<16x128xf32>
    %c8_i32_84 = arith.constant 8 : i32
    %225 = tpu.dynamic_rotate %224 by %c8_i32_84 dim 0 : vector<16x128xf32>, i32 -> vector<16x128xf32>
    %cst_85 = arith.constant 0.000000e+00 : f32
    %226 = vector.shape_cast %9 : vector<16x1xi1> to vector<16x1xi1>
    %227 = vector.broadcast %226 : vector<16x1xi1> to vector<16x128xi1>
    %228 = vector.broadcast %cst_85 : f32 to vector<16x128xf32>
    %229 = arith.select %227, %228, %225 : vector<16x128xi1>, vector<16x128xf32>
    %c8_i32_86 = arith.constant 8 : i32
    %230 = tpu.dynamic_rotate %224 by %c8_i32_86 dim 0 : vector<16x128xf32>, i32 -> vector<16x128xf32>
    %cst_87 = arith.constant 0.000000e+00 : f32
    %231 = vector.shape_cast %17 : vector<16x1xi1> to vector<16x1xi1>
    %232 = vector.broadcast %231 : vector<16x1xi1> to vector<16x128xi1>
    %233 = vector.broadcast %cst_87 : f32 to vector<16x128xf32>
    %234 = arith.select %232, %233, %230 : vector<16x128xi1>, vector<16x128xf32>
    %235 = tpu.concatenate %229, %224, %234 in 1 : vector<16x128xf32>, vector<16x128xf32>, vector<16x128xf32> -> vector<16x384xf32>
    %236 = arith.truncf %235 : vector<16x384xf32> to vector<16x384xbf16>
    %c0_88 = arith.constant 0 : index
    %c0_89 = arith.constant 0 : index
    %237 = vector.load %arg14[%c0_88, %c0_89] : memref<384x512xbf16, #tpu.memory_space<vmem>>, vector<384x512xbf16>
    %cst_90 = arith.constant dense<0.000000e+00> : vector<16x512xf32>
    %238 = tpu.matmul %236, %237, %cst_90 {dimension_numbers = #tpu.dot_dimension_numbers<[1], [0], [0], [1], [0, 0, 1, 1], [], []>} : vector<16x384xbf16>, vector<384x512xbf16>, vector<16x512xf32> -> vector<16x512xf32>
    %c0_91 = arith.constant 0 : index
    %c0_92 = arith.constant 0 : index
    %239 = vector.load %arg15[%c0_91, %c0_92] : memref<1x512xf32, #tpu.memory_space<vmem>>, vector<1x512xf32>
    %240 = vector.broadcast %239 : vector<1x512xf32> to vector<16x512xf32>
    %241 = arith.addf %238, %240 : vector<16x512xf32>
    %242 = vector.extract_strided_slice %241 {offsets = [0, 0], sizes = [16, 256], strides = [1, 1]} : vector<16x512xf32> to vector<16x256xf32>
    %243 = arith.negf %242 : vector<16x256xf32>
    %244 = math.exp %243 : vector<16x256xf32>
    %cst_93 = arith.constant 1.000000e+00 : f32
    %245 = vector.broadcast %cst_93 : f32 to vector<16x256xf32>
    %246 = arith.addf %245, %244 : vector<16x256xf32>
    %247 = arith.divf %245, %246 : vector<16x256xf32>
    %248 = arith.mulf %242, %247 : vector<16x256xf32>
    %c8_i32_94 = arith.constant 8 : i32
    %249 = tpu.dynamic_rotate %248 by %c8_i32_94 dim 0 : vector<16x256xf32>, i32 -> vector<16x256xf32>
    %cst_95 = arith.constant 0.000000e+00 : f32
    %250 = vector.shape_cast %9 : vector<16x1xi1> to vector<16x1xi1>
    %251 = vector.broadcast %250 : vector<16x1xi1> to vector<16x256xi1>
    %252 = vector.broadcast %cst_95 : f32 to vector<16x256xf32>
    %253 = arith.select %251, %252, %249 : vector<16x256xi1>, vector<16x256xf32>
    %c8_i32_96 = arith.constant 8 : i32
    %254 = tpu.dynamic_rotate %248 by %c8_i32_96 dim 0 : vector<16x256xf32>, i32 -> vector<16x256xf32>
    %cst_97 = arith.constant 0.000000e+00 : f32
    %255 = vector.shape_cast %17 : vector<16x1xi1> to vector<16x1xi1>
    %256 = vector.broadcast %255 : vector<16x1xi1> to vector<16x256xi1>
    %257 = vector.broadcast %cst_97 : f32 to vector<16x256xf32>
    %258 = arith.select %256, %257, %254 : vector<16x256xi1>, vector<16x256xf32>
    %259 = tpu.concatenate %253, %248, %258 in 1 : vector<16x256xf32>, vector<16x256xf32>, vector<16x256xf32> -> vector<16x768xf32>
    %260 = arith.truncf %259 : vector<16x768xf32> to vector<16x768xbf16>
    %c0_98 = arith.constant 0 : index
    %c0_99 = arith.constant 0 : index
    %261 = vector.load %arg16[%c0_98, %c0_99] : memref<768x256xbf16, #tpu.memory_space<vmem>>, vector<768x256xbf16>
    %cst_100 = arith.constant dense<0.000000e+00> : vector<16x256xf32>
    %262 = tpu.matmul %260, %261, %cst_100 {dimension_numbers = #tpu.dot_dimension_numbers<[1], [0], [0], [1], [0, 0, 1, 1], [], []>} : vector<16x768xbf16>, vector<768x256xbf16>, vector<16x256xf32> -> vector<16x256xf32>
    %c0_101 = arith.constant 0 : index
    %c0_102 = arith.constant 0 : index
    %263 = vector.load %arg17[%c0_101, %c0_102] : memref<1x256xf32, #tpu.memory_space<vmem>>, vector<1x256xf32>
    %264 = vector.broadcast %263 : vector<1x256xf32> to vector<16x256xf32>
    %265 = arith.addf %262, %264 : vector<16x256xf32>
    %266 = arith.negf %265 : vector<16x256xf32>
    %267 = math.exp %266 : vector<16x256xf32>
    %cst_103 = arith.constant 1.000000e+00 : f32
    %268 = vector.broadcast %cst_103 : f32 to vector<16x256xf32>
    %269 = arith.addf %268, %267 : vector<16x256xf32>
    %270 = arith.divf %268, %269 : vector<16x256xf32>
    %271 = arith.mulf %265, %270 : vector<16x256xf32>
    %272 = vector.extract_strided_slice %241 {offsets = [0, 256], sizes = [16, 256], strides = [1, 1]} : vector<16x512xf32> to vector<16x256xf32>
    %273 = arith.addf %271, %272 : vector<16x256xf32>
    %274 = arith.truncf %273 : vector<16x256xf32> to vector<16x256xbf16>
    %c0_104 = arith.constant 0 : index
    %c0_105 = arith.constant 0 : index
    %275 = vector.load %arg18[%c0_104, %c0_105] : memref<256x256xbf16, #tpu.memory_space<vmem>>, vector<256x256xbf16>
    %cst_106 = arith.constant dense<0.000000e+00> : vector<16x256xf32>
    %276 = tpu.matmul %274, %275, %cst_106 {dimension_numbers = #tpu.dot_dimension_numbers<[1], [0], [0], [1], [0, 0, 1, 1], [], []>} : vector<16x256xbf16>, vector<256x256xbf16>, vector<16x256xf32> -> vector<16x256xf32>
    %277 = vector.extract_strided_slice %276 {offsets = [0, 0], sizes = [16, 128], strides = [1, 1]} : vector<16x256xf32> to vector<16x128xf32>
    %278 = vector.extract_strided_slice %276 {offsets = [0, 128], sizes = [16, 128], strides = [1, 1]} : vector<16x256xf32> to vector<16x128xf32>
    %c4_i32_107 = arith.constant 4 : i32
    %279 = tpu.dynamic_rotate %278 by %c4_i32_107 dim 0 : vector<16x128xf32>, i32 -> vector<16x128xf32>
    %280 = vector.shape_cast %71 : vector<16x1xi1> to vector<16x1xi1>
    %281 = vector.broadcast %280 : vector<16x1xi1> to vector<16x128xi1>
    %282 = arith.select %281, %277, %279 : vector<16x128xi1>, vector<16x128xf32>
    %c0_108 = arith.constant 0 : index
    %c0_109 = arith.constant 0 : index
    %283 = vector.load %arg19[%c0_108, %c0_109] : memref<1x128xf32, #tpu.memory_space<vmem>>, vector<1x128xf32>
    %284 = vector.broadcast %283 : vector<1x128xf32> to vector<16x128xf32>
    %285 = arith.addf %282, %284 : vector<16x128xf32>
    %286 = tpu.concatenate %285, %222 in 1 : vector<16x128xf32>, vector<16x128xf32> -> vector<16x256xf32>
    %c4_i32_110 = arith.constant 4 : i32
    %287 = tpu.dynamic_rotate %286 by %c4_i32_110 dim 0 : vector<16x256xf32>, i32 -> vector<16x256xf32>
    %cst_111 = arith.constant 0.000000e+00 : f32
    %288 = vector.shape_cast %7 : vector<16x1xi1> to vector<16x1xi1>
    %289 = vector.broadcast %288 : vector<16x1xi1> to vector<16x256xi1>
    %290 = vector.broadcast %cst_111 : f32 to vector<16x256xf32>
    %291 = arith.select %289, %290, %287 : vector<16x256xi1>, vector<16x256xf32>
    %c12_i32_112 = arith.constant 12 : i32
    %292 = tpu.dynamic_rotate %286 by %c12_i32_112 dim 0 : vector<16x256xf32>, i32 -> vector<16x256xf32>
    %cst_113 = arith.constant 0.000000e+00 : f32
    %293 = vector.shape_cast %15 : vector<16x1xi1> to vector<16x1xi1>
    %294 = vector.broadcast %293 : vector<16x1xi1> to vector<16x256xi1>
    %295 = vector.broadcast %cst_113 : f32 to vector<16x256xf32>
    %296 = arith.select %294, %295, %292 : vector<16x256xi1>, vector<16x256xf32>
    %297 = tpu.concatenate %291, %286, %296 in 1 : vector<16x256xf32>, vector<16x256xf32>, vector<16x256xf32> -> vector<16x768xf32>
    %298 = arith.truncf %297 : vector<16x768xf32> to vector<16x768xbf16>
    %c0_114 = arith.constant 0 : index
    %c0_115 = arith.constant 0 : index
    %299 = vector.load %arg24[%c0_114, %c0_115] : memref<768x256xbf16, #tpu.memory_space<vmem>>, vector<768x256xbf16>
    %cst_116 = arith.constant dense<0.000000e+00> : vector<16x256xf32>
    %300 = tpu.matmul %298, %299, %cst_116 {dimension_numbers = #tpu.dot_dimension_numbers<[1], [0], [0], [1], [0, 0, 1, 1], [], []>} : vector<16x768xbf16>, vector<768x256xbf16>, vector<16x256xf32> -> vector<16x256xf32>
    %c0_117 = arith.constant 0 : index
    %c0_118 = arith.constant 0 : index
    %301 = vector.load %arg25[%c0_117, %c0_118] : memref<1x256xf32, #tpu.memory_space<vmem>>, vector<1x256xf32>
    %302 = vector.broadcast %301 : vector<1x256xf32> to vector<16x256xf32>
    %303 = arith.addf %300, %302 : vector<16x256xf32>
    %304 = vector.extract_strided_slice %303 {offsets = [0, 0], sizes = [16, 128], strides = [1, 1]} : vector<16x256xf32> to vector<16x128xf32>
    %305 = arith.negf %304 : vector<16x128xf32>
    %306 = math.exp %305 : vector<16x128xf32>
    %cst_119 = arith.constant 1.000000e+00 : f32
    %307 = vector.broadcast %cst_119 : f32 to vector<16x128xf32>
    %308 = arith.addf %307, %306 : vector<16x128xf32>
    %309 = arith.divf %307, %308 : vector<16x128xf32>
    %310 = arith.mulf %304, %309 : vector<16x128xf32>
    %c4_i32_120 = arith.constant 4 : i32
    %311 = tpu.dynamic_rotate %310 by %c4_i32_120 dim 0 : vector<16x128xf32>, i32 -> vector<16x128xf32>
    %cst_121 = arith.constant 0.000000e+00 : f32
    %312 = vector.shape_cast %7 : vector<16x1xi1> to vector<16x1xi1>
    %313 = vector.broadcast %312 : vector<16x1xi1> to vector<16x128xi1>
    %314 = vector.broadcast %cst_121 : f32 to vector<16x128xf32>
    %315 = arith.select %313, %314, %311 : vector<16x128xi1>, vector<16x128xf32>
    %c12_i32_122 = arith.constant 12 : i32
    %316 = tpu.dynamic_rotate %310 by %c12_i32_122 dim 0 : vector<16x128xf32>, i32 -> vector<16x128xf32>
    %cst_123 = arith.constant 0.000000e+00 : f32
    %317 = vector.shape_cast %15 : vector<16x1xi1> to vector<16x1xi1>
    %318 = vector.broadcast %317 : vector<16x1xi1> to vector<16x128xi1>
    %319 = vector.broadcast %cst_123 : f32 to vector<16x128xf32>
    %320 = arith.select %318, %319, %316 : vector<16x128xi1>, vector<16x128xf32>
    %321 = tpu.concatenate %315, %310, %320 in 1 : vector<16x128xf32>, vector<16x128xf32>, vector<16x128xf32> -> vector<16x384xf32>
    %322 = arith.truncf %321 : vector<16x384xf32> to vector<16x384xbf16>
    %c0_124 = arith.constant 0 : index
    %c0_125 = arith.constant 0 : index
    %323 = vector.load %arg26[%c0_124, %c0_125] : memref<384x128xbf16, #tpu.memory_space<vmem>>, vector<384x128xbf16>
    %cst_126 = arith.constant dense<0.000000e+00> : vector<16x128xf32>
    %324 = tpu.matmul %322, %323, %cst_126 {dimension_numbers = #tpu.dot_dimension_numbers<[1], [0], [0], [1], [0, 0, 1, 1], [], []>} : vector<16x384xbf16>, vector<384x128xbf16>, vector<16x128xf32> -> vector<16x128xf32>
    %c0_127 = arith.constant 0 : index
    %c0_128 = arith.constant 0 : index
    %325 = vector.load %arg27[%c0_127, %c0_128] : memref<1x128xf32, #tpu.memory_space<vmem>>, vector<1x128xf32>
    %326 = vector.broadcast %325 : vector<1x128xf32> to vector<16x128xf32>
    %327 = arith.addf %324, %326 : vector<16x128xf32>
    %328 = arith.negf %327 : vector<16x128xf32>
    %329 = math.exp %328 : vector<16x128xf32>
    %cst_129 = arith.constant 1.000000e+00 : f32
    %330 = vector.broadcast %cst_129 : f32 to vector<16x128xf32>
    %331 = arith.addf %330, %329 : vector<16x128xf32>
    %332 = arith.divf %330, %331 : vector<16x128xf32>
    %333 = arith.mulf %327, %332 : vector<16x128xf32>
    %334 = vector.extract_strided_slice %303 {offsets = [0, 128], sizes = [16, 128], strides = [1, 1]} : vector<16x256xf32> to vector<16x128xf32>
    %335 = arith.addf %333, %334 : vector<16x128xf32>
    %336 = arith.truncf %335 : vector<16x128xf32> to vector<16x128xbf16>
    %c0_130 = arith.constant 0 : index
    %c0_131 = arith.constant 0 : index
    %337 = vector.load %arg20[%c0_130, %c0_131] : memref<128x128xbf16, #tpu.memory_space<vmem>>, vector<128x128xbf16>
    %cst_132 = arith.constant dense<0.000000e+00> : vector<16x128xf32>
    %338 = tpu.matmul %336, %337, %cst_132 {dimension_numbers = #tpu.dot_dimension_numbers<[1], [0], [0], [1], [0, 0, 1, 1], [], []>} : vector<16x128xbf16>, vector<128x128xbf16>, vector<16x128xf32> -> vector<16x128xf32>
    %339 = vector.extract_strided_slice %338 {offsets = [0, 0], sizes = [16, 64], strides = [1, 1]} : vector<16x128xf32> to vector<16x64xf32>
    %340 = vector.extract_strided_slice %338 {offsets = [0, 64], sizes = [16, 64], strides = [1, 1]} : vector<16x128xf32> to vector<16x64xf32>
    %c2_i32_133 = arith.constant 2 : i32
    %341 = tpu.dynamic_rotate %340 by %c2_i32_133 dim 0 : vector<16x64xf32>, i32 -> vector<16x64xf32>
    %342 = vector.shape_cast %53 : vector<16x1xi1> to vector<16x1xi1>
    %343 = vector.broadcast %342 : vector<16x1xi1> to vector<16x64xi1>
    %344 = arith.select %343, %339, %341 : vector<16x64xi1>, vector<16x64xf32>
    %c0_134 = arith.constant 0 : index
    %c0_135 = arith.constant 0 : index
    %345 = vector.load %arg21[%c0_134, %c0_135] : memref<1x64xf32, #tpu.memory_space<vmem>>, vector<1x64xf32>
    %346 = vector.broadcast %345 : vector<1x64xf32> to vector<16x64xf32>
    %347 = arith.addf %344, %346 : vector<16x64xf32>
    %348 = tpu.concatenate %347, %171 in 1 : vector<16x64xf32>, vector<16x64xf32> -> vector<16x128xf32>
    %c2_i32_136 = arith.constant 2 : i32
    %349 = tpu.dynamic_rotate %348 by %c2_i32_136 dim 0 : vector<16x128xf32>, i32 -> vector<16x128xf32>
    %cst_137 = arith.constant 0.000000e+00 : f32
    %350 = vector.shape_cast %5 : vector<16x1xi1> to vector<16x1xi1>
    %351 = vector.broadcast %350 : vector<16x1xi1> to vector<16x128xi1>
    %352 = vector.broadcast %cst_137 : f32 to vector<16x128xf32>
    %353 = arith.select %351, %352, %349 : vector<16x128xi1>, vector<16x128xf32>
    %c14_i32_138 = arith.constant 14 : i32
    %354 = tpu.dynamic_rotate %348 by %c14_i32_138 dim 0 : vector<16x128xf32>, i32 -> vector<16x128xf32>
    %cst_139 = arith.constant 0.000000e+00 : f32
    %355 = vector.shape_cast %13 : vector<16x1xi1> to vector<16x1xi1>
    %356 = vector.broadcast %355 : vector<16x1xi1> to vector<16x128xi1>
    %357 = vector.broadcast %cst_139 : f32 to vector<16x128xf32>
    %358 = arith.select %356, %357, %354 : vector<16x128xi1>, vector<16x128xf32>
    %359 = tpu.concatenate %353, %348, %358 in 1 : vector<16x128xf32>, vector<16x128xf32>, vector<16x128xf32> -> vector<16x384xf32>
    %360 = arith.truncf %359 : vector<16x384xf32> to vector<16x384xbf16>
    %c0_140 = arith.constant 0 : index
    %c0_141 = arith.constant 0 : index
    %361 = vector.load %arg28[%c0_140, %c0_141] : memref<384x128xbf16, #tpu.memory_space<vmem>>, vector<384x128xbf16>
    %cst_142 = arith.constant dense<0.000000e+00> : vector<16x128xf32>
    %362 = tpu.matmul %360, %361, %cst_142 {dimension_numbers = #tpu.dot_dimension_numbers<[1], [0], [0], [1], [0, 0, 1, 1], [], []>} : vector<16x384xbf16>, vector<384x128xbf16>, vector<16x128xf32> -> vector<16x128xf32>
    %c0_143 = arith.constant 0 : index
    %c0_144 = arith.constant 0 : index
    %363 = vector.load %arg29[%c0_143, %c0_144] : memref<1x128xf32, #tpu.memory_space<vmem>>, vector<1x128xf32>
    %364 = vector.broadcast %363 : vector<1x128xf32> to vector<16x128xf32>
    %365 = arith.addf %362, %364 : vector<16x128xf32>
    %366 = vector.extract_strided_slice %365 {offsets = [0, 0], sizes = [16, 64], strides = [1, 1]} : vector<16x128xf32> to vector<16x64xf32>
    %367 = arith.negf %366 : vector<16x64xf32>
    %368 = math.exp %367 : vector<16x64xf32>
    %cst_145 = arith.constant 1.000000e+00 : f32
    %369 = vector.broadcast %cst_145 : f32 to vector<16x64xf32>
    %370 = arith.addf %369, %368 : vector<16x64xf32>
    %371 = arith.divf %369, %370 : vector<16x64xf32>
    %372 = arith.mulf %366, %371 : vector<16x64xf32>
    %c2_i32_146 = arith.constant 2 : i32
    %373 = tpu.dynamic_rotate %372 by %c2_i32_146 dim 0 : vector<16x64xf32>, i32 -> vector<16x64xf32>
    %cst_147 = arith.constant 0.000000e+00 : f32
    %374 = vector.shape_cast %5 : vector<16x1xi1> to vector<16x1xi1>
    %375 = vector.broadcast %374 : vector<16x1xi1> to vector<16x64xi1>
    %376 = vector.broadcast %cst_147 : f32 to vector<16x64xf32>
    %377 = arith.select %375, %376, %373 : vector<16x64xi1>, vector<16x64xf32>
    %c14_i32_148 = arith.constant 14 : i32
    %378 = tpu.dynamic_rotate %372 by %c14_i32_148 dim 0 : vector<16x64xf32>, i32 -> vector<16x64xf32>
    %cst_149 = arith.constant 0.000000e+00 : f32
    %379 = vector.shape_cast %13 : vector<16x1xi1> to vector<16x1xi1>
    %380 = vector.broadcast %379 : vector<16x1xi1> to vector<16x64xi1>
    %381 = vector.broadcast %cst_149 : f32 to vector<16x64xf32>
    %382 = arith.select %380, %381, %378 : vector<16x64xi1>, vector<16x64xf32>
    %383 = tpu.concatenate %377, %372, %382 in 1 : vector<16x64xf32>, vector<16x64xf32>, vector<16x64xf32> -> vector<16x192xf32>
    %384 = arith.truncf %383 : vector<16x192xf32> to vector<16x192xbf16>
    %c0_150 = arith.constant 0 : index
    %c0_151 = arith.constant 0 : index
    %385 = vector.load %arg30[%c0_150, %c0_151] : memref<192x64xbf16, #tpu.memory_space<vmem>>, vector<192x64xbf16>
    %cst_152 = arith.constant dense<0.000000e+00> : vector<16x64xf32>
    %386 = tpu.matmul %384, %385, %cst_152 {dimension_numbers = #tpu.dot_dimension_numbers<[1], [0], [0], [1], [0, 0, 1, 1], [], []>} : vector<16x192xbf16>, vector<192x64xbf16>, vector<16x64xf32> -> vector<16x64xf32>
    %c0_153 = arith.constant 0 : index
    %c0_154 = arith.constant 0 : index
    %387 = vector.load %arg31[%c0_153, %c0_154] : memref<1x64xf32, #tpu.memory_space<vmem>>, vector<1x64xf32>
    %388 = vector.broadcast %387 : vector<1x64xf32> to vector<16x64xf32>
    %389 = arith.addf %386, %388 : vector<16x64xf32>
    %390 = arith.negf %389 : vector<16x64xf32>
    %391 = math.exp %390 : vector<16x64xf32>
    %cst_155 = arith.constant 1.000000e+00 : f32
    %392 = vector.broadcast %cst_155 : f32 to vector<16x64xf32>
    %393 = arith.addf %392, %391 : vector<16x64xf32>
    %394 = arith.divf %392, %393 : vector<16x64xf32>
    %395 = arith.mulf %389, %394 : vector<16x64xf32>
    %396 = vector.extract_strided_slice %365 {offsets = [0, 64], sizes = [16, 64], strides = [1, 1]} : vector<16x128xf32> to vector<16x64xf32>
    %397 = arith.addf %395, %396 : vector<16x64xf32>
    %398 = arith.truncf %397 : vector<16x64xf32> to vector<16x64xbf16>
    %c0_156 = arith.constant 0 : index
    %c0_157 = arith.constant 0 : index
    %399 = vector.load %arg22[%c0_156, %c0_157] : memref<64x64xbf16, #tpu.memory_space<vmem>>, vector<64x64xbf16>
    %cst_158 = arith.constant dense<0.000000e+00> : vector<16x64xf32>
    %400 = tpu.matmul %398, %399, %cst_158 {dimension_numbers = #tpu.dot_dimension_numbers<[1], [0], [0], [1], [0, 0, 1, 1], [], []>} : vector<16x64xbf16>, vector<64x64xbf16>, vector<16x64xf32> -> vector<16x64xf32>
    %401 = vector.extract_strided_slice %400 {offsets = [0, 0], sizes = [16, 32], strides = [1, 1]} : vector<16x64xf32> to vector<16x32xf32>
    %402 = vector.extract_strided_slice %400 {offsets = [0, 32], sizes = [16, 32], strides = [1, 1]} : vector<16x64xf32> to vector<16x32xf32>
    %c1_i32_159 = arith.constant 1 : i32
    %403 = tpu.dynamic_rotate %402 by %c1_i32_159 dim 0 : vector<16x32xf32>, i32 -> vector<16x32xf32>
    %404 = vector.shape_cast %35 : vector<16x1xi1> to vector<16x1xi1>
    %405 = vector.broadcast %404 : vector<16x1xi1> to vector<16x32xi1>
    %406 = arith.select %405, %401, %403 : vector<16x32xi1>, vector<16x32xf32>
    %c0_160 = arith.constant 0 : index
    %c0_161 = arith.constant 0 : index
    %407 = vector.load %arg23[%c0_160, %c0_161] : memref<1x32xf32, #tpu.memory_space<vmem>>, vector<1x32xf32>
    %408 = vector.broadcast %407 : vector<1x32xf32> to vector<16x32xf32>
    %409 = arith.addf %406, %408 : vector<16x32xf32>
    %410 = tpu.concatenate %409, %120 in 1 : vector<16x32xf32>, vector<16x32xf32> -> vector<16x64xf32>
    %c1_i32_162 = arith.constant 1 : i32
    %411 = tpu.dynamic_rotate %410 by %c1_i32_162 dim 0 : vector<16x64xf32>, i32 -> vector<16x64xf32>
    %cst_163 = arith.constant 0.000000e+00 : f32
    %412 = vector.shape_cast %3 : vector<16x1xi1> to vector<16x1xi1>
    %413 = vector.broadcast %412 : vector<16x1xi1> to vector<16x64xi1>
    %414 = vector.broadcast %cst_163 : f32 to vector<16x64xf32>
    %415 = arith.select %413, %414, %411 : vector<16x64xi1>, vector<16x64xf32>
    %c15_i32_164 = arith.constant 15 : i32
    %416 = tpu.dynamic_rotate %410 by %c15_i32_164 dim 0 : vector<16x64xf32>, i32 -> vector<16x64xf32>
    %cst_165 = arith.constant 0.000000e+00 : f32
    %417 = vector.shape_cast %11 : vector<16x1xi1> to vector<16x1xi1>
    %418 = vector.broadcast %417 : vector<16x1xi1> to vector<16x64xi1>
    %419 = vector.broadcast %cst_165 : f32 to vector<16x64xf32>
    %420 = arith.select %418, %419, %416 : vector<16x64xi1>, vector<16x64xf32>
    %421 = tpu.concatenate %415, %410, %420 in 1 : vector<16x64xf32>, vector<16x64xf32>, vector<16x64xf32> -> vector<16x192xf32>
    %422 = arith.truncf %421 : vector<16x192xf32> to vector<16x192xbf16>
    %c0_166 = arith.constant 0 : index
    %c0_167 = arith.constant 0 : index
    %423 = vector.load %arg32[%c0_166, %c0_167] : memref<192x64xbf16, #tpu.memory_space<vmem>>, vector<192x64xbf16>
    %cst_168 = arith.constant dense<0.000000e+00> : vector<16x64xf32>
    %424 = tpu.matmul %422, %423, %cst_168 {dimension_numbers = #tpu.dot_dimension_numbers<[1], [0], [0], [1], [0, 0, 1, 1], [], []>} : vector<16x192xbf16>, vector<192x64xbf16>, vector<16x64xf32> -> vector<16x64xf32>
    %c0_169 = arith.constant 0 : index
    %c0_170 = arith.constant 0 : index
    %425 = vector.load %arg33[%c0_169, %c0_170] : memref<1x64xf32, #tpu.memory_space<vmem>>, vector<1x64xf32>
    %426 = vector.broadcast %425 : vector<1x64xf32> to vector<16x64xf32>
    %427 = arith.addf %424, %426 : vector<16x64xf32>
    %428 = vector.extract_strided_slice %427 {offsets = [0, 0], sizes = [16, 32], strides = [1, 1]} : vector<16x64xf32> to vector<16x32xf32>
    %429 = arith.negf %428 : vector<16x32xf32>
    %430 = math.exp %429 : vector<16x32xf32>
    %cst_171 = arith.constant 1.000000e+00 : f32
    %431 = vector.broadcast %cst_171 : f32 to vector<16x32xf32>
    %432 = arith.addf %431, %430 : vector<16x32xf32>
    %433 = arith.divf %431, %432 : vector<16x32xf32>
    %434 = arith.mulf %428, %433 : vector<16x32xf32>
    %c1_i32_172 = arith.constant 1 : i32
    %435 = tpu.dynamic_rotate %434 by %c1_i32_172 dim 0 : vector<16x32xf32>, i32 -> vector<16x32xf32>
    %cst_173 = arith.constant 0.000000e+00 : f32
    %436 = vector.shape_cast %3 : vector<16x1xi1> to vector<16x1xi1>
    %437 = vector.broadcast %436 : vector<16x1xi1> to vector<16x32xi1>
    %438 = vector.broadcast %cst_173 : f32 to vector<16x32xf32>
    %439 = arith.select %437, %438, %435 : vector<16x32xi1>, vector<16x32xf32>
    %c15_i32_174 = arith.constant 15 : i32
    %440 = tpu.dynamic_rotate %434 by %c15_i32_174 dim 0 : vector<16x32xf32>, i32 -> vector<16x32xf32>
    %cst_175 = arith.constant 0.000000e+00 : f32
    %441 = vector.shape_cast %11 : vector<16x1xi1> to vector<16x1xi1>
    %442 = vector.broadcast %441 : vector<16x1xi1> to vector<16x32xi1>
    %443 = vector.broadcast %cst_175 : f32 to vector<16x32xf32>
    %444 = arith.select %442, %443, %440 : vector<16x32xi1>, vector<16x32xf32>
    %445 = tpu.concatenate %439, %434, %444 in 1 : vector<16x32xf32>, vector<16x32xf32>, vector<16x32xf32> -> vector<16x96xf32>
    %446 = arith.truncf %445 : vector<16x96xf32> to vector<16x96xbf16>
    %c0_176 = arith.constant 0 : index
    %c0_177 = arith.constant 0 : index
    %447 = vector.load %arg34[%c0_176, %c0_177] : memref<96x32xbf16, #tpu.memory_space<vmem>>, vector<96x32xbf16>
    %cst_178 = arith.constant dense<0.000000e+00> : vector<16x32xf32>
    %448 = tpu.matmul %446, %447, %cst_178 {dimension_numbers = #tpu.dot_dimension_numbers<[1], [0], [0], [1], [0, 0, 1, 1], [], []>} : vector<16x96xbf16>, vector<96x32xbf16>, vector<16x32xf32> -> vector<16x32xf32>
    %c0_179 = arith.constant 0 : index
    %c0_180 = arith.constant 0 : index
    %449 = vector.load %arg35[%c0_179, %c0_180] : memref<1x32xf32, #tpu.memory_space<vmem>>, vector<1x32xf32>
    %450 = vector.broadcast %449 : vector<1x32xf32> to vector<16x32xf32>
    %451 = arith.addf %448, %450 : vector<16x32xf32>
    %452 = arith.negf %451 : vector<16x32xf32>
    %453 = math.exp %452 : vector<16x32xf32>
    %cst_181 = arith.constant 1.000000e+00 : f32
    %454 = vector.broadcast %cst_181 : f32 to vector<16x32xf32>
    %455 = arith.addf %454, %453 : vector<16x32xf32>
    %456 = arith.divf %454, %455 : vector<16x32xf32>
    %457 = arith.mulf %451, %456 : vector<16x32xf32>
    %458 = vector.extract_strided_slice %427 {offsets = [0, 32], sizes = [16, 32], strides = [1, 1]} : vector<16x64xf32> to vector<16x32xf32>
    %459 = arith.addf %457, %458 : vector<16x32xf32>
    %460 = arith.truncf %459 : vector<16x32xf32> to vector<16x32xbf16>
    %c0_182 = arith.constant 0 : index
    %c0_183 = arith.constant 0 : index
    %461 = vector.load %arg36[%c0_182, %c0_183] : memref<32x3xbf16, #tpu.memory_space<vmem>>, vector<32x3xbf16>
    %cst_184 = arith.constant dense<0.000000e+00> : vector<16x3xf32>
    %462 = tpu.matmul %460, %461, %cst_184 {dimension_numbers = #tpu.dot_dimension_numbers<[1], [0], [0], [1], [0, 0, 1, 1], [], []>} : vector<16x32xbf16>, vector<32x3xbf16>, vector<16x3xf32> -> vector<16x3xf32>
    %c0_185 = arith.constant 0 : index
    %c0_186 = arith.constant 0 : index
    %463 = vector.load %arg37[%c0_185, %c0_186] : memref<1x3xf32, #tpu.memory_space<vmem>>, vector<1x3xf32>
    %464 = vector.broadcast %463 : vector<1x3xf32> to vector<16x3xf32>
    %465 = arith.addf %462, %464 : vector<16x3xf32>
    %466 = arith.addf %465, %0 : vector<16x3xf32>
    %c0_187 = arith.constant 0 : index
    %c0_188 = arith.constant 0 : index
    %467 = vector.load %arg38[%c0_187, %c0_188] : memref<16x3xf32, #tpu.memory_space<vmem>>, vector<16x3xf32>
    tpu.vector_store %arg38[%c0_187, %c0_188], %466 {strides = array<i32>} : memref<16x3xf32, #tpu.memory_space<vmem>>, vector<16x3xf32>,
    return
  }
  func.func @transform_0(%arg0: i32) -> (i32, i32) {
    %c0_i32 = arith.constant 0 : i32
    %c0_i32_0 = arith.constant 0 : i32
    return %arg0, %c0_i32 : i32, i32
  }
  func.func @transform_1(%arg0: i32) -> (i32, i32) {
    %c0_i32 = arith.constant 0 : i32
    %c0_i32_0 = arith.constant 0 : i32
    %c0_i32_1 = arith.constant 0 : i32
    return %c0_i32, %c0_i32_0 : i32, i32
  }
  func.func @transform_2(%arg0: i32) -> (i32, i32) {
    %c0_i32 = arith.constant 0 : i32
    %c0_i32_0 = arith.constant 0 : i32
    %c0_i32_1 = arith.constant 0 : i32
    return %c0_i32, %c0_i32_0 : i32, i32
  }
  func.func @transform_3(%arg0: i32) -> (i32, i32) {
    %c0_i32 = arith.constant 0 : i32
    %c0_i32_0 = arith.constant 0 : i32
    %c0_i32_1 = arith.constant 0 : i32
    return %c0_i32, %c0_i32_0 : i32, i32
  }
  func.func @transform_4(%arg0: i32) -> (i32, i32) {
    %c0_i32 = arith.constant 0 : i32
    %c0_i32_0 = arith.constant 0 : i32
    %c0_i32_1 = arith.constant 0 : i32
    return %c0_i32, %c0_i32_0 : i32, i32
  }
  func.func @transform_5(%arg0: i32) -> (i32, i32) {
    %c0_i32 = arith.constant 0 : i32
    %c0_i32_0 = arith.constant 0 : i32
    %c0_i32_1 = arith.constant 0 : i32
    return %c0_i32, %c0_i32_0 : i32, i32
  }
  func.func @transform_6(%arg0: i32) -> (i32, i32) {
    %c0_i32 = arith.constant 0 : i32
    %c0_i32_0 = arith.constant 0 : i32
    %c0_i32_1 = arith.constant 0 : i32
    return %c0_i32, %c0_i32_0 : i32, i32
  }
  func.func @transform_7(%arg0: i32) -> (i32, i32) {
    %c0_i32 = arith.constant 0 : i32
    %c0_i32_0 = arith.constant 0 : i32
    %c0_i32_1 = arith.constant 0 : i32
    return %c0_i32, %c0_i32_0 : i32, i32
  }
  func.func @transform_8(%arg0: i32) -> (i32, i32) {
    %c0_i32 = arith.constant 0 : i32
    %c0_i32_0 = arith.constant 0 : i32
    %c0_i32_1 = arith.constant 0 : i32
    return %c0_i32, %c0_i32_0 : i32, i32
  }
  func.func @transform_9(%arg0: i32) -> (i32, i32) {
    %c0_i32 = arith.constant 0 : i32
    %c0_i32_0 = arith.constant 0 : i32
    %c0_i32_1 = arith.constant 0 : i32
    return %c0_i32, %c0_i32_0 : i32, i32
  }
  func.func @transform_10(%arg0: i32) -> (i32, i32) {
    %c0_i32 = arith.constant 0 : i32
    %c0_i32_0 = arith.constant 0 : i32
    %c0_i32_1 = arith.constant 0 : i32
    return %c0_i32, %c0_i32_0 : i32, i32
  }
  func.func @transform_11(%arg0: i32) -> (i32, i32) {
    %c0_i32 = arith.constant 0 : i32
    %c0_i32_0 = arith.constant 0 : i32
    %c0_i32_1 = arith.constant 0 : i32
    return %c0_i32, %c0_i32_0 : i32, i32
  }
  func.func @transform_12(%arg0: i32) -> (i32, i32) {
    %c0_i32 = arith.constant 0 : i32
    %c0_i32_0 = arith.constant 0 : i32
    %c0_i32_1 = arith.constant 0 : i32
    return %c0_i32, %c0_i32_0 : i32, i32
  }
  func.func @transform_13(%arg0: i32) -> (i32, i32) {
    %c0_i32 = arith.constant 0 : i32
    %c0_i32_0 = arith.constant 0 : i32
    %c0_i32_1 = arith.constant 0 : i32
    return %c0_i32, %c0_i32_0 : i32, i32
  }
  func.func @transform_14(%arg0: i32) -> (i32, i32) {
    %c0_i32 = arith.constant 0 : i32
    %c0_i32_0 = arith.constant 0 : i32
    %c0_i32_1 = arith.constant 0 : i32
    return %c0_i32, %c0_i32_0 : i32, i32
  }
  func.func @transform_15(%arg0: i32) -> (i32, i32) {
    %c0_i32 = arith.constant 0 : i32
    %c0_i32_0 = arith.constant 0 : i32
    %c0_i32_1 = arith.constant 0 : i32
    return %c0_i32, %c0_i32_0 : i32, i32
  }
  func.func @transform_16(%arg0: i32) -> (i32, i32) {
    %c0_i32 = arith.constant 0 : i32
    %c0_i32_0 = arith.constant 0 : i32
    %c0_i32_1 = arith.constant 0 : i32
    return %c0_i32, %c0_i32_0 : i32, i32
  }
  func.func @transform_17(%arg0: i32) -> (i32, i32) {
    %c0_i32 = arith.constant 0 : i32
    %c0_i32_0 = arith.constant 0 : i32
    %c0_i32_1 = arith.constant 0 : i32
    return %c0_i32, %c0_i32_0 : i32, i32
  }
  func.func @transform_18(%arg0: i32) -> (i32, i32) {
    %c0_i32 = arith.constant 0 : i32
    %c0_i32_0 = arith.constant 0 : i32
    %c0_i32_1 = arith.constant 0 : i32
    return %c0_i32, %c0_i32_0 : i32, i32
  }
  func.func @transform_19(%arg0: i32) -> (i32, i32) {
    %c0_i32 = arith.constant 0 : i32
    %c0_i32_0 = arith.constant 0 : i32
    %c0_i32_1 = arith.constant 0 : i32
    return %c0_i32, %c0_i32_0 : i32, i32
  }
  func.func @transform_20(%arg0: i32) -> (i32, i32) {
    %c0_i32 = arith.constant 0 : i32
    %c0_i32_0 = arith.constant 0 : i32
    %c0_i32_1 = arith.constant 0 : i32
    return %c0_i32, %c0_i32_0 : i32, i32
  }
  func.func @transform_21(%arg0: i32) -> (i32, i32) {
    %c0_i32 = arith.constant 0 : i32
    %c0_i32_0 = arith.constant 0 : i32
    %c0_i32_1 = arith.constant 0 : i32
    return %c0_i32, %c0_i32_0 : i32, i32
  }
  func.func @transform_22(%arg0: i32) -> (i32, i32) {
    %c0_i32 = arith.constant 0 : i32
    %c0_i32_0 = arith.constant 0 : i32
    %c0_i32_1 = arith.constant 0 : i32
    return %c0_i32, %c0_i32_0 : i32, i32
  }
  func.func @transform_23(%arg0: i32) -> (i32, i32) {
    %c0_i32 = arith.constant 0 : i32
    %c0_i32_0 = arith.constant 0 : i32
    %c0_i32_1 = arith.constant 0 : i32
    return %c0_i32, %c0_i32_0 : i32, i32
  }
  func.func @transform_24(%arg0: i32) -> (i32, i32) {
    %c0_i32 = arith.constant 0 : i32
    %c0_i32_0 = arith.constant 0 : i32
    %c0_i32_1 = arith.constant 0 : i32
    return %c0_i32, %c0_i32_0 : i32, i32
  }
  func.func @transform_25(%arg0: i32) -> (i32, i32) {
    %c0_i32 = arith.constant 0 : i32
    %c0_i32_0 = arith.constant 0 : i32
    %c0_i32_1 = arith.constant 0 : i32
    return %c0_i32, %c0_i32_0 : i32, i32
  }
  func.func @transform_26(%arg0: i32) -> (i32, i32) {
    %c0_i32 = arith.constant 0 : i32
    %c0_i32_0 = arith.constant 0 : i32
    %c0_i32_1 = arith.constant 0 : i32
    return %c0_i32, %c0_i32_0 : i32, i32
  }
  func.func @transform_27(%arg0: i32) -> (i32, i32) {
    %c0_i32 = arith.constant 0 : i32
    %c0_i32_0 = arith.constant 0 : i32
    %c0_i32_1 = arith.constant 0 : i32
    return %c0_i32, %c0_i32_0 : i32, i32
  }
  func.func @transform_28(%arg0: i32) -> (i32, i32) {
    %c0_i32 = arith.constant 0 : i32
    %c0_i32_0 = arith.constant 0 : i32
    %c0_i32_1 = arith.constant 0 : i32
    return %c0_i32, %c0_i32_0 : i32, i32
  }
  func.func @transform_29(%arg0: i32) -> (i32, i32) {
    %c0_i32 = arith.constant 0 : i32
    %c0_i32_0 = arith.constant 0 : i32
    %c0_i32_1 = arith.constant 0 : i32
    return %c0_i32, %c0_i32_0 : i32, i32
  }
  func.func @transform_30(%arg0: i32) -> (i32, i32) {
    %c0_i32 = arith.constant 0 : i32
    %c0_i32_0 = arith.constant 0 : i32
    %c0_i32_1 = arith.constant 0 : i32
    return %c0_i32, %c0_i32_0 : i32, i32
  }
  func.func @transform_31(%arg0: i32) -> (i32, i32) {
    %c0_i32 = arith.constant 0 : i32
    %c0_i32_0 = arith.constant 0 : i32
    %c0_i32_1 = arith.constant 0 : i32
    return %c0_i32, %c0_i32_0 : i32, i32
  }
  func.func @transform_32(%arg0: i32) -> (i32, i32) {
    %c0_i32 = arith.constant 0 : i32
    %c0_i32_0 = arith.constant 0 : i32
    %c0_i32_1 = arith.constant 0 : i32
    return %c0_i32, %c0_i32_0 : i32, i32
  }
  func.func @transform_33(%arg0: i32) -> (i32, i32) {
    %c0_i32 = arith.constant 0 : i32
    %c0_i32_0 = arith.constant 0 : i32
    %c0_i32_1 = arith.constant 0 : i32
    return %c0_i32, %c0_i32_0 : i32, i32
  }
  func.func @transform_34(%arg0: i32) -> (i32, i32) {
    %c0_i32 = arith.constant 0 : i32
    %c0_i32_0 = arith.constant 0 : i32
    %c0_i32_1 = arith.constant 0 : i32
    return %c0_i32, %c0_i32_0 : i32, i32
  }
  func.func @transform_35(%arg0: i32) -> (i32, i32) {
    %c0_i32 = arith.constant 0 : i32
    %c0_i32_0 = arith.constant 0 : i32
    %c0_i32_1 = arith.constant 0 : i32
    return %c0_i32, %c0_i32_0 : i32, i32
  }
  func.func @transform_36(%arg0: i32) -> (i32, i32) {
    %c0_i32 = arith.constant 0 : i32
    %c0_i32_0 = arith.constant 0 : i32
    %c0_i32_1 = arith.constant 0 : i32
    return %c0_i32, %c0_i32_0 : i32, i32
  }
  func.func @transform_37(%arg0: i32) -> (i32, i32) {
    %c0_i32 = arith.constant 0 : i32
    %c0_i32_0 = arith.constant 0 : i32
    return %arg0, %c0_i32 : i32, i32
  }
}

</mosaic_0001>

<llo_original>
// kernel: unet_forward.1
$region0: #{unet_forward.1}
  #allocation0 [shape = 'u32[]', space=smem, size = 0x4, offset = 0x4, fixed_abs, tag = 'smem constant byte address 0x4 - core index']
  #allocation1 [shape = 'u32[144,128]{1,0:T(1,128)}', space=vmem, size = 0x12000, scoped, tag = 'internal scratch']
  %s0 = inlined_call_operand.smem [shape: u32[38], index: -1, kind: input, shape index: {}]
  %s1 = sld [smem:[%s0]]
  %s2 = scalar_lea.smem %s0, 1
  %s3 = sld [smem:[%s2]]
  %s4 = scalar_lea.smem %s0, 2
  %s5 = sld [smem:[%s4]]
  %s6 = scalar_lea.smem %s0, 3
  %s7 = sld [smem:[%s6]]
  %s8 = scalar_lea.smem %s0, 4
  %s9 = sld [smem:[%s8]]
  %s10 = scalar_lea.smem %s0, 5
  %s11 = sld [smem:[%s10]]
  %s12 = scalar_lea.smem %s0, 6
  %s13 = sld [smem:[%s12]]
  %s14 = scalar_lea.smem %s0, 7
  %s15 = sld [smem:[%s14]]
  %s16 = scalar_lea.smem %s0, 8
  %s17 = sld [smem:[%s16]]
  %s18 = scalar_lea.smem %s0, 9
  %s19 = sld [smem:[%s18]]
  %s20 = scalar_lea.smem %s0, 10
  %s21 = sld [smem:[%s20]]
  %s22 = scalar_lea.smem %s0, 11
  %s23 = sld [smem:[%s22]]
  %s24 = scalar_lea.smem %s0, 12
  %s25 = sld [smem:[%s24]]
  %s26 = scalar_lea.smem %s0, 13
  %s27 = sld [smem:[%s26]]
  %s28 = scalar_lea.smem %s0, 14
  %s29 = sld [smem:[%s28]]
  %s30 = scalar_lea.smem %s0, 15
  %s31 = sld [smem:[%s30]]
  %s32 = scalar_lea.smem %s0, 16
  %s33 = sld [smem:[%s32]]
  %s34 = scalar_lea.smem %s0, 17
  %s35 = sld [smem:[%s34]]
  %s36 = scalar_lea.smem %s0, 18
  %s37 = sld [smem:[%s36]]
  %s38 = scalar_lea.smem %s0, 19
  %s39 = sld [smem:[%s38]]
  %s40 = scalar_lea.smem %s0, 20
  %s41 = sld [smem:[%s40]]
  %s42 = scalar_lea.smem %s0, 21
  %s43 = sld [smem:[%s42]]
  %s44 = scalar_lea.smem %s0, 22
  %s45 = sld [smem:[%s44]]
  %s46 = scalar_lea.smem %s0, 23
  %s47 = sld [smem:[%s46]]
  %s48 = scalar_lea.smem %s0, 24
  %s49 = sld [smem:[%s48]]
  %s50 = scalar_lea.smem %s0, 25
  %s51 = sld [smem:[%s50]]
  %s52 = scalar_lea.smem %s0, 26
  %s53 = sld [smem:[%s52]]
  %s54 = scalar_lea.smem %s0, 27
  %s55 = sld [smem:[%s54]]
  %s56 = scalar_lea.smem %s0, 28
  %s57 = sld [smem:[%s56]]
  %s58 = scalar_lea.smem %s0, 29
  %s59 = sld [smem:[%s58]]
  %s60 = scalar_lea.smem %s0, 30
  %s61 = sld [smem:[%s60]]
  %s62 = scalar_lea.smem %s0, 31
  %s63 = sld [smem:[%s62]]
  %s64 = scalar_lea.smem %s0, 32
  %s65 = sld [smem:[%s64]]
  %s66 = scalar_lea.smem %s0, 33
  %s67 = sld [smem:[%s66]]
  %s68 = scalar_lea.smem %s0, 34
  %s69 = sld [smem:[%s68]]
  %s70 = scalar_lea.smem %s0, 35
  %s71 = sld [smem:[%s70]]
  %s72 = scalar_lea.smem %s0, 36
  %s73 = sld [smem:[%s72]]
  %s74 = scalar_lea.smem %s0, 37
  %s75 = sld [smem:[%s74]]
  %s76 = sld [smem:[#allocation0]]
  $region281: #{unet_forward.1} parent=0
    _
  %s78 = ssub.s32 1, %s76
  %s79 = scalar_select 0, %s78, %s76
  $region1: #{unet_forward.1} parent=0
    #allocation2 [shape = 'u8[4096]{0}', space=vmem, size = 0x1000, scoped, tag = 'input window, operand 1, single buffered']
    #allocation3 [shape = 's32[2]{0}', space=sflag, size = 0x8, scoped, tag = 'scoped memory for unet_forward.1']
    #allocation4 [shape = 'u8[512]{0}', space=vmem, size = 0x400, scoped, tag = 'input window, operand 4, single buffered']
    #allocation5 [shape = 's32[1]{0}', space=sflag, size = 0x4, scoped, tag = 'scoped memory for unet_forward.1']
    #allocation6 [shape = 'u8[24576]{0}', space=vmem, size = 0x6000, scoped, tag = 'input window, operand 5, single buffered']
    #allocation7 [shape = 'u8[512]{0}', space=vmem, size = 0x400, scoped, tag = 'input window, operand 6, single buffered']
    #allocation8 [shape = 's32[1]{0}', space=sflag, size = 0x4, scoped, tag = 'scoped memory for unet_forward.1']
    #allocation9 [shape = 'u8[512]{0}', space=vmem, size = 0x400, scoped, tag = 'input window, operand 8, single buffered']
    #allocation10 [shape = 'u8[98304]{0}', space=vmem, size = 0x18000, scoped, tag = 'input window, operand 9, single buffered']
    #allocation11 [shape = 's32[1]{0}', space=sflag, size = 0x4, scoped, tag = 'scoped memory for unet_forward.1']
    #allocation12 [shape = 'u8[1024]{0}', space=vmem, size = 0x400, scoped, tag = 'input window, operand 10, single buffered']
    #allocation13 [shape = 'u8[98304]{0}', space=vmem, size = 0x18000, scoped, tag = 'input window, operand 11, single buffered']
    #allocation14 [shape = 's32[1]{0}', space=sflag, size = 0x4, scoped, tag = 'scoped memory for unet_forward.1']
    #allocation15 [shape = 'u8[512]{0}', space=vmem, size = 0x400, scoped, tag = 'input window, operand 12, single buffered']
    #allocation16 [shape = 'u8[2048]{0}', space=vmem, size = 0x800, scoped, tag = 'input window, operand 14, single buffered']
    #allocation17 [shape = 's32[1]{0}', space=sflag, size = 0x4, scoped, tag = 'scoped memory for unet_forward.1']
    #allocation18 [shape = 'u8[393216]{0}', space=vmem, size = 0x60000, scoped, tag = 'input window, operand 15, single buffered']
    #allocation19 [shape = 'u8[1024]{0}', space=vmem, size = 0x400, scoped, tag = 'input window, operand 16, single buffered']
    #allocation20 [shape = 's32[1]{0}', space=sflag, size = 0x4, scoped, tag = 'scoped memory for unet_forward.1']
    #allocation21 [shape = 'u8[131072]{0}', space=vmem, size = 0x20000, scoped, tag = 'input window, operand 17, single buffered']
    #allocation22 [shape = 'u8[32768]{0}', space=vmem, size = 0x8000, scoped, tag = 'input window, operand 19, single buffered']
    #allocation23 [shape = 's32[1]{0}', space=sflag, size = 0x4, scoped, tag = 'scoped memory for unet_forward.1']
    #allocation24 [shape = 'u8[16384]{0}', space=vmem, size = 0x4000, scoped, tag = 'input window, operand 21, single buffered']
    #allocation25 [shape = 'u8[393216]{0}', space=vmem, size = 0x60000, scoped, tag = 'input window, operand 23, single buffered']
    #allocation26 [shape = 's32[1]{0}', space=sflag, size = 0x4, scoped, tag = 'scoped memory for unet_forward.1']
    #allocation27 [shape = 'u8[1024]{0}', space=vmem, size = 0x400, scoped, tag = 'input window, operand 24, single buffered']
    #allocation28 [shape = 'u8[98304]{0}', space=vmem, size = 0x18000, scoped, tag = 'input window, operand 25, single buffered']
    #allocation29 [shape = 's32[1]{0}', space=sflag, size = 0x4, scoped, tag = 'scoped memory for unet_forward.1']
    #allocation30 [shape = 'u8[512]{0}', space=vmem, size = 0x400, scoped, tag = 'input window, operand 26, single buffered']
    #allocation31 [shape = 'u8[98304]{0}', space=vmem, size = 0x18000, scoped, tag = 'input window, operand 27, single buffered']
    #allocation32 [shape = 's32[1]{0}', space=sflag, size = 0x4, scoped, tag = 'scoped memory for unet_forward.1']
    #allocation33 [shape = 'u8[512]{0}', space=vmem, size = 0x400, scoped, tag = 'input window, operand 28, single buffered']
    #allocation34 [shape = 'u8[512]{0}', space=vmem, size = 0x400, scoped, tag = 'input window, operand 30, single buffered']
    #allocation35 [shape = 's32[1]{0}', space=sflag, size = 0x4, scoped, tag = 'scoped memory for unet_forward.1']
    #allocation36 [shape = 'u8[512]{0}', space=vmem, size = 0x400, scoped, tag = 'input window, operand 32, single buffered']
    #allocation37 [shape = 'u8[512]{0}', space=vmem, size = 0x400, scoped, tag = 'input window, operand 34, single buffered']
    #allocation38 [shape = 's32[1]{0}', space=sflag, size = 0x4, scoped, tag = 'scoped memory for unet_forward.1']
    #allocation39 [shape = 'u8[512]{0}', space=vmem, size = 0x400, scoped, tag = 'input window, operand 36, single buffered']
    %80 = vsyncpa [#allocation3], 0
    %81 = vsyncpa [#allocation5], 0
    %82 = vsyncpa [#allocation8], 0
    %83 = vsyncpa [#allocation11], 0
    %84 = vsyncpa [#allocation14], 0
    %85 = vsyncpa [#allocation17], 0
    %86 = vsyncpa [#allocation20], 0
    %87 = vsyncpa [#allocation23], 0
    %88 = vsyncpa [#allocation26], 0
    %89 = vsyncpa [#allocation29], 0
    %90 = vsyncpa [#allocation32], 0
    %91 = vsyncpa [#allocation35], 0
    %92 = vsyncpa [#allocation38], 0
    loop: start=0, step=1, limit=4
    $region2: #{unet_forward.1} parent=1 // loop_pre_header
      _
    $region3: #{unet_forward.1} parent=1 // loop_header
      %s94 = sphi 0, %s98
      %p95 = scmp.ge.s32.totalorder %s94, 4
      %s104 = sphi 0, %s106
      %s107 = sphi 0, %s104
      %s108 = sphi 0, %s107
      %s124 = sphi 0, %s108
      %s128 = sphi 0, %s128
      %s130 = sphi 0, %s128
      %s131 = sphi 0, %s130
      %s145 = sphi 0, %s131
      %s149 = sphi 0, %s149
      %s151 = sphi 0, %s149
      %s152 = sphi 0, %s151
      %s166 = sphi 0, %s152
      %s170 = sphi 0, %s170
      %s172 = sphi 0, %s170
      %s173 = sphi 0, %s172
      %s187 = sphi 0, %s173
      %s191 = sphi 0, %s191
      %s193 = sphi 0, %s191
      %s194 = sphi 0, %s193
      %s208 = sphi 0, %s194
      %s212 = sphi 0, %s212
      %s214 = sphi 0, %s212
      %s215 = sphi 0, %s214
      %s229 = sphi 0, %s215
      %s233 = sphi 0, %s233
      %s235 = sphi 0, %s233
      %s236 = sphi 0, %s235
      %s250 = sphi 0, %s236
      %s254 = sphi 0, %s254
      %s256 = sphi 0, %s254
      %s257 = sphi 0, %s256
      %s271 = sphi 0, %s257
      %s275 = sphi 0, %s275
      %s277 = sphi 0, %s275
      %s278 = sphi 0, %s277
      %s292 = sphi 0, %s278
      %s296 = sphi 0, %s296
      %s298 = sphi 0, %s296
      %s299 = sphi 0, %s298
      %s313 = sphi 0, %s299
      %s317 = sphi 0, %s317
      %s319 = sphi 0, %s317
      %s320 = sphi 0, %s319
      %s334 = sphi 0, %s320
      %s338 = sphi 0, %s338
      %s340 = sphi 0, %s338
      %s341 = sphi 0, %s340
      %s355 = sphi 0, %s341
      %s359 = sphi 0, %s359
      %s361 = sphi 0, %s359
      %s362 = sphi 0, %s361
      %s376 = sphi 0, %s362
      %s380 = sphi 0, %s380
      %s382 = sphi 0, %s380
      %s383 = sphi 0, %s382
      %s397 = sphi 0, %s383
      %s401 = sphi 0, %s401
      %s403 = sphi 0, %s401
      %s404 = sphi 0, %s403
      %s418 = sphi 0, %s404
      %s422 = sphi 0, %s422
      %s424 = sphi 0, %s422
      %s425 = sphi 0, %s424
      %s439 = sphi 0, %s425
      %s443 = sphi 0, %s443
      %s445 = sphi 0, %s443
      %s446 = sphi 0, %s445
      %s460 = sphi 0, %s446
      %s464 = sphi 0, %s464
      %s466 = sphi 0, %s464
      %s467 = sphi 0, %s466
      %s481 = sphi 0, %s467
      %s485 = sphi 0, %s485
      %s487 = sphi 0, %s485
      %s488 = sphi 0, %s487
      %s502 = sphi 0, %s488
      %s506 = sphi 0, %s506
      %s508 = sphi 0, %s506
      %s509 = sphi 0, %s508
      %s523 = sphi 0, %s509
      %s527 = sphi 0, %s527
      %s529 = sphi 0, %s527
      %s530 = sphi 0, %s529
      %s544 = sphi 0, %s530
      %s548 = sphi 0, %s548
      %s550 = sphi 0, %s548
      %s551 = sphi 0, %s550
      %s565 = sphi 0, %s551
      %s569 = sphi 0, %s569
      %s571 = sphi 0, %s569
      %s572 = sphi 0, %s571
      %s586 = sphi 0, %s572
      %s590 = sphi 0, %s590
      %s592 = sphi 0, %s590
      %s593 = sphi 0, %s592
      %s607 = sphi 0, %s593
      %s611 = sphi 0, %s611
      %s613 = sphi 0, %s611
      %s614 = sphi 0, %s613
      %s628 = sphi 0, %s614
      %s632 = sphi 0, %s632
      %s634 = sphi 0, %s632
      %s635 = sphi 0, %s634
      %s649 = sphi 0, %s635
      %s653 = sphi 0, %s653
      %s655 = sphi 0, %s653
      %s656 = sphi 0, %s655
      %s670 = sphi 0, %s656
      %s674 = sphi 0, %s674
      %s676 = sphi 0, %s674
      %s677 = sphi 0, %s676
      %s691 = sphi 0, %s677
      %s695 = sphi 0, %s695
      %s697 = sphi 0, %s695
      %s698 = sphi 0, %s697
      %s712 = sphi 0, %s698
      %s716 = sphi 0, %s716
      %s718 = sphi 0, %s716
      %s719 = sphi 0, %s718
      %s733 = sphi 0, %s719
      %s737 = sphi 0, %s737
      %s739 = sphi 0, %s737
      %s740 = sphi 0, %s739
      %s754 = sphi 0, %s740
      %s758 = sphi 0, %s758
      %s760 = sphi 0, %s758
      %s761 = sphi 0, %s760
      %s775 = sphi 0, %s761
      %s779 = sphi 0, %s779
      %s781 = sphi 0, %s779
      %s782 = sphi 0, %s781
      %s796 = sphi 0, %s782
      %s800 = sphi 0, %s800
      %s802 = sphi 0, %s800
      %s803 = sphi 0, %s802
      %s817 = sphi 0, %s803
      %s821 = sphi 0, %s821
      %s823 = sphi 0, %s821
      %s824 = sphi 0, %s823
      %s838 = sphi 0, %s824
      %s842 = sphi 0, %s842
      %s844 = sphi 0, %s842
      %s845 = sphi 0, %s844
      %s859 = sphi 0, %s845
      %s863 = sphi 0, %s863
      %s865 = sphi 0, %s863
      %s866 = sphi 0, %s865
      %s880 = sphi 0, %s866
      %s886 = sphi 0, %s888
      %s889 = sphi 0, %s886
      %s890 = sphi 0, %s889
      %s906 = sphi 0, %s890
    $region4: #{unet_forward.1} parent=1 // loop_header_branch
      %97 = sbr.rel (%p95) target = $region8
    $region5: #{unet_forward.1} parent=1 // loop_body
      %s99 = ssub.s32 %s94, 1
      %s100 = ssub.s32 %s94, 2
      %s101 = sadd.s32 %s94, 1
      %s102 = ssub.s32 %s94, %s101
      %p103 = scmp.eq.s32.totalorder %s102, 0
      %s105 = sadd.s32 %s104, 1
      %s106 = scalar_select %p103, %s104, %s105
      %p109 = pneg %p103
      %p110 = scmp.eq.s32.totalorder %s94, 1
      %p111 = por %p109, %p110
      %p112 = scmp.ne.s32.totalorder %s104, %s107
      %p113 = scmp.eq.s32.totalorder %s94, 0
      %p114 = por %p112, %p113
      %p115 = scmp.ne.s32.totalorder %s104, %s107
      %p116 = scmp.eq.s32.totalorder %s99, 1
      %p117 = por %p115, %p116
      %p118 = scmp.ne.s32.totalorder %s107, %s108
      %p119 = scmp.eq.s32.totalorder %s99, 0
      %p120 = por %p118, %p119
      %p121 = scmp.ne.s32.totalorder %s107, %s108
      %p122 = scmp.eq.s32.totalorder %s100, 1
      %p123 = por %p121, %p122
      %p125 = scmp.ne.s32.totalorder %s108, %s124
      %p126 = scmp.eq.s32.totalorder %s100, 0
      %p127 = por %p125, %p126
      %s129 = sadd.s32 %s128, 1
      %p132 = scmp.eq.s32.totalorder %s94, 1
      %p133 = scmp.ne.s32.totalorder %s128, %s130
      %p134 = scmp.eq.s32.totalorder %s94, 0
      %p135 = por %p133, %p134
      %p136 = scmp.ne.s32.totalorder %s128, %s130
      %p137 = scmp.eq.s32.totalorder %s99, 1
      %p138 = por %p136, %p137
      %p139 = scmp.ne.s32.totalorder %s130, %s131
      %p140 = scmp.eq.s32.totalorder %s99, 0
      %p141 = por %p139, %p140
      %p142 = scmp.ne.s32.totalorder %s130, %s131
      %p143 = scmp.eq.s32.totalorder %s100, 1
      %p144 = por %p142, %p143
      %p146 = scmp.ne.s32.totalorder %s131, %s145
      %p147 = scmp.eq.s32.totalorder %s100, 0
      %p148 = por %p146, %p147
      %s150 = sadd.s32 %s149, 1
      %p153 = scmp.eq.s32.totalorder %s94, 1
      %p154 = scmp.ne.s32.totalorder %s149, %s151
      %p155 = scmp.eq.s32.totalorder %s94, 0
      %p156 = por %p154, %p155
      %p157 = scmp.ne.s32.totalorder %s149, %s151
      %p158 = scmp.eq.s32.totalorder %s99, 1
      %p159 = por %p157, %p158
      %p160 = scmp.ne.s32.totalorder %s151, %s152
      %p161 = scmp.eq.s32.totalorder %s99, 0
      %p162 = por %p160, %p161
      %p163 = scmp.ne.s32.totalorder %s151, %s152
      %p164 = scmp.eq.s32.totalorder %s100, 1
      %p165 = por %p163, %p164
      %p167 = scmp.ne.s32.totalorder %s152, %s166
      %p168 = scmp.eq.s32.totalorder %s100, 0
      %p169 = por %p167, %p168
      %s171 = sadd.s32 %s170, 1
      %p174 = scmp.eq.s32.totalorder %s94, 1
      %p175 = scmp.ne.s32.totalorder %s170, %s172
      %p176 = scmp.eq.s32.totalorder %s94, 0
      %p177 = por %p175, %p176
      %p178 = scmp.ne.s32.totalorder %s170, %s172
      %p179 = scmp.eq.s32.totalorder %s99, 1
      %p180 = por %p178, %p179
      %p181 = scmp.ne.s32.totalorder %s172, %s173
      %p182 = scmp.eq.s32.totalorder %s99, 0
      %p183 = por %p181, %p182
      %p184 = scmp.ne.s32.totalorder %s172, %s173
      %p185 = scmp.eq.s32.totalorder %s100, 1
      %p186 = por %p184, %p185
      %p188 = scmp.ne.s32.totalorder %s173, %s187
      %p189 = scmp.eq.s32.totalorder %s100, 0
      %p190 = por %p188, %p189
      %s192 = sadd.s32 %s191, 1
      %p195 = scmp.eq.s32.totalorder %s94, 1
      %p196 = scmp.ne.s32.totalorder %s191, %s193
      %p197 = scmp.eq.s32.totalorder %s94, 0
      %p198 = por %p196, %p197
      %p199 = scmp.ne.s32.totalorder %s191, %s193
      %p200 = scmp.eq.s32.totalorder %s99, 1
      %p201 = por %p199, %p200
      %p202 = scmp.ne.s32.totalorder %s193, %s194
      %p203 = scmp.eq.s32.totalorder %s99, 0
      %p204 = por %p202, %p203
      %p205 = scmp.ne.s32.totalorder %s193, %s194
      %p206 = scmp.eq.s32.totalorder %s100, 1
      %p207 = por %p205, %p206
      %p209 = scmp.ne.s32.totalorder %s194, %s208
      %p210 = scmp.eq.s32.totalorder %s100, 0
      %p211 = por %p209, %p210
      %s213 = sadd.s32 %s212, 1
      %p216 = scmp.eq.s32.totalorder %s94, 1
      %p217 = scmp.ne.s32.totalorder %s212, %s214
      %p218 = scmp.eq.s32.totalorder %s94, 0
      %p219 = por %p217, %p218
      %p220 = scmp.ne.s32.totalorder %s212, %s214
      %p221 = scmp.eq.s32.totalorder %s99, 1
      %p222 = por %p220, %p221
      %p223 = scmp.ne.s32.totalorder %s214, %s215
      %p224 = scmp.eq.s32.totalorder %s99, 0
      %p225 = por %p223, %p224
      %p226 = scmp.ne.s32.totalorder %s214, %s215
      %p227 = scmp.eq.s32.totalorder %s100, 1
      %p228 = por %p226, %p227
      %p230 = scmp.ne.s32.totalorder %s215, %s229
      %p231 = scmp.eq.s32.totalorder %s100, 0
      %p232 = por %p230, %p231
      %s234 = sadd.s32 %s233, 1
      %p237 = scmp.eq.s32.totalorder %s94, 1
      %p238 = scmp.ne.s32.totalorder %s233, %s235
      %p239 = scmp.eq.s32.totalorder %s94, 0
      %p240 = por %p238, %p239
      %p241 = scmp.ne.s32.totalorder %s233, %s235
      %p242 = scmp.eq.s32.totalorder %s99, 1
      %p243 = por %p241, %p242
      %p244 = scmp.ne.s32.totalorder %s235, %s236
      %p245 = scmp.eq.s32.totalorder %s99, 0
      %p246 = por %p244, %p245
      %p247 = scmp.ne.s32.totalorder %s235, %s236
      %p248 = scmp.eq.s32.totalorder %s100, 1
      %p249 = por %p247, %p248
      %p251 = scmp.ne.s32.totalorder %s236, %s250
      %p252 = scmp.eq.s32.totalorder %s100, 0
      %p253 = por %p251, %p252
      %s255 = sadd.s32 %s254, 1
      %p258 = scmp.eq.s32.totalorder %s94, 1
      %p259 = scmp.ne.s32.totalorder %s254, %s256
      %p260 = scmp.eq.s32.totalorder %s94, 0
      %p261 = por %p259, %p260
      %p262 = scmp.ne.s32.totalorder %s254, %s256
      %p263 = scmp.eq.s32.totalorder %s99, 1
      %p264 = por %p262, %p263
      %p265 = scmp.ne.s32.totalorder %s256, %s257
      %p266 = scmp.eq.s32.totalorder %s99, 0
      %p267 = por %p265, %p266
      %p268 = scmp.ne.s32.totalorder %s256, %s257
      %p269 = scmp.eq.s32.totalorder %s100, 1
      %p270 = por %p268, %p269
      %p272 = scmp.ne.s32.totalorder %s257, %s271
      %p273 = scmp.eq.s32.totalorder %s100, 0
      %p274 = por %p272, %p273
      %s276 = sadd.s32 %s275, 1
      %p279 = scmp.eq.s32.totalorder %s94, 1
      %p280 = scmp.ne.s32.totalorder %s275, %s277
      %p281 = scmp.eq.s32.totalorder %s94, 0
      %p282 = por %p280, %p281
      %p283 = scmp.ne.s32.totalorder %s275, %s277
      %p284 = scmp.eq.s32.totalorder %s99, 1
      %p285 = por %p283, %p284
      %p286 = scmp.ne.s32.totalorder %s277, %s278
      %p287 = scmp.eq.s32.totalorder %s99, 0
      %p288 = por %p286, %p287
      %p289 = scmp.ne.s32.totalorder %s277, %s278
      %p290 = scmp.eq.s32.totalorder %s100, 1
      %p291 = por %p289, %p290
      %p293 = scmp.ne.s32.totalorder %s278, %s292
      %p294 = scmp.eq.s32.totalorder %s100, 0
      %p295 = por %p293, %p294
      %s297 = sadd.s32 %s296, 1
      %p300 = scmp.eq.s32.totalorder %s94, 1
      %p301 = scmp.ne.s32.totalorder %s296, %s298
      %p302 = scmp.eq.s32.totalorder %s94, 0
      %p303 = por %p301, %p302
      %p304 = scmp.ne.s32.totalorder %s296, %s298
      %p305 = scmp.eq.s32.totalorder %s99, 1
      %p306 = por %p304, %p305
      %p307 = scmp.ne.s32.totalorder %s298, %s299
      %p308 = scmp.eq.s32.totalorder %s99, 0
      %p309 = por %p307, %p308
      %p310 = scmp.ne.s32.totalorder %s298, %s299
      %p311 = scmp.eq.s32.totalorder %s100, 1
      %p312 = por %p310, %p311
      %p314 = scmp.ne.s32.totalorder %s299, %s313
      %p315 = scmp.eq.s32.totalorder %s100, 0
      %p316 = por %p314, %p315
      %s318 = sadd.s32 %s317, 1
      %p321 = scmp.eq.s32.totalorder %s94, 1
      %p322 = scmp.ne.s32.totalorder %s317, %s319
      %p323 = scmp.eq.s32.totalorder %s94, 0
      %p324 = por %p322, %p323
      %p325 = scmp.ne.s32.totalorder %s317, %s319
      %p326 = scmp.eq.s32.totalorder %s99, 1
      %p327 = por %p325, %p326
      %p328 = scmp.ne.s32.totalorder %s319, %s320
      %p329 = scmp.eq.s32.totalorder %s99, 0
      %p330 = por %p328, %p329
      %p331 = scmp.ne.s32.totalorder %s319, %s320
      %p332 = scmp.eq.s32.totalorder %s100, 1
      %p333 = por %p331, %p332
      %p335 = scmp.ne.s32.totalorder %s320, %s334
      %p336 = scmp.eq.s32.totalorder %s100, 0
      %p337 = por %p335, %p336
      %s339 = sadd.s32 %s338, 1
      %p342 = scmp.eq.s32.totalorder %s94, 1
      %p343 = scmp.ne.s32.totalorder %s338, %s340
      %p344 = scmp.eq.s32.totalorder %s94, 0
      %p345 = por %p343, %p344
      %p346 = scmp.ne.s32.totalorder %s338, %s340
      %p347 = scmp.eq.s32.totalorder %s99, 1
      %p348 = por %p346, %p347
      %p349 = scmp.ne.s32.totalorder %s340, %s341
      %p350 = scmp.eq.s32.totalorder %s99, 0
      %p351 = por %p349, %p350
      %p352 = scmp.ne.s32.totalorder %s340, %s341
      %p353 = scmp.eq.s32.totalorder %s100, 1
      %p354 = por %p352, %p353
      %p356 = scmp.ne.s32.totalorder %s341, %s355
      %p357 = scmp.eq.s32.totalorder %s100, 0
      %p358 = por %p356, %p357
      %s360 = sadd.s32 %s359, 1
      %p363 = scmp.eq.s32.totalorder %s94, 1
      %p364 = scmp.ne.s32.totalorder %s359, %s361
      %p365 = scmp.eq.s32.totalorder %s94, 0
      %p366 = por %p364, %p365
      %p367 = scmp.ne.s32.totalorder %s359, %s361
      %p368 = scmp.eq.s32.totalorder %s99, 1
      %p369 = por %p367, %p368
      %p370 = scmp.ne.s32.totalorder %s361, %s362
      %p371 = scmp.eq.s32.totalorder %s99, 0
      %p372 = por %p370, %p371
      %p373 = scmp.ne.s32.totalorder %s361, %s362
      %p374 = scmp.eq.s32.totalorder %s100, 1
      %p375 = por %p373, %p374
      %p377 = scmp.ne.s32.totalorder %s362, %s376
      %p378 = scmp.eq.s32.totalorder %s100, 0
      %p379 = por %p377, %p378
      %s381 = sadd.s32 %s380, 1
      %p384 = scmp.eq.s32.totalorder %s94, 1
      %p385 = scmp.ne.s32.totalorder %s380, %s382
      %p386 = scmp.eq.s32.totalorder %s94, 0
      %p387 = por %p385, %p386
      %p388 = scmp.ne.s32.totalorder %s380, %s382
      %p389 = scmp.eq.s32.totalorder %s99, 1
      %p390 = por %p388, %p389
      %p391 = scmp.ne.s32.totalorder %s382, %s383
      %p392 = scmp.eq.s32.totalorder %s99, 0
      %p393 = por %p391, %p392
      %p394 = scmp.ne.s32.totalorder %s382, %s383
      %p395 = scmp.eq.s32.totalorder %s100, 1
      %p396 = por %p394, %p395
      %p398 = scmp.ne.s32.totalorder %s383, %s397
      %p399 = scmp.eq.s32.totalorder %s100, 0
      %p400 = por %p398, %p399
      %s402 = sadd.s32 %s401, 1
      %p405 = scmp.eq.s32.totalorder %s94, 1
      %p406 = scmp.ne.s32.totalorder %s401, %s403
      %p407 = scmp.eq.s32.totalorder %s94, 0
      %p408 = por %p406, %p407
      %p409 = scmp.ne.s32.totalorder %s401, %s403
      %p410 = scmp.eq.s32.totalorder %s99, 1
      %p411 = por %p409, %p410
      %p412 = scmp.ne.s32.totalorder %s403, %s404
      %p413 = scmp.eq.s32.totalorder %s99, 0
      %p414 = por %p412, %p413
      %p415 = scmp.ne.s32.totalorder %s403, %s404
      %p416 = scmp.eq.s32.totalorder %s100, 1
      %p417 = por %p415, %p416
      %p419 = scmp.ne.s32.totalorder %s404, %s418
      %p420 = scmp.eq.s32.totalorder %s100, 0
      %p421 = por %p419, %p420
      %s423 = sadd.s32 %s422, 1
      %p426 = scmp.eq.s32.totalorder %s94, 1
      %p427 = scmp.ne.s32.totalorder %s422, %s424
      %p428 = scmp.eq.s32.totalorder %s94, 0
      %p429 = por %p427, %p428
      %p430 = scmp.ne.s32.totalorder %s422, %s424
      %p431 = scmp.eq.s32.totalorder %s99, 1
      %p432 = por %p430, %p431
      %p433 = scmp.ne.s32.totalorder %s424, %s425
      %p434 = scmp.eq.s32.totalorder %s99, 0
      %p435 = por %p433, %p434
      %p436 = scmp.ne.s32.totalorder %s424, %s425
      %p437 = scmp.eq.s32.totalorder %s100, 1
      %p438 = por %p436, %p437
      %p440 = scmp.ne.s32.totalorder %s425, %s439
      %p441 = scmp.eq.s32.totalorder %s100, 0
      %p442 = por %p440, %p441
      %s444 = sadd.s32 %s443, 1
      %p447 = scmp.eq.s32.totalorder %s94, 1
      %p448 = scmp.ne.s32.totalorder %s443, %s445
      %p449 = scmp.eq.s32.totalorder %s94, 0
      %p450 = por %p448, %p449
      %p451 = scmp.ne.s32.totalorder %s443, %s445
      %p452 = scmp.eq.s32.totalorder %s99, 1
      %p453 = por %p451, %p452
      %p454 = scmp.ne.s32.totalorder %s445, %s446
      %p455 = scmp.eq.s32.totalorder %s99, 0
      %p456 = por %p454, %p455
      %p457 = scmp.ne.s32.totalorder %s445, %s446
      %p458 = scmp.eq.s32.totalorder %s100, 1
      %p459 = por %p457, %p458
      %p461 = scmp.ne.s32.totalorder %s446, %s460
      %p462 = scmp.eq.s32.totalorder %s100, 0
      %p463 = por %p461, %p462
      %s465 = sadd.s32 %s464, 1
      %p468 = scmp.eq.s32.totalorder %s94, 1
      %p469 = scmp.ne.s32.totalorder %s464, %s466
      %p470 = scmp.eq.s32.totalorder %s94, 0
      %p471 = por %p469, %p470
      %p472 = scmp.ne.s32.totalorder %s464, %s466
      %p473 = scmp.eq.s32.totalorder %s99, 1
      %p474 = por %p472, %p473
      %p475 = scmp.ne.s32.totalorder %s466, %s467
      %p476 = scmp.eq.s32.totalorder %s99, 0
      %p477 = por %p475, %p476
      %p478 = scmp.ne.s32.totalorder %s466, %s467
      %p479 = scmp.eq.s32.totalorder %s100, 1
      %p480 = por %p478, %p479
      %p482 = scmp.ne.s32.totalorder %s467, %s481
      %p483 = scmp.eq.s32.totalorder %s100, 0
      %p484 = por %p482, %p483
      %s486 = sadd.s32 %s485, 1
      %p489 = scmp.eq.s32.totalorder %s94, 1
      %p490 = scmp.ne.s32.totalorder %s485, %s487
      %p491 = scmp.eq.s32.totalorder %s94, 0
      %p492 = por %p490, %p491
      %p493 = scmp.ne.s32.totalorder %s485, %s487
      %p494 = scmp.eq.s32.totalorder %s99, 1
      %p495 = por %p493, %p494
      %p496 = scmp.ne.s32.totalorder %s487, %s488
      %p497 = scmp.eq.s32.totalorder %s99, 0
      %p498 = por %p496, %p497
      %p499 = scmp.ne.s32.totalorder %s487, %s488
      %p500 = scmp.eq.s32.totalorder %s100, 1
      %p501 = por %p499, %p500
      %p503 = scmp.ne.s32.totalorder %s488, %s502
      %p504 = scmp.eq.s32.totalorder %s100, 0
      %p505 = por %p503, %p504
      %s507 = sadd.s32 %s506, 1
      %p510 = scmp.eq.s32.totalorder %s94, 1
      %p511 = scmp.ne.s32.totalorder %s506, %s508
      %p512 = scmp.eq.s32.totalorder %s94, 0
      %p513 = por %p511, %p512
      %p514 = scmp.ne.s32.totalorder %s506, %s508
      %p515 = scmp.eq.s32.totalorder %s99, 1
      %p516 = por %p514, %p515
      %p517 = scmp.ne.s32.totalorder %s508, %s509
      %p518 = scmp.eq.s32.totalorder %s99, 0
      %p519 = por %p517, %p518
      %p520 = scmp.ne.s32.totalorder %s508, %s509
      %p521 = scmp.eq.s32.totalorder %s100, 1
      %p522 = por %p520, %p521
      %p524 = scmp.ne.s32.totalorder %s509, %s523
      %p525 = scmp.eq.s32.totalorder %s100, 0
      %p526 = por %p524, %p525
      %s528 = sadd.s32 %s527, 1
      %p531 = scmp.eq.s32.totalorder %s94, 1
      %p532 = scmp.ne.s32.totalorder %s527, %s529
      %p533 = scmp.eq.s32.totalorder %s94, 0
      %p534 = por %p532, %p533
      %p535 = scmp.ne.s32.totalorder %s527, %s529
      %p536 = scmp.eq.s32.totalorder %s99, 1
      %p537 = por %p535, %p536
      %p538 = scmp.ne.s32.totalorder %s529, %s530
      %p539 = scmp.eq.s32.totalorder %s99, 0
      %p540 = por %p538, %p539
      %p541 = scmp.ne.s32.totalorder %s529, %s530
      %p542 = scmp.eq.s32.totalorder %s100, 1
      %p543 = por %p541, %p542
      %p545 = scmp.ne.s32.totalorder %s530, %s544
      %p546 = scmp.eq.s32.totalorder %s100, 0
      %p547 = por %p545, %p546
      %s549 = sadd.s32 %s548, 1
      %p552 = scmp.eq.s32.totalorder %s94, 1
      %p553 = scmp.ne.s32.totalorder %s548, %s550
      %p554 = scmp.eq.s32.totalorder %s94, 0
      %p555 = por %p553, %p554
      %p556 = scmp.ne.s32.totalorder %s548, %s550
      %p557 = scmp.eq.s32.totalorder %s99, 1
      %p558 = por %p556, %p557
      %p559 = scmp.ne.s32.totalorder %s550, %s551
      %p560 = scmp.eq.s32.totalorder %s99, 0
      %p561 = por %p559, %p560
      %p562 = scmp.ne.s32.totalorder %s550, %s551
      %p563 = scmp.eq.s32.totalorder %s100, 1
      %p564 = por %p562, %p563
      %p566 = scmp.ne.s32.totalorder %s551, %s565
      %p567 = scmp.eq.s32.totalorder %s100, 0
      %p568 = por %p566, %p567
      %s570 = sadd.s32 %s569, 1
      %p573 = scmp.eq.s32.totalorder %s94, 1
      %p574 = scmp.ne.s32.totalorder %s569, %s571
      %p575 = scmp.eq.s32.totalorder %s94, 0
      %p576 = por %p574, %p575
      %p577 = scmp.ne.s32.totalorder %s569, %s571
      %p578 = scmp.eq.s32.totalorder %s99, 1
      %p579 = por %p577, %p578
      %p580 = scmp.ne.s32.totalorder %s571, %s572
      %p581 = scmp.eq.s32.totalorder %s99, 0
      %p582 = por %p580, %p581
      %p583 = scmp.ne.s32.totalorder %s571, %s572
      %p584 = scmp.eq.s32.totalorder %s100, 1
      %p585 = por %p583, %p584
      %p587 = scmp.ne.s32.totalorder %s572, %s586
      %p588 = scmp.eq.s32.totalorder %s100, 0
      %p589 = por %p587, %p588
      %s591 = sadd.s32 %s590, 1
      %p594 = scmp.eq.s32.totalorder %s94, 1
      %p595 = scmp.ne.s32.totalorder %s590, %s592
      %p596 = scmp.eq.s32.totalorder %s94, 0
      %p597 = por %p595, %p596
      %p598 = scmp.ne.s32.totalorder %s590, %s592
      %p599 = scmp.eq.s32.totalorder %s99, 1
      %p600 = por %p598, %p599
      %p601 = scmp.ne.s32.totalorder %s592, %s593
      %p602 = scmp.eq.s32.totalorder %s99, 0
      %p603 = por %p601, %p602
      %p604 = scmp.ne.s32.totalorder %s592, %s593
      %p605 = scmp.eq.s32.totalorder %s100, 1
      %p606 = por %p604, %p605
      %p608 = scmp.ne.s32.totalorder %s593, %s607
      %p609 = scmp.eq.s32.totalorder %s100, 0
      %p610 = por %p608, %p609
      %s612 = sadd.s32 %s611, 1
      %p615 = scmp.eq.s32.totalorder %s94, 1
      %p616 = scmp.ne.s32.totalorder %s611, %s613
      %p617 = scmp.eq.s32.totalorder %s94, 0
      %p618 = por %p616, %p617
      %p619 = scmp.ne.s32.totalorder %s611, %s613
      %p620 = scmp.eq.s32.totalorder %s99, 1
      %p621 = por %p619, %p620
      %p622 = scmp.ne.s32.totalorder %s613, %s614
      %p623 = scmp.eq.s32.totalorder %s99, 0
      %p624 = por %p622, %p623
      %p625 = scmp.ne.s32.totalorder %s613, %s614
      %p626 = scmp.eq.s32.totalorder %s100, 1
      %p627 = por %p625, %p626
      %p629 = scmp.ne.s32.totalorder %s614, %s628
      %p630 = scmp.eq.s32.totalorder %s100, 0
      %p631 = por %p629, %p630
      %s633 = sadd.s32 %s632, 1
      %p636 = scmp.eq.s32.totalorder %s94, 1
      %p637 = scmp.ne.s32.totalorder %s632, %s634
      %p638 = scmp.eq.s32.totalorder %s94, 0
      %p639 = por %p637, %p638
      %p640 = scmp.ne.s32.totalorder %s632, %s634
      %p641 = scmp.eq.s32.totalorder %s99, 1
      %p642 = por %p640, %p641
      %p643 = scmp.ne.s32.totalorder %s634, %s635
      %p644 = scmp.eq.s32.totalorder %s99, 0
      %p645 = por %p643, %p644
      %p646 = scmp.ne.s32.totalorder %s634, %s635
      %p647 = scmp.eq.s32.totalorder %s100, 1
      %p648 = por %p646, %p647
      %p650 = scmp.ne.s32.totalorder %s635, %s649
      %p651 = scmp.eq.s32.totalorder %s100, 0
      %p652 = por %p650, %p651
      %s654 = sadd.s32 %s653, 1
      %p657 = scmp.eq.s32.totalorder %s94, 1
      %p658 = scmp.ne.s32.totalorder %s653, %s655
      %p659 = scmp.eq.s32.totalorder %s94, 0
      %p660 = por %p658, %p659
      %p661 = scmp.ne.s32.totalorder %s653, %s655
      %p662 = scmp.eq.s32.totalorder %s99, 1
      %p663 = por %p661, %p662
      %p664 = scmp.ne.s32.totalorder %s655, %s656
      %p665 = scmp.eq.s32.totalorder %s99, 0
      %p666 = por %p664, %p665
      %p667 = scmp.ne.s32.totalorder %s655, %s656
      %p668 = scmp.eq.s32.totalorder %s100, 1
      %p669 = por %p667, %p668
      %p671 = scmp.ne.s32.totalorder %s656, %s670
      %p672 = scmp.eq.s32.totalorder %s100, 0
      %p673 = por %p671, %p672
      %s675 = sadd.s32 %s674, 1
      %p678 = scmp.eq.s32.totalorder %s94, 1
      %p679 = scmp.ne.s32.totalorder %s674, %s676
      %p680 = scmp.eq.s32.totalorder %s94, 0
      %p681 = por %p679, %p680
      %p682 = scmp.ne.s32.totalorder %s674, %s676
      %p683 = scmp.eq.s32.totalorder %s99, 1
      %p684 = por %p682, %p683
      %p685 = scmp.ne.s32.totalorder %s676, %s677
      %p686 = scmp.eq.s32.totalorder %s99, 0
      %p687 = por %p685, %p686
      %p688 = scmp.ne.s32.totalorder %s676, %s677
      %p689 = scmp.eq.s32.totalorder %s100, 1
      %p690 = por %p688, %p689
      %p692 = scmp.ne.s32.totalorder %s677, %s691
      %p693 = scmp.eq.s32.totalorder %s100, 0
      %p694 = por %p692, %p693
      %s696 = sadd.s32 %s695, 1
      %p699 = scmp.eq.s32.totalorder %s94, 1
      %p700 = scmp.ne.s32.totalorder %s695, %s697
      %p701 = scmp.eq.s32.totalorder %s94, 0
      %p702 = por %p700, %p701
      %p703 = scmp.ne.s32.totalorder %s695, %s697
      %p704 = scmp.eq.s32.totalorder %s99, 1
      %p705 = por %p703, %p704
      %p706 = scmp.ne.s32.totalorder %s697, %s698
      %p707 = scmp.eq.s32.totalorder %s99, 0
      %p708 = por %p706, %p707
      %p709 = scmp.ne.s32.totalorder %s697, %s698
      %p710 = scmp.eq.s32.totalorder %s100, 1
      %p711 = por %p709, %p710
      %p713 = scmp.ne.s32.totalorder %s698, %s712
      %p714 = scmp.eq.s32.totalorder %s100, 0
      %p715 = por %p713, %p714
      %s717 = sadd.s32 %s716, 1
      %p720 = scmp.eq.s32.totalorder %s94, 1
      %p721 = scmp.ne.s32.totalorder %s716, %s718
      %p722 = scmp.eq.s32.totalorder %s94, 0
      %p723 = por %p721, %p722
      %p724 = scmp.ne.s32.totalorder %s716, %s718
      %p725 = scmp.eq.s32.totalorder %s99, 1
      %p726 = por %p724, %p725
      %p727 = scmp.ne.s32.totalorder %s718, %s719
      %p728 = scmp.eq.s32.totalorder %s99, 0
      %p729 = por %p727, %p728
      %p730 = scmp.ne.s32.totalorder %s718, %s719
      %p731 = scmp.eq.s32.totalorder %s100, 1
      %p732 = por %p730, %p731
      %p734 = scmp.ne.s32.totalorder %s719, %s733
      %p735 = scmp.eq.s32.totalorder %s100, 0
      %p736 = por %p734, %p735
      %s738 = sadd.s32 %s737, 1
      %p741 = scmp.eq.s32.totalorder %s94, 1
      %p742 = scmp.ne.s32.totalorder %s737, %s739
      %p743 = scmp.eq.s32.totalorder %s94, 0
      %p744 = por %p742, %p743
      %p745 = scmp.ne.s32.totalorder %s737, %s739
      %p746 = scmp.eq.s32.totalorder %s99, 1
      %p747 = por %p745, %p746
      %p748 = scmp.ne.s32.totalorder %s739, %s740
      %p749 = scmp.eq.s32.totalorder %s99, 0
      %p750 = por %p748, %p749
      %p751 = scmp.ne.s32.totalorder %s739, %s740
      %p752 = scmp.eq.s32.totalorder %s100, 1
      %p753 = por %p751, %p752
      %p755 = scmp.ne.s32.totalorder %s740, %s754
      %p756 = scmp.eq.s32.totalorder %s100, 0
      %p757 = por %p755, %p756
      %s759 = sadd.s32 %s758, 1
      %p762 = scmp.eq.s32.totalorder %s94, 1
      %p763 = scmp.ne.s32.totalorder %s758, %s760
      %p764 = scmp.eq.s32.totalorder %s94, 0
      %p765 = por %p763, %p764
      %p766 = scmp.ne.s32.totalorder %s758, %s760
      %p767 = scmp.eq.s32.totalorder %s99, 1
      %p768 = por %p766, %p767
      %p769 = scmp.ne.s32.totalorder %s760, %s761
      %p770 = scmp.eq.s32.totalorder %s99, 0
      %p771 = por %p769, %p770
      %p772 = scmp.ne.s32.totalorder %s760, %s761
      %p773 = scmp.eq.s32.totalorder %s100, 1
      %p774 = por %p772, %p773
      %p776 = scmp.ne.s32.totalorder %s761, %s775
      %p777 = scmp.eq.s32.totalorder %s100, 0
      %p778 = por %p776, %p777
      %s780 = sadd.s32 %s779, 1
      %p783 = scmp.eq.s32.totalorder %s94, 1
      %p784 = scmp.ne.s32.totalorder %s779, %s781
      %p785 = scmp.eq.s32.totalorder %s94, 0
      %p786 = por %p784, %p785
      %p787 = scmp.ne.s32.totalorder %s779, %s781
      %p788 = scmp.eq.s32.totalorder %s99, 1
      %p789 = por %p787, %p788
      %p790 = scmp.ne.s32.totalorder %s781, %s782
      %p791 = scmp.eq.s32.totalorder %s99, 0
      %p792 = por %p790, %p791
      %p793 = scmp.ne.s32.totalorder %s781, %s782
      %p794 = scmp.eq.s32.totalorder %s100, 1
      %p795 = por %p793, %p794
      %p797 = scmp.ne.s32.totalorder %s782, %s796
      %p798 = scmp.eq.s32.totalorder %s100, 0
      %p799 = por %p797, %p798
      %s801 = sadd.s32 %s800, 1
      %p804 = scmp.eq.s32.totalorder %s94, 1
      %p805 = scmp.ne.s32.totalorder %s800, %s802
      %p806 = scmp.eq.s32.totalorder %s94, 0
      %p807 = por %p805, %p806
      %p808 = scmp.ne.s32.totalorder %s800, %s802
      %p809 = scmp.eq.s32.totalorder %s99, 1
      %p810 = por %p808, %p809
      %p811 = scmp.ne.s32.totalorder %s802, %s803
      %p812 = scmp.eq.s32.totalorder %s99, 0
      %p813 = por %p811, %p812
      %p814 = scmp.ne.s32.totalorder %s802, %s803
      %p815 = scmp.eq.s32.totalorder %s100, 1
      %p816 = por %p814, %p815
      %p818 = scmp.ne.s32.totalorder %s803, %s817
      %p819 = scmp.eq.s32.totalorder %s100, 0
      %p820 = por %p818, %p819
      %s822 = sadd.s32 %s821, 1
      %p825 = scmp.eq.s32.totalorder %s94, 1
      %p826 = scmp.ne.s32.totalorder %s821, %s823
      %p827 = scmp.eq.s32.totalorder %s94, 0
      %p828 = por %p826, %p827
      %p829 = scmp.ne.s32.totalorder %s821, %s823
      %p830 = scmp.eq.s32.totalorder %s99, 1
      %p831 = por %p829, %p830
      %p832 = scmp.ne.s32.totalorder %s823, %s824
      %p833 = scmp.eq.s32.totalorder %s99, 0
      %p834 = por %p832, %p833
      %p835 = scmp.ne.s32.totalorder %s823, %s824
      %p836 = scmp.eq.s32.totalorder %s100, 1
      %p837 = por %p835, %p836
      %p839 = scmp.ne.s32.totalorder %s824, %s838
      %p840 = scmp.eq.s32.totalorder %s100, 0
      %p841 = por %p839, %p840
      %s843 = sadd.s32 %s842, 1
      %p846 = scmp.eq.s32.totalorder %s94, 1
      %p847 = scmp.ne.s32.totalorder %s842, %s844
      %p848 = scmp.eq.s32.totalorder %s94, 0
      %p849 = por %p847, %p848
      %p850 = scmp.ne.s32.totalorder %s842, %s844
      %p851 = scmp.eq.s32.totalorder %s99, 1
      %p852 = por %p850, %p851
      %p853 = scmp.ne.s32.totalorder %s844, %s845
      %p854 = scmp.eq.s32.totalorder %s99, 0
      %p855 = por %p853, %p854
      %p856 = scmp.ne.s32.totalorder %s844, %s845
      %p857 = scmp.eq.s32.totalorder %s100, 1
      %p858 = por %p856, %p857
      %p860 = scmp.ne.s32.totalorder %s845, %s859
      %p861 = scmp.eq.s32.totalorder %s100, 0
      %p862 = por %p860, %p861
      %s864 = sadd.s32 %s863, 1
      %p867 = scmp.eq.s32.totalorder %s94, 1
      %p868 = scmp.ne.s32.totalorder %s863, %s865
      %p869 = scmp.eq.s32.totalorder %s94, 0
      %p870 = por %p868, %p869
      %p871 = scmp.ne.s32.totalorder %s863, %s865
      %p872 = scmp.eq.s32.totalorder %s99, 1
      %p873 = por %p871, %p872
      %p874 = scmp.ne.s32.totalorder %s865, %s866
      %p875 = scmp.eq.s32.totalorder %s99, 0
      %p876 = por %p874, %p875
      %p877 = scmp.ne.s32.totalorder %s865, %s866
      %p878 = scmp.eq.s32.totalorder %s100, 1
      %p879 = por %p877, %p878
      %p881 = scmp.ne.s32.totalorder %s866, %s880
      %p882 = scmp.eq.s32.totalorder %s100, 0
      %p883 = por %p881, %p882
      %s884 = ssub.s32 %s94, %s101
      %p885 = scmp.eq.s32.totalorder %s884, 0
      %s887 = sadd.s32 %s886, 1
      %s888 = scalar_select %p885, %s886, %s887
      %p891 = pneg %p885
      %p892 = scmp.eq.s32.totalorder %s94, 1
      %p893 = por %p891, %p892
      %p894 = scmp.ne.s32.totalorder %s886, %s889
      %p895 = scmp.eq.s32.totalorder %s94, 0
      %p896 = por %p894, %p895
      %p897 = scmp.ne.s32.totalorder %s886, %s889
      %p898 = scmp.eq.s32.totalorder %s99, 1
      %p899 = por %p897, %p898
      %p900 = scmp.ne.s32.totalorder %s889, %s890
      %p901 = scmp.eq.s32.totalorder %s99, 0
      %p902 = por %p900, %p901
      %p903 = scmp.ne.s32.totalorder %s889, %s890
      %p904 = scmp.eq.s32.totalorder %s100, 1
      %p905 = por %p903, %p904
      %p907 = scmp.ne.s32.totalorder %s890, %s906
      %p908 = scmp.eq.s32.totalorder %s100, 0
      %p909 = por %p907, %p908
      %p910 = scmp.le.s32.totalorder 1, %s94
      %p911 = scmp.lt.s32.totalorder %s94, 3
      %p912 = pnand %p910, %p911
      %p913 = pneg %p912
      // Predicated region
      $region9: #{unet_forward.1} parent=5 // pred_check
        _
      $region10: #{unet_forward.1} parent=5 // pred_check_branch
        %915 = sbr.rel (%p912) target = $region12
      $region11: #{unet_forward.1} parent=5 // pred_region
        %s916 = ssub.s32 %s94, 1
        // Predicated region
        $region13: #{unet_forward.1} parent=11 // pred_check
          %p917 = pneg %p141
        $region14: #{unet_forward.1} parent=11 // pred_check_branch
          %919 = sbr.rel (%p917) target = $region16
        $region15: #{unet_forward.1} parent=11 // pred_region
          %s921 = ssub.s32 128, 128
          %922 = vsyncadd [#allocation3], %s921
          %s923 = sshll.u32 [#allocation2], 4
          %s924 = int_to_ptr.vmem [resolvable:$true] %s923
          %929 = dma.hbm_to_vmem [thread:$0]  %s3, 128, %s924, [#allocation3], 64, 64, 4
        $region16: #{unet_forward.1} parent=11 // pred_fallthru
          _
        // Predicated region
        $region17: #{unet_forward.1} parent=11 // pred_check
          %p930 = pneg %p162
        $region18: #{unet_forward.1} parent=11 // pred_check_branch
          %932 = sbr.rel (%p930) target = $region20
        $region19: #{unet_forward.1} parent=11 // pred_region
          _
        $region20: #{unet_forward.1} parent=11 // pred_fallthru
          _
        // Predicated region
        $region21: #{unet_forward.1} parent=11 // pred_check
          %p933 = pneg %p183
        $region22: #{unet_forward.1} parent=11 // pred_check_branch
          %935 = sbr.rel (%p933) target = $region24
        $region23: #{unet_forward.1} parent=11 // pred_region
          _
        $region24: #{unet_forward.1} parent=11 // pred_fallthru
          _
        // Predicated region
        $region25: #{unet_forward.1} parent=11 // pred_check
          %p936 = pneg %p204
        $region26: #{unet_forward.1} parent=11 // pred_check_branch
          %938 = sbr.rel (%p936) target = $region28
        $region27: #{unet_forward.1} parent=11 // pred_region
          %s940 = ssub.s32 16, 16
          %941 = vsyncadd [#allocation5], %s940
          %s943 = sshll.u32 [#allocation4], 4
          %s944 = int_to_ptr.vmem [resolvable:$true] %s943
          %946 = dma.hbm_to_vmem [thread:$0]  %s9, 16, %s944, [#allocation5]
        $region28: #{unet_forward.1} parent=11 // pred_fallthru
          _
        // Predicated region
        $region29: #{unet_forward.1} parent=11 // pred_check
          %p947 = pneg %p225
        $region30: #{unet_forward.1} parent=11 // pred_check_branch
          %949 = sbr.rel (%p947) target = $region32
        $region31: #{unet_forward.1} parent=11 // pred_region
          %s951 = ssub.s32 768, 768
          %952 = vsyncadd [#allocation5], %s951
          %s953 = sshll.u32 [#allocation6], 4
          %s954 = int_to_ptr.vmem [resolvable:$true] %s953
          %959 = dma.hbm_to_vmem [thread:$0]  %s11, 768, %s954, [#allocation5], 64, 64, 4
        $region32: #{unet_forward.1} parent=11 // pred_fallthru
          _
        // Predicated region
        $region33: #{unet_forward.1} parent=11 // pred_check
          %p960 = pneg %p246
        $region34: #{unet_forward.1} parent=11 // pred_check_branch
          %962 = sbr.rel (%p960) target = $region36
        $region35: #{unet_forward.1} parent=11 // pred_region
          %s964 = ssub.s32 16, 16
          %965 = vsyncadd [#allocation8], %s964
          %s967 = sshll.u32 [#allocation7], 4
          %s968 = int_to_ptr.vmem [resolvable:$true] %s967
          %970 = dma.hbm_to_vmem [thread:$0]  %s13, 16, %s968, [#allocation8]
        $region36: #{unet_forward.1} parent=11 // pred_fallthru
          _
        // Predicated region
        $region37: #{unet_forward.1} parent=11 // pred_check
          %p971 = pneg %p267
        $region38: #{unet_forward.1} parent=11 // pred_check_branch
          %973 = sbr.rel (%p971) target = $region40
        $region39: #{unet_forward.1} parent=11 // pred_region
          _
        $region40: #{unet_forward.1} parent=11 // pred_fallthru
          _
        // Predicated region
        $region41: #{unet_forward.1} parent=11 // pred_check
          %p974 = pneg %p288
        $region42: #{unet_forward.1} parent=11 // pred_check_branch
          %976 = sbr.rel (%p974) target = $region44
        $region43: #{unet_forward.1} parent=11 // pred_region
          %s978 = ssub.s32 16, 16
          %979 = vsyncadd [#allocation8], %s978
          %s981 = sshll.u32 [#allocation9], 4
          %s982 = int_to_ptr.vmem [resolvable:$true] %s981
          %984 = dma.hbm_to_vmem [thread:$0]  %s17, 16, %s982, [#allocation8]
        $region44: #{unet_forward.1} parent=11 // pred_fallthru
          _
        // Predicated region
        $region45: #{unet_forward.1} parent=11 // pred_check
          %p985 = pneg %p309
        $region46: #{unet_forward.1} parent=11 // pred_check_branch
          %987 = sbr.rel (%p985) target = $region48
        $region47: #{unet_forward.1} parent=11 // pred_region
          %s989 = ssub.s32 3072, 3072
          %990 = vsyncadd [#allocation11], %s989
          %s991 = sshll.u32 [#allocation10], 4
          %s992 = int_to_ptr.vmem [resolvable:$true] %s991
          %997 = dma.hbm_to_vmem [thread:$0]  %s19, 3072, %s992, [#allocation11], 128, 128, 8
        $region48: #{unet_forward.1} parent=11 // pred_fallthru
          _
        // Predicated region
        $region49: #{unet_forward.1} parent=11 // pred_check
          %p998 = pneg %p330
        $region50: #{unet_forward.1} parent=11 // pred_check_branch
          %1000 = sbr.rel (%p998) target = $region52
        $region51: #{unet_forward.1} parent=11 // pred_region
          %s1002 = ssub.s32 32, 32
          %1003 = vsyncadd [#allocation11], %s1002
          %s1005 = sshll.u32 [#allocation12], 4
          %s1006 = int_to_ptr.vmem [resolvable:$true] %s1005
          %1008 = dma.hbm_to_vmem [thread:$0]  %s21, 32, %s1006, [#allocation11]
        $region52: #{unet_forward.1} parent=11 // pred_fallthru
          _
        // Predicated region
        $region53: #{unet_forward.1} parent=11 // pred_check
          %p1009 = pneg %p351
        $region54: #{unet_forward.1} parent=11 // pred_check_branch
          %1011 = sbr.rel (%p1009) target = $region56
        $region55: #{unet_forward.1} parent=11 // pred_region
          %s1013 = ssub.s32 3072, 3072
          %1014 = vsyncadd [#allocation14], %s1013
          %s1015 = sshll.u32 [#allocation13], 4
          %s1016 = int_to_ptr.vmem [resolvable:$true] %s1015
          %1021 = dma.hbm_to_vmem [thread:$0]  %s23, 3072, %s1016, [#allocation14], 64, 64, 4
        $region56: #{unet_forward.1} parent=11 // pred_fallthru
          _
        // Predicated region
        $region57: #{unet_forward.1} parent=11 // pred_check
          %p1022 = pneg %p372
        $region58: #{unet_forward.1} parent=11 // pred_check_branch
          %1024 = sbr.rel (%p1022) target = $region60
        $region59: #{unet_forward.1} parent=11 // pred_region
          %s1026 = ssub.s32 16, 16
          %1027 = vsyncadd [#allocation14], %s1026
          %s1029 = sshll.u32 [#allocation15], 4
          %s1030 = int_to_ptr.vmem [resolvable:$true] %s1029
          %1032 = dma.hbm_to_vmem [thread:$0]  %s25, 16, %s1030, [#allocation14]
        $region60: #{unet_forward.1} parent=11 // pred_fallthru
          _
        // Predicated region
        $region61: #{unet_forward.1} parent=11 // pred_check
          %p1033 = pneg %p393
        $region62: #{unet_forward.1} parent=11 // pred_check_branch
          %1035 = sbr.rel (%p1033) target = $region64
        $region63: #{unet_forward.1} parent=11 // pred_region
          _
        $region64: #{unet_forward.1} parent=11 // pred_fallthru
          _
        // Predicated region
        $region65: #{unet_forward.1} parent=11 // pred_check
          %p1036 = pneg %p414
        $region66: #{unet_forward.1} parent=11 // pred_check_branch
          %1038 = sbr.rel (%p1036) target = $region68
        $region67: #{unet_forward.1} parent=11 // pred_region
          %s1040 = ssub.s32 64, 64
          %1041 = vsyncadd [#allocation17], %s1040
          %s1043 = sshll.u32 [#allocation16], 4
          %s1044 = int_to_ptr.vmem [resolvable:$true] %s1043
          %1046 = dma.hbm_to_vmem [thread:$0]  %s29, 64, %s1044, [#allocation17]
        $region68: #{unet_forward.1} parent=11 // pred_fallthru
          _
        // Predicated region
        $region69: #{unet_forward.1} parent=11 // pred_check
          %p1047 = pneg %p435
        $region70: #{unet_forward.1} parent=11 // pred_check_branch
          %1049 = sbr.rel (%p1047) target = $region72
        $region71: #{unet_forward.1} parent=11 // pred_region
          %s1051 = ssub.s32 12288, 12288
          %1052 = vsyncadd [#allocation17], %s1051
          %s1053 = sshll.u32 [#allocation18], 4
          %s1054 = int_to_ptr.vmem [resolvable:$true] %s1053
          %1059 = dma.hbm_to_vmem [thread:$0]  %s31, 12288, %s1054, [#allocation17], 128, 128, 8
        $region72: #{unet_forward.1} parent=11 // pred_fallthru
          _
        // Predicated region
        $region73: #{unet_forward.1} parent=11 // pred_check
          %p1060 = pneg %p456
        $region74: #{unet_forward.1} parent=11 // pred_check_branch
          %1062 = sbr.rel (%p1060) target = $region76
        $region75: #{unet_forward.1} parent=11 // pred_region
          %s1064 = ssub.s32 32, 32
          %1065 = vsyncadd [#allocation20], %s1064
          %s1067 = sshll.u32 [#allocation19], 4
          %s1068 = int_to_ptr.vmem [resolvable:$true] %s1067
          %1070 = dma.hbm_to_vmem [thread:$0]  %s33, 32, %s1068, [#allocation20]
        $region76: #{unet_forward.1} parent=11 // pred_fallthru
          _
        // Predicated region
        $region77: #{unet_forward.1} parent=11 // pred_check
          %p1071 = pneg %p477
        $region78: #{unet_forward.1} parent=11 // pred_check_branch
          %1073 = sbr.rel (%p1071) target = $region80
        $region79: #{unet_forward.1} parent=11 // pred_region
          %s1075 = ssub.s32 4096, 4096
          %1076 = vsyncadd [#allocation20], %s1075
          %s1077 = sshll.u32 [#allocation21], 4
          %s1078 = int_to_ptr.vmem [resolvable:$true] %s1077
          %1083 = dma.hbm_to_vmem [thread:$0]  %s35, 4096, %s1078, [#allocation20], 128, 128, 8
        $region80: #{unet_forward.1} parent=11 // pred_fallthru
          _
        // Predicated region
        $region81: #{unet_forward.1} parent=11 // pred_check
          %p1084 = pneg %p498
        $region82: #{unet_forward.1} parent=11 // pred_check_branch
          %1086 = sbr.rel (%p1084) target = $region84
        $region83: #{unet_forward.1} parent=11 // pred_region
          _
        $region84: #{unet_forward.1} parent=11 // pred_fallthru
          _
        // Predicated region
        $region85: #{unet_forward.1} parent=11 // pred_check
          %p1087 = pneg %p519
        $region86: #{unet_forward.1} parent=11 // pred_check_branch
          %1089 = sbr.rel (%p1087) target = $region88
        $region87: #{unet_forward.1} parent=11 // pred_region
          %s1091 = ssub.s32 1024, 1024
          %1092 = vsyncadd [#allocation23], %s1091
          %s1093 = sshll.u32 [#allocation22], 4
          %s1094 = int_to_ptr.vmem [resolvable:$true] %s1093
          %1099 = dma.hbm_to_vmem [thread:$0]  %s39, 1024, %s1094, [#allocation23], 64, 64, 4
        $region88: #{unet_forward.1} parent=11 // pred_fallthru
          _
        // Predicated region
        $region89: #{unet_forward.1} parent=11 // pred_check
          %p1100 = pneg %p540
        $region90: #{unet_forward.1} parent=11 // pred_check_branch
          %1102 = sbr.rel (%p1100) target = $region92
        $region91: #{unet_forward.1} parent=11 // pred_region
          _
        $region92: #{unet_forward.1} parent=11 // pred_fallthru
          _
        // Predicated region
        $region93: #{unet_forward.1} parent=11 // pred_check
          %p1103 = pneg %p561
        $region94: #{unet_forward.1} parent=11 // pred_check_branch
          %1105 = sbr.rel (%p1103) target = $region96
        $region95: #{unet_forward.1} parent=11 // pred_region
          %s1107 = ssub.s32 512, 512
          %1108 = vsyncadd [#allocation23], %s1107
          %s1109 = sshll.u32 [#allocation24], 4
          %s1110 = int_to_ptr.vmem [resolvable:$true] %s1109
          %1115 = dma.hbm_to_vmem [thread:$0]  %s43, 512, %s1110, [#allocation23], 64, 64, 4
        $region96: #{unet_forward.1} parent=11 // pred_fallthru
          _
        // Predicated region
        $region97: #{unet_forward.1} parent=11 // pred_check
          %p1116 = pneg %p582
        $region98: #{unet_forward.1} parent=11 // pred_check_branch
          %1118 = sbr.rel (%p1116) target = $region100
        $region99: #{unet_forward.1} parent=11 // pred_region
          _
        $region100: #{unet_forward.1} parent=11 // pred_fallthru
          _
        // Predicated region
        $region101: #{unet_forward.1} parent=11 // pred_check
          %p1119 = pneg %p603
        $region102: #{unet_forward.1} parent=11 // pred_check_branch
          %1121 = sbr.rel (%p1119) target = $region104
        $region103: #{unet_forward.1} parent=11 // pred_region
          %s1123 = ssub.s32 12288, 12288
          %1124 = vsyncadd [#allocation26], %s1123
          %s1125 = sshll.u32 [#allocation25], 4
          %s1126 = int_to_ptr.vmem [resolvable:$true] %s1125
          %1131 = dma.hbm_to_vmem [thread:$0]  %s47, 12288, %s1126, [#allocation26], 128, 128, 8
        $region104: #{unet_forward.1} parent=11 // pred_fallthru
          _
        // Predicated region
        $region105: #{unet_forward.1} parent=11 // pred_check
          %p1132 = pneg %p624
        $region106: #{unet_forward.1} parent=11 // pred_check_branch
          %1134 = sbr.rel (%p1132) target = $region108
        $region107: #{unet_forward.1} parent=11 // pred_region
          %s1136 = ssub.s32 32, 32
          %1137 = vsyncadd [#allocation26], %s1136
          %s1139 = sshll.u32 [#allocation27], 4
          %s1140 = int_to_ptr.vmem [resolvable:$true] %s1139
          %1142 = dma.hbm_to_vmem [thread:$0]  %s49, 32, %s1140, [#allocation26]
        $region108: #{unet_forward.1} parent=11 // pred_fallthru
          _
        // Predicated region
        $region109: #{unet_forward.1} parent=11 // pred_check
          %p1143 = pneg %p645
        $region110: #{unet_forward.1} parent=11 // pred_check_branch
          %1145 = sbr.rel (%p1143) target = $region112
        $region111: #{unet_forward.1} parent=11 // pred_region
          %s1147 = ssub.s32 3072, 3072
          %1148 = vsyncadd [#allocation29], %s1147
          %s1149 = sshll.u32 [#allocation28], 4
          %s1150 = int_to_ptr.vmem [resolvable:$true] %s1149
          %1155 = dma.hbm_to_vmem [thread:$0]  %s51, 3072, %s1150, [#allocation29], 64, 64, 4
        $region112: #{unet_forward.1} parent=11 // pred_fallthru
          _
        // Predicated region
        $region113: #{unet_forward.1} parent=11 // pred_check
          %p1156 = pneg %p666
        $region114: #{unet_forward.1} parent=11 // pred_check_branch
          %1158 = sbr.rel (%p1156) target = $region116
        $region115: #{unet_forward.1} parent=11 // pred_region
          %s1160 = ssub.s32 16, 16
          %1161 = vsyncadd [#allocation29], %s1160
          %s1163 = sshll.u32 [#allocation30], 4
          %s1164 = int_to_ptr.vmem [resolvable:$true] %s1163
          %1166 = dma.hbm_to_vmem [thread:$0]  %s53, 16, %s1164, [#allocation29]
        $region116: #{unet_forward.1} parent=11 // pred_fallthru
          _
        // Predicated region
        $region117: #{unet_forward.1} parent=11 // pred_check
          %p1167 = pneg %p687
        $region118: #{unet_forward.1} parent=11 // pred_check_branch
          %1169 = sbr.rel (%p1167) target = $region120
        $region119: #{unet_forward.1} parent=11 // pred_region
          %s1171 = ssub.s32 3072, 3072
          %1172 = vsyncadd [#allocation32], %s1171
          %s1173 = sshll.u32 [#allocation31], 4
          %s1174 = int_to_ptr.vmem [resolvable:$true] %s1173
          %1179 = dma.hbm_to_vmem [thread:$0]  %s55, 3072, %s1174, [#allocation32], 64, 64, 4
        $region120: #{unet_forward.1} parent=11 // pred_fallthru
          _
        // Predicated region
        $region121: #{unet_forward.1} parent=11 // pred_check
          %p1180 = pneg %p708
        $region122: #{unet_forward.1} parent=11 // pred_check_branch
          %1182 = sbr.rel (%p1180) target = $region124
        $region123: #{unet_forward.1} parent=11 // pred_region
          %s1184 = ssub.s32 16, 16
          %1185 = vsyncadd [#allocation32], %s1184
          %s1187 = sshll.u32 [#allocation33], 4
          %s1188 = int_to_ptr.vmem [resolvable:$true] %s1187
          %1190 = dma.hbm_to_vmem [thread:$0]  %s57, 16, %s1188, [#allocation32]
        $region124: #{unet_forward.1} parent=11 // pred_fallthru
          _
        // Predicated region
        $region125: #{unet_forward.1} parent=11 // pred_check
          %p1191 = pneg %p729
        $region126: #{unet_forward.1} parent=11 // pred_check_branch
          %1193 = sbr.rel (%p1191) target = $region128
        $region127: #{unet_forward.1} parent=11 // pred_region
          _
        $region128: #{unet_forward.1} parent=11 // pred_fallthru
          _
        // Predicated region
        $region129: #{unet_forward.1} parent=11 // pred_check
          %p1194 = pneg %p750
        $region130: #{unet_forward.1} parent=11 // pred_check_branch
          %1196 = sbr.rel (%p1194) target = $region132
        $region131: #{unet_forward.1} parent=11 // pred_region
          %s1198 = ssub.s32 16, 16
          %1199 = vsyncadd [#allocation35], %s1198
          %s1201 = sshll.u32 [#allocation34], 4
          %s1202 = int_to_ptr.vmem [resolvable:$true] %s1201
          %1204 = dma.hbm_to_vmem [thread:$0]  %s61, 16, %s1202, [#allocation35]
        $region132: #{unet_forward.1} parent=11 // pred_fallthru
          _
        // Predicated region
        $region133: #{unet_forward.1} parent=11 // pred_check
          %p1205 = pneg %p771
        $region134: #{unet_forward.1} parent=11 // pred_check_branch
          %1207 = sbr.rel (%p1205) target = $region136
        $region135: #{unet_forward.1} parent=11 // pred_region
          _
        $region136: #{unet_forward.1} parent=11 // pred_fallthru
          _
        // Predicated region
        $region137: #{unet_forward.1} parent=11 // pred_check
          %p1208 = pneg %p792
        $region138: #{unet_forward.1} parent=11 // pred_check_branch
          %1210 = sbr.rel (%p1208) target = $region140
        $region139: #{unet_forward.1} parent=11 // pred_region
          %s1212 = ssub.s32 16, 16
          %1213 = vsyncadd [#allocation35], %s1212
          %s1215 = sshll.u32 [#allocation36], 4
          %s1216 = int_to_ptr.vmem [resolvable:$true] %s1215
          %1218 = dma.hbm_to_vmem [thread:$0]  %s65, 16, %s1216, [#allocation35]
        $region140: #{unet_forward.1} parent=11 // pred_fallthru
          _
        // Predicated region
        $region141: #{unet_forward.1} parent=11 // pred_check
          %p1219 = pneg %p813
        $region142: #{unet_forward.1} parent=11 // pred_check_branch
          %1221 = sbr.rel (%p1219) target = $region144
        $region143: #{unet_forward.1} parent=11 // pred_region
          _
        $region144: #{unet_forward.1} parent=11 // pred_fallthru
          _
        // Predicated region
        $region145: #{unet_forward.1} parent=11 // pred_check
          %p1222 = pneg %p834
        $region146: #{unet_forward.1} parent=11 // pred_check_branch
          %1224 = sbr.rel (%p1222) target = $region148
        $region147: #{unet_forward.1} parent=11 // pred_region
          %s1226 = ssub.s32 16, 16
          %1227 = vsyncadd [#allocation38], %s1226
          %s1229 = sshll.u32 [#allocation37], 4
          %s1230 = int_to_ptr.vmem [resolvable:$true] %s1229
          %1232 = dma.hbm_to_vmem [thread:$0]  %s69, 16, %s1230, [#allocation38]
        $region148: #{unet_forward.1} parent=11 // pred_fallthru
          _
        // Predicated region
        $region149: #{unet_forward.1} parent=11 // pred_check
          %p1233 = pneg %p855
        $region150: #{unet_forward.1} parent=11 // pred_check_branch
          %1235 = sbr.rel (%p1233) target = $region152
        $region151: #{unet_forward.1} parent=11 // pred_region
          _
        $region152: #{unet_forward.1} parent=11 // pred_fallthru
          _
        // Predicated region
        $region153: #{unet_forward.1} parent=11 // pred_check
          %p1236 = pneg %p876
        $region154: #{unet_forward.1} parent=11 // pred_check_branch
          %1238 = sbr.rel (%p1236) target = $region156
        $region155: #{unet_forward.1} parent=11 // pred_region
          %s1240 = ssub.s32 16, 16
          %1241 = vsyncadd [#allocation38], %s1240
          %s1243 = sshll.u32 [#allocation39], 4
          %s1244 = int_to_ptr.vmem [resolvable:$true] %s1243
          %1246 = dma.hbm_to_vmem [thread:$0]  %s73, 16, %s1244, [#allocation38]
        $region156: #{unet_forward.1} parent=11 // pred_fallthru
          _
      $region12: #{unet_forward.1} parent=5 // pred_fallthru
        _
      %p1247 = scmp.lt.s32.totalorder %s94, 2
      // Predicated region
      $region157: #{unet_forward.1} parent=5 // pred_check
        %p1248 = pneg %p1247
      $region158: #{unet_forward.1} parent=5 // pred_check_branch
        %1250 = sbr.rel (%p1248) target = $region160
      $region159: #{unet_forward.1} parent=5 // pred_region
        // Predicated region
        $region161: #{unet_forward.1} parent=159 // pred_check
          %p1251 = pneg %p114
        $region162: #{unet_forward.1} parent=159 // pred_check_branch
          %1253 = sbr.rel (%p1251) target = $region164
        $region163: #{unet_forward.1} parent=159 // pred_region
          %s1254 = smul.u32 2, %s94
          %p1255 = scmp.lt.s32.totalorder %s1254, 3
          %s1256 = scalar_select %p1255, %s1254, 3
          %s1257 = smul.addr %s1256, 8
          %s1258 = scalar_lea.vmem %s1, %s1257
          %s1259 = smul.u32 2, %s94
        $region164: #{unet_forward.1} parent=159 // pred_fallthru
          _
      $region160: #{unet_forward.1} parent=5 // pred_fallthru
        _
      %p1260 = scmp.le.s32.totalorder 1, %s94
      %p1261 = scmp.lt.s32.totalorder %s94, 3
      %p1262 = pnand %p1260, %p1261
      %p1263 = pneg %p1262
      // Predicated region
      $region165: #{unet_forward.1} parent=5 // pred_check
        _
      $region166: #{unet_forward.1} parent=5 // pred_check_branch
        %1265 = sbr.rel (%p1262) target = $region168
      $region167: #{unet_forward.1} parent=5 // pred_region
        %s1266 = ssub.s32 %s94, 1
        // Predicated region
        $region169: #{unet_forward.1} parent=167 // pred_check
          %p1267 = pneg %p141
        $region170: #{unet_forward.1} parent=167 // pred_check_branch
          %1269 = sbr.rel (%p1267) target = $region172
        $region171: #{unet_forward.1} parent=167 // pred_region
          %1270 = dma.done [#allocation3], 128
        $region172: #{unet_forward.1} parent=167 // pred_fallthru
          _
        // Predicated region
        $region173: #{unet_forward.1} parent=167 // pred_check
          %p1271 = pneg %p204
        $region174: #{unet_forward.1} parent=167 // pred_check_branch
          %1273 = sbr.rel (%p1271) target = $region176
        $region175: #{unet_forward.1} parent=167 // pred_region
          %1274 = dma.done [#allocation5], 16
        $region176: #{unet_forward.1} parent=167 // pred_fallthru
          _
        // Predicated region
        $region177: #{unet_forward.1} parent=167 // pred_check
          %p1275 = pneg %p225
        $region178: #{unet_forward.1} parent=167 // pred_check_branch
          %1277 = sbr.rel (%p1275) target = $region180
        $region179: #{unet_forward.1} parent=167 // pred_region
          %1278 = dma.done [#allocation5], 768
        $region180: #{unet_forward.1} parent=167 // pred_fallthru
          _
        // Predicated region
        $region181: #{unet_forward.1} parent=167 // pred_check
          %p1279 = pneg %p246
        $region182: #{unet_forward.1} parent=167 // pred_check_branch
          %1281 = sbr.rel (%p1279) target = $region184
        $region183: #{unet_forward.1} parent=167 // pred_region
          %1282 = dma.done [#allocation8], 16
        $region184: #{unet_forward.1} parent=167 // pred_fallthru
          _
        // Predicated region
        $region185: #{unet_forward.1} parent=167 // pred_check
          %p1283 = pneg %p288
        $region186: #{unet_forward.1} parent=167 // pred_check_branch
          %1285 = sbr.rel (%p1283) target = $region188
        $region187: #{unet_forward.1} parent=167 // pred_region
          %1286 = dma.done [#allocation8], 16
        $region188: #{unet_forward.1} parent=167 // pred_fallthru
          _
        // Predicated region
        $region189: #{unet_forward.1} parent=167 // pred_check
          %p1287 = pneg %p309
        $region190: #{unet_forward.1} parent=167 // pred_check_branch
          %1289 = sbr.rel (%p1287) target = $region192
        $region191: #{unet_forward.1} parent=167 // pred_region
          %1290 = dma.done [#allocation11], 3072
        $region192: #{unet_forward.1} parent=167 // pred_fallthru
          _
        // Predicated region
        $region193: #{unet_forward.1} parent=167 // pred_check
          %p1291 = pneg %p330
        $region194: #{unet_forward.1} parent=167 // pred_check_branch
          %1293 = sbr.rel (%p1291) target = $region196
        $region195: #{unet_forward.1} parent=167 // pred_region
          %1294 = dma.done [#allocation11], 32
        $region196: #{unet_forward.1} parent=167 // pred_fallthru
          _
        // Predicated region
        $region197: #{unet_forward.1} parent=167 // pred_check
          %p1295 = pneg %p351
        $region198: #{unet_forward.1} parent=167 // pred_check_branch
          %1297 = sbr.rel (%p1295) target = $region200
        $region199: #{unet_forward.1} parent=167 // pred_region
          %1298 = dma.done [#allocation14], 3072
        $region200: #{unet_forward.1} parent=167 // pred_fallthru
          _
        // Predicated region
        $region201: #{unet_forward.1} parent=167 // pred_check
          %p1299 = pneg %p372
        $region202: #{unet_forward.1} parent=167 // pred_check_branch
          %1301 = sbr.rel (%p1299) target = $region204
        $region203: #{unet_forward.1} parent=167 // pred_region
          %1302 = dma.done [#allocation14], 16
        $region204: #{unet_forward.1} parent=167 // pred_fallthru
          _
        // Predicated region
        $region205: #{unet_forward.1} parent=167 // pred_check
          %p1303 = pneg %p414
        $region206: #{unet_forward.1} parent=167 // pred_check_branch
          %1305 = sbr.rel (%p1303) target = $region208
        $region207: #{unet_forward.1} parent=167 // pred_region
          %1306 = dma.done [#allocation17], 64
        $region208: #{unet_forward.1} parent=167 // pred_fallthru
          _
        // Predicated region
        $region209: #{unet_forward.1} parent=167 // pred_check
          %p1307 = pneg %p435
        $region210: #{unet_forward.1} parent=167 // pred_check_branch
          %1309 = sbr.rel (%p1307) target = $region212
        $region211: #{unet_forward.1} parent=167 // pred_region
          %1310 = dma.done [#allocation17], 12288
        $region212: #{unet_forward.1} parent=167 // pred_fallthru
          _
        // Predicated region
        $region213: #{unet_forward.1} parent=167 // pred_check
          %p1311 = pneg %p456
        $region214: #{unet_forward.1} parent=167 // pred_check_branch
          %1313 = sbr.rel (%p1311) target = $region216
        $region215: #{unet_forward.1} parent=167 // pred_region
          %1314 = dma.done [#allocation20], 32
        $region216: #{unet_forward.1} parent=167 // pred_fallthru
          _
        // Predicated region
        $region217: #{unet_forward.1} parent=167 // pred_check
          %p1315 = pneg %p477
        $region218: #{unet_forward.1} parent=167 // pred_check_branch
          %1317 = sbr.rel (%p1315) target = $region220
        $region219: #{unet_forward.1} parent=167 // pred_region
          %1318 = dma.done [#allocation20], 4096
        $region220: #{unet_forward.1} parent=167 // pred_fallthru
          _
        // Predicated region
        $region221: #{unet_forward.1} parent=167 // pred_check
          %p1319 = pneg %p519
        $region222: #{unet_forward.1} parent=167 // pred_check_branch
          %1321 = sbr.rel (%p1319) target = $region224
        $region223: #{unet_forward.1} parent=167 // pred_region
          %1322 = dma.done [#allocation23], 1024
        $region224: #{unet_forward.1} parent=167 // pred_fallthru
          _
        // Predicated region
        $region225: #{unet_forward.1} parent=167 // pred_check
          %p1323 = pneg %p561
        $region226: #{unet_forward.1} parent=167 // pred_check_branch
          %1325 = sbr.rel (%p1323) target = $region228
        $region227: #{unet_forward.1} parent=167 // pred_region
          %1326 = dma.done [#allocation23], 512
        $region228: #{unet_forward.1} parent=167 // pred_fallthru
          _
        // Predicated region
        $region229: #{unet_forward.1} parent=167 // pred_check
          %p1327 = pneg %p603
        $region230: #{unet_forward.1} parent=167 // pred_check_branch
          %1329 = sbr.rel (%p1327) target = $region232
        $region231: #{unet_forward.1} parent=167 // pred_region
          %1330 = dma.done [#allocation26], 12288
        $region232: #{unet_forward.1} parent=167 // pred_fallthru
          _
        // Predicated region
        $region233: #{unet_forward.1} parent=167 // pred_check
          %p1331 = pneg %p624
        $region234: #{unet_forward.1} parent=167 // pred_check_branch
          %1333 = sbr.rel (%p1331) target = $region236
        $region235: #{unet_forward.1} parent=167 // pred_region
          %1334 = dma.done [#allocation26], 32
        $region236: #{unet_forward.1} parent=167 // pred_fallthru
          _
        // Predicated region
        $region237: #{unet_forward.1} parent=167 // pred_check
          %p1335 = pneg %p645
        $region238: #{unet_forward.1} parent=167 // pred_check_branch
          %1337 = sbr.rel (%p1335) target = $region240
        $region239: #{unet_forward.1} parent=167 // pred_region
          %1338 = dma.done [#allocation29], 3072
        $region240: #{unet_forward.1} parent=167 // pred_fallthru
          _
        // Predicated region
        $region241: #{unet_forward.1} parent=167 // pred_check
          %p1339 = pneg %p666
        $region242: #{unet_forward.1} parent=167 // pred_check_branch
          %1341 = sbr.rel (%p1339) target = $region244
        $region243: #{unet_forward.1} parent=167 // pred_region
          %1342 = dma.done [#allocation29], 16
        $region244: #{unet_forward.1} parent=167 // pred_fallthru
          _
        // Predicated region
        $region245: #{unet_forward.1} parent=167 // pred_check
          %p1343 = pneg %p687
        $region246: #{unet_forward.1} parent=167 // pred_check_branch
          %1345 = sbr.rel (%p1343) target = $region248
        $region247: #{unet_forward.1} parent=167 // pred_region
          %1346 = dma.done [#allocation32], 3072
        $region248: #{unet_forward.1} parent=167 // pred_fallthru
          _
        // Predicated region
        $region249: #{unet_forward.1} parent=167 // pred_check
          %p1347 = pneg %p708
        $region250: #{unet_forward.1} parent=167 // pred_check_branch
          %1349 = sbr.rel (%p1347) target = $region252
        $region251: #{unet_forward.1} parent=167 // pred_region
          %1350 = dma.done [#allocation32], 16
        $region252: #{unet_forward.1} parent=167 // pred_fallthru
          _
        // Predicated region
        $region253: #{unet_forward.1} parent=167 // pred_check
          %p1351 = pneg %p750
        $region254: #{unet_forward.1} parent=167 // pred_check_branch
          %1353 = sbr.rel (%p1351) target = $region256
        $region255: #{unet_forward.1} parent=167 // pred_region
          %1354 = dma.done [#allocation35], 16
        $region256: #{unet_forward.1} parent=167 // pred_fallthru
          _
        // Predicated region
        $region257: #{unet_forward.1} parent=167 // pred_check
          %p1355 = pneg %p792
        $region258: #{unet_forward.1} parent=167 // pred_check_branch
          %1357 = sbr.rel (%p1355) target = $region260
        $region259: #{unet_forward.1} parent=167 // pred_region
          %1358 = dma.done [#allocation35], 16
        $region260: #{unet_forward.1} parent=167 // pred_fallthru
          _
        // Predicated region
        $region261: #{unet_forward.1} parent=167 // pred_check
          %p1359 = pneg %p834
        $region262: #{unet_forward.1} parent=167 // pred_check_branch
          %1361 = sbr.rel (%p1359) target = $region264
        $region263: #{unet_forward.1} parent=167 // pred_region
          %1362 = dma.done [#allocation38], 16
        $region264: #{unet_forward.1} parent=167 // pred_fallthru
          _
        // Predicated region
        $region265: #{unet_forward.1} parent=167 // pred_check
          %p1363 = pneg %p876
        $region266: #{unet_forward.1} parent=167 // pred_check_branch
          %1365 = sbr.rel (%p1363) target = $region268
        $region267: #{unet_forward.1} parent=167 // pred_region
          %1366 = dma.done [#allocation38], 16
        $region268: #{unet_forward.1} parent=167 // pred_fallthru
          _
        %s1367 = smul.u32 2, %s99
        %p1368 = scmp.lt.s32.totalorder %s1367, 3
        %s1369 = scalar_select %p1368, %s1367, 3
        %s1370 = smul.addr %s1369, 8
        %s1371 = scalar_lea.vmem %s1, %s1370
        %p1372 = pneg %p120
        %p1373 = pneg %p117
        %p1374 = pneg %p141
        %p1375 = pneg %p138
        %p1376 = pneg %p162
        %p1377 = pneg %p159
        %p1378 = pneg %p183
        %p1379 = pneg %p180
        %p1380 = pneg %p204
        %p1381 = pneg %p201
        %p1382 = pneg %p225
        %p1383 = pneg %p222
        %p1384 = pneg %p246
        %p1385 = pneg %p243
        %p1386 = pneg %p267
        %p1387 = pneg %p264
        %p1388 = pneg %p288
        %p1389 = pneg %p285
        %p1390 = pneg %p309
        %p1391 = pneg %p306
        %p1392 = pneg %p330
        %p1393 = pneg %p327
        %p1394 = pneg %p351
        %p1395 = pneg %p348
        %p1396 = pneg %p372
        %p1397 = pneg %p369
        %p1398 = pneg %p393
        %p1399 = pneg %p390
        %p1400 = pneg %p414
        %p1401 = pneg %p411
        %p1402 = pneg %p435
        %p1403 = pneg %p432
        %p1404 = pneg %p456
        %p1405 = pneg %p453
        %p1406 = pneg %p477
        %p1407 = pneg %p474
        %p1408 = pneg %p498
        %p1409 = pneg %p495
        %p1410 = pneg %p519
        %p1411 = pneg %p516
        %p1412 = pneg %p540
        %p1413 = pneg %p537
        %p1414 = pneg %p561
        %p1415 = pneg %p558
        %p1416 = pneg %p582
        %p1417 = pneg %p579
        %p1418 = pneg %p603
        %p1419 = pneg %p600
        %p1420 = pneg %p624
        %p1421 = pneg %p621
        %p1422 = pneg %p645
        %p1423 = pneg %p642
        %p1424 = pneg %p666
        %p1425 = pneg %p663
        %p1426 = pneg %p687
        %p1427 = pneg %p684
        %p1428 = pneg %p708
        %p1429 = pneg %p705
        %p1430 = pneg %p729
        %p1431 = pneg %p726
        %p1432 = pneg %p750
        %p1433 = pneg %p747
        %p1434 = pneg %p771
        %p1435 = pneg %p768
        %p1436 = pneg %p792
        %p1437 = pneg %p789
        %p1438 = pneg %p813
        %p1439 = pneg %p810
        %p1440 = pneg %p834
        %p1441 = pneg %p831
        %p1442 = pneg %p855
        %p1443 = pneg %p852
        %p1444 = pneg %p876
        %p1445 = pneg %p873
        %p1446 = pneg %p902
        %p1447 = pneg %p899
        %s1448 = smul.u32 2, %s99
        %p1449 = scmp.lt.s32.totalorder %s1448, 3
        %s1450 = scalar_select %p1449, %s1448, 3
        %s1451 = smul.addr %s1450, 8
        %s1452 = scalar_lea.vmem %s75, %s1451
        %s1453 = smul.u32 2, %s99
        %p1454 = scmp.lt.s32.totalorder %s1453, 3
        %s1455 = scalar_select %p1454, %s1453, 3
        %s1456 = smul.addr %s1455, 8
        %s1457 = scalar_lea.vmem %s1, %s1456
        %s1458 = smul.u32 2, %s99
        %s1459 = smul.u32 2, %s99
        %p1460 = scmp.lt.s32.totalorder %s1459, 3
        %s1461 = scalar_select %p1460, %s1459, 3
        %s1462 = smul.addr %s1461, 8
        %s1463 = scalar_lea.vmem %s75, %s1462
        %s1464 = smul.u32 2, %s99
        %v1466 = vld [vmem:[%s1457] sm:$0xff]
        %v1467 = vld [vmem:[%s1457 + $0x8] sm:$0xff]
        %v1468 = vlaneseq
        %v1469 = vshrl.u32 %v1468, 7
        %v1470 = vadd.s32 %v1469, 8
        %vm1471 = vcmp.lt.s32.totalorder %v1469, 1
        %vm1472 = vcmp.lt.s32.totalorder %v1470, 1
        %vm1473 = vcmp.lt.s32.totalorder %v1469, 2
        %vm1474 = vcmp.lt.s32.totalorder %v1470, 2
        %vm1475 = vcmp.lt.s32.totalorder %v1469, 4
        %vm1476 = vcmp.lt.s32.totalorder %v1470, 4
        %vm1477 = vcmp.lt.s32.totalorder %v1469, 8
        %vm1478 = vcmp.lt.s32.totalorder %v1470, 8
        %vm1479 = vcmp.ge.s32.totalorder %v1469, 15
        %vm1480 = vcmp.ge.s32.totalorder %v1470, 15
        %vm1481 = vcmp.ge.s32.totalorder %v1469, 14
        %vm1482 = vcmp.ge.s32.totalorder %v1470, 14
        %vm1483 = vcmp.ge.s32.totalorder %v1469, 12
        %vm1484 = vcmp.ge.s32.totalorder %v1470, 12
        %vm1485 = vcmp.ge.s32.totalorder %v1469, 8
        %vm1486 = vcmp.ge.s32.totalorder %v1470, 8
        %vm1487 = vcmp.lt.s32.totalorder %v1469, 0
        %v1488 = vsub.s32 0, %v1469
        %v1489 = vsel %vm1487, %v1488, %v1469
        %v1490 = vshrl.u32 %v1489, 1
        %v1491 = vand.u32 %v1489, 1
        %v1492 = vsub.s32 0, %v1491
        %v1493 = vsel %vm1487, %v1492, %v1491
        %vm1494 = vcmp.lt.s32.totalorder %v1470, 0
        %v1495 = vsub.s32 0, %v1470
        %v1496 = vsel %vm1494, %v1495, %v1470
        %v1497 = vshrl.u32 %v1496, 1
        %v1498 = vand.u32 %v1496, 1
        %v1499 = vsub.s32 0, %v1498
        %v1500 = vsel %vm1494, %v1499, %v1498
        %vm1501 = vcmp.ne.s32.totalorder %v1493, 0
        %vm1502 = vcmp.ne.s32.totalorder %v1500, 0
        %vm1503 = vcmp.lt.s32.totalorder %v1493, 0
        %vm1504 = vcmp.lt.s32.totalorder %v1500, 0
        %vm1505 = vmand %vm1503, %vm1501
        %vm1506 = vmand %vm1504, %vm1502
        %v1507 = vadd.s32 %v1493, 2
        %v1508 = vadd.s32 %v1500, 2
        %v1509 = vsel %vm1505, %v1507, %v1493
        %v1510 = vsel %vm1506, %v1508, %v1500
        %vm1511 = vcmp.lt.s32.totalorder %v1509, 1
        %vm1512 = vcmp.lt.s32.totalorder %v1510, 1
        %vm1513 = vcmp.lt.s32.totalorder %v1469, 0
        %v1514 = vsub.s32 0, %v1469
        %v1515 = vsel %vm1513, %v1514, %v1469
        %v1516 = vshrl.u32 %v1515, 2
        %v1517 = vand.u32 %v1515, 3
        %v1518 = vsub.s32 0, %v1517
        %v1519 = vsel %vm1513, %v1518, %v1517
        %vm1520 = vcmp.lt.s32.totalorder %v1470, 0
        %v1521 = vsub.s32 0, %v1470
        %v1522 = vsel %vm1520, %v1521, %v1470
        %v1523 = vshrl.u32 %v1522, 2
        %v1524 = vand.u32 %v1522, 3
        %v1525 = vsub.s32 0, %v1524
        %v1526 = vsel %vm1520, %v1525, %v1524
        %vm1527 = vcmp.ne.s32.totalorder %v1519, 0
        %vm1528 = vcmp.ne.s32.totalorder %v1526, 0
        %vm1529 = vcmp.lt.s32.totalorder %v1519, 0
        %vm1530 = vcmp.lt.s32.totalorder %v1526, 0
        %vm1531 = vmand %vm1529, %vm1527
        %vm1532 = vmand %vm1530, %vm1528
        %v1533 = vadd.s32 %v1519, 4
        %v1534 = vadd.s32 %v1526, 4
        %v1535 = vsel %vm1531, %v1533, %v1519
        %v1536 = vsel %vm1532, %v1534, %v1526
        %vm1537 = vcmp.lt.s32.totalorder %v1535, 2
        %vm1538 = vcmp.lt.s32.totalorder %v1536, 2
        %vm1539 = vcmp.lt.s32.totalorder %v1469, 0
        %v1540 = vsub.s32 0, %v1469
        %v1541 = vsel %vm1539, %v1540, %v1469
        %v1542 = vshrl.u32 %v1541, 3
        %v1543 = vand.u32 %v1541, 7
        %v1544 = vsub.s32 0, %v1543
        %v1545 = vsel %vm1539, %v1544, %v1543
        %vm1546 = vcmp.lt.s32.totalorder %v1470, 0
        %v1547 = vsub.s32 0, %v1470
        %v1548 = vsel %vm1546, %v1547, %v1470
        %v1549 = vshrl.u32 %v1548, 3
        %v1550 = vand.u32 %v1548, 7
        %v1551 = vsub.s32 0, %v1550
        %v1552 = vsel %vm1546, %v1551, %v1550
        %vm1553 = vcmp.ne.s32.totalorder %v1545, 0
        %vm1554 = vcmp.ne.s32.totalorder %v1552, 0
        %vm1555 = vcmp.lt.s32.totalorder %v1545, 0
        %vm1556 = vcmp.lt.s32.totalorder %v1552, 0
        %vm1557 = vmand %vm1555, %vm1553
        %vm1558 = vmand %vm1556, %vm1554
        %v1559 = vadd.s32 %v1545, 8
        %v1560 = vadd.s32 %v1552, 8
        %v1561 = vsel %vm1557, %v1559, %v1545
        %v1562 = vsel %vm1558, %v1560, %v1552
        %vm1563 = vcmp.lt.s32.totalorder %v1561, 4
        %vm1564 = vcmp.lt.s32.totalorder %v1562, 4
        %v1565 = vrot.slane %v1466, 7
        %v1566 = vrot.slane %v1467, 7
        %v1567 = vsel %vm1471, %v1565, %v1566
        %v1568 = vsel %vm1471, %v1566, %v1565
        %v1569 = vsel %vm1471, 1, 0
        %v1570 = vsel %vm1472, 1, 0
        %vm1571 = vcmp.eq.s32.totalorder %v1569, 1
        %vm1572 = vcmp.eq.s32.totalorder %v1570, 1
        %v1573 = vsel %vm1571, 0.0, %v1568
        %v1574 = vsel %vm1572, 0.0, %v1567
        %v1575 = vrot.slane %v1466, 1
        %v1576 = vrot.slane %v1467, 1
        %vm1577 = vcmp.lt.s32.totalorder %v1469, 7
        %v1578 = vsel %vm1577, %v1575, %v1576
        %v1579 = vsel %vm1577, %v1576, %v1575
        %v1580 = vsel %vm1479, 1, 0
        %v1581 = vsel %vm1480, 1, 0
        %vm1582 = vcmp.eq.s32.totalorder %v1580, 1
        %vm1583 = vcmp.eq.s32.totalorder %v1581, 1
        %v1584 = vsel %vm1582, 0.0, %v1578
        %v1585 = vsel %vm1583, 0.0, %v1579
        %1588 = vrot.lane.b32.xlu0 %v1466, 3
        %v1589 = vpop.permute.xlu0 %1588
        %1590 = vrot.lane.b32.xlu0 %v1467, 3
        %v1591 = vpop.permute.xlu0 %1590
        %1596 = vrot.lane.b32.xlu0 %v1584, 6
        %v1597 = vpop.permute.xlu0 %1596
        %1598 = vrot.lane.b32.xlu0 %v1585, 6
        %v1599 = vpop.permute.xlu0 %1598
        %vm1602 = vcmask 23552
        %v1603 = vsel %vm1602, %v1573, %v1589
        %v1604 = vsel %vm1602, %v1574, %v1591
        %vm1605 = vcmask 48128
        %v1606 = vsel %vm1605, %v1603, %v1597
        %v1607 = vsel %vm1605, %v1604, %v1599
        %v1608 = vpack.c.bf16 %v1607, %v1606
        %v1609 = vld [vmem:[#allocation2] sm:$0xf]
        %v1610 = vld [vmem:[#allocation2 + $0x4] sm:$0x1]
        %v1611 = vld [vmem:[%s5] sm:$0x1]
        %v1613 = vlaneseq
        %v1614 = vshrl.u32 %v1613, 7
        %v1615 = vsub.s32 0, %v1614
        %v1616 = vrot.slane %v1611, %v1615
        %v1620 = vunpack.c.l.b16 %v1609
        %v1621 = vunpack.c.l.b16 %v1610
        %v1622 = vpack.c.b16 %v1621, %v1620
        %vm1623 = vcmask 72704
        %v1625 = vsel %vm1623, %v1608, 0
        %vm1627 = vcmask 1043456
        %vm1628 = vcmask 1044480
        %v1629 = vsel %vm1627, 4294967295, 65535
        %v1630 = vsel %vm1628, %v1629, 0
        %v1632 = vand.u32 %v1622, %v1630
        %1634 = vmatprep.subr.bf16.mxu0 0
        %1635 = vmatpush1.bf16.msra.mxu0 %v1632
        %1636 = vmatprep.subr.bf16.mxu0 0
        %1637 = vmatpush1.bf16.msra.mxu0 0
        %1638 = vmatprep.subr.bf16.mxu0 0
        %1639 = vmatpush1.bf16.msra.mxu0 0
        %1640 = vmatprep.subr.bf16.mxu0 0
        %1641 = vmatpush1.bf16.msra.mxu0 0
        %1642 = vmatprep.subr.bf16.mxu0 0
        %1643 = vmatpush1.bf16.msra.mxu0 0
        %1644 = vmatprep.subr.bf16.mxu0 0
        %1645 = vmatpush1.bf16.msra.mxu0 0
        %1646 = vmatprep.subr.bf16.mxu0 0
        %1647 = vmatpush1.bf16.msra.mxu0 0
        %1648 = vmatprep.subr.bf16.mxu0 0
        %1649 = vmatpush1.bf16.msra.mxu0 0
        %1650 = vmatprep.subr.bf16.mxu0 0
        %1651 = vmatpush1.bf16.msra.mxu0 0
        %1652 = vmatprep.subr.bf16.mxu0 0
        %1653 = vmatpush1.bf16.msra.mxu0 0
        %1654 = vmatprep.subr.bf16.mxu0 0
        %1655 = vmatpush1.bf16.msra.mxu0 0
        %1656 = vmatprep.subr.bf16.mxu0 0
        %1657 = vmatpush1.bf16.msra.mxu0 0
        %1658 = vmatprep.subr.bf16.mxu0 0
        %1659 = vmatpush1.bf16.msra.mxu0 0
        %1660 = vmatprep.subr.bf16.mxu0 0
        %1661 = vmatpush1.bf16.msra.mxu0 0
        %1662 = vmatprep.subr.bf16.mxu0 0
        %1663 = vmatpush1.bf16.msra.mxu0 0
        %1664 = vmatprep.subr.bf16.mxu0 0
        %1665 = vmatpush1.bf16.msra.mxu0 0
        %1666 = vmatprep.mubr.bf16.mxu0 0
        %1667 = vmatmul.mubr.bf16.gmra.mrb[0].mxu0 %v1625
        %v1668 = vpop.f32.mrb[0].mxu0
        %v1669 = vadd.f32 %v1616, %v1668
        %v1670 = vpop.f32.mrb[0].mxu0
        %v1671 = vpop.f32.mrb[0].mxu0
        %v1672 = vadd.f32 %v1616, %v1671
        %v1673 = vpop.f32.mrb[0].mxu0
        %1674 = vdwg.mxu0
        %v1675 = vxor.u32 %v1669, 2147483648
        %v1676 = vxor.u32 %v1672, 2147483648
        %v1677 = vmul.f32 %v1675, 1.442695
        %v1678 = vpow.pop %v1677
        %v1679 = vmul.f32 %v1676, 1.442695
        %v1680 = vpow.pop %v1679
        %v1681 = vadd.f32 %v1678, 1.0
        %v1682 = vadd.f32 %v1680, 1.0
        %v1683 = vrcp.pop %v1681
        %v1684 = vmul.f32 1.0, %v1683
        %v1685 = vrcp.pop %v1682
        %v1686 = vmul.f32 1.0, %v1685
        %v1687 = vmul.f32 %v1669, %v1684
        %v1688 = vmul.f32 %v1672, %v1686
        %v1689 = vrot.slane %v1687, 7
        %v1690 = vrot.slane %v1688, 7
        %v1691 = vsel %vm1471, %v1689, %v1690
        %v1692 = vsel %vm1471, %v1690, %v1689
        %v1693 = vsel %vm1571, 0.0, %v1692
        %v1694 = vsel %vm1572, 0.0, %v1691
        %v1695 = vrot.slane %v1687, 1
        %v1696 = vrot.slane %v1688, 1
        %v1697 = vsel %vm1577, %v1695, %v1696
        %v1698 = vsel %vm1577, %v1696, %v1695
        %v1699 = vsel %vm1582, 0.0, %v1697
        %v1700 = vsel %vm1583, 0.0, %v1698
        %1703 = vrot.lane.b32.xlu0 %v1687, 32
        %v1704 = vpop.permute.xlu0 %1703
        %1705 = vrot.lane.b32.xlu0 %v1688, 32
        %v1706 = vpop.permute.xlu0 %1705
        %1711 = vrot.lane.b32.xlu0 %v1699, 64
        %v1712 = vpop.permute.xlu0 %1711
        %1713 = vrot.lane.b32.xlu0 %v1700, 64
        %v1714 = vpop.permute.xlu0 %1713
        %vm1717 = vcmask 261120
        %v1718 = vsel %vm1717, %v1693, %v1704
        %v1719 = vsel %vm1717, %v1694, %v1706
        %vm1720 = vcmask 523264
        %v1721 = vsel %vm1720, %v1718, %v1712
        %v1722 = vsel %vm1720, %v1719, %v1714
        %v1723 = vpack.c.bf16 %v1722, %v1721
        %v1724 = vld [vmem:[%s7] sm:$0xf]
        %v1725 = vld [vmem:[%s7 + $0x4] sm:$0xf]
        %v1726 = vld [vmem:[%s7 + $0x8] sm:$0xf]
        %v1727 = vld [vmem:[%s7 + $0xc] sm:$0xf]
        %v1728 = vld [vmem:[%s7 + $0x10] sm:$0xf]
        %v1729 = vld [vmem:[%s7 + $0x14] sm:$0xf]
        %v1730 = vld [vmem:[%s7 + $0x18] sm:$0xf]
        %v1731 = vld [vmem:[%s7 + $0x1c] sm:$0xf]
        %v1732 = vld [vmem:[%s7 + $0x20] sm:$0xf]
        %v1733 = vld [vmem:[%s7 + $0x24] sm:$0xf]
        %v1734 = vld [vmem:[%s7 + $0x28] sm:$0xf]
        %v1735 = vld [vmem:[%s7 + $0x2c] sm:$0xf]
        %v1736 = vld [vmem:[#allocation4] sm:$0x1]
        %v1738 = vlaneseq
        %v1739 = vshrl.u32 %v1738, 7
        %v1740 = vsub.s32 0, %v1739
        %v1741 = vrot.slane %v1736, %v1740
        %v1755 = vunpack.c.l.b16 %v1724
        %v1756 = vunpack.c.l.b16 %v1725
        %v1757 = vunpack.c.l.b16 %v1726
        %v1758 = vunpack.c.l.b16 %v1727
        %v1759 = vunpack.c.l.b16 %v1728
        %v1760 = vunpack.c.l.b16 %v1729
        %v1761 = vunpack.c.l.b16 %v1730
        %v1762 = vunpack.c.l.b16 %v1731
        %v1763 = vunpack.c.l.b16 %v1732
        %v1764 = vunpack.c.l.b16 %v1733
        %v1765 = vunpack.c.l.b16 %v1734
        %v1766 = vunpack.c.l.b16 %v1735
        %v1767 = vpack.c.b16 %v1756, %v1755
        %v1768 = vpack.c.b16 %v1758, %v1757
        %v1769 = vpack.c.b16 %v1760, %v1759
        %v1770 = vpack.c.b16 %v1762, %v1761
        %v1771 = vpack.c.b16 %v1764, %v1763
        %v1772 = vpack.c.b16 %v1766, %v1765
        %vm1779 = vcmask 785408
        %v1781 = vsel %vm1779, %v1723, 0
        %1783 = vmatprep.subr.bf16.mxu0 0
        %1784 = vmatpush1.bf16.msra.mxu0 %v1767
        %1785 = vmatprep.subr.bf16.mxu0 0
        %1786 = vmatpush1.bf16.msra.mxu0 %v1768
        %1787 = vmatprep.subr.bf16.mxu0 0
        %1788 = vmatpush1.bf16.msra.mxu0 %v1769
        %1789 = vmatprep.subr.bf16.mxu0 0
        %1790 = vmatpush1.bf16.msra.mxu0 %v1770
        %1791 = vmatprep.subr.bf16.mxu0 0
        %1792 = vmatpush1.bf16.msra.mxu0 %v1771
        %1793 = vmatprep.subr.bf16.mxu0 0
        %1794 = vmatpush1.bf16.msra.mxu0 %v1772
        %1795 = vmatprep.subr.bf16.mxu0 0
        %1796 = vmatpush1.bf16.msra.mxu0 0
        %1797 = vmatprep.subr.bf16.mxu0 0
        %1798 = vmatpush1.bf16.msra.mxu0 0
        %1799 = vmatprep.subr.bf16.mxu0 0
        %1800 = vmatpush1.bf16.msra.mxu0 0
        %1801 = vmatprep.subr.bf16.mxu0 0
        %1802 = vmatpush1.bf16.msra.mxu0 0
        %1803 = vmatprep.subr.bf16.mxu0 0
        %1804 = vmatpush1.bf16.msra.mxu0 0
        %1805 = vmatprep.subr.bf16.mxu0 0
        %1806 = vmatpush1.bf16.msra.mxu0 0
        %1807 = vmatprep.subr.bf16.mxu0 0
        %1808 = vmatpush1.bf16.msra.mxu0 0
        %1809 = vmatprep.subr.bf16.mxu0 0
        %1810 = vmatpush1.bf16.msra.mxu0 0
        %1811 = vmatprep.subr.bf16.mxu0 0
        %1812 = vmatpush1.bf16.msra.mxu0 0
        %1813 = vmatprep.subr.bf16.mxu0 0
        %1814 = vmatpush1.bf16.msra.mxu0 0
        %1815 = vmatprep.mubr.bf16.mxu0 0
        %1816 = vmatmul.mubr.bf16.gmra.mrb[0].mxu0 %v1781
        %v1817 = vpop.f32.mrb[0].mxu0
        %v1818 = vadd.f32 %v1741, %v1817
        %v1819 = vpop.f32.mrb[0].mxu0
        %v1820 = vpop.f32.mrb[0].mxu0
        %v1821 = vadd.f32 %v1741, %v1820
        %v1822 = vpop.f32.mrb[0].mxu0
        %1823 = vdwg.mxu0
        %v1824 = vxor.u32 %v1818, 2147483648
        %v1825 = vxor.u32 %v1821, 2147483648
        %v1826 = vmul.f32 %v1824, 1.442695
        %v1827 = vpow.pop %v1826
        %v1828 = vmul.f32 %v1825, 1.442695
        %v1829 = vpow.pop %v1828
        %v1830 = vadd.f32 %v1827, 1.0
        %v1831 = vadd.f32 %v1829, 1.0
        %v1832 = vrcp.pop %v1830
        %v1833 = vmul.f32 1.0, %v1832
        %v1834 = vrcp.pop %v1831
        %v1835 = vmul.f32 1.0, %v1834
        %v1836 = vmul.f32 %v1818, %v1833
        %v1837 = vmul.f32 %v1821, %v1835
        %1840 = vrot.lane.b32.xlu0 %v1669, 96
        %v1841 = vpop.permute.xlu0 %1840
        %1842 = vrot.lane.b32.xlu0 %v1672, 96
        %v1843 = vpop.permute.xlu0 %1842
        %v1846 = vadd.f32 %v1836, %v1841
        %v1847 = vadd.f32 %v1837, %v1843
        %v1848 = vrot.slane %v1846, 1
        %v1849 = vrot.slane %v1847, 1
        %v1850 = vsel %vm1577, %v1848, %v1849
        %v1851 = vsel %vm1577, %v1849, %v1848
        %v1852 = vmax.f32 %v1846, %v1850
        %v1853 = vmax.f32 %v1847, %v1851
        %v1854 = vrot.slane %v1852, 6
        %v1855 = vrot.slane %v1853, 6
        %v1856 = vsel %vm1473, %v1854, %v1855
        %v1857 = vsel %vm1473, %v1855, %v1854
        %v1858 = vsel %vm1473, 1, 0
        %v1859 = vsel %vm1474, 1, 0
        %vm1860 = vcmp.eq.s32.totalorder %v1858, 1
        %vm1861 = vcmp.eq.s32.totalorder %v1859, 1
        %v1862 = vsel %vm1860, 0.0, %v1857
        %v1863 = vsel %vm1861, 0.0, %v1856
        %v1864 = vrot.slane %v1852, 2
        %v1865 = vrot.slane %v1853, 2
        %vm1866 = vcmp.lt.s32.totalorder %v1469, 6
        %v1867 = vsel %vm1866, %v1864, %v1865
        %v1868 = vsel %vm1866, %v1865, %v1864
        %v1869 = vsel %vm1481, 1, 0
        %v1870 = vsel %vm1482, 1, 0
        %vm1871 = vcmp.eq.s32.totalorder %v1869, 1
        %vm1872 = vcmp.eq.s32.totalorder %v1870, 1
        %v1873 = vsel %vm1871, 0.0, %v1867
        %v1874 = vsel %vm1872, 0.0, %v1868
        %1877 = vrot.lane.b32.xlu0 %v1852, 32
        %v1878 = vpop.permute.xlu0 %1877
        %1879 = vrot.lane.b32.xlu0 %v1853, 32
        %v1880 = vpop.permute.xlu0 %1879
        %1885 = vrot.lane.b32.xlu0 %v1873, 64
        %v1886 = vpop.permute.xlu0 %1885
        %1887 = vrot.lane.b32.xlu0 %v1874, 64
        %v1888 = vpop.permute.xlu0 %1887
        %v1891 = vsel %vm1717, %v1862, %v1878
        %v1892 = vsel %vm1717, %v1863, %v1880
        %v1893 = vsel %vm1720, %v1891, %v1886
        %v1894 = vsel %vm1720, %v1892, %v1888
        %v1895 = vpack.c.bf16 %v1894, %v1893
        %v1896 = vld [vmem:[#allocation6] sm:$0xf]
        %v1897 = vld [vmem:[#allocation6 + $0x4] sm:$0xf]
        %v1898 = vld [vmem:[#allocation6 + $0x8] sm:$0xf]
        %v1899 = vld [vmem:[#allocation6 + $0xc] sm:$0xf]
        %v1900 = vld [vmem:[#allocation6 + $0x10] sm:$0xf]
        %v1901 = vld [vmem:[#allocation6 + $0x14] sm:$0xf]
        %v1902 = vld [vmem:[#allocation6 + $0x18] sm:$0xf]
        %v1903 = vld [vmem:[#allocation6 + $0x1c] sm:$0xf]
        %v1904 = vld [vmem:[#allocation6 + $0x20] sm:$0xf]
        %v1905 = vld [vmem:[#allocation6 + $0x24] sm:$0xf]
        %v1906 = vld [vmem:[#allocation6 + $0x28] sm:$0xf]
        %v1907 = vld [vmem:[#allocation6 + $0x2c] sm:$0xf]
        %v1908 = vld [vmem:[#allocation7] sm:$0x1]
        %v1910 = vlaneseq
        %v1911 = vshrl.u32 %v1910, 7
        %v1912 = vsub.s32 0, %v1911
        %v1913 = vrot.slane %v1908, %v1912
        %v1927 = vunpack.c.l.b16 %v1896
        %v1928 = vunpack.c.l.b16 %v1897
        %v1929 = vunpack.c.l.b16 %v1898
        %v1930 = vunpack.c.l.b16 %v1899
        %v1931 = vunpack.c.l.b16 %v1900
        %v1932 = vunpack.c.l.b16 %v1901
        %v1933 = vunpack.c.l.b16 %v1902
        %v1934 = vunpack.c.l.b16 %v1903
        %v1935 = vunpack.c.l.b16 %v1904
        %v1936 = vunpack.c.l.b16 %v1905
        %v1937 = vunpack.c.l.b16 %v1906
        %v1938 = vunpack.c.l.b16 %v1907
        %v1939 = vpack.c.b16 %v1928, %v1927
        %v1940 = vpack.c.b16 %v1930, %v1929
        %v1941 = vpack.c.b16 %v1932, %v1931
        %v1942 = vpack.c.b16 %v1934, %v1933
        %v1943 = vpack.c.b16 %v1936, %v1935
        %v1944 = vpack.c.b16 %v1938, %v1937
        %v1952 = vsel %vm1779, %v1895, 0
        %1954 = vmatprep.subr.bf16.mxu0 0
        %1955 = vmatpush1.bf16.msra.mxu0 %v1939
        %1956 = vmatprep.subr.bf16.mxu0 0
        %1957 = vmatpush1.bf16.msra.mxu0 %v1940
        %1958 = vmatprep.subr.bf16.mxu0 0
        %1959 = vmatpush1.bf16.msra.mxu0 %v1941
        %1960 = vmatprep.subr.bf16.mxu0 0
        %1961 = vmatpush1.bf16.msra.mxu0 %v1942
        %1962 = vmatprep.subr.bf16.mxu0 0
        %1963 = vmatpush1.bf16.msra.mxu0 %v1943
        %1964 = vmatprep.subr.bf16.mxu0 0
        %1965 = vmatpush1.bf16.msra.mxu0 %v1944
        %1966 = vmatprep.subr.bf16.mxu0 0
        %1967 = vmatpush1.bf16.msra.mxu0 0
        %1968 = vmatprep.subr.bf16.mxu0 0
        %1969 = vmatpush1.bf16.msra.mxu0 0
        %1970 = vmatprep.subr.bf16.mxu0 0
        %1971 = vmatpush1.bf16.msra.mxu0 0
        %1972 = vmatprep.subr.bf16.mxu0 0
        %1973 = vmatpush1.bf16.msra.mxu0 0
        %1974 = vmatprep.subr.bf16.mxu0 0
        %1975 = vmatpush1.bf16.msra.mxu0 0
        %1976 = vmatprep.subr.bf16.mxu0 0
        %1977 = vmatpush1.bf16.msra.mxu0 0
        %1978 = vmatprep.subr.bf16.mxu0 0
        %1979 = vmatpush1.bf16.msra.mxu0 0
        %1980 = vmatprep.subr.bf16.mxu0 0
        %1981 = vmatpush1.bf16.msra.mxu0 0
        %1982 = vmatprep.subr.bf16.mxu0 0
        %1983 = vmatpush1.bf16.msra.mxu0 0
        %1984 = vmatprep.subr.bf16.mxu0 0
        %1985 = vmatpush1.bf16.msra.mxu0 0
        %1986 = vmatprep.mubr.bf16.mxu0 0
        %1987 = vmatmul.mubr.bf16.gmra.mrb[0].mxu0 %v1952
        %v1988 = vpop.f32.mrb[0].mxu0
        %v1989 = vadd.f32 %v1913, %v1988
        %v1990 = vpop.f32.mrb[0].mxu0
        %v1991 = vpop.f32.mrb[0].mxu0
        %v1992 = vadd.f32 %v1913, %v1991
        %v1993 = vpop.f32.mrb[0].mxu0
        %1994 = vdwg.mxu0
        %v1995 = vxor.u32 %v1989, 2147483648
        %v1996 = vxor.u32 %v1992, 2147483648
        %v1997 = vmul.f32 %v1995, 1.442695
        %v1998 = vpow.pop %v1997
        %v1999 = vmul.f32 %v1996, 1.442695
        %v2000 = vpow.pop %v1999
        %v2001 = vadd.f32 %v1998, 1.0
        %v2002 = vadd.f32 %v2000, 1.0
        %v2003 = vrcp.pop %v2001
        %v2004 = vmul.f32 1.0, %v2003
        %v2005 = vrcp.pop %v2002
        %v2006 = vmul.f32 1.0, %v2005
        %v2007 = vmul.f32 %v1989, %v2004
        %v2008 = vmul.f32 %v1992, %v2006
        %v2009 = vrot.slane %v2007, 6
        %v2010 = vrot.slane %v2008, 6
        %v2011 = vsel %vm1473, %v2009, %v2010
        %v2012 = vsel %vm1473, %v2010, %v2009
        %v2013 = vsel %vm1860, 0.0, %v2012
        %v2014 = vsel %vm1861, 0.0, %v2011
        %v2015 = vrot.slane %v2007, 2
        %v2016 = vrot.slane %v2008, 2
        %v2017 = vsel %vm1866, %v2015, %v2016
        %v2018 = vsel %vm1866, %v2016, %v2015
        %v2019 = vsel %vm1871, 0.0, %v2017
        %v2020 = vsel %vm1872, 0.0, %v2018
        %2023 = vrot.lane.b32.xlu0 %v2007, 64
        %v2024 = vpop.permute.xlu0 %2023
        %2025 = vrot.lane.b32.xlu0 %v2008, 64
        %v2026 = vpop.permute.xlu0 %2025
        %v2029 = vsel %vm1720, %v2013, %v2024
        %v2030 = vsel %vm1720, %v2014, %v2026
        %v2031 = vpack.c.bf16 %v2030, %v2029
        %v2032 = vpack.c.bf16 %v2020, %v2019
        %v2033 = vld [vmem:[%s15] sm:$0xf]
        %v2034 = vld [vmem:[%s15 + $0x4] sm:$0xf]
        %v2035 = vld [vmem:[%s15 + $0x8] sm:$0xf]
        %v2036 = vld [vmem:[%s15 + $0xc] sm:$0xf]
        %v2037 = vld [vmem:[%s15 + $0x10] sm:$0xf]
        %v2038 = vld [vmem:[%s15 + $0x14] sm:$0xf]
        %v2039 = vld [vmem:[%s15 + $0x18] sm:$0xf]
        %v2040 = vld [vmem:[%s15 + $0x1c] sm:$0xf]
        %v2041 = vld [vmem:[%s15 + $0x20] sm:$0xf]
        %v2042 = vld [vmem:[%s15 + $0x24] sm:$0xf]
        %v2043 = vld [vmem:[%s15 + $0x28] sm:$0xf]
        %v2044 = vld [vmem:[%s15 + $0x2c] sm:$0xf]
        %v2045 = vld [vmem:[%s15 + $0x30] sm:$0xf]
        %v2046 = vld [vmem:[%s15 + $0x34] sm:$0xf]
        %v2047 = vld [vmem:[%s15 + $0x38] sm:$0xf]
        %v2048 = vld [vmem:[%s15 + $0x3c] sm:$0xf]
        %v2049 = vld [vmem:[%s15 + $0x40] sm:$0xf]
        %v2050 = vld [vmem:[%s15 + $0x44] sm:$0xf]
        %v2051 = vld [vmem:[%s15 + $0x48] sm:$0xf]
        %v2052 = vld [vmem:[%s15 + $0x4c] sm:$0xf]
        %v2053 = vld [vmem:[%s15 + $0x50] sm:$0xf]
        %v2054 = vld [vmem:[%s15 + $0x54] sm:$0xf]
        %v2055 = vld [vmem:[%s15 + $0x58] sm:$0xf]
        %v2056 = vld [vmem:[%s15 + $0x5c] sm:$0xf]
        %v2057 = vld [vmem:[#allocation9] sm:$0x1]
        %v2059 = vlaneseq
        %v2060 = vshrl.u32 %v2059, 7
        %v2061 = vsub.s32 0, %v2060
        %v2062 = vrot.slane %v2057, %v2061
        %v2088 = vunpack.c.l.b16 %v2033
        %v2089 = vunpack.c.l.b16 %v2034
        %v2090 = vunpack.c.l.b16 %v2035
        %v2091 = vunpack.c.l.b16 %v2036
        %v2092 = vunpack.c.l.b16 %v2037
        %v2093 = vunpack.c.l.b16 %v2038
        %v2094 = vunpack.c.l.b16 %v2039
        %v2095 = vunpack.c.l.b16 %v2040
        %v2096 = vunpack.c.l.b16 %v2041
        %v2097 = vunpack.c.l.b16 %v2042
        %v2098 = vunpack.c.l.b16 %v2043
        %v2099 = vunpack.c.l.b16 %v2044
        %v2100 = vunpack.c.l.b16 %v2045
        %v2101 = vunpack.c.l.b16 %v2046
        %v2102 = vunpack.c.l.b16 %v2047
        %v2103 = vunpack.c.l.b16 %v2048
        %v2104 = vunpack.c.l.b16 %v2049
        %v2105 = vunpack.c.l.b16 %v2050
        %v2106 = vunpack.c.l.b16 %v2051
        %v2107 = vunpack.c.l.b16 %v2052
        %v2108 = vunpack.c.l.b16 %v2053
        %v2109 = vunpack.c.l.b16 %v2054
        %v2110 = vunpack.c.l.b16 %v2055
        %v2111 = vunpack.c.l.b16 %v2056
        %v2112 = vpack.c.b16 %v2089, %v2088
        %v2113 = vpack.c.b16 %v2091, %v2090
        %v2114 = vpack.c.b16 %v2093, %v2092
        %v2115 = vpack.c.b16 %v2095, %v2094
        %v2116 = vpack.c.b16 %v2097, %v2096
        %v2117 = vpack.c.b16 %v2099, %v2098
        %v2118 = vpack.c.b16 %v2101, %v2100
        %v2119 = vpack.c.b16 %v2103, %v2102
        %v2120 = vpack.c.b16 %v2105, %v2104
        %v2121 = vpack.c.b16 %v2107, %v2106
        %v2122 = vpack.c.b16 %v2109, %v2108
        %v2123 = vpack.c.b16 %v2111, %v2110
        %v2137 = vsel %vm1720, %v2032, 0
        %2139 = vmatprep.subr.bf16.mxu0 0
        %2140 = vmatpush1.bf16.msra.mxu0 %v2112
        %2141 = vmatprep.subr.bf16.mxu0 0
        %2142 = vmatpush1.bf16.msra.mxu0 %v2113
        %2143 = vmatprep.subr.bf16.mxu0 0
        %2144 = vmatpush1.bf16.msra.mxu0 %v2114
        %2145 = vmatprep.subr.bf16.mxu0 0
        %2146 = vmatpush1.bf16.msra.mxu0 %v2115
        %2147 = vmatprep.subr.bf16.mxu0 0
        %2148 = vmatpush1.bf16.msra.mxu0 %v2116
        %2149 = vmatprep.subr.bf16.mxu0 0
        %2150 = vmatpush1.bf16.msra.mxu0 %v2117
        %2151 = vmatprep.subr.bf16.mxu0 0
        %2152 = vmatpush1.bf16.msra.mxu0 %v2118
        %2153 = vmatprep.subr.bf16.mxu0 0
        %2154 = vmatpush1.bf16.msra.mxu0 %v2119
        %2155 = vmatprep.subr.bf16.mxu0 0
        %2156 = vmatpush1.bf16.msra.mxu0 %v2120
        %2157 = vmatprep.subr.bf16.mxu0 0
        %2158 = vmatpush1.bf16.msra.mxu0 %v2121
        %2159 = vmatprep.subr.bf16.mxu0 0
        %2160 = vmatpush1.bf16.msra.mxu0 %v2122
        %2161 = vmatprep.subr.bf16.mxu0 0
        %2162 = vmatpush1.bf16.msra.mxu0 %v2123
        %2163 = vmatprep.subr.bf16.mxu0 0
        %2164 = vmatpush1.bf16.msra.mxu0 0
        %2165 = vmatprep.subr.bf16.mxu0 0
        %2166 = vmatpush1.bf16.msra.mxu0 0
        %2167 = vmatprep.subr.bf16.mxu0 0
        %2168 = vmatpush1.bf16.msra.mxu0 0
        %2169 = vmatprep.subr.bf16.mxu0 0
        %2170 = vmatpush1.bf16.msra.mxu0 0
        %2171 = vmatprep.mubr.bf16.mxu0 %v2137
        %2172 = vmatmul.mubr.bf16.gmra.mrb[0].mxu0 %v2031
        %v2173 = vpop.f32.mrb[0].mxu0
        %v2174 = vadd.f32 %v2062, %v2173
        %v2175 = vpop.f32.mrb[0].mxu0
        %v2176 = vpop.f32.mrb[0].mxu0
        %v2177 = vadd.f32 %v2062, %v2176
        %v2178 = vpop.f32.mrb[0].mxu0
        %2179 = vdwg.mxu0
        %v2180 = vxor.u32 %v2174, 2147483648
        %v2181 = vxor.u32 %v2177, 2147483648
        %v2182 = vmul.f32 %v2180, 1.442695
        %v2183 = vpow.pop %v2182
        %v2184 = vmul.f32 %v2181, 1.442695
        %v2185 = vpow.pop %v2184
        %v2186 = vadd.f32 %v2183, 1.0
        %v2187 = vadd.f32 %v2185, 1.0
        %v2188 = vrcp.pop %v2186
        %v2189 = vmul.f32 1.0, %v2188
        %v2190 = vrcp.pop %v2187
        %v2191 = vmul.f32 1.0, %v2190
        %v2192 = vmul.f32 %v2174, %v2189
        %v2193 = vmul.f32 %v2177, %v2191
        %2196 = vrot.lane.b32.xlu0 %v1989, 64
        %v2197 = vpop.permute.xlu0 %2196
        %2198 = vrot.lane.b32.xlu0 %v1992, 64
        %v2199 = vpop.permute.xlu0 %2198
        %v2202 = vadd.f32 %v2192, %v2197
        %v2203 = vadd.f32 %v2193, %v2199
        %v2204 = vrot.slane %v2202, 2
        %v2205 = vrot.slane %v2203, 2
        %v2206 = vsel %vm1866, %v2204, %v2205
        %v2207 = vsel %vm1866, %v2205, %v2204
        %v2208 = vmax.f32 %v2202, %v2206
        %v2209 = vmax.f32 %v2203, %v2207
        %v2210 = vrot.slane %v2208, 4
        %v2211 = vrot.slane %v2209, 4
        %v2212 = vsel %vm1475, %v2210, %v2211
        %v2213 = vsel %vm1475, %v2211, %v2210
        %v2214 = vsel %vm1475, 1, 0
        %v2215 = vsel %vm1476, 1, 0
        %vm2216 = vcmp.eq.s32.totalorder %v2214, 1
        %vm2217 = vcmp.eq.s32.totalorder %v2215, 1
        %v2218 = vsel %vm2216, 0.0, %v2213
        %v2219 = vsel %vm2217, 0.0, %v2212
        %v2220 = vsel %vm1483, 1, 0
        %v2221 = vsel %vm1484, 1, 0
        %vm2222 = vcmp.eq.s32.totalorder %v2220, 1
        %vm2223 = vcmp.eq.s32.totalorder %v2221, 1
        %v2224 = vsel %vm2222, 0.0, %v2212
        %v2225 = vsel %vm2223, 0.0, %v2213
        %2228 = vrot.lane.b32.xlu0 %v2208, 64
        %v2229 = vpop.permute.xlu0 %2228
        %2230 = vrot.lane.b32.xlu0 %v2209, 64
        %v2231 = vpop.permute.xlu0 %2230
        %v2234 = vsel %vm1720, %v2218, %v2229
        %v2235 = vsel %vm1720, %v2219, %v2231
        %v2236 = vpack.c.bf16 %v2235, %v2234
        %v2237 = vpack.c.bf16 %v2225, %v2224
        %v2238 = vld [vmem:[#allocation10] sm:$0xff]
        %v2239 = vld [vmem:[#allocation10 + $0x8] sm:$0xff]
        %v2240 = vld [vmem:[#allocation10 + $0x10] sm:$0xff]
        %v2241 = vld [vmem:[#allocation10 + $0x18] sm:$0xff]
        %v2242 = vld [vmem:[#allocation10 + $0x20] sm:$0xff]
        %v2243 = vld [vmem:[#allocation10 + $0x28] sm:$0xff]
        %v2244 = vld [vmem:[#allocation10 + $0x30] sm:$0xff]
        %v2245 = vld [vmem:[#allocation10 + $0x38] sm:$0xff]
        %v2246 = vld [vmem:[#allocation10 + $0x40] sm:$0xff]
        %v2247 = vld [vmem:[#allocation10 + $0x48] sm:$0xff]
        %v2248 = vld [vmem:[#allocation10 + $0x50] sm:$0xff]
        %v2249 = vld [vmem:[#allocation10 + $0x58] sm:$0xff]
        %v2250 = vld [vmem:[#allocation10 + $0x60] sm:$0xff]
        %v2251 = vld [vmem:[#allocation10 + $0x68] sm:$0xff]
        %v2252 = vld [vmem:[#allocation10 + $0x70] sm:$0xff]
        %v2253 = vld [vmem:[#allocation10 + $0x78] sm:$0xff]
        %v2254 = vld [vmem:[#allocation10 + $0x80] sm:$0xff]
        %v2255 = vld [vmem:[#allocation10 + $0x88] sm:$0xff]
        %v2256 = vld [vmem:[#allocation10 + $0x90] sm:$0xff]
        %v2257 = vld [vmem:[#allocation10 + $0x98] sm:$0xff]
        %v2258 = vld [vmem:[#allocation10 + $0xa0] sm:$0xff]
        %v2259 = vld [vmem:[#allocation10 + $0xa8] sm:$0xff]
        %v2260 = vld [vmem:[#allocation10 + $0xb0] sm:$0xff]
        %v2261 = vld [vmem:[#allocation10 + $0xb8] sm:$0xff]
        %v2262 = vld [vmem:[#allocation12] sm:$0x3]
        %v2264 = vlaneseq
        %v2265 = vshrl.u32 %v2264, 7
        %v2266 = vsub.s32 0, %v2265
        %v2267 = vrot.slane %v2262, %v2266
        %v2268 = vlaneseq
        %v2269 = vshrl.u32 %v2268, 7
        %v2270 = vsub.s32 1, %v2269
        %v2271 = vrot.slane %v2262, %v2270
        %v2298 = vunpack.c.l.b16 %v2238
        %v2299 = vunpack.c.h.b16 %v2238
        %v2300 = vunpack.c.l.b16 %v2239
        %v2301 = vunpack.c.h.b16 %v2239
        %v2302 = vunpack.c.l.b16 %v2240
        %v2303 = vunpack.c.h.b16 %v2240
        %v2304 = vunpack.c.l.b16 %v2241
        %v2305 = vunpack.c.h.b16 %v2241
        %v2306 = vunpack.c.l.b16 %v2242
        %v2307 = vunpack.c.h.b16 %v2242
        %v2308 = vunpack.c.l.b16 %v2243
        %v2309 = vunpack.c.h.b16 %v2243
        %v2310 = vunpack.c.l.b16 %v2244
        %v2311 = vunpack.c.h.b16 %v2244
        %v2312 = vunpack.c.l.b16 %v2245
        %v2313 = vunpack.c.h.b16 %v2245
        %v2314 = vunpack.c.l.b16 %v2246
        %v2315 = vunpack.c.h.b16 %v2246
        %v2316 = vunpack.c.l.b16 %v2247
        %v2317 = vunpack.c.h.b16 %v2247
        %v2318 = vunpack.c.l.b16 %v2248
        %v2319 = vunpack.c.h.b16 %v2248
        %v2320 = vunpack.c.l.b16 %v2249
        %v2321 = vunpack.c.h.b16 %v2249
        %v2322 = vunpack.c.l.b16 %v2250
        %v2323 = vunpack.c.h.b16 %v2250
        %v2324 = vunpack.c.l.b16 %v2251
        %v2325 = vunpack.c.h.b16 %v2251
        %v2326 = vunpack.c.l.b16 %v2252
        %v2327 = vunpack.c.h.b16 %v2252
        %v2328 = vunpack.c.l.b16 %v2253
        %v2329 = vunpack.c.h.b16 %v2253
        %v2330 = vunpack.c.l.b16 %v2254
        %v2331 = vunpack.c.h.b16 %v2254
        %v2332 = vunpack.c.l.b16 %v2255
        %v2333 = vunpack.c.h.b16 %v2255
        %v2334 = vunpack.c.l.b16 %v2256
        %v2335 = vunpack.c.h.b16 %v2256
        %v2336 = vunpack.c.l.b16 %v2257
        %v2337 = vunpack.c.h.b16 %v2257
        %v2338 = vunpack.c.l.b16 %v2258
        %v2339 = vunpack.c.h.b16 %v2258
        %v2340 = vunpack.c.l.b16 %v2259
        %v2341 = vunpack.c.h.b16 %v2259
        %v2342 = vunpack.c.l.b16 %v2260
        %v2343 = vunpack.c.h.b16 %v2260
        %v2344 = vunpack.c.l.b16 %v2261
        %v2345 = vunpack.c.h.b16 %v2261
        %v2346 = vpack.c.b16 %v2300, %v2298
        %v2347 = vpack.c.b16 %v2301, %v2299
        %v2348 = vpack.c.b16 %v2304, %v2302
        %v2349 = vpack.c.b16 %v2305, %v2303
        %v2350 = vpack.c.b16 %v2308, %v2306
        %v2351 = vpack.c.b16 %v2309, %v2307
        %v2352 = vpack.c.b16 %v2312, %v2310
        %v2353 = vpack.c.b16 %v2313, %v2311
        %v2354 = vpack.c.b16 %v2316, %v2314
        %v2355 = vpack.c.b16 %v2317, %v2315
        %v2356 = vpack.c.b16 %v2320, %v2318
        %v2357 = vpack.c.b16 %v2321, %v2319
        %v2358 = vpack.c.b16 %v2324, %v2322
        %v2359 = vpack.c.b16 %v2325, %v2323
        %v2360 = vpack.c.b16 %v2328, %v2326
        %v2361 = vpack.c.b16 %v2329, %v2327
        %v2362 = vpack.c.b16 %v2332, %v2330
        %v2363 = vpack.c.b16 %v2333, %v2331
        %v2364 = vpack.c.b16 %v2336, %v2334
        %v2365 = vpack.c.b16 %v2337, %v2335
        %v2366 = vpack.c.b16 %v2340, %v2338
        %v2367 = vpack.c.b16 %v2341, %v2339
        %v2368 = vpack.c.b16 %v2344, %v2342
        %v2369 = vpack.c.b16 %v2345, %v2343
        %v2395 = vsel %vm1720, %v2237, 0
        %2397 = vmatprep.subr.bf16.mxu0 %v2347
        %2398 = vmatpush1.bf16.msra.mxu0 %v2346
        %2399 = vmatprep.subr.bf16.mxu0 %v2349
        %2400 = vmatpush1.bf16.msra.mxu0 %v2348
        %2401 = vmatprep.subr.bf16.mxu0 %v2351
        %2402 = vmatpush1.bf16.msra.mxu0 %v2350
        %2403 = vmatprep.subr.bf16.mxu0 %v2353
        %2404 = vmatpush1.bf16.msra.mxu0 %v2352
        %2405 = vmatprep.subr.bf16.mxu0 %v2355
        %2406 = vmatpush1.bf16.msra.mxu0 %v2354
        %2407 = vmatprep.subr.bf16.mxu0 %v2357
        %2408 = vmatpush1.bf16.msra.mxu0 %v2356
        %2409 = vmatprep.subr.bf16.mxu0 %v2359
        %2410 = vmatpush1.bf16.msra.mxu0 %v2358
        %2411 = vmatprep.subr.bf16.mxu0 %v2361
        %2412 = vmatpush1.bf16.msra.mxu0 %v2360
        %2413 = vmatprep.subr.bf16.mxu0 %v2363
        %2414 = vmatpush1.bf16.msra.mxu0 %v2362
        %2415 = vmatprep.subr.bf16.mxu0 %v2365
        %2416 = vmatpush1.bf16.msra.mxu0 %v2364
        %2417 = vmatprep.subr.bf16.mxu0 %v2367
        %2418 = vmatpush1.bf16.msra.mxu0 %v2366
        %2419 = vmatprep.subr.bf16.mxu0 %v2369
        %2420 = vmatpush1.bf16.msra.mxu0 %v2368
        %2421 = vmatprep.subr.bf16.mxu0 0
        %2422 = vmatpush1.bf16.msra.mxu0 0
        %2423 = vmatprep.subr.bf16.mxu0 0
        %2424 = vmatpush1.bf16.msra.mxu0 0
        %2425 = vmatprep.subr.bf16.mxu0 0
        %2426 = vmatpush1.bf16.msra.mxu0 0
        %2427 = vmatprep.subr.bf16.mxu0 0
        %2428 = vmatpush1.bf16.msra.mxu0 0
        %2429 = vmatprep.mubr.bf16.mxu0 %v2395
        %2430 = vmatmul.mubr.bf16.gmra.mrb[0].mxu0 %v2236
        %v2431 = vpop.f32.mrb[0].mxu0
        %v2432 = vadd.f32 %v2267, %v2431
        %v2433 = vpop.f32.mrb[0].mxu0
        %v2434 = vadd.f32 %v2271, %v2433
        %v2435 = vpop.f32.mrb[0].mxu0
        %v2436 = vadd.f32 %v2267, %v2435
        %v2437 = vpop.f32.mrb[0].mxu0
        %v2438 = vadd.f32 %v2271, %v2437
        %2439 = vdwg.mxu0
        %v2440 = vxor.u32 %v2432, 2147483648
        %v2441 = vxor.u32 %v2436, 2147483648
        %v2442 = vmul.f32 %v2440, 1.442695
        %v2443 = vpow.pop %v2442
        %v2444 = vmul.f32 %v2441, 1.442695
        %v2445 = vpow.pop %v2444
        %v2446 = vadd.f32 %v2443, 1.0
        %v2447 = vadd.f32 %v2445, 1.0
        %v2448 = vrcp.pop %v2446
        %v2449 = vmul.f32 1.0, %v2448
        %v2450 = vrcp.pop %v2447
        %v2451 = vmul.f32 1.0, %v2450
        %v2452 = vmul.f32 %v2432, %v2449
        %v2453 = vmul.f32 %v2436, %v2451
        %v2454 = vrot.slane %v2452, 4
        %v2455 = vrot.slane %v2453, 4
        %v2456 = vsel %vm1475, %v2454, %v2455
        %v2457 = vsel %vm1475, %v2455, %v2454
        %v2458 = vsel %vm2216, 0.0, %v2457
        %v2459 = vsel %vm2217, 0.0, %v2456
        %v2460 = vsel %vm2222, 0.0, %v2456
        %v2461 = vsel %vm2223, 0.0, %v2457
        %v2462 = vpack.c.bf16 %v2459, %v2458
        %v2463 = vpack.c.bf16 %v2453, %v2452
        %v2464 = vpack.c.bf16 %v2461, %v2460
        %v2465 = vld [vmem:[#allocation13] sm:$0xf]
        %v2466 = vld [vmem:[#allocation13 + $0x4] sm:$0xf]
        %v2467 = vld [vmem:[#allocation13 + $0x8] sm:$0xf]
        %v2468 = vld [vmem:[#allocation13 + $0xc] sm:$0xf]
        %v2469 = vld [vmem:[#allocation13 + $0x10] sm:$0xf]
        %v2470 = vld [vmem:[#allocation13 + $0x14] sm:$0xf]
        %v2471 = vld [vmem:[#allocation13 + $0x18] sm:$0xf]
        %v2472 = vld [vmem:[#allocation13 + $0x1c] sm:$0xf]
        %v2473 = vld [vmem:[#allocation13 + $0x20] sm:$0xf]
        %v2474 = vld [vmem:[#allocation13 + $0x24] sm:$0xf]
        %v2475 = vld [vmem:[#allocation13 + $0x28] sm:$0xf]
        %v2476 = vld [vmem:[#allocation13 + $0x2c] sm:$0xf]
        %v2477 = vld [vmem:[#allocation13 + $0x30] sm:$0xf]
        %v2478 = vld [vmem:[#allocation13 + $0x34] sm:$0xf]
        %v2479 = vld [vmem:[#allocation13 + $0x38] sm:$0xf]
        %v2480 = vld [vmem:[#allocation13 + $0x3c] sm:$0xf]
        %v2481 = vld [vmem:[#allocation13 + $0x40] sm:$0xf]
        %v2482 = vld [vmem:[#allocation13 + $0x44] sm:$0xf]
        %v2483 = vld [vmem:[#allocation13 + $0x48] sm:$0xf]
        %v2484 = vld [vmem:[#allocation13 + $0x4c] sm:$0xf]
        %v2485 = vld [vmem:[#allocation13 + $0x50] sm:$0xf]
        %v2486 = vld [vmem:[#allocation13 + $0x54] sm:$0xf]
        %v2487 = vld [vmem:[#allocation13 + $0x58] sm:$0xf]
        %v2488 = vld [vmem:[#allocation13 + $0x5c] sm:$0xf]
        %v2489 = vld [vmem:[#allocation13 + $0x60] sm:$0xf]
        %v2490 = vld [vmem:[#allocation13 + $0x64] sm:$0xf]
        %v2491 = vld [vmem:[#allocation13 + $0x68] sm:$0xf]
        %v2492 = vld [vmem:[#allocation13 + $0x6c] sm:$0xf]
        %v2493 = vld [vmem:[#allocation13 + $0x70] sm:$0xf]
        %v2494 = vld [vmem:[#allocation13 + $0x74] sm:$0xf]
        %v2495 = vld [vmem:[#allocation13 + $0x78] sm:$0xf]
        %v2496 = vld [vmem:[#allocation13 + $0x7c] sm:$0xf]
        %v2497 = vld [vmem:[#allocation13 + $0x80] sm:$0xf]
        %v2498 = vld [vmem:[#allocation13 + $0x84] sm:$0xf]
        %v2499 = vld [vmem:[#allocation13 + $0x88] sm:$0xf]
        %v2500 = vld [vmem:[#allocation13 + $0x8c] sm:$0xf]
        %v2501 = vld [vmem:[#allocation13 + $0x90] sm:$0xf]
        %v2502 = vld [vmem:[#allocation13 + $0x94] sm:$0xf]
        %v2503 = vld [vmem:[#allocation13 + $0x98] sm:$0xf]
        %v2504 = vld [vmem:[#allocation13 + $0x9c] sm:$0xf]
        %v2505 = vld [vmem:[#allocation13 + $0xa0] sm:$0xf]
        %v2506 = vld [vmem:[#allocation13 + $0xa4] sm:$0xf]
        %v2507 = vld [vmem:[#allocation13 + $0xa8] sm:$0xf]
        %v2508 = vld [vmem:[#allocation13 + $0xac] sm:$0xf]
        %v2509 = vld [vmem:[#allocation13 + $0xb0] sm:$0xf]
        %v2510 = vld [vmem:[#allocation13 + $0xb4] sm:$0xf]
        %v2511 = vld [vmem:[#allocation13 + $0xb8] sm:$0xf]
        %v2512 = vld [vmem:[#allocation13 + $0xbc] sm:$0xf]
        %v2513 = vld [vmem:[#allocation15] sm:$0x1]
        %v2515 = vlaneseq
        %v2516 = vshrl.u32 %v2515, 7
        %v2517 = vsub.s32 0, %v2516
        %v2518 = vrot.slane %v2513, %v2517
        %v2568 = vunpack.c.l.b16 %v2465
        %v2569 = vunpack.c.l.b16 %v2466
        %v2570 = vunpack.c.l.b16 %v2467
        %v2571 = vunpack.c.l.b16 %v2468
        %v2572 = vunpack.c.l.b16 %v2469
        %v2573 = vunpack.c.l.b16 %v2470
        %v2574 = vunpack.c.l.b16 %v2471
        %v2575 = vunpack.c.l.b16 %v2472
        %v2576 = vunpack.c.l.b16 %v2473
        %v2577 = vunpack.c.l.b16 %v2474
        %v2578 = vunpack.c.l.b16 %v2475
        %v2579 = vunpack.c.l.b16 %v2476
        %v2580 = vunpack.c.l.b16 %v2477
        %v2581 = vunpack.c.l.b16 %v2478
        %v2582 = vunpack.c.l.b16 %v2479
        %v2583 = vunpack.c.l.b16 %v2480
        %v2584 = vunpack.c.l.b16 %v2481
        %v2585 = vunpack.c.l.b16 %v2482
        %v2586 = vunpack.c.l.b16 %v2483
        %v2587 = vunpack.c.l.b16 %v2484
        %v2588 = vunpack.c.l.b16 %v2485
        %v2589 = vunpack.c.l.b16 %v2486
        %v2590 = vunpack.c.l.b16 %v2487
        %v2591 = vunpack.c.l.b16 %v2488
        %v2592 = vunpack.c.l.b16 %v2489
        %v2593 = vunpack.c.l.b16 %v2490
        %v2594 = vunpack.c.l.b16 %v2491
        %v2595 = vunpack.c.l.b16 %v2492
        %v2596 = vunpack.c.l.b16 %v2493
        %v2597 = vunpack.c.l.b16 %v2494
        %v2598 = vunpack.c.l.b16 %v2495
        %v2599 = vunpack.c.l.b16 %v2496
        %v2600 = vunpack.c.l.b16 %v2497
        %v2601 = vunpack.c.l.b16 %v2498
        %v2602 = vunpack.c.l.b16 %v2499
        %v2603 = vunpack.c.l.b16 %v2500
        %v2604 = vunpack.c.l.b16 %v2501
        %v2605 = vunpack.c.l.b16 %v2502
        %v2606 = vunpack.c.l.b16 %v2503
        %v2607 = vunpack.c.l.b16 %v2504
        %v2608 = vunpack.c.l.b16 %v2505
        %v2609 = vunpack.c.l.b16 %v2506
        %v2610 = vunpack.c.l.b16 %v2507
        %v2611 = vunpack.c.l.b16 %v2508
        %v2612 = vunpack.c.l.b16 %v2509
        %v2613 = vunpack.c.l.b16 %v2510
        %v2614 = vunpack.c.l.b16 %v2511
        %v2615 = vunpack.c.l.b16 %v2512
        %v2616 = vpack.c.b16 %v2569, %v2568
        %v2617 = vpack.c.b16 %v2571, %v2570
        %v2618 = vpack.c.b16 %v2573, %v2572
        %v2619 = vpack.c.b16 %v2575, %v2574
        %v2620 = vpack.c.b16 %v2577, %v2576
        %v2621 = vpack.c.b16 %v2579, %v2578
        %v2622 = vpack.c.b16 %v2581, %v2580
        %v2623 = vpack.c.b16 %v2583, %v2582
        %v2624 = vpack.c.b16 %v2585, %v2584
        %v2625 = vpack.c.b16 %v2587, %v2586
        %v2626 = vpack.c.b16 %v2589, %v2588
        %v2627 = vpack.c.b16 %v2591, %v2590
        %v2628 = vpack.c.b16 %v2593, %v2592
        %v2629 = vpack.c.b16 %v2595, %v2594
        %v2630 = vpack.c.b16 %v2597, %v2596
        %v2631 = vpack.c.b16 %v2599, %v2598
        %v2632 = vpack.c.b16 %v2601, %v2600
        %v2633 = vpack.c.b16 %v2603, %v2602
        %v2634 = vpack.c.b16 %v2605, %v2604
        %v2635 = vpack.c.b16 %v2607, %v2606
        %v2636 = vpack.c.b16 %v2609, %v2608
        %v2637 = vpack.c.b16 %v2611, %v2610
        %v2638 = vpack.c.b16 %v2613, %v2612
        %v2639 = vpack.c.b16 %v2615, %v2614
        %2664 = vmatprep.subr.bf16.mxu0 0
        %2665 = vmatpush1.bf16.msra.mxu0 %v2616
        %2666 = vmatprep.subr.bf16.mxu0 0
        %2667 = vmatpush1.bf16.msra.mxu0 %v2617
        %2668 = vmatprep.subr.bf16.mxu0 0
        %2669 = vmatpush1.bf16.msra.mxu0 %v2618
        %2670 = vmatprep.subr.bf16.mxu0 0
        %2671 = vmatpush1.bf16.msra.mxu0 %v2619
        %2672 = vmatprep.subr.bf16.mxu0 0
        %2673 = vmatpush1.bf16.msra.mxu0 %v2620
        %2674 = vmatprep.subr.bf16.mxu0 0
        %2675 = vmatpush1.bf16.msra.mxu0 %v2621
        %2676 = vmatprep.subr.bf16.mxu0 0
        %2677 = vmatpush1.bf16.msra.mxu0 %v2622
        %2678 = vmatprep.subr.bf16.mxu0 0
        %2679 = vmatpush1.bf16.msra.mxu0 %v2623
        %2680 = vmatprep.subr.bf16.mxu0 0
        %2681 = vmatpush1.bf16.msra.mxu0 %v2624
        %2682 = vmatprep.subr.bf16.mxu0 0
        %2683 = vmatpush1.bf16.msra.mxu0 %v2625
        %2684 = vmatprep.subr.bf16.mxu0 0
        %2685 = vmatpush1.bf16.msra.mxu0 %v2626
        %2686 = vmatprep.subr.bf16.mxu0 0
        %2687 = vmatpush1.bf16.msra.mxu0 %v2627
        %2688 = vmatprep.subr.bf16.mxu0 0
        %2689 = vmatpush1.bf16.msra.mxu0 %v2628
        %2690 = vmatprep.subr.bf16.mxu0 0
        %2691 = vmatpush1.bf16.msra.mxu0 %v2629
        %2692 = vmatprep.subr.bf16.mxu0 0
        %2693 = vmatpush1.bf16.msra.mxu0 %v2630
        %2694 = vmatprep.subr.bf16.mxu0 0
        %2695 = vmatpush1.bf16.msra.mxu0 %v2631
        %2696 = vmatprep.mubr.bf16.mxu0 %v2463
        %2697 = vmatmul.mubr.bf16.gmra.mrb[0].mxu0 %v2462
        %v2698 = vpop.f32.mrb[0].mxu0
        %v2699 = vadd.f32 %v2518, %v2698
        %v2700 = vpop.f32.mrb[0].mxu0
        %v2701 = vpop.f32.mrb[0].mxu0
        %v2702 = vadd.f32 %v2518, %v2701
        %v2703 = vpop.f32.mrb[0].mxu0
        %2704 = vdwg.mxu0
        %2705 = vmatprep.subr.bf16.mxu0 0
        %2706 = vmatpush1.bf16.msra.mxu0 %v2632
        %2707 = vmatprep.subr.bf16.mxu0 0
        %2708 = vmatpush1.bf16.msra.mxu0 %v2633
        %2709 = vmatprep.subr.bf16.mxu0 0
        %2710 = vmatpush1.bf16.msra.mxu0 %v2634
        %2711 = vmatprep.subr.bf16.mxu0 0
        %2712 = vmatpush1.bf16.msra.mxu0 %v2635
        %2713 = vmatprep.subr.bf16.mxu0 0
        %2714 = vmatpush1.bf16.msra.mxu0 %v2636
        %2715 = vmatprep.subr.bf16.mxu0 0
        %2716 = vmatpush1.bf16.msra.mxu0 %v2637
        %2717 = vmatprep.subr.bf16.mxu0 0
        %2718 = vmatpush1.bf16.msra.mxu0 %v2638
        %2719 = vmatprep.subr.bf16.mxu0 0
        %2720 = vmatpush1.bf16.msra.mxu0 %v2639
        %2721 = vmatprep.subr.bf16.mxu0 0
        %2722 = vmatpush1.bf16.msra.mxu0 0
        %2723 = vmatprep.subr.bf16.mxu0 0
        %2724 = vmatpush1.bf16.msra.mxu0 0
        %2725 = vmatprep.subr.bf16.mxu0 0
        %2726 = vmatpush1.bf16.msra.mxu0 0
        %2727 = vmatprep.subr.bf16.mxu0 0
        %2728 = vmatpush1.bf16.msra.mxu0 0
        %2729 = vmatprep.subr.bf16.mxu0 0
        %2730 = vmatpush1.bf16.msra.mxu0 0
        %2731 = vmatprep.subr.bf16.mxu0 0
        %2732 = vmatpush1.bf16.msra.mxu0 0
        %2733 = vmatprep.subr.bf16.mxu0 0
        %2734 = vmatpush1.bf16.msra.mxu0 0
        %2735 = vmatprep.subr.bf16.mxu0 0
        %2736 = vmatpush1.bf16.msra.mxu0 0
        %2737 = vmatprep.mubr.bf16.mxu0 0
        %2738 = vmatmul.mubr.bf16.gmra.mrb[0].mxu0 %v2464
        %v2739 = vpop.f32.mrb[0].mxu0
        %v2740 = vadd.f32 %v2699, %v2739
        %v2741 = vpop.f32.mrb[0].mxu0
        %v2742 = vpop.f32.mrb[0].mxu0
        %v2743 = vadd.f32 %v2702, %v2742
        %v2744 = vpop.f32.mrb[0].mxu0
        %2745 = vdwg.mxu0
        %v2746 = vxor.u32 %v2740, 2147483648
        %v2747 = vxor.u32 %v2743, 2147483648
        %v2748 = vmul.f32 %v2746, 1.442695
        %v2749 = vpow.pop %v2748
        %v2750 = vmul.f32 %v2747, 1.442695
        %v2751 = vpow.pop %v2750
        %v2752 = vadd.f32 %v2749, 1.0
        %v2753 = vadd.f32 %v2751, 1.0
        %v2754 = vrcp.pop %v2752
        %v2755 = vmul.f32 1.0, %v2754
        %v2756 = vrcp.pop %v2753
        %v2757 = vmul.f32 1.0, %v2756
        %v2758 = vmul.f32 %v2740, %v2755
        %v2759 = vmul.f32 %v2743, %v2757
        %v2760 = vadd.f32 %v2758, %v2434
        %v2761 = vadd.f32 %v2759, %v2438
        %v2762 = vrot.slane %v2760, 4
        %v2763 = vrot.slane %v2761, 4
        %v2764 = vsel %vm1475, %v2762, %v2763
        %v2765 = vsel %vm1475, %v2763, %v2762
        %v2766 = vmax.f32 %v2760, %v2764
        %v2767 = vmax.f32 %v2761, %v2765
        %v2768 = vsel %vm1477, 1, 0
        %v2769 = vsel %vm1478, 1, 0
        %vm2770 = vcmp.eq.s32.totalorder %v2768, 1
        %vm2771 = vcmp.eq.s32.totalorder %v2769, 1
        %v2772 = vsel %vm2770, 0.0, %v2767
        %v2773 = vsel %vm2771, 0.0, %v2766
        %v2774 = vsel %vm1485, 1, 0
        %v2775 = vsel %vm1486, 1, 0
        %vm2776 = vcmp.eq.s32.totalorder %v2774, 1
        %vm2777 = vcmp.eq.s32.totalorder %v2775, 1
        %v2778 = vsel %vm2776, 0.0, %v2767
        %v2779 = vsel %vm2777, 0.0, %v2766
        %v2780 = vpack.c.bf16 %v2773, %v2772
        %v2781 = vpack.c.bf16 %v2767, %v2766
        %v2782 = vpack.c.bf16 %v2779, %v2778
        %v2783 = vld [vmem:[%s27] sm:$0xff]
        %v2784 = vld [vmem:[%s27 + $0x8] sm:$0xff]
        %v2785 = vld [vmem:[%s27 + $0x10] sm:$0xff]
        %v2786 = vld [vmem:[%s27 + $0x18] sm:$0xff]
        %v2787 = vld [vmem:[%s27 + $0x20] sm:$0xff]
        %v2788 = vld [vmem:[%s27 + $0x28] sm:$0xff]
        %v2789 = vld [vmem:[%s27 + $0x30] sm:$0xff]
        %v2790 = vld [vmem:[%s27 + $0x38] sm:$0xff]
        %v2791 = vld [vmem:[%s27 + $0x40] sm:$0xff]
        %v2792 = vld [vmem:[%s27 + $0x48] sm:$0xff]
        %v2793 = vld [vmem:[%s27 + $0x50] sm:$0xff]
        %v2794 = vld [vmem:[%s27 + $0x58] sm:$0xff]
        %v2795 = vld [vmem:[%s27 + $0x60] sm:$0xff]
        %v2796 = vld [vmem:[%s27 + $0x68] sm:$0xff]
        %v2797 = vld [vmem:[%s27 + $0x70] sm:$0xff]
        %v2798 = vld [vmem:[%s27 + $0x78] sm:$0xff]
        %v2799 = vld [vmem:[%s27 + $0x80] sm:$0xff]
        %v2800 = vld [vmem:[%s27 + $0x88] sm:$0xff]
        %v2801 = vld [vmem:[%s27 + $0x90] sm:$0xff]
        %v2802 = vld [vmem:[%s27 + $0x98] sm:$0xff]
        %v2803 = vld [vmem:[%s27 + $0xa0] sm:$0xff]
        %v2804 = vld [vmem:[%s27 + $0xa8] sm:$0xff]
        %v2805 = vld [vmem:[%s27 + $0xb0] sm:$0xff]
        %v2806 = vld [vmem:[%s27 + $0xb8] sm:$0xff]
        %v2807 = vld [vmem:[%s27 + $0xc0] sm:$0xff]
        %v2808 = vld [vmem:[%s27 + $0xc8] sm:$0xff]
        %v2809 = vld [vmem:[%s27 + $0xd0] sm:$0xff]
        %v2810 = vld [vmem:[%s27 + $0xd8] sm:$0xff]
        %v2811 = vld [vmem:[%s27 + $0xe0] sm:$0xff]
        %v2812 = vld [vmem:[%s27 + $0xe8] sm:$0xff]
        %v2813 = vld [vmem:[%s27 + $0xf0] sm:$0xff]
        %v2814 = vld [vmem:[%s27 + $0xf8] sm:$0xff]
        %v2815 = vld [vmem:[%s27 + $0x100] sm:$0xff]
        %v2816 = vld [vmem:[%s27 + $0x108] sm:$0xff]
        %v2817 = vld [vmem:[%s27 + $0x110] sm:$0xff]
        %v2818 = vld [vmem:[%s27 + $0x118] sm:$0xff]
        %v2819 = vld [vmem:[%s27 + $0x120] sm:$0xff]
        %v2820 = vld [vmem:[%s27 + $0x128] sm:$0xff]
        %v2821 = vld [vmem:[%s27 + $0x130] sm:$0xff]
        %v2822 = vld [vmem:[%s27 + $0x138] sm:$0xff]
        %v2823 = vld [vmem:[%s27 + $0x140] sm:$0xff]
        %v2824 = vld [vmem:[%s27 + $0x148] sm:$0xff]
        %v2825 = vld [vmem:[%s27 + $0x150] sm:$0xff]
        %v2826 = vld [vmem:[%s27 + $0x158] sm:$0xff]
        %v2827 = vld [vmem:[%s27 + $0x160] sm:$0xff]
        %v2828 = vld [vmem:[%s27 + $0x168] sm:$0xff]
        %v2829 = vld [vmem:[%s27 + $0x170] sm:$0xff]
        %v2830 = vld [vmem:[%s27 + $0x178] sm:$0xff]
        %v2831 = vld [vmem:[%s27 + $0x180] sm:$0xff]
        %v2832 = vld [vmem:[%s27 + $0x188] sm:$0xff]
        %v2833 = vld [vmem:[%s27 + $0x190] sm:$0xff]
        %v2834 = vld [vmem:[%s27 + $0x198] sm:$0xff]
        %v2835 = vld [vmem:[%s27 + $0x1a0] sm:$0xff]
        %v2836 = vld [vmem:[%s27 + $0x1a8] sm:$0xff]
        %v2837 = vld [vmem:[%s27 + $0x1b0] sm:$0xff]
        %v2838 = vld [vmem:[%s27 + $0x1b8] sm:$0xff]
        %v2839 = vld [vmem:[%s27 + $0x1c0] sm:$0xff]
        %v2840 = vld [vmem:[%s27 + $0x1c8] sm:$0xff]
        %v2841 = vld [vmem:[%s27 + $0x1d0] sm:$0xff]
        %v2842 = vld [vmem:[%s27 + $0x1d8] sm:$0xff]
        %v2843 = vld [vmem:[%s27 + $0x1e0] sm:$0xff]
        %v2844 = vld [vmem:[%s27 + $0x1e8] sm:$0xff]
        %v2845 = vld [vmem:[%s27 + $0x1f0] sm:$0xff]
        %v2846 = vld [vmem:[%s27 + $0x1f8] sm:$0xff]
        %v2847 = vld [vmem:[%s27 + $0x200] sm:$0xff]
        %v2848 = vld [vmem:[%s27 + $0x208] sm:$0xff]
        %v2849 = vld [vmem:[%s27 + $0x210] sm:$0xff]
        %v2850 = vld [vmem:[%s27 + $0x218] sm:$0xff]
        %v2851 = vld [vmem:[%s27 + $0x220] sm:$0xff]
        %v2852 = vld [vmem:[%s27 + $0x228] sm:$0xff]
        %v2853 = vld [vmem:[%s27 + $0x230] sm:$0xff]
        %v2854 = vld [vmem:[%s27 + $0x238] sm:$0xff]
        %v2855 = vld [vmem:[%s27 + $0x240] sm:$0xff]
        %v2856 = vld [vmem:[%s27 + $0x248] sm:$0xff]
        %v2857 = vld [vmem:[%s27 + $0x250] sm:$0xff]
        %v2858 = vld [vmem:[%s27 + $0x258] sm:$0xff]
        %v2859 = vld [vmem:[%s27 + $0x260] sm:$0xff]
        %v2860 = vld [vmem:[%s27 + $0x268] sm:$0xff]
        %v2861 = vld [vmem:[%s27 + $0x270] sm:$0xff]
        %v2862 = vld [vmem:[%s27 + $0x278] sm:$0xff]
        %v2863 = vld [vmem:[%s27 + $0x280] sm:$0xff]
        %v2864 = vld [vmem:[%s27 + $0x288] sm:$0xff]
        %v2865 = vld [vmem:[%s27 + $0x290] sm:$0xff]
        %v2866 = vld [vmem:[%s27 + $0x298] sm:$0xff]
        %v2867 = vld [vmem:[%s27 + $0x2a0] sm:$0xff]
        %v2868 = vld [vmem:[%s27 + $0x2a8] sm:$0xff]
        %v2869 = vld [vmem:[%s27 + $0x2b0] sm:$0xff]
        %v2870 = vld [vmem:[%s27 + $0x2b8] sm:$0xff]
        %v2871 = vld [vmem:[%s27 + $0x2c0] sm:$0xff]
        %v2872 = vld [vmem:[%s27 + $0x2c8] sm:$0xff]
        %v2873 = vld [vmem:[%s27 + $0x2d0] sm:$0xff]
        %v2874 = vld [vmem:[%s27 + $0x2d8] sm:$0xff]
        %v2875 = vld [vmem:[%s27 + $0x2e0] sm:$0xff]
        %v2876 = vld [vmem:[%s27 + $0x2e8] sm:$0xff]
        %v2877 = vld [vmem:[%s27 + $0x2f0] sm:$0xff]
        %v2878 = vld [vmem:[%s27 + $0x2f8] sm:$0xff]
        %v2879 = vld [vmem:[#allocation16] sm:$0xf]
        %v2881 = vlaneseq
        %v2882 = vshrl.u32 %v2881, 7
        %v2883 = vsub.s32 0, %v2882
        %v2884 = vrot.slane %v2879, %v2883
        %v2885 = vlaneseq
        %v2886 = vshrl.u32 %v2885, 7
        %v2887 = vsub.s32 1, %v2886
        %v2888 = vrot.slane %v2879, %v2887
        %v2889 = vlaneseq
        %v2890 = vshrl.u32 %v2889, 7
        %v2891 = vsub.s32 2, %v2890
        %v2892 = vrot.slane %v2879, %v2891
        %v2893 = vlaneseq
        %v2894 = vshrl.u32 %v2893, 7
        %v2895 = vsub.s32 3, %v2894
        %v2896 = vrot.slane %v2879, %v2895
        %v2997 = vunpack.c.l.b16 %v2783
        %v2998 = vunpack.c.h.b16 %v2783
        %v2999 = vunpack.c.l.b16 %v2784
        %v3000 = vunpack.c.h.b16 %v2784
        %v3001 = vunpack.c.l.b16 %v2785
        %v3002 = vunpack.c.h.b16 %v2785
        %v3003 = vunpack.c.l.b16 %v2786
        %v3004 = vunpack.c.h.b16 %v2786
        %v3005 = vunpack.c.l.b16 %v2787
        %v3006 = vunpack.c.h.b16 %v2787
        %v3007 = vunpack.c.l.b16 %v2788
        %v3008 = vunpack.c.h.b16 %v2788
        %v3009 = vunpack.c.l.b16 %v2789
        %v3010 = vunpack.c.h.b16 %v2789
        %v3011 = vunpack.c.l.b16 %v2790
        %v3012 = vunpack.c.h.b16 %v2790
        %v3013 = vunpack.c.l.b16 %v2791
        %v3014 = vunpack.c.h.b16 %v2791
        %v3015 = vunpack.c.l.b16 %v2792
        %v3016 = vunpack.c.h.b16 %v2792
        %v3017 = vunpack.c.l.b16 %v2793
        %v3018 = vunpack.c.h.b16 %v2793
        %v3019 = vunpack.c.l.b16 %v2794
        %v3020 = vunpack.c.h.b16 %v2794
        %v3021 = vunpack.c.l.b16 %v2795
        %v3022 = vunpack.c.h.b16 %v2795
        %v3023 = vunpack.c.l.b16 %v2796
        %v3024 = vunpack.c.h.b16 %v2796
        %v3025 = vunpack.c.l.b16 %v2797
        %v3026 = vunpack.c.h.b16 %v2797
        %v3027 = vunpack.c.l.b16 %v2798
        %v3028 = vunpack.c.h.b16 %v2798
        %v3029 = vunpack.c.l.b16 %v2799
        %v3030 = vunpack.c.h.b16 %v2799
        %v3031 = vunpack.c.l.b16 %v2800
        %v3032 = vunpack.c.h.b16 %v2800
        %v3033 = vunpack.c.l.b16 %v2801
        %v3034 = vunpack.c.h.b16 %v2801
        %v3035 = vunpack.c.l.b16 %v2802
        %v3036 = vunpack.c.h.b16 %v2802
        %v3037 = vunpack.c.l.b16 %v2803
        %v3038 = vunpack.c.h.b16 %v2803
        %v3039 = vunpack.c.l.b16 %v2804
        %v3040 = vunpack.c.h.b16 %v2804
        %v3041 = vunpack.c.l.b16 %v2805
        %v3042 = vunpack.c.h.b16 %v2805
        %v3043 = vunpack.c.l.b16 %v2806
        %v3044 = vunpack.c.h.b16 %v2806
        %v3045 = vunpack.c.l.b16 %v2807
        %v3046 = vunpack.c.h.b16 %v2807
        %v3047 = vunpack.c.l.b16 %v2808
        %v3048 = vunpack.c.h.b16 %v2808
        %v3049 = vunpack.c.l.b16 %v2809
        %v3050 = vunpack.c.h.b16 %v2809
        %v3051 = vunpack.c.l.b16 %v2810
        %v3052 = vunpack.c.h.b16 %v2810
        %v3053 = vunpack.c.l.b16 %v2811
        %v3054 = vunpack.c.h.b16 %v2811
        %v3055 = vunpack.c.l.b16 %v2812
        %v3056 = vunpack.c.h.b16 %v2812
        %v3057 = vunpack.c.l.b16 %v2813
        %v3058 = vunpack.c.h.b16 %v2813
        %v3059 = vunpack.c.l.b16 %v2814
        %v3060 = vunpack.c.h.b16 %v2814
        %v3061 = vunpack.c.l.b16 %v2815
        %v3062 = vunpack.c.h.b16 %v2815
        %v3063 = vunpack.c.l.b16 %v2816
        %v3064 = vunpack.c.h.b16 %v2816
        %v3065 = vunpack.c.l.b16 %v2817
        %v3066 = vunpack.c.h.b16 %v2817
        %v3067 = vunpack.c.l.b16 %v2818
        %v3068 = vunpack.c.h.b16 %v2818
        %v3069 = vunpack.c.l.b16 %v2819
        %v3070 = vunpack.c.h.b16 %v2819
        %v3071 = vunpack.c.l.b16 %v2820
        %v3072 = vunpack.c.h.b16 %v2820
        %v3073 = vunpack.c.l.b16 %v2821
        %v3074 = vunpack.c.h.b16 %v2821
        %v3075 = vunpack.c.l.b16 %v2822
        %v3076 = vunpack.c.h.b16 %v2822
        %v3077 = vunpack.c.l.b16 %v2823
        %v3078 = vunpack.c.h.b16 %v2823
        %v3079 = vunpack.c.l.b16 %v2824
        %v3080 = vunpack.c.h.b16 %v2824
        %v3081 = vunpack.c.l.b16 %v2825
        %v3082 = vunpack.c.h.b16 %v2825
        %v3083 = vunpack.c.l.b16 %v2826
        %v3084 = vunpack.c.h.b16 %v2826
        %v3085 = vunpack.c.l.b16 %v2827
        %v3086 = vunpack.c.h.b16 %v2827
        %v3087 = vunpack.c.l.b16 %v2828
        %v3088 = vunpack.c.h.b16 %v2828
        %v3089 = vunpack.c.l.b16 %v2829
        %v3090 = vunpack.c.h.b16 %v2829
        %v3091 = vunpack.c.l.b16 %v2830
        %v3092 = vunpack.c.h.b16 %v2830
        %v3093 = vunpack.c.l.b16 %v2831
        %v3094 = vunpack.c.h.b16 %v2831
        %v3095 = vunpack.c.l.b16 %v2832
        %v3096 = vunpack.c.h.b16 %v2832
        %v3097 = vunpack.c.l.b16 %v2833
        %v3098 = vunpack.c.h.b16 %v2833
        %v3099 = vunpack.c.l.b16 %v2834
        %v3100 = vunpack.c.h.b16 %v2834
        %v3101 = vunpack.c.l.b16 %v2835
        %v3102 = vunpack.c.h.b16 %v2835
        %v3103 = vunpack.c.l.b16 %v2836
        %v3104 = vunpack.c.h.b16 %v2836
        %v3105 = vunpack.c.l.b16 %v2837
        %v3106 = vunpack.c.h.b16 %v2837
        %v3107 = vunpack.c.l.b16 %v2838
        %v3108 = vunpack.c.h.b16 %v2838
        %v3109 = vunpack.c.l.b16 %v2839
        %v3110 = vunpack.c.h.b16 %v2839
        %v3111 = vunpack.c.l.b16 %v2840
        %v3112 = vunpack.c.h.b16 %v2840
        %v3113 = vunpack.c.l.b16 %v2841
        %v3114 = vunpack.c.h.b16 %v2841
        %v3115 = vunpack.c.l.b16 %v2842
        %v3116 = vunpack.c.h.b16 %v2842
        %v3117 = vunpack.c.l.b16 %v2843
        %v3118 = vunpack.c.h.b16 %v2843
        %v3119 = vunpack.c.l.b16 %v2844
        %v3120 = vunpack.c.h.b16 %v2844
        %v3121 = vunpack.c.l.b16 %v2845
        %v3122 = vunpack.c.h.b16 %v2845
        %v3123 = vunpack.c.l.b16 %v2846
        %v3124 = vunpack.c.h.b16 %v2846
        %v3125 = vunpack.c.l.b16 %v2847
        %v3126 = vunpack.c.h.b16 %v2847
        %v3127 = vunpack.c.l.b16 %v2848
        %v3128 = vunpack.c.h.b16 %v2848
        %v3129 = vunpack.c.l.b16 %v2849
        %v3130 = vunpack.c.h.b16 %v2849
        %v3131 = vunpack.c.l.b16 %v2850
        %v3132 = vunpack.c.h.b16 %v2850
        %v3133 = vunpack.c.l.b16 %v2851
        %v3134 = vunpack.c.h.b16 %v2851
        %v3135 = vunpack.c.l.b16 %v2852
        %v3136 = vunpack.c.h.b16 %v2852
        %v3137 = vunpack.c.l.b16 %v2853
        %v3138 = vunpack.c.h.b16 %v2853
        %v3139 = vunpack.c.l.b16 %v2854
        %v3140 = vunpack.c.h.b16 %v2854
        %v3141 = vunpack.c.l.b16 %v2855
        %v3142 = vunpack.c.h.b16 %v2855
        %v3143 = vunpack.c.l.b16 %v2856
        %v3144 = vunpack.c.h.b16 %v2856
        %v3145 = vunpack.c.l.b16 %v2857
        %v3146 = vunpack.c.h.b16 %v2857
        %v3147 = vunpack.c.l.b16 %v2858
        %v3148 = vunpack.c.h.b16 %v2858
        %v3149 = vunpack.c.l.b16 %v2859
        %v3150 = vunpack.c.h.b16 %v2859
        %v3151 = vunpack.c.l.b16 %v2860
        %v3152 = vunpack.c.h.b16 %v2860
        %v3153 = vunpack.c.l.b16 %v2861
        %v3154 = vunpack.c.h.b16 %v2861
        %v3155 = vunpack.c.l.b16 %v2862
        %v3156 = vunpack.c.h.b16 %v2862
        %v3157 = vunpack.c.l.b16 %v2863
        %v3158 = vunpack.c.h.b16 %v2863
        %v3159 = vunpack.c.l.b16 %v2864
        %v3160 = vunpack.c.h.b16 %v2864
        %v3161 = vunpack.c.l.b16 %v2865
        %v3162 = vunpack.c.h.b16 %v2865
        %v3163 = vunpack.c.l.b16 %v2866
        %v3164 = vunpack.c.h.b16 %v2866
        %v3165 = vunpack.c.l.b16 %v2867
        %v3166 = vunpack.c.h.b16 %v2867
        %v3167 = vunpack.c.l.b16 %v2868
        %v3168 = vunpack.c.h.b16 %v2868
        %v3169 = vunpack.c.l.b16 %v2869
        %v3170 = vunpack.c.h.b16 %v2869
        %v3171 = vunpack.c.l.b16 %v2870
        %v3172 = vunpack.c.h.b16 %v2870
        %v3173 = vunpack.c.l.b16 %v2871
        %v3174 = vunpack.c.h.b16 %v2871
        %v3175 = vunpack.c.l.b16 %v2872
        %v3176 = vunpack.c.h.b16 %v2872
        %v3177 = vunpack.c.l.b16 %v2873
        %v3178 = vunpack.c.h.b16 %v2873
        %v3179 = vunpack.c.l.b16 %v2874
        %v3180 = vunpack.c.h.b16 %v2874
        %v3181 = vunpack.c.l.b16 %v2875
        %v3182 = vunpack.c.h.b16 %v2875
        %v3183 = vunpack.c.l.b16 %v2876
        %v3184 = vunpack.c.h.b16 %v2876
        %v3185 = vunpack.c.l.b16 %v2877
        %v3186 = vunpack.c.h.b16 %v2877
        %v3187 = vunpack.c.l.b16 %v2878
        %v3188 = vunpack.c.h.b16 %v2878
        %v3189 = vpack.c.b16 %v3001, %v2997
        %v3190 = vpack.c.b16 %v3002, %v2998
        %v3191 = vpack.c.b16 %v3003, %v2999
        %v3192 = vpack.c.b16 %v3004, %v3000
        %v3193 = vpack.c.b16 %v3009, %v3005
        %v3194 = vpack.c.b16 %v3010, %v3006
        %v3195 = vpack.c.b16 %v3011, %v3007
        %v3196 = vpack.c.b16 %v3012, %v3008
        %v3197 = vpack.c.b16 %v3017, %v3013
        %v3198 = vpack.c.b16 %v3018, %v3014
        %v3199 = vpack.c.b16 %v3019, %v3015
        %v3200 = vpack.c.b16 %v3020, %v3016
        %v3201 = vpack.c.b16 %v3025, %v3021
        %v3202 = vpack.c.b16 %v3026, %v3022
        %v3203 = vpack.c.b16 %v3027, %v3023
        %v3204 = vpack.c.b16 %v3028, %v3024
        %v3205 = vpack.c.b16 %v3033, %v3029
        %v3206 = vpack.c.b16 %v3034, %v3030
        %v3207 = vpack.c.b16 %v3035, %v3031
        %v3208 = vpack.c.b16 %v3036, %v3032
        %v3209 = vpack.c.b16 %v3041, %v3037
        %v3210 = vpack.c.b16 %v3042, %v3038
        %v3211 = vpack.c.b16 %v3043, %v3039
        %v3212 = vpack.c.b16 %v3044, %v3040
        %v3213 = vpack.c.b16 %v3049, %v3045
        %v3214 = vpack.c.b16 %v3050, %v3046
        %v3215 = vpack.c.b16 %v3051, %v3047
        %v3216 = vpack.c.b16 %v3052, %v3048
        %v3217 = vpack.c.b16 %v3057, %v3053
        %v3218 = vpack.c.b16 %v3058, %v3054
        %v3219 = vpack.c.b16 %v3059, %v3055
        %v3220 = vpack.c.b16 %v3060, %v3056
        %v3221 = vpack.c.b16 %v3065, %v3061
        %v3222 = vpack.c.b16 %v3066, %v3062
        %v3223 = vpack.c.b16 %v3067, %v3063
        %v3224 = vpack.c.b16 %v3068, %v3064
        %v3225 = vpack.c.b16 %v3073, %v3069
        %v3226 = vpack.c.b16 %v3074, %v3070
        %v3227 = vpack.c.b16 %v3075, %v3071
        %v3228 = vpack.c.b16 %v3076, %v3072
        %v3229 = vpack.c.b16 %v3081, %v3077
        %v3230 = vpack.c.b16 %v3082, %v3078
        %v3231 = vpack.c.b16 %v3083, %v3079
        %v3232 = vpack.c.b16 %v3084, %v3080
        %v3233 = vpack.c.b16 %v3089, %v3085
        %v3234 = vpack.c.b16 %v3090, %v3086
        %v3235 = vpack.c.b16 %v3091, %v3087
        %v3236 = vpack.c.b16 %v3092, %v3088
        %v3237 = vpack.c.b16 %v3097, %v3093
        %v3238 = vpack.c.b16 %v3098, %v3094
        %v3239 = vpack.c.b16 %v3099, %v3095
        %v3240 = vpack.c.b16 %v3100, %v3096
        %v3241 = vpack.c.b16 %v3105, %v3101
        %v3242 = vpack.c.b16 %v3106, %v3102
        %v3243 = vpack.c.b16 %v3107, %v3103
        %v3244 = vpack.c.b16 %v3108, %v3104
        %v3245 = vpack.c.b16 %v3113, %v3109
        %v3246 = vpack.c.b16 %v3114, %v3110
        %v3247 = vpack.c.b16 %v3115, %v3111
        %v3248 = vpack.c.b16 %v3116, %v3112
        %v3249 = vpack.c.b16 %v3121, %v3117
        %v3250 = vpack.c.b16 %v3122, %v3118
        %v3251 = vpack.c.b16 %v3123, %v3119
        %v3252 = vpack.c.b16 %v3124, %v3120
        %v3253 = vpack.c.b16 %v3129, %v3125
        %v3254 = vpack.c.b16 %v3130, %v3126
        %v3255 = vpack.c.b16 %v3131, %v3127
        %v3256 = vpack.c.b16 %v3132, %v3128
        %v3257 = vpack.c.b16 %v3137, %v3133
        %v3258 = vpack.c.b16 %v3138, %v3134
        %v3259 = vpack.c.b16 %v3139, %v3135
        %v3260 = vpack.c.b16 %v3140, %v3136
        %v3261 = vpack.c.b16 %v3145, %v3141
        %v3262 = vpack.c.b16 %v3146, %v3142
        %v3263 = vpack.c.b16 %v3147, %v3143
        %v3264 = vpack.c.b16 %v3148, %v3144
        %v3265 = vpack.c.b16 %v3153, %v3149
        %v3266 = vpack.c.b16 %v3154, %v3150
        %v3267 = vpack.c.b16 %v3155, %v3151
        %v3268 = vpack.c.b16 %v3156, %v3152
        %v3269 = vpack.c.b16 %v3161, %v3157
        %v3270 = vpack.c.b16 %v3162, %v3158
        %v3271 = vpack.c.b16 %v3163, %v3159
        %v3272 = vpack.c.b16 %v3164, %v3160
        %v3273 = vpack.c.b16 %v3169, %v3165
        %v3274 = vpack.c.b16 %v3170, %v3166
        %v3275 = vpack.c.b16 %v3171, %v3167
        %v3276 = vpack.c.b16 %v3172, %v3168
        %v3277 = vpack.c.b16 %v3177, %v3173
        %v3278 = vpack.c.b16 %v3178, %v3174
        %v3279 = vpack.c.b16 %v3179, %v3175
        %v3280 = vpack.c.b16 %v3180, %v3176
        %v3281 = vpack.c.b16 %v3185, %v3181
        %v3282 = vpack.c.b16 %v3186, %v3182
        %v3283 = vpack.c.b16 %v3187, %v3183
        %v3284 = vpack.c.b16 %v3188, %v3184
        %3381 = vmatprep.subr.bf16.mxu0 %v3190
        %3382 = vmatpush1.bf16.msra.mxu0 %v3189
        %3383 = vmatprep.subr.bf16.mxu0 %v3194
        %3384 = vmatpush1.bf16.msra.mxu0 %v3193
        %3385 = vmatprep.subr.bf16.mxu0 %v3198
        %3386 = vmatpush1.bf16.msra.mxu0 %v3197
        %3387 = vmatprep.subr.bf16.mxu0 %v3202
        %3388 = vmatpush1.bf16.msra.mxu0 %v3201
        %3389 = vmatprep.subr.bf16.mxu0 %v3206
        %3390 = vmatpush1.bf16.msra.mxu0 %v3205
        %3391 = vmatprep.subr.bf16.mxu0 %v3210
        %3392 = vmatpush1.bf16.msra.mxu0 %v3209
        %3393 = vmatprep.subr.bf16.mxu0 %v3214
        %3394 = vmatpush1.bf16.msra.mxu0 %v3213
        %3395 = vmatprep.subr.bf16.mxu0 %v3218
        %3396 = vmatpush1.bf16.msra.mxu0 %v3217
        %3397 = vmatprep.subr.bf16.mxu0 %v3222
        %3398 = vmatpush1.bf16.msra.mxu0 %v3221
        %3399 = vmatprep.subr.bf16.mxu0 %v3226
        %3400 = vmatpush1.bf16.msra.mxu0 %v3225
        %3401 = vmatprep.subr.bf16.mxu0 %v3230
        %3402 = vmatpush1.bf16.msra.mxu0 %v3229
        %3403 = vmatprep.subr.bf16.mxu0 %v3234
        %3404 = vmatpush1.bf16.msra.mxu0 %v3233
        %3405 = vmatprep.subr.bf16.mxu0 %v3238
        %3406 = vmatpush1.bf16.msra.mxu0 %v3237
        %3407 = vmatprep.subr.bf16.mxu0 %v3242
        %3408 = vmatpush1.bf16.msra.mxu0 %v3241
        %3409 = vmatprep.subr.bf16.mxu0 %v3246
        %3410 = vmatpush1.bf16.msra.mxu0 %v3245
        %3411 = vmatprep.subr.bf16.mxu0 %v3250
        %3412 = vmatpush1.bf16.msra.mxu0 %v3249
        %3413 = vmatprep.mubr.bf16.mxu0 %v2781
        %3414 = vmatmul.mubr.bf16.gmra.mrb[0].mxu0 %v2780
        %v3415 = vpop.f32.mrb[0].mxu0
        %v3416 = vadd.f32 %v2884, %v3415
        %v3417 = vpop.f32.mrb[0].mxu0
        %v3418 = vadd.f32 %v2888, %v3417
        %v3419 = vpop.f32.mrb[0].mxu0
        %v3420 = vadd.f32 %v2884, %v3419
        %v3421 = vpop.f32.mrb[0].mxu0
        %v3422 = vadd.f32 %v2888, %v3421
        %3423 = vdwg.mxu0
        %3424 = vmatprep.subr.bf16.mxu0 %v3254
        %3425 = vmatpush1.bf16.msra.mxu0 %v3253
        %3426 = vmatprep.subr.bf16.mxu0 %v3258
        %3427 = vmatpush1.bf16.msra.mxu0 %v3257
        %3428 = vmatprep.subr.bf16.mxu0 %v3262
        %3429 = vmatpush1.bf16.msra.mxu0 %v3261
        %3430 = vmatprep.subr.bf16.mxu0 %v3266
        %3431 = vmatpush1.bf16.msra.mxu0 %v3265
        %3432 = vmatprep.subr.bf16.mxu0 %v3270
        %3433 = vmatpush1.bf16.msra.mxu0 %v3269
        %3434 = vmatprep.subr.bf16.mxu0 %v3274
        %3435 = vmatpush1.bf16.msra.mxu0 %v3273
        %3436 = vmatprep.subr.bf16.mxu0 %v3278
        %3437 = vmatpush1.bf16.msra.mxu0 %v3277
        %3438 = vmatprep.subr.bf16.mxu0 %v3282
        %3439 = vmatpush1.bf16.msra.mxu0 %v3281
        %3440 = vmatprep.subr.bf16.mxu0 0
        %3441 = vmatpush1.bf16.msra.mxu0 0
        %3442 = vmatprep.subr.bf16.mxu0 0
        %3443 = vmatpush1.bf16.msra.mxu0 0
        %3444 = vmatprep.subr.bf16.mxu0 0
        %3445 = vmatpush1.bf16.msra.mxu0 0
        %3446 = vmatprep.subr.bf16.mxu0 0
        %3447 = vmatpush1.bf16.msra.mxu0 0
        %3448 = vmatprep.subr.bf16.mxu0 0
        %3449 = vmatpush1.bf16.msra.mxu0 0
        %3450 = vmatprep.subr.bf16.mxu0 0
        %3451 = vmatpush1.bf16.msra.mxu0 0
        %3452 = vmatprep.subr.bf16.mxu0 0
        %3453 = vmatpush1.bf16.msra.mxu0 0
        %3454 = vmatprep.subr.bf16.mxu0 0
        %3455 = vmatpush1.bf16.msra.mxu0 0
        %3456 = vmatprep.mubr.bf16.mxu0 0
        %3457 = vmatmul.mubr.bf16.gmra.mrb[0].mxu0 %v2782
        %v3458 = vpop.f32.mrb[0].mxu0
        %v3459 = vadd.f32 %v3416, %v3458
        %v3460 = vpop.f32.mrb[0].mxu0
        %v3461 = vadd.f32 %v3418, %v3460
        %v3462 = vpop.f32.mrb[0].mxu0
        %v3463 = vadd.f32 %v3420, %v3462
        %v3464 = vpop.f32.mrb[0].mxu0
        %v3465 = vadd.f32 %v3422, %v3464
        %3466 = vdwg.mxu0
        %3467 = vmatprep.subr.bf16.mxu0 %v3192
        %3468 = vmatpush1.bf16.msra.mxu0 %v3191
        %3469 = vmatprep.subr.bf16.mxu0 %v3196
        %3470 = vmatpush1.bf16.msra.mxu0 %v3195
        %3471 = vmatprep.subr.bf16.mxu0 %v3200
        %3472 = vmatpush1.bf16.msra.mxu0 %v3199
        %3473 = vmatprep.subr.bf16.mxu0 %v3204
        %3474 = vmatpush1.bf16.msra.mxu0 %v3203
        %3475 = vmatprep.subr.bf16.mxu0 %v3208
        %3476 = vmatpush1.bf16.msra.mxu0 %v3207
        %3477 = vmatprep.subr.bf16.mxu0 %v3212
        %3478 = vmatpush1.bf16.msra.mxu0 %v3211
        %3479 = vmatprep.subr.bf16.mxu0 %v3216
        %3480 = vmatpush1.bf16.msra.mxu0 %v3215
        %3481 = vmatprep.subr.bf16.mxu0 %v3220
        %3482 = vmatpush1.bf16.msra.mxu0 %v3219
        %3483 = vmatprep.subr.bf16.mxu0 %v3224
        %3484 = vmatpush1.bf16.msra.mxu0 %v3223
        %3485 = vmatprep.subr.bf16.mxu0 %v3228
        %3486 = vmatpush1.bf16.msra.mxu0 %v3227
        %3487 = vmatprep.subr.bf16.mxu0 %v3232
        %3488 = vmatpush1.bf16.msra.mxu0 %v3231
        %3489 = vmatprep.subr.bf16.mxu0 %v3236
        %3490 = vmatpush1.bf16.msra.mxu0 %v3235
        %3491 = vmatprep.subr.bf16.mxu0 %v3240
        %3492 = vmatpush1.bf16.msra.mxu0 %v3239
        %3493 = vmatprep.subr.bf16.mxu0 %v3244
        %3494 = vmatpush1.bf16.msra.mxu0 %v3243
        %3495 = vmatprep.subr.bf16.mxu0 %v3248
        %3496 = vmatpush1.bf16.msra.mxu0 %v3247
        %3497 = vmatprep.subr.bf16.mxu0 %v3252
        %3498 = vmatpush1.bf16.msra.mxu0 %v3251
        %3499 = vmatprep.mubr.bf16.mxu0 %v2781
        %3500 = vmatmul.mubr.bf16.gmra.mrb[0].mxu0 %v2780
        %v3501 = vpop.f32.mrb[0].mxu0
        %v3502 = vadd.f32 %v2892, %v3501
        %v3503 = vpop.f32.mrb[0].mxu0
        %v3504 = vadd.f32 %v2896, %v3503
        %v3505 = vpop.f32.mrb[0].mxu0
        %v3506 = vadd.f32 %v2892, %v3505
        %v3507 = vpop.f32.mrb[0].mxu0
        %v3508 = vadd.f32 %v2896, %v3507
        %3509 = vdwg.mxu0
        %3510 = vmatprep.subr.bf16.mxu0 %v3256
        %3511 = vmatpush1.bf16.msra.mxu0 %v3255
        %3512 = vmatprep.subr.bf16.mxu0 %v3260
        %3513 = vmatpush1.bf16.msra.mxu0 %v3259
        %3514 = vmatprep.subr.bf16.mxu0 %v3264
        %3515 = vmatpush1.bf16.msra.mxu0 %v3263
        %3516 = vmatprep.subr.bf16.mxu0 %v3268
        %3517 = vmatpush1.bf16.msra.mxu0 %v3267
        %3518 = vmatprep.subr.bf16.mxu0 %v3272
        %3519 = vmatpush1.bf16.msra.mxu0 %v3271
        %3520 = vmatprep.subr.bf16.mxu0 %v3276
        %3521 = vmatpush1.bf16.msra.mxu0 %v3275
        %3522 = vmatprep.subr.bf16.mxu0 %v3280
        %3523 = vmatpush1.bf16.msra.mxu0 %v3279
        %3524 = vmatprep.subr.bf16.mxu0 %v3284
        %3525 = vmatpush1.bf16.msra.mxu0 %v3283
        %3526 = vmatprep.subr.bf16.mxu0 0
        %3527 = vmatpush1.bf16.msra.mxu0 0
        %3528 = vmatprep.subr.bf16.mxu0 0
        %3529 = vmatpush1.bf16.msra.mxu0 0
        %3530 = vmatprep.subr.bf16.mxu0 0
        %3531 = vmatpush1.bf16.msra.mxu0 0
        %3532 = vmatprep.subr.bf16.mxu0 0
        %3533 = vmatpush1.bf16.msra.mxu0 0
        %3534 = vmatprep.subr.bf16.mxu0 0
        %3535 = vmatpush1.bf16.msra.mxu0 0
        %3536 = vmatprep.subr.bf16.mxu0 0
        %3537 = vmatpush1.bf16.msra.mxu0 0
        %3538 = vmatprep.subr.bf16.mxu0 0
        %3539 = vmatpush1.bf16.msra.mxu0 0
        %3540 = vmatprep.subr.bf16.mxu0 0
        %3541 = vmatpush1.bf16.msra.mxu0 0
        %3542 = vmatprep.mubr.bf16.mxu0 0
        %3543 = vmatmul.mubr.bf16.gmra.mrb[0].mxu0 %v2782
        %v3544 = vpop.f32.mrb[0].mxu0
        %v3545 = vadd.f32 %v3502, %v3544
        %v3546 = vpop.f32.mrb[0].mxu0
        %v3547 = vadd.f32 %v3504, %v3546
        %v3548 = vpop.f32.mrb[0].mxu0
        %v3549 = vadd.f32 %v3506, %v3548
        %v3550 = vpop.f32.mrb[0].mxu0
        %v3551 = vadd.f32 %v3508, %v3550
        %3552 = vdwg.mxu0
        %v3553 = vxor.u32 %v3459, 2147483648
        %v3554 = vxor.u32 %v3461, 2147483648
        %v3555 = vxor.u32 %v3463, 2147483648
        %v3556 = vxor.u32 %v3465, 2147483648
        %v3557 = vmul.f32 %v3553, 1.442695
        %v3558 = vpow.pop %v3557
        %v3559 = vmul.f32 %v3554, 1.442695
        %v3560 = vpow.pop %v3559
        %v3561 = vmul.f32 %v3555, 1.442695
        %v3562 = vpow.pop %v3561
        %v3563 = vmul.f32 %v3556, 1.442695
        %v3564 = vpow.pop %v3563
        %v3565 = vadd.f32 %v3558, 1.0
        %v3566 = vadd.f32 %v3560, 1.0
        %v3567 = vadd.f32 %v3562, 1.0
        %v3568 = vadd.f32 %v3564, 1.0
        %v3569 = vrcp.pop %v3565
        %v3570 = vmul.f32 1.0, %v3569
        %v3571 = vrcp.pop %v3566
        %v3572 = vmul.f32 1.0, %v3571
        %v3573 = vrcp.pop %v3567
        %v3574 = vmul.f32 1.0, %v3573
        %v3575 = vrcp.pop %v3568
        %v3576 = vmul.f32 1.0, %v3575
        %v3577 = vmul.f32 %v3459, %v3570
        %v3578 = vmul.f32 %v3461, %v3572
        %v3579 = vmul.f32 %v3463, %v3574
        %v3580 = vmul.f32 %v3465, %v3576
        %v3581 = vsel %vm2770, 0.0, %v3579
        %v3582 = vsel %vm2770, 0.0, %v3580
        %v3583 = vsel %vm2771, 0.0, %v3577
        %v3584 = vsel %vm2771, 0.0, %v3578
        %v3585 = vsel %vm2776, 0.0, %v3579
        %v3586 = vsel %vm2776, 0.0, %v3580
        %v3587 = vsel %vm2777, 0.0, %v3577
        %v3588 = vsel %vm2777, 0.0, %v3578
        %v3589 = vpack.c.bf16 %v3583, %v3581
        %v3590 = vpack.c.bf16 %v3584, %v3582
        %v3591 = vpack.c.bf16 %v3579, %v3577
        %v3592 = vpack.c.bf16 %v3580, %v3578
        %v3593 = vpack.c.bf16 %v3587, %v3585
        %v3594 = vpack.c.bf16 %v3588, %v3586
        %v3595 = vld [vmem:[#allocation18] sm:$0xff]
        %v3596 = vld [vmem:[#allocation18 + $0x8] sm:$0xff]
        %v3597 = vld [vmem:[#allocation18 + $0x10] sm:$0xff]
        %v3598 = vld [vmem:[#allocation18 + $0x18] sm:$0xff]
        %v3599 = vld [vmem:[#allocation18 + $0x20] sm:$0xff]
        %v3600 = vld [vmem:[#allocation18 + $0x28] sm:$0xff]
        %v3601 = vld [vmem:[#allocation18 + $0x30] sm:$0xff]
        %v3602 = vld [vmem:[#allocation18 + $0x38] sm:$0xff]
        %v3603 = vld [vmem:[#allocation18 + $0x40] sm:$0xff]
        %v3604 = vld [vmem:[#allocation18 + $0x48] sm:$0xff]
        %v3605 = vld [vmem:[#allocation18 + $0x50] sm:$0xff]
        %v3606 = vld [vmem:[#allocation18 + $0x58] sm:$0xff]
        %v3607 = vld [vmem:[#allocation18 + $0x60] sm:$0xff]
        %v3608 = vld [vmem:[#allocation18 + $0x68] sm:$0xff]
        %v3609 = vld [vmem:[#allocation18 + $0x70] sm:$0xff]
        %v3610 = vld [vmem:[#allocation18 + $0x78] sm:$0xff]
        %v3611 = vld [vmem:[#allocation18 + $0x80] sm:$0xff]
        %v3612 = vld [vmem:[#allocation18 + $0x88] sm:$0xff]
        %v3613 = vld [vmem:[#allocation18 + $0x90] sm:$0xff]
        %v3614 = vld [vmem:[#allocation18 + $0x98] sm:$0xff]
        %v3615 = vld [vmem:[#allocation18 + $0xa0] sm:$0xff]
        %v3616 = vld [vmem:[#allocation18 + $0xa8] sm:$0xff]
        %v3617 = vld [vmem:[#allocation18 + $0xb0] sm:$0xff]
        %v3618 = vld [vmem:[#allocation18 + $0xb8] sm:$0xff]
        %v3619 = vld [vmem:[#allocation18 + $0xc0] sm:$0xff]
        %v3620 = vld [vmem:[#allocation18 + $0xc8] sm:$0xff]
        %v3621 = vld [vmem:[#allocation18 + $0xd0] sm:$0xff]
        %v3622 = vld [vmem:[#allocation18 + $0xd8] sm:$0xff]
        %v3623 = vld [vmem:[#allocation18 + $0xe0] sm:$0xff]
        %v3624 = vld [vmem:[#allocation18 + $0xe8] sm:$0xff]
        %v3625 = vld [vmem:[#allocation18 + $0xf0] sm:$0xff]
        %v3626 = vld [vmem:[#allocation18 + $0xf8] sm:$0xff]
        %v3627 = vld [vmem:[#allocation18 + $0x100] sm:$0xff]
        %v3628 = vld [vmem:[#allocation18 + $0x108] sm:$0xff]
        %v3629 = vld [vmem:[#allocation18 + $0x110] sm:$0xff]
        %v3630 = vld [vmem:[#allocation18 + $0x118] sm:$0xff]
        %v3631 = vld [vmem:[#allocation18 + $0x120] sm:$0xff]
        %v3632 = vld [vmem:[#allocation18 + $0x128] sm:$0xff]
        %v3633 = vld [vmem:[#allocation18 + $0x130] sm:$0xff]
        %v3634 = vld [vmem:[#allocation18 + $0x138] sm:$0xff]
        %v3635 = vld [vmem:[#allocation18 + $0x140] sm:$0xff]
        %v3636 = vld [vmem:[#allocation18 + $0x148] sm:$0xff]
        %v3637 = vld [vmem:[#allocation18 + $0x150] sm:$0xff]
        %v3638 = vld [vmem:[#allocation18 + $0x158] sm:$0xff]
        %v3639 = vld [vmem:[#allocation18 + $0x160] sm:$0xff]
        %v3640 = vld [vmem:[#allocation18 + $0x168] sm:$0xff]
        %v3641 = vld [vmem:[#allocation18 + $0x170] sm:$0xff]
        %v3642 = vld [vmem:[#allocation18 + $0x178] sm:$0xff]
        %v3643 = vld [vmem:[#allocation18 + $0x180] sm:$0xff]
        %v3644 = vld [vmem:[#allocation18 + $0x188] sm:$0xff]
        %v3645 = vld [vmem:[#allocation18 + $0x190] sm:$0xff]
        %v3646 = vld [vmem:[#allocation18 + $0x198] sm:$0xff]
        %v3647 = vld [vmem:[#allocation18 + $0x1a0] sm:$0xff]
        %v3648 = vld [vmem:[#allocation18 + $0x1a8] sm:$0xff]
        %v3649 = vld [vmem:[#allocation18 + $0x1b0] sm:$0xff]
        %v3650 = vld [vmem:[#allocation18 + $0x1b8] sm:$0xff]
        %v3651 = vld [vmem:[#allocation18 + $0x1c0] sm:$0xff]
        %v3652 = vld [vmem:[#allocation18 + $0x1c8] sm:$0xff]
        %v3653 = vld [vmem:[#allocation18 + $0x1d0] sm:$0xff]
        %v3654 = vld [vmem:[#allocation18 + $0x1d8] sm:$0xff]
        %v3655 = vld [vmem:[#allocation18 + $0x1e0] sm:$0xff]
        %v3656 = vld [vmem:[#allocation18 + $0x1e8] sm:$0xff]
        %v3657 = vld [vmem:[#allocation18 + $0x1f0] sm:$0xff]
        %v3658 = vld [vmem:[#allocation18 + $0x1f8] sm:$0xff]
        %v3659 = vld [vmem:[#allocation18 + $0x200] sm:$0xff]
        %v3660 = vld [vmem:[#allocation18 + $0x208] sm:$0xff]
        %v3661 = vld [vmem:[#allocation18 + $0x210] sm:$0xff]
        %v3662 = vld [vmem:[#allocation18 + $0x218] sm:$0xff]
        %v3663 = vld [vmem:[#allocation18 + $0x220] sm:$0xff]
        %v3664 = vld [vmem:[#allocation18 + $0x228] sm:$0xff]
        %v3665 = vld [vmem:[#allocation18 + $0x230] sm:$0xff]
        %v3666 = vld [vmem:[#allocation18 + $0x238] sm:$0xff]
        %v3667 = vld [vmem:[#allocation18 + $0x240] sm:$0xff]
        %v3668 = vld [vmem:[#allocation18 + $0x248] sm:$0xff]
        %v3669 = vld [vmem:[#allocation18 + $0x250] sm:$0xff]
        %v3670 = vld [vmem:[#allocation18 + $0x258] sm:$0xff]
        %v3671 = vld [vmem:[#allocation18 + $0x260] sm:$0xff]
        %v3672 = vld [vmem:[#allocation18 + $0x268] sm:$0xff]
        %v3673 = vld [vmem:[#allocation18 + $0x270] sm:$0xff]
        %v3674 = vld [vmem:[#allocation18 + $0x278] sm:$0xff]
        %v3675 = vld [vmem:[#allocation18 + $0x280] sm:$0xff]
        %v3676 = vld [vmem:[#allocation18 + $0x288] sm:$0xff]
        %v3677 = vld [vmem:[#allocation18 + $0x290] sm:$0xff]
        %v3678 = vld [vmem:[#allocation18 + $0x298] sm:$0xff]
        %v3679 = vld [vmem:[#allocation18 + $0x2a0] sm:$0xff]
        %v3680 = vld [vmem:[#allocation18 + $0x2a8] sm:$0xff]
        %v3681 = vld [vmem:[#allocation18 + $0x2b0] sm:$0xff]
        %v3682 = vld [vmem:[#allocation18 + $0x2b8] sm:$0xff]
        %v3683 = vld [vmem:[#allocation18 + $0x2c0] sm:$0xff]
        %v3684 = vld [vmem:[#allocation18 + $0x2c8] sm:$0xff]
        %v3685 = vld [vmem:[#allocation18 + $0x2d0] sm:$0xff]
        %v3686 = vld [vmem:[#allocation18 + $0x2d8] sm:$0xff]
        %v3687 = vld [vmem:[#allocation18 + $0x2e0] sm:$0xff]
        %v3688 = vld [vmem:[#allocation18 + $0x2e8] sm:$0xff]
        %v3689 = vld [vmem:[#allocation18 + $0x2f0] sm:$0xff]
        %v3690 = vld [vmem:[#allocation18 + $0x2f8] sm:$0xff]
        %v3691 = vld [vmem:[#allocation19] sm:$0x3]
        %v3693 = vlaneseq
        %v3694 = vshrl.u32 %v3693, 7
        %v3695 = vsub.s32 0, %v3694
        %v3696 = vrot.slane %v3691, %v3695
        %v3697 = vlaneseq
        %v3698 = vshrl.u32 %v3697, 7
        %v3699 = vsub.s32 1, %v3698
        %v3700 = vrot.slane %v3691, %v3699
        %v3799 = vunpack.c.l.b16 %v3595
        %v3800 = vunpack.c.h.b16 %v3595
        %v3801 = vunpack.c.l.b16 %v3596
        %v3802 = vunpack.c.h.b16 %v3596
        %v3803 = vunpack.c.l.b16 %v3597
        %v3804 = vunpack.c.h.b16 %v3597
        %v3805 = vunpack.c.l.b16 %v3598
        %v3806 = vunpack.c.h.b16 %v3598
        %v3807 = vunpack.c.l.b16 %v3599
        %v3808 = vunpack.c.h.b16 %v3599
        %v3809 = vunpack.c.l.b16 %v3600
        %v3810 = vunpack.c.h.b16 %v3600
        %v3811 = vunpack.c.l.b16 %v3601
        %v3812 = vunpack.c.h.b16 %v3601
        %v3813 = vunpack.c.l.b16 %v3602
        %v3814 = vunpack.c.h.b16 %v3602
        %v3815 = vunpack.c.l.b16 %v3603
        %v3816 = vunpack.c.h.b16 %v3603
        %v3817 = vunpack.c.l.b16 %v3604
        %v3818 = vunpack.c.h.b16 %v3604
        %v3819 = vunpack.c.l.b16 %v3605
        %v3820 = vunpack.c.h.b16 %v3605
        %v3821 = vunpack.c.l.b16 %v3606
        %v3822 = vunpack.c.h.b16 %v3606
        %v3823 = vunpack.c.l.b16 %v3607
        %v3824 = vunpack.c.h.b16 %v3607
        %v3825 = vunpack.c.l.b16 %v3608
        %v3826 = vunpack.c.h.b16 %v3608
        %v3827 = vunpack.c.l.b16 %v3609
        %v3828 = vunpack.c.h.b16 %v3609
        %v3829 = vunpack.c.l.b16 %v3610
        %v3830 = vunpack.c.h.b16 %v3610
        %v3831 = vunpack.c.l.b16 %v3611
        %v3832 = vunpack.c.h.b16 %v3611
        %v3833 = vunpack.c.l.b16 %v3612
        %v3834 = vunpack.c.h.b16 %v3612
        %v3835 = vunpack.c.l.b16 %v3613
        %v3836 = vunpack.c.h.b16 %v3613
        %v3837 = vunpack.c.l.b16 %v3614
        %v3838 = vunpack.c.h.b16 %v3614
        %v3839 = vunpack.c.l.b16 %v3615
        %v3840 = vunpack.c.h.b16 %v3615
        %v3841 = vunpack.c.l.b16 %v3616
        %v3842 = vunpack.c.h.b16 %v3616
        %v3843 = vunpack.c.l.b16 %v3617
        %v3844 = vunpack.c.h.b16 %v3617
        %v3845 = vunpack.c.l.b16 %v3618
        %v3846 = vunpack.c.h.b16 %v3618
        %v3847 = vunpack.c.l.b16 %v3619
        %v3848 = vunpack.c.h.b16 %v3619
        %v3849 = vunpack.c.l.b16 %v3620
        %v3850 = vunpack.c.h.b16 %v3620
        %v3851 = vunpack.c.l.b16 %v3621
        %v3852 = vunpack.c.h.b16 %v3621
        %v3853 = vunpack.c.l.b16 %v3622
        %v3854 = vunpack.c.h.b16 %v3622
        %v3855 = vunpack.c.l.b16 %v3623
        %v3856 = vunpack.c.h.b16 %v3623
        %v3857 = vunpack.c.l.b16 %v3624
        %v3858 = vunpack.c.h.b16 %v3624
        %v3859 = vunpack.c.l.b16 %v3625
        %v3860 = vunpack.c.h.b16 %v3625
        %v3861 = vunpack.c.l.b16 %v3626
        %v3862 = vunpack.c.h.b16 %v3626
        %v3863 = vunpack.c.l.b16 %v3627
        %v3864 = vunpack.c.h.b16 %v3627
        %v3865 = vunpack.c.l.b16 %v3628
        %v3866 = vunpack.c.h.b16 %v3628
        %v3867 = vunpack.c.l.b16 %v3629
        %v3868 = vunpack.c.h.b16 %v3629
        %v3869 = vunpack.c.l.b16 %v3630
        %v3870 = vunpack.c.h.b16 %v3630
        %v3871 = vunpack.c.l.b16 %v3631
        %v3872 = vunpack.c.h.b16 %v3631
        %v3873 = vunpack.c.l.b16 %v3632
        %v3874 = vunpack.c.h.b16 %v3632
        %v3875 = vunpack.c.l.b16 %v3633
        %v3876 = vunpack.c.h.b16 %v3633
        %v3877 = vunpack.c.l.b16 %v3634
        %v3878 = vunpack.c.h.b16 %v3634
        %v3879 = vunpack.c.l.b16 %v3635
        %v3880 = vunpack.c.h.b16 %v3635
        %v3881 = vunpack.c.l.b16 %v3636
        %v3882 = vunpack.c.h.b16 %v3636
        %v3883 = vunpack.c.l.b16 %v3637
        %v3884 = vunpack.c.h.b16 %v3637
        %v3885 = vunpack.c.l.b16 %v3638
        %v3886 = vunpack.c.h.b16 %v3638
        %v3887 = vunpack.c.l.b16 %v3639
        %v3888 = vunpack.c.h.b16 %v3639
        %v3889 = vunpack.c.l.b16 %v3640
        %v3890 = vunpack.c.h.b16 %v3640
        %v3891 = vunpack.c.l.b16 %v3641
        %v3892 = vunpack.c.h.b16 %v3641
        %v3893 = vunpack.c.l.b16 %v3642
        %v3894 = vunpack.c.h.b16 %v3642
        %v3895 = vunpack.c.l.b16 %v3643
        %v3896 = vunpack.c.h.b16 %v3643
        %v3897 = vunpack.c.l.b16 %v3644
        %v3898 = vunpack.c.h.b16 %v3644
        %v3899 = vunpack.c.l.b16 %v3645
        %v3900 = vunpack.c.h.b16 %v3645
        %v3901 = vunpack.c.l.b16 %v3646
        %v3902 = vunpack.c.h.b16 %v3646
        %v3903 = vunpack.c.l.b16 %v3647
        %v3904 = vunpack.c.h.b16 %v3647
        %v3905 = vunpack.c.l.b16 %v3648
        %v3906 = vunpack.c.h.b16 %v3648
        %v3907 = vunpack.c.l.b16 %v3649
        %v3908 = vunpack.c.h.b16 %v3649
        %v3909 = vunpack.c.l.b16 %v3650
        %v3910 = vunpack.c.h.b16 %v3650
        %v3911 = vunpack.c.l.b16 %v3651
        %v3912 = vunpack.c.h.b16 %v3651
        %v3913 = vunpack.c.l.b16 %v3652
        %v3914 = vunpack.c.h.b16 %v3652
        %v3915 = vunpack.c.l.b16 %v3653
        %v3916 = vunpack.c.h.b16 %v3653
        %v3917 = vunpack.c.l.b16 %v3654
        %v3918 = vunpack.c.h.b16 %v3654
        %v3919 = vunpack.c.l.b16 %v3655
        %v3920 = vunpack.c.h.b16 %v3655
        %v3921 = vunpack.c.l.b16 %v3656
        %v3922 = vunpack.c.h.b16 %v3656
        %v3923 = vunpack.c.l.b16 %v3657
        %v3924 = vunpack.c.h.b16 %v3657
        %v3925 = vunpack.c.l.b16 %v3658
        %v3926 = vunpack.c.h.b16 %v3658
        %v3927 = vunpack.c.l.b16 %v3659
        %v3928 = vunpack.c.h.b16 %v3659
        %v3929 = vunpack.c.l.b16 %v3660
        %v3930 = vunpack.c.h.b16 %v3660
        %v3931 = vunpack.c.l.b16 %v3661
        %v3932 = vunpack.c.h.b16 %v3661
        %v3933 = vunpack.c.l.b16 %v3662
        %v3934 = vunpack.c.h.b16 %v3662
        %v3935 = vunpack.c.l.b16 %v3663
        %v3936 = vunpack.c.h.b16 %v3663
        %v3937 = vunpack.c.l.b16 %v3664
        %v3938 = vunpack.c.h.b16 %v3664
        %v3939 = vunpack.c.l.b16 %v3665
        %v3940 = vunpack.c.h.b16 %v3665
        %v3941 = vunpack.c.l.b16 %v3666
        %v3942 = vunpack.c.h.b16 %v3666
        %v3943 = vunpack.c.l.b16 %v3667
        %v3944 = vunpack.c.h.b16 %v3667
        %v3945 = vunpack.c.l.b16 %v3668
        %v3946 = vunpack.c.h.b16 %v3668
        %v3947 = vunpack.c.l.b16 %v3669
        %v3948 = vunpack.c.h.b16 %v3669
        %v3949 = vunpack.c.l.b16 %v3670
        %v3950 = vunpack.c.h.b16 %v3670
        %v3951 = vunpack.c.l.b16 %v3671
        %v3952 = vunpack.c.h.b16 %v3671
        %v3953 = vunpack.c.l.b16 %v3672
        %v3954 = vunpack.c.h.b16 %v3672
        %v3955 = vunpack.c.l.b16 %v3673
        %v3956 = vunpack.c.h.b16 %v3673
        %v3957 = vunpack.c.l.b16 %v3674
        %v3958 = vunpack.c.h.b16 %v3674
        %v3959 = vunpack.c.l.b16 %v3675
        %v3960 = vunpack.c.h.b16 %v3675
        %v3961 = vunpack.c.l.b16 %v3676
        %v3962 = vunpack.c.h.b16 %v3676
        %v3963 = vunpack.c.l.b16 %v3677
        %v3964 = vunpack.c.h.b16 %v3677
        %v3965 = vunpack.c.l.b16 %v3678
        %v3966 = vunpack.c.h.b16 %v3678
        %v3967 = vunpack.c.l.b16 %v3679
        %v3968 = vunpack.c.h.b16 %v3679
        %v3969 = vunpack.c.l.b16 %v3680
        %v3970 = vunpack.c.h.b16 %v3680
        %v3971 = vunpack.c.l.b16 %v3681
        %v3972 = vunpack.c.h.b16 %v3681
        %v3973 = vunpack.c.l.b16 %v3682
        %v3974 = vunpack.c.h.b16 %v3682
        %v3975 = vunpack.c.l.b16 %v3683
        %v3976 = vunpack.c.h.b16 %v3683
        %v3977 = vunpack.c.l.b16 %v3684
        %v3978 = vunpack.c.h.b16 %v3684
        %v3979 = vunpack.c.l.b16 %v3685
        %v3980 = vunpack.c.h.b16 %v3685
        %v3981 = vunpack.c.l.b16 %v3686
        %v3982 = vunpack.c.h.b16 %v3686
        %v3983 = vunpack.c.l.b16 %v3687
        %v3984 = vunpack.c.h.b16 %v3687
        %v3985 = vunpack.c.l.b16 %v3688
        %v3986 = vunpack.c.h.b16 %v3688
        %v3987 = vunpack.c.l.b16 %v3689
        %v3988 = vunpack.c.h.b16 %v3689
        %v3989 = vunpack.c.l.b16 %v3690
        %v3990 = vunpack.c.h.b16 %v3690
        %v3991 = vpack.c.b16 %v3801, %v3799
        %v3992 = vpack.c.b16 %v3802, %v3800
        %v3993 = vpack.c.b16 %v3805, %v3803
        %v3994 = vpack.c.b16 %v3806, %v3804
        %v3995 = vpack.c.b16 %v3809, %v3807
        %v3996 = vpack.c.b16 %v3810, %v3808
        %v3997 = vpack.c.b16 %v3813, %v3811
        %v3998 = vpack.c.b16 %v3814, %v3812
        %v3999 = vpack.c.b16 %v3817, %v3815
        %v4000 = vpack.c.b16 %v3818, %v3816
        %v4001 = vpack.c.b16 %v3821, %v3819
        %v4002 = vpack.c.b16 %v3822, %v3820
        %v4003 = vpack.c.b16 %v3825, %v3823
        %v4004 = vpack.c.b16 %v3826, %v3824
        %v4005 = vpack.c.b16 %v3829, %v3827
        %v4006 = vpack.c.b16 %v3830, %v3828
        %v4007 = vpack.c.b16 %v3833, %v3831
        %v4008 = vpack.c.b16 %v3834, %v3832
        %v4009 = vpack.c.b16 %v3837, %v3835
        %v4010 = vpack.c.b16 %v3838, %v3836
        %v4011 = vpack.c.b16 %v3841, %v3839
        %v4012 = vpack.c.b16 %v3842, %v3840
        %v4013 = vpack.c.b16 %v3845, %v3843
        %v4014 = vpack.c.b16 %v3846, %v3844
        %v4015 = vpack.c.b16 %v3849, %v3847
        %v4016 = vpack.c.b16 %v3850, %v3848
        %v4017 = vpack.c.b16 %v3853, %v3851
        %v4018 = vpack.c.b16 %v3854, %v3852
        %v4019 = vpack.c.b16 %v3857, %v3855
        %v4020 = vpack.c.b16 %v3858, %v3856
        %v4021 = vpack.c.b16 %v3861, %v3859
        %v4022 = vpack.c.b16 %v3862, %v3860
        %v4023 = vpack.c.b16 %v3865, %v3863
        %v4024 = vpack.c.b16 %v3866, %v3864
        %v4025 = vpack.c.b16 %v3869, %v3867
        %v4026 = vpack.c.b16 %v3870, %v3868
        %v4027 = vpack.c.b16 %v3873, %v3871
        %v4028 = vpack.c.b16 %v3874, %v3872
        %v4029 = vpack.c.b16 %v3877, %v3875
        %v4030 = vpack.c.b16 %v3878, %v3876
        %v4031 = vpack.c.b16 %v3881, %v3879
        %v4032 = vpack.c.b16 %v3882, %v3880
        %v4033 = vpack.c.b16 %v3885, %v3883
        %v4034 = vpack.c.b16 %v3886, %v3884
        %v4035 = vpack.c.b16 %v3889, %v3887
        %v4036 = vpack.c.b16 %v3890, %v3888
        %v4037 = vpack.c.b16 %v3893, %v3891
        %v4038 = vpack.c.b16 %v3894, %v3892
        %v4039 = vpack.c.b16 %v3897, %v3895
        %v4040 = vpack.c.b16 %v3898, %v3896
        %v4041 = vpack.c.b16 %v3901, %v3899
        %v4042 = vpack.c.b16 %v3902, %v3900
        %v4043 = vpack.c.b16 %v3905, %v3903
        %v4044 = vpack.c.b16 %v3906, %v3904
        %v4045 = vpack.c.b16 %v3909, %v3907
        %v4046 = vpack.c.b16 %v3910, %v3908
        %v4047 = vpack.c.b16 %v3913, %v3911
        %v4048 = vpack.c.b16 %v3914, %v3912
        %v4049 = vpack.c.b16 %v3917, %v3915
        %v4050 = vpack.c.b16 %v3918, %v3916
        %v4051 = vpack.c.b16 %v3921, %v3919
        %v4052 = vpack.c.b16 %v3922, %v3920
        %v4053 = vpack.c.b16 %v3925, %v3923
        %v4054 = vpack.c.b16 %v3926, %v3924
        %v4055 = vpack.c.b16 %v3929, %v3927
        %v4056 = vpack.c.b16 %v3930, %v3928
        %v4057 = vpack.c.b16 %v3933, %v3931
        %v4058 = vpack.c.b16 %v3934, %v3932
        %v4059 = vpack.c.b16 %v3937, %v3935
        %v4060 = vpack.c.b16 %v3938, %v3936
        %v4061 = vpack.c.b16 %v3941, %v3939
        %v4062 = vpack.c.b16 %v3942, %v3940
        %v4063 = vpack.c.b16 %v3945, %v3943
        %v4064 = vpack.c.b16 %v3946, %v3944
        %v4065 = vpack.c.b16 %v3949, %v3947
        %v4066 = vpack.c.b16 %v3950, %v3948
        %v4067 = vpack.c.b16 %v3953, %v3951
        %v4068 = vpack.c.b16 %v3954, %v3952
        %v4069 = vpack.c.b16 %v3957, %v3955
        %v4070 = vpack.c.b16 %v3958, %v3956
        %v4071 = vpack.c.b16 %v3961, %v3959
        %v4072 = vpack.c.b16 %v3962, %v3960
        %v4073 = vpack.c.b16 %v3965, %v3963
        %v4074 = vpack.c.b16 %v3966, %v3964
        %v4075 = vpack.c.b16 %v3969, %v3967
        %v4076 = vpack.c.b16 %v3970, %v3968
        %v4077 = vpack.c.b16 %v3973, %v3971
        %v4078 = vpack.c.b16 %v3974, %v3972
        %v4079 = vpack.c.b16 %v3977, %v3975
        %v4080 = vpack.c.b16 %v3978, %v3976
        %v4081 = vpack.c.b16 %v3981, %v3979
        %v4082 = vpack.c.b16 %v3982, %v3980
        %v4083 = vpack.c.b16 %v3985, %v3983
        %v4084 = vpack.c.b16 %v3986, %v3984
        %v4085 = vpack.c.b16 %v3989, %v3987
        %v4086 = vpack.c.b16 %v3990, %v3988
        %4183 = vmatprep.subr.bf16.mxu0 %v3992
        %4184 = vmatpush1.bf16.msra.mxu0 %v3991
        %4185 = vmatprep.subr.bf16.mxu0 %v3994
        %4186 = vmatpush1.bf16.msra.mxu0 %v3993
        %4187 = vmatprep.subr.bf16.mxu0 %v3996
        %4188 = vmatpush1.bf16.msra.mxu0 %v3995
        %4189 = vmatprep.subr.bf16.mxu0 %v3998
        %4190 = vmatpush1.bf16.msra.mxu0 %v3997
        %4191 = vmatprep.subr.bf16.mxu0 %v4000
        %4192 = vmatpush1.bf16.msra.mxu0 %v3999
        %4193 = vmatprep.subr.bf16.mxu0 %v4002
        %4194 = vmatpush1.bf16.msra.mxu0 %v4001
        %4195 = vmatprep.subr.bf16.mxu0 %v4004
        %4196 = vmatpush1.bf16.msra.mxu0 %v4003
        %4197 = vmatprep.subr.bf16.mxu0 %v4006
        %4198 = vmatpush1.bf16.msra.mxu0 %v4005
        %4199 = vmatprep.subr.bf16.mxu0 %v4008
        %4200 = vmatpush1.bf16.msra.mxu0 %v4007
        %4201 = vmatprep.subr.bf16.mxu0 %v4010
        %4202 = vmatpush1.bf16.msra.mxu0 %v4009
        %4203 = vmatprep.subr.bf16.mxu0 %v4012
        %4204 = vmatpush1.bf16.msra.mxu0 %v4011
        %4205 = vmatprep.subr.bf16.mxu0 %v4014
        %4206 = vmatpush1.bf16.msra.mxu0 %v4013
        %4207 = vmatprep.subr.bf16.mxu0 %v4016
        %4208 = vmatpush1.bf16.msra.mxu0 %v4015
        %4209 = vmatprep.subr.bf16.mxu0 %v4018
        %4210 = vmatpush1.bf16.msra.mxu0 %v4017
        %4211 = vmatprep.subr.bf16.mxu0 %v4020
        %4212 = vmatpush1.bf16.msra.mxu0 %v4019
        %4213 = vmatprep.subr.bf16.mxu0 %v4022
        %4214 = vmatpush1.bf16.msra.mxu0 %v4021
        %4215 = vmatprep.mubr.bf16.mxu0 %v3590
        %4216 = vmatmul.mubr.bf16.gmra.mrb[0].mxu0 %v3589
        %v4217 = vpop.f32.mrb[0].mxu0
        %v4218 = vadd.f32 %v3696, %v4217
        %v4219 = vpop.f32.mrb[0].mxu0
        %v4220 = vadd.f32 %v3700, %v4219
        %v4221 = vpop.f32.mrb[0].mxu0
        %v4222 = vadd.f32 %v3696, %v4221
        %v4223 = vpop.f32.mrb[0].mxu0
        %v4224 = vadd.f32 %v3700, %v4223
        %4225 = vdwg.mxu0
        %4226 = vmatprep.subr.bf16.mxu0 %v4024
        %4227 = vmatpush1.bf16.msra.mxu0 %v4023
        %4228 = vmatprep.subr.bf16.mxu0 %v4026
        %4229 = vmatpush1.bf16.msra.mxu0 %v4025
        %4230 = vmatprep.subr.bf16.mxu0 %v4028
        %4231 = vmatpush1.bf16.msra.mxu0 %v4027
        %4232 = vmatprep.subr.bf16.mxu0 %v4030
        %4233 = vmatpush1.bf16.msra.mxu0 %v4029
        %4234 = vmatprep.subr.bf16.mxu0 %v4032
        %4235 = vmatpush1.bf16.msra.mxu0 %v4031
        %4236 = vmatprep.subr.bf16.mxu0 %v4034
        %4237 = vmatpush1.bf16.msra.mxu0 %v4033
        %4238 = vmatprep.subr.bf16.mxu0 %v4036
        %4239 = vmatpush1.bf16.msra.mxu0 %v4035
        %4240 = vmatprep.subr.bf16.mxu0 %v4038
        %4241 = vmatpush1.bf16.msra.mxu0 %v4037
        %4242 = vmatprep.subr.bf16.mxu0 %v4040
        %4243 = vmatpush1.bf16.msra.mxu0 %v4039
        %4244 = vmatprep.subr.bf16.mxu0 %v4042
        %4245 = vmatpush1.bf16.msra.mxu0 %v4041
        %4246 = vmatprep.subr.bf16.mxu0 %v4044
        %4247 = vmatpush1.bf16.msra.mxu0 %v4043
        %4248 = vmatprep.subr.bf16.mxu0 %v4046
        %4249 = vmatpush1.bf16.msra.mxu0 %v4045
        %4250 = vmatprep.subr.bf16.mxu0 %v4048
        %4251 = vmatpush1.bf16.msra.mxu0 %v4047
        %4252 = vmatprep.subr.bf16.mxu0 %v4050
        %4253 = vmatpush1.bf16.msra.mxu0 %v4049
        %4254 = vmatprep.subr.bf16.mxu0 %v4052
        %4255 = vmatpush1.bf16.msra.mxu0 %v4051
        %4256 = vmatprep.subr.bf16.mxu0 %v4054
        %4257 = vmatpush1.bf16.msra.mxu0 %v4053
        %4258 = vmatprep.mubr.bf16.mxu0 %v3592
        %4259 = vmatmul.mubr.bf16.gmra.mrb[0].mxu0 %v3591
        %v4260 = vpop.f32.mrb[0].mxu0
        %v4261 = vadd.f32 %v4218, %v4260
        %v4262 = vpop.f32.mrb[0].mxu0
        %v4263 = vadd.f32 %v4220, %v4262
        %v4264 = vpop.f32.mrb[0].mxu0
        %v4265 = vadd.f32 %v4222, %v4264
        %v4266 = vpop.f32.mrb[0].mxu0
        %v4267 = vadd.f32 %v4224, %v4266
        %4268 = vdwg.mxu0
        %4269 = vmatprep.subr.bf16.mxu0 %v4056
        %4270 = vmatpush1.bf16.msra.mxu0 %v4055
        %4271 = vmatprep.subr.bf16.mxu0 %v4058
        %4272 = vmatpush1.bf16.msra.mxu0 %v4057
        %4273 = vmatprep.subr.bf16.mxu0 %v4060
        %4274 = vmatpush1.bf16.msra.mxu0 %v4059
        %4275 = vmatprep.subr.bf16.mxu0 %v4062
        %4276 = vmatpush1.bf16.msra.mxu0 %v4061
        %4277 = vmatprep.subr.bf16.mxu0 %v4064
        %4278 = vmatpush1.bf16.msra.mxu0 %v4063
        %4279 = vmatprep.subr.bf16.mxu0 %v4066
        %4280 = vmatpush1.bf16.msra.mxu0 %v4065
        %4281 = vmatprep.subr.bf16.mxu0 %v4068
        %4282 = vmatpush1.bf16.msra.mxu0 %v4067
        %4283 = vmatprep.subr.bf16.mxu0 %v4070
        %4284 = vmatpush1.bf16.msra.mxu0 %v4069
        %4285 = vmatprep.subr.bf16.mxu0 %v4072
        %4286 = vmatpush1.bf16.msra.mxu0 %v4071
        %4287 = vmatprep.subr.bf16.mxu0 %v4074
        %4288 = vmatpush1.bf16.msra.mxu0 %v4073
        %4289 = vmatprep.subr.bf16.mxu0 %v4076
        %4290 = vmatpush1.bf16.msra.mxu0 %v4075
        %4291 = vmatprep.subr.bf16.mxu0 %v4078
        %4292 = vmatpush1.bf16.msra.mxu0 %v4077
        %4293 = vmatprep.subr.bf16.mxu0 %v4080
        %4294 = vmatpush1.bf16.msra.mxu0 %v4079
        %4295 = vmatprep.subr.bf16.mxu0 %v4082
        %4296 = vmatpush1.bf16.msra.mxu0 %v4081
        %4297 = vmatprep.subr.bf16.mxu0 %v4084
        %4298 = vmatpush1.bf16.msra.mxu0 %v4083
        %4299 = vmatprep.subr.bf16.mxu0 %v4086
        %4300 = vmatpush1.bf16.msra.mxu0 %v4085
        %4301 = vmatprep.mubr.bf16.mxu0 %v3594
        %4302 = vmatmul.mubr.bf16.gmra.mrb[0].mxu0 %v3593
        %v4303 = vpop.f32.mrb[0].mxu0
        %v4304 = vadd.f32 %v4261, %v4303
        %v4305 = vpop.f32.mrb[0].mxu0
        %v4306 = vadd.f32 %v4263, %v4305
        %v4307 = vpop.f32.mrb[0].mxu0
        %v4308 = vadd.f32 %v4265, %v4307
        %v4309 = vpop.f32.mrb[0].mxu0
        %v4310 = vadd.f32 %v4267, %v4309
        %4311 = vdwg.mxu0
        %v4312 = vxor.u32 %v4304, 2147483648
        %v4313 = vxor.u32 %v4306, 2147483648
        %v4314 = vxor.u32 %v4308, 2147483648
        %v4315 = vxor.u32 %v4310, 2147483648
        %v4316 = vmul.f32 %v4312, 1.442695
        %v4317 = vpow.pop %v4316
        %v4318 = vmul.f32 %v4313, 1.442695
        %v4319 = vpow.pop %v4318
        %v4320 = vmul.f32 %v4314, 1.442695
        %v4321 = vpow.pop %v4320
        %v4322 = vmul.f32 %v4315, 1.442695
        %v4323 = vpow.pop %v4322
        %v4324 = vadd.f32 %v4317, 1.0
        %v4325 = vadd.f32 %v4319, 1.0
        %v4326 = vadd.f32 %v4321, 1.0
        %v4327 = vadd.f32 %v4323, 1.0
        %v4328 = vrcp.pop %v4324
        %v4329 = vmul.f32 1.0, %v4328
        %v4330 = vrcp.pop %v4325
        %v4331 = vmul.f32 1.0, %v4330
        %v4332 = vrcp.pop %v4326
        %v4333 = vmul.f32 1.0, %v4332
        %v4334 = vrcp.pop %v4327
        %v4335 = vmul.f32 1.0, %v4334
        %v4336 = vmul.f32 %v4304, %v4329
        %v4337 = vmul.f32 %v4306, %v4331
        %v4338 = vmul.f32 %v4308, %v4333
        %v4339 = vmul.f32 %v4310, %v4335
        %v4340 = vadd.f32 %v4336, %v3545
        %v4341 = vadd.f32 %v4337, %v3547
        %v4342 = vadd.f32 %v4338, %v3549
        %v4343 = vadd.f32 %v4339, %v3551
        %v4344 = vpack.c.bf16 %v4342, %v4340
        %v4345 = vpack.c.bf16 %v4343, %v4341
        %v4346 = vld [vmem:[#allocation21] sm:$0xff]
        %v4347 = vld [vmem:[#allocation21 + $0x8] sm:$0xff]
        %v4348 = vld [vmem:[#allocation21 + $0x10] sm:$0xff]
        %v4349 = vld [vmem:[#allocation21 + $0x18] sm:$0xff]
        %v4350 = vld [vmem:[#allocation21 + $0x20] sm:$0xff]
        %v4351 = vld [vmem:[#allocation21 + $0x28] sm:$0xff]
        %v4352 = vld [vmem:[#allocation21 + $0x30] sm:$0xff]
        %v4353 = vld [vmem:[#allocation21 + $0x38] sm:$0xff]
        %v4354 = vld [vmem:[#allocation21 + $0x40] sm:$0xff]
        %v4355 = vld [vmem:[#allocation21 + $0x48] sm:$0xff]
        %v4356 = vld [vmem:[#allocation21 + $0x50] sm:$0xff]
        %v4357 = vld [vmem:[#allocation21 + $0x58] sm:$0xff]
        %v4358 = vld [vmem:[#allocation21 + $0x60] sm:$0xff]
        %v4359 = vld [vmem:[#allocation21 + $0x68] sm:$0xff]
        %v4360 = vld [vmem:[#allocation21 + $0x70] sm:$0xff]
        %v4361 = vld [vmem:[#allocation21 + $0x78] sm:$0xff]
        %v4362 = vld [vmem:[#allocation21 + $0x80] sm:$0xff]
        %v4363 = vld [vmem:[#allocation21 + $0x88] sm:$0xff]
        %v4364 = vld [vmem:[#allocation21 + $0x90] sm:$0xff]
        %v4365 = vld [vmem:[#allocation21 + $0x98] sm:$0xff]
        %v4366 = vld [vmem:[#allocation21 + $0xa0] sm:$0xff]
        %v4367 = vld [vmem:[#allocation21 + $0xa8] sm:$0xff]
        %v4368 = vld [vmem:[#allocation21 + $0xb0] sm:$0xff]
        %v4369 = vld [vmem:[#allocation21 + $0xb8] sm:$0xff]
        %v4370 = vld [vmem:[#allocation21 + $0xc0] sm:$0xff]
        %v4371 = vld [vmem:[#allocation21 + $0xc8] sm:$0xff]
        %v4372 = vld [vmem:[#allocation21 + $0xd0] sm:$0xff]
        %v4373 = vld [vmem:[#allocation21 + $0xd8] sm:$0xff]
        %v4374 = vld [vmem:[#allocation21 + $0xe0] sm:$0xff]
        %v4375 = vld [vmem:[#allocation21 + $0xe8] sm:$0xff]
        %v4376 = vld [vmem:[#allocation21 + $0xf0] sm:$0xff]
        %v4377 = vld [vmem:[#allocation21 + $0xf8] sm:$0xff]
        %v4410 = vunpack.c.l.b16 %v4346
        %v4411 = vunpack.c.h.b16 %v4346
        %v4412 = vunpack.c.l.b16 %v4347
        %v4413 = vunpack.c.h.b16 %v4347
        %v4414 = vunpack.c.l.b16 %v4348
        %v4415 = vunpack.c.h.b16 %v4348
        %v4416 = vunpack.c.l.b16 %v4349
        %v4417 = vunpack.c.h.b16 %v4349
        %v4418 = vunpack.c.l.b16 %v4350
        %v4419 = vunpack.c.h.b16 %v4350
        %v4420 = vunpack.c.l.b16 %v4351
        %v4421 = vunpack.c.h.b16 %v4351
        %v4422 = vunpack.c.l.b16 %v4352
        %v4423 = vunpack.c.h.b16 %v4352
        %v4424 = vunpack.c.l.b16 %v4353
        %v4425 = vunpack.c.h.b16 %v4353
        %v4426 = vunpack.c.l.b16 %v4354
        %v4427 = vunpack.c.h.b16 %v4354
        %v4428 = vunpack.c.l.b16 %v4355
        %v4429 = vunpack.c.h.b16 %v4355
        %v4430 = vunpack.c.l.b16 %v4356
        %v4431 = vunpack.c.h.b16 %v4356
        %v4432 = vunpack.c.l.b16 %v4357
        %v4433 = vunpack.c.h.b16 %v4357
        %v4434 = vunpack.c.l.b16 %v4358
        %v4435 = vunpack.c.h.b16 %v4358
        %v4436 = vunpack.c.l.b16 %v4359
        %v4437 = vunpack.c.h.b16 %v4359
        %v4438 = vunpack.c.l.b16 %v4360
        %v4439 = vunpack.c.h.b16 %v4360
        %v4440 = vunpack.c.l.b16 %v4361
        %v4441 = vunpack.c.h.b16 %v4361
        %v4442 = vunpack.c.l.b16 %v4362
        %v4443 = vunpack.c.h.b16 %v4362
        %v4444 = vunpack.c.l.b16 %v4363
        %v4445 = vunpack.c.h.b16 %v4363
        %v4446 = vunpack.c.l.b16 %v4364
        %v4447 = vunpack.c.h.b16 %v4364
        %v4448 = vunpack.c.l.b16 %v4365
        %v4449 = vunpack.c.h.b16 %v4365
        %v4450 = vunpack.c.l.b16 %v4366
        %v4451 = vunpack.c.h.b16 %v4366
        %v4452 = vunpack.c.l.b16 %v4367
        %v4453 = vunpack.c.h.b16 %v4367
        %v4454 = vunpack.c.l.b16 %v4368
        %v4455 = vunpack.c.h.b16 %v4368
        %v4456 = vunpack.c.l.b16 %v4369
        %v4457 = vunpack.c.h.b16 %v4369
        %v4458 = vunpack.c.l.b16 %v4370
        %v4459 = vunpack.c.h.b16 %v4370
        %v4460 = vunpack.c.l.b16 %v4371
        %v4461 = vunpack.c.h.b16 %v4371
        %v4462 = vunpack.c.l.b16 %v4372
        %v4463 = vunpack.c.h.b16 %v4372
        %v4464 = vunpack.c.l.b16 %v4373
        %v4465 = vunpack.c.h.b16 %v4373
        %v4466 = vunpack.c.l.b16 %v4374
        %v4467 = vunpack.c.h.b16 %v4374
        %v4468 = vunpack.c.l.b16 %v4375
        %v4469 = vunpack.c.h.b16 %v4375
        %v4470 = vunpack.c.l.b16 %v4376
        %v4471 = vunpack.c.h.b16 %v4376
        %v4472 = vunpack.c.l.b16 %v4377
        %v4473 = vunpack.c.h.b16 %v4377
        %v4474 = vpack.c.b16 %v4412, %v4410
        %v4475 = vpack.c.b16 %v4413, %v4411
        %v4476 = vpack.c.b16 %v4416, %v4414
        %v4477 = vpack.c.b16 %v4417, %v4415
        %v4478 = vpack.c.b16 %v4420, %v4418
        %v4479 = vpack.c.b16 %v4421, %v4419
        %v4480 = vpack.c.b16 %v4424, %v4422
        %v4481 = vpack.c.b16 %v4425, %v4423
        %v4482 = vpack.c.b16 %v4428, %v4426
        %v4483 = vpack.c.b16 %v4429, %v4427
        %v4484 = vpack.c.b16 %v4432, %v4430
        %v4485 = vpack.c.b16 %v4433, %v4431
        %v4486 = vpack.c.b16 %v4436, %v4434
        %v4487 = vpack.c.b16 %v4437, %v4435
        %v4488 = vpack.c.b16 %v4440, %v4438
        %v4489 = vpack.c.b16 %v4441, %v4439
        %v4490 = vpack.c.b16 %v4444, %v4442
        %v4491 = vpack.c.b16 %v4445, %v4443
        %v4492 = vpack.c.b16 %v4448, %v4446
        %v4493 = vpack.c.b16 %v4449, %v4447
        %v4494 = vpack.c.b16 %v4452, %v4450
        %v4495 = vpack.c.b16 %v4453, %v4451
        %v4496 = vpack.c.b16 %v4456, %v4454
        %v4497 = vpack.c.b16 %v4457, %v4455
        %v4498 = vpack.c.b16 %v4460, %v4458
        %v4499 = vpack.c.b16 %v4461, %v4459
        %v4500 = vpack.c.b16 %v4464, %v4462
        %v4501 = vpack.c.b16 %v4465, %v4463
        %v4502 = vpack.c.b16 %v4468, %v4466
        %v4503 = vpack.c.b16 %v4469, %v4467
        %v4504 = vpack.c.b16 %v4472, %v4470
        %v4505 = vpack.c.b16 %v4473, %v4471
        %4538 = vmatprep.subr.bf16.mxu0 %v4475
        %4539 = vmatpush1.bf16.msra.mxu0 %v4474
        %4540 = vmatprep.subr.bf16.mxu0 %v4477
        %4541 = vmatpush1.bf16.msra.mxu0 %v4476
        %4542 = vmatprep.subr.bf16.mxu0 %v4479
        %4543 = vmatpush1.bf16.msra.mxu0 %v4478
        %4544 = vmatprep.subr.bf16.mxu0 %v4481
        %4545 = vmatpush1.bf16.msra.mxu0 %v4480
        %4546 = vmatprep.subr.bf16.mxu0 %v4483
        %4547 = vmatpush1.bf16.msra.mxu0 %v4482
        %4548 = vmatprep.subr.bf16.mxu0 %v4485
        %4549 = vmatpush1.bf16.msra.mxu0 %v4484
        %4550 = vmatprep.subr.bf16.mxu0 %v4487
        %4551 = vmatpush1.bf16.msra.mxu0 %v4486
        %4552 = vmatprep.subr.bf16.mxu0 %v4489
        %4553 = vmatpush1.bf16.msra.mxu0 %v4488
        %4554 = vmatprep.subr.bf16.mxu0 %v4491
        %4555 = vmatpush1.bf16.msra.mxu0 %v4490
        %4556 = vmatprep.subr.bf16.mxu0 %v4493
        %4557 = vmatpush1.bf16.msra.mxu0 %v4492
        %4558 = vmatprep.subr.bf16.mxu0 %v4495
        %4559 = vmatpush1.bf16.msra.mxu0 %v4494
        %4560 = vmatprep.subr.bf16.mxu0 %v4497
        %4561 = vmatpush1.bf16.msra.mxu0 %v4496
        %4562 = vmatprep.subr.bf16.mxu0 %v4499
        %4563 = vmatpush1.bf16.msra.mxu0 %v4498
        %4564 = vmatprep.subr.bf16.mxu0 %v4501
        %4565 = vmatpush1.bf16.msra.mxu0 %v4500
        %4566 = vmatprep.subr.bf16.mxu0 %v4503
        %4567 = vmatpush1.bf16.msra.mxu0 %v4502
        %4568 = vmatprep.subr.bf16.mxu0 %v4505
        %4569 = vmatpush1.bf16.msra.mxu0 %v4504
        %4570 = vmatprep.mubr.bf16.mxu0 %v4345
        %4571 = vmatmul.mubr.bf16.gmra.mrb[0].mxu0 %v4344
        %v4572 = vpop.f32.mrb[0].mxu0
        %v4573 = vadd.f32 0.0, %v4572
        %v4574 = vpop.f32.mrb[0].mxu0
        %v4575 = vadd.f32 0.0, %v4574
        %v4576 = vpop.f32.mrb[0].mxu0
        %v4577 = vadd.f32 0.0, %v4576
        %v4578 = vpop.f32.mrb[0].mxu0
        %v4579 = vadd.f32 0.0, %v4578
        %4580 = vdwg.mxu0
        %v4581 = vrot.slane %v4575, 4
        %v4582 = vrot.slane %v4579, 4
        %v4583 = vsel %vm1475, %v4581, %v4582
        %v4584 = vsel %vm1475, %v4582, %v4581
        %v4585 = vsel %vm1563, 1, 0
        %v4586 = vsel %vm1564, 1, 0
        %vm4587 = vcmp.eq.s32.totalorder %v4585, 1
        %vm4588 = vcmp.eq.s32.totalorder %v4586, 1
        %v4589 = vsel %vm4587, %v4573, %v4584
        %v4590 = vsel %vm4588, %v4577, %v4583
        %v4591 = vld [vmem:[%s37] sm:$0x1]
        %v4593 = vlaneseq
        %v4594 = vshrl.u32 %v4593, 7
        %v4595 = vsub.s32 0, %v4594
        %v4596 = vrot.slane %v4591, %v4595
        %v4598 = vadd.f32 %v4589, %v4596
        %v4599 = vadd.f32 %v4590, %v4596
        %v4600 = vrot.slane %v4598, 4
        %v4601 = vrot.slane %v4599, 4
        %v4602 = vsel %vm1475, %v4600, %v4601
        %v4603 = vsel %vm1475, %v4601, %v4600
        %v4604 = vsel %vm2216, 0.0, %v4603
        %v4605 = vsel %vm2216, 0.0, %v2765
        %v4606 = vsel %vm2217, 0.0, %v4602
        %v4607 = vsel %vm2217, 0.0, %v2764
        %v4608 = vsel %vm2222, 0.0, %v4602
        %v4609 = vsel %vm2222, 0.0, %v2764
        %v4610 = vsel %vm2223, 0.0, %v4603
        %v4611 = vsel %vm2223, 0.0, %v2765
        %v4612 = vpack.c.bf16 %v4606, %v4604
        %v4613 = vpack.c.bf16 %v4607, %v4605
        %v4614 = vpack.c.bf16 %v4599, %v4598
        %v4615 = vpack.c.bf16 %v2761, %v2760
        %v4616 = vpack.c.bf16 %v4610, %v4608
        %v4617 = vpack.c.bf16 %v4611, %v4609
        %v4618 = vld [vmem:[#allocation25] sm:$0xff]
        %v4619 = vld [vmem:[#allocation25 + $0x8] sm:$0xff]
        %v4620 = vld [vmem:[#allocation25 + $0x10] sm:$0xff]
        %v4621 = vld [vmem:[#allocation25 + $0x18] sm:$0xff]
        %v4622 = vld [vmem:[#allocation25 + $0x20] sm:$0xff]
        %v4623 = vld [vmem:[#allocation25 + $0x28] sm:$0xff]
        %v4624 = vld [vmem:[#allocation25 + $0x30] sm:$0xff]
        %v4625 = vld [vmem:[#allocation25 + $0x38] sm:$0xff]
        %v4626 = vld [vmem:[#allocation25 + $0x40] sm:$0xff]
        %v4627 = vld [vmem:[#allocation25 + $0x48] sm:$0xff]
        %v4628 = vld [vmem:[#allocation25 + $0x50] sm:$0xff]
        %v4629 = vld [vmem:[#allocation25 + $0x58] sm:$0xff]
        %v4630 = vld [vmem:[#allocation25 + $0x60] sm:$0xff]
        %v4631 = vld [vmem:[#allocation25 + $0x68] sm:$0xff]
        %v4632 = vld [vmem:[#allocation25 + $0x70] sm:$0xff]
        %v4633 = vld [vmem:[#allocation25 + $0x78] sm:$0xff]
        %v4634 = vld [vmem:[#allocation25 + $0x80] sm:$0xff]
        %v4635 = vld [vmem:[#allocation25 + $0x88] sm:$0xff]
        %v4636 = vld [vmem:[#allocation25 + $0x90] sm:$0xff]
        %v4637 = vld [vmem:[#allocation25 + $0x98] sm:$0xff]
        %v4638 = vld [vmem:[#allocation25 + $0xa0] sm:$0xff]
        %v4639 = vld [vmem:[#allocation25 + $0xa8] sm:$0xff]
        %v4640 = vld [vmem:[#allocation25 + $0xb0] sm:$0xff]
        %v4641 = vld [vmem:[#allocation25 + $0xb8] sm:$0xff]
        %v4642 = vld [vmem:[#allocation25 + $0xc0] sm:$0xff]
        %v4643 = vld [vmem:[#allocation25 + $0xc8] sm:$0xff]
        %v4644 = vld [vmem:[#allocation25 + $0xd0] sm:$0xff]
        %v4645 = vld [vmem:[#allocation25 + $0xd8] sm:$0xff]
        %v4646 = vld [vmem:[#allocation25 + $0xe0] sm:$0xff]
        %v4647 = vld [vmem:[#allocation25 + $0xe8] sm:$0xff]
        %v4648 = vld [vmem:[#allocation25 + $0xf0] sm:$0xff]
        %v4649 = vld [vmem:[#allocation25 + $0xf8] sm:$0xff]
        %v4650 = vld [vmem:[#allocation25 + $0x100] sm:$0xff]
        %v4651 = vld [vmem:[#allocation25 + $0x108] sm:$0xff]
        %v4652 = vld [vmem:[#allocation25 + $0x110] sm:$0xff]
        %v4653 = vld [vmem:[#allocation25 + $0x118] sm:$0xff]
        %v4654 = vld [vmem:[#allocation25 + $0x120] sm:$0xff]
        %v4655 = vld [vmem:[#allocation25 + $0x128] sm:$0xff]
        %v4656 = vld [vmem:[#allocation25 + $0x130] sm:$0xff]
        %v4657 = vld [vmem:[#allocation25 + $0x138] sm:$0xff]
        %v4658 = vld [vmem:[#allocation25 + $0x140] sm:$0xff]
        %v4659 = vld [vmem:[#allocation25 + $0x148] sm:$0xff]
        %v4660 = vld [vmem:[#allocation25 + $0x150] sm:$0xff]
        %v4661 = vld [vmem:[#allocation25 + $0x158] sm:$0xff]
        %v4662 = vld [vmem:[#allocation25 + $0x160] sm:$0xff]
        %v4663 = vld [vmem:[#allocation25 + $0x168] sm:$0xff]
        %v4664 = vld [vmem:[#allocation25 + $0x170] sm:$0xff]
        %v4665 = vld [vmem:[#allocation25 + $0x178] sm:$0xff]
        %v4666 = vld [vmem:[#allocation25 + $0x180] sm:$0xff]
        %v4667 = vld [vmem:[#allocation25 + $0x188] sm:$0xff]
        %v4668 = vld [vmem:[#allocation25 + $0x190] sm:$0xff]
        %v4669 = vld [vmem:[#allocation25 + $0x198] sm:$0xff]
        %v4670 = vld [vmem:[#allocation25 + $0x1a0] sm:$0xff]
        %v4671 = vld [vmem:[#allocation25 + $0x1a8] sm:$0xff]
        %v4672 = vld [vmem:[#allocation25 + $0x1b0] sm:$0xff]
        %v4673 = vld [vmem:[#allocation25 + $0x1b8] sm:$0xff]
        %v4674 = vld [vmem:[#allocation25 + $0x1c0] sm:$0xff]
        %v4675 = vld [vmem:[#allocation25 + $0x1c8] sm:$0xff]
        %v4676 = vld [vmem:[#allocation25 + $0x1d0] sm:$0xff]
        %v4677 = vld [vmem:[#allocation25 + $0x1d8] sm:$0xff]
        %v4678 = vld [vmem:[#allocation25 + $0x1e0] sm:$0xff]
        %v4679 = vld [vmem:[#allocation25 + $0x1e8] sm:$0xff]
        %v4680 = vld [vmem:[#allocation25 + $0x1f0] sm:$0xff]
        %v4681 = vld [vmem:[#allocation25 + $0x1f8] sm:$0xff]
        %v4682 = vld [vmem:[#allocation25 + $0x200] sm:$0xff]
        %v4683 = vld [vmem:[#allocation25 + $0x208] sm:$0xff]
        %v4684 = vld [vmem:[#allocation25 + $0x210] sm:$0xff]
        %v4685 = vld [vmem:[#allocation25 + $0x218] sm:$0xff]
        %v4686 = vld [vmem:[#allocation25 + $0x220] sm:$0xff]
        %v4687 = vld [vmem:[#allocation25 + $0x228] sm:$0xff]
        %v4688 = vld [vmem:[#allocation25 + $0x230] sm:$0xff]
        %v4689 = vld [vmem:[#allocation25 + $0x238] sm:$0xff]
        %v4690 = vld [vmem:[#allocation25 + $0x240] sm:$0xff]
        %v4691 = vld [vmem:[#allocation25 + $0x248] sm:$0xff]
        %v4692 = vld [vmem:[#allocation25 + $0x250] sm:$0xff]
        %v4693 = vld [vmem:[#allocation25 + $0x258] sm:$0xff]
        %v4694 = vld [vmem:[#allocation25 + $0x260] sm:$0xff]
        %v4695 = vld [vmem:[#allocation25 + $0x268] sm:$0xff]
        %v4696 = vld [vmem:[#allocation25 + $0x270] sm:$0xff]
        %v4697 = vld [vmem:[#allocation25 + $0x278] sm:$0xff]
        %v4698 = vld [vmem:[#allocation25 + $0x280] sm:$0xff]
        %v4699 = vld [vmem:[#allocation25 + $0x288] sm:$0xff]
        %v4700 = vld [vmem:[#allocation25 + $0x290] sm:$0xff]
        %v4701 = vld [vmem:[#allocation25 + $0x298] sm:$0xff]
        %v4702 = vld [vmem:[#allocation25 + $0x2a0] sm:$0xff]
        %v4703 = vld [vmem:[#allocation25 + $0x2a8] sm:$0xff]
        %v4704 = vld [vmem:[#allocation25 + $0x2b0] sm:$0xff]
        %v4705 = vld [vmem:[#allocation25 + $0x2b8] sm:$0xff]
        %v4706 = vld [vmem:[#allocation25 + $0x2c0] sm:$0xff]
        %v4707 = vld [vmem:[#allocation25 + $0x2c8] sm:$0xff]
        %v4708 = vld [vmem:[#allocation25 + $0x2d0] sm:$0xff]
        %v4709 = vld [vmem:[#allocation25 + $0x2d8] sm:$0xff]
        %v4710 = vld [vmem:[#allocation25 + $0x2e0] sm:$0xff]
        %v4711 = vld [vmem:[#allocation25 + $0x2e8] sm:$0xff]
        %v4712 = vld [vmem:[#allocation25 + $0x2f0] sm:$0xff]
        %v4713 = vld [vmem:[#allocation25 + $0x2f8] sm:$0xff]
        %v4714 = vld [vmem:[#allocation27] sm:$0x3]
        %v4716 = vlaneseq
        %v4717 = vshrl.u32 %v4716, 7
        %v4718 = vsub.s32 0, %v4717
        %v4719 = vrot.slane %v4714, %v4718
        %v4720 = vlaneseq
        %v4721 = vshrl.u32 %v4720, 7
        %v4722 = vsub.s32 1, %v4721
        %v4723 = vrot.slane %v4714, %v4722
        %v4822 = vunpack.c.l.b16 %v4618
        %v4823 = vunpack.c.h.b16 %v4618
        %v4824 = vunpack.c.l.b16 %v4619
        %v4825 = vunpack.c.h.b16 %v4619
        %v4826 = vunpack.c.l.b16 %v4620
        %v4827 = vunpack.c.h.b16 %v4620
        %v4828 = vunpack.c.l.b16 %v4621
        %v4829 = vunpack.c.h.b16 %v4621
        %v4830 = vunpack.c.l.b16 %v4622
        %v4831 = vunpack.c.h.b16 %v4622
        %v4832 = vunpack.c.l.b16 %v4623
        %v4833 = vunpack.c.h.b16 %v4623
        %v4834 = vunpack.c.l.b16 %v4624
        %v4835 = vunpack.c.h.b16 %v4624
        %v4836 = vunpack.c.l.b16 %v4625
        %v4837 = vunpack.c.h.b16 %v4625
        %v4838 = vunpack.c.l.b16 %v4626
        %v4839 = vunpack.c.h.b16 %v4626
        %v4840 = vunpack.c.l.b16 %v4627
        %v4841 = vunpack.c.h.b16 %v4627
        %v4842 = vunpack.c.l.b16 %v4628
        %v4843 = vunpack.c.h.b16 %v4628
        %v4844 = vunpack.c.l.b16 %v4629
        %v4845 = vunpack.c.h.b16 %v4629
        %v4846 = vunpack.c.l.b16 %v4630
        %v4847 = vunpack.c.h.b16 %v4630
        %v4848 = vunpack.c.l.b16 %v4631
        %v4849 = vunpack.c.h.b16 %v4631
        %v4850 = vunpack.c.l.b16 %v4632
        %v4851 = vunpack.c.h.b16 %v4632
        %v4852 = vunpack.c.l.b16 %v4633
        %v4853 = vunpack.c.h.b16 %v4633
        %v4854 = vunpack.c.l.b16 %v4634
        %v4855 = vunpack.c.h.b16 %v4634
        %v4856 = vunpack.c.l.b16 %v4635
        %v4857 = vunpack.c.h.b16 %v4635
        %v4858 = vunpack.c.l.b16 %v4636
        %v4859 = vunpack.c.h.b16 %v4636
        %v4860 = vunpack.c.l.b16 %v4637
        %v4861 = vunpack.c.h.b16 %v4637
        %v4862 = vunpack.c.l.b16 %v4638
        %v4863 = vunpack.c.h.b16 %v4638
        %v4864 = vunpack.c.l.b16 %v4639
        %v4865 = vunpack.c.h.b16 %v4639
        %v4866 = vunpack.c.l.b16 %v4640
        %v4867 = vunpack.c.h.b16 %v4640
        %v4868 = vunpack.c.l.b16 %v4641
        %v4869 = vunpack.c.h.b16 %v4641
        %v4870 = vunpack.c.l.b16 %v4642
        %v4871 = vunpack.c.h.b16 %v4642
        %v4872 = vunpack.c.l.b16 %v4643
        %v4873 = vunpack.c.h.b16 %v4643
        %v4874 = vunpack.c.l.b16 %v4644
        %v4875 = vunpack.c.h.b16 %v4644
        %v4876 = vunpack.c.l.b16 %v4645
        %v4877 = vunpack.c.h.b16 %v4645
        %v4878 = vunpack.c.l.b16 %v4646
        %v4879 = vunpack.c.h.b16 %v4646
        %v4880 = vunpack.c.l.b16 %v4647
        %v4881 = vunpack.c.h.b16 %v4647
        %v4882 = vunpack.c.l.b16 %v4648
        %v4883 = vunpack.c.h.b16 %v4648
        %v4884 = vunpack.c.l.b16 %v4649
        %v4885 = vunpack.c.h.b16 %v4649
        %v4886 = vunpack.c.l.b16 %v4650
        %v4887 = vunpack.c.h.b16 %v4650
        %v4888 = vunpack.c.l.b16 %v4651
        %v4889 = vunpack.c.h.b16 %v4651
        %v4890 = vunpack.c.l.b16 %v4652
        %v4891 = vunpack.c.h.b16 %v4652
        %v4892 = vunpack.c.l.b16 %v4653
        %v4893 = vunpack.c.h.b16 %v4653
        %v4894 = vunpack.c.l.b16 %v4654
        %v4895 = vunpack.c.h.b16 %v4654
        %v4896 = vunpack.c.l.b16 %v4655
        %v4897 = vunpack.c.h.b16 %v4655
        %v4898 = vunpack.c.l.b16 %v4656
        %v4899 = vunpack.c.h.b16 %v4656
        %v4900 = vunpack.c.l.b16 %v4657
        %v4901 = vunpack.c.h.b16 %v4657
        %v4902 = vunpack.c.l.b16 %v4658
        %v4903 = vunpack.c.h.b16 %v4658
        %v4904 = vunpack.c.l.b16 %v4659
        %v4905 = vunpack.c.h.b16 %v4659
        %v4906 = vunpack.c.l.b16 %v4660
        %v4907 = vunpack.c.h.b16 %v4660
        %v4908 = vunpack.c.l.b16 %v4661
        %v4909 = vunpack.c.h.b16 %v4661
        %v4910 = vunpack.c.l.b16 %v4662
        %v4911 = vunpack.c.h.b16 %v4662
        %v4912 = vunpack.c.l.b16 %v4663
        %v4913 = vunpack.c.h.b16 %v4663
        %v4914 = vunpack.c.l.b16 %v4664
        %v4915 = vunpack.c.h.b16 %v4664
        %v4916 = vunpack.c.l.b16 %v4665
        %v4917 = vunpack.c.h.b16 %v4665
        %v4918 = vunpack.c.l.b16 %v4666
        %v4919 = vunpack.c.h.b16 %v4666
        %v4920 = vunpack.c.l.b16 %v4667
        %v4921 = vunpack.c.h.b16 %v4667
        %v4922 = vunpack.c.l.b16 %v4668
        %v4923 = vunpack.c.h.b16 %v4668
        %v4924 = vunpack.c.l.b16 %v4669
        %v4925 = vunpack.c.h.b16 %v4669
        %v4926 = vunpack.c.l.b16 %v4670
        %v4927 = vunpack.c.h.b16 %v4670
        %v4928 = vunpack.c.l.b16 %v4671
        %v4929 = vunpack.c.h.b16 %v4671
        %v4930 = vunpack.c.l.b16 %v4672
        %v4931 = vunpack.c.h.b16 %v4672
        %v4932 = vunpack.c.l.b16 %v4673
        %v4933 = vunpack.c.h.b16 %v4673
        %v4934 = vunpack.c.l.b16 %v4674
        %v4935 = vunpack.c.h.b16 %v4674
        %v4936 = vunpack.c.l.b16 %v4675
        %v4937 = vunpack.c.h.b16 %v4675
        %v4938 = vunpack.c.l.b16 %v4676
        %v4939 = vunpack.c.h.b16 %v4676
        %v4940 = vunpack.c.l.b16 %v4677
        %v4941 = vunpack.c.h.b16 %v4677
        %v4942 = vunpack.c.l.b16 %v4678
        %v4943 = vunpack.c.h.b16 %v4678
        %v4944 = vunpack.c.l.b16 %v4679
        %v4945 = vunpack.c.h.b16 %v4679
        %v4946 = vunpack.c.l.b16 %v4680
        %v4947 = vunpack.c.h.b16 %v4680
        %v4948 = vunpack.c.l.b16 %v4681
        %v4949 = vunpack.c.h.b16 %v4681
        %v4950 = vunpack.c.l.b16 %v4682
        %v4951 = vunpack.c.h.b16 %v4682
        %v4952 = vunpack.c.l.b16 %v4683
        %v4953 = vunpack.c.h.b16 %v4683
        %v4954 = vunpack.c.l.b16 %v4684
        %v4955 = vunpack.c.h.b16 %v4684
        %v4956 = vunpack.c.l.b16 %v4685
        %v4957 = vunpack.c.h.b16 %v4685
        %v4958 = vunpack.c.l.b16 %v4686
        %v4959 = vunpack.c.h.b16 %v4686
        %v4960 = vunpack.c.l.b16 %v4687
        %v4961 = vunpack.c.h.b16 %v4687
        %v4962 = vunpack.c.l.b16 %v4688
        %v4963 = vunpack.c.h.b16 %v4688
        %v4964 = vunpack.c.l.b16 %v4689
        %v4965 = vunpack.c.h.b16 %v4689
        %v4966 = vunpack.c.l.b16 %v4690
        %v4967 = vunpack.c.h.b16 %v4690
        %v4968 = vunpack.c.l.b16 %v4691
        %v4969 = vunpack.c.h.b16 %v4691
        %v4970 = vunpack.c.l.b16 %v4692
        %v4971 = vunpack.c.h.b16 %v4692
        %v4972 = vunpack.c.l.b16 %v4693
        %v4973 = vunpack.c.h.b16 %v4693
        %v4974 = vunpack.c.l.b16 %v4694
        %v4975 = vunpack.c.h.b16 %v4694
        %v4976 = vunpack.c.l.b16 %v4695
        %v4977 = vunpack.c.h.b16 %v4695
        %v4978 = vunpack.c.l.b16 %v4696
        %v4979 = vunpack.c.h.b16 %v4696
        %v4980 = vunpack.c.l.b16 %v4697
        %v4981 = vunpack.c.h.b16 %v4697
        %v4982 = vunpack.c.l.b16 %v4698
        %v4983 = vunpack.c.h.b16 %v4698
        %v4984 = vunpack.c.l.b16 %v4699
        %v4985 = vunpack.c.h.b16 %v4699
        %v4986 = vunpack.c.l.b16 %v4700
        %v4987 = vunpack.c.h.b16 %v4700
        %v4988 = vunpack.c.l.b16 %v4701
        %v4989 = vunpack.c.h.b16 %v4701
        %v4990 = vunpack.c.l.b16 %v4702
        %v4991 = vunpack.c.h.b16 %v4702
        %v4992 = vunpack.c.l.b16 %v4703
        %v4993 = vunpack.c.h.b16 %v4703
        %v4994 = vunpack.c.l.b16 %v4704
        %v4995 = vunpack.c.h.b16 %v4704
        %v4996 = vunpack.c.l.b16 %v4705
        %v4997 = vunpack.c.h.b16 %v4705
        %v4998 = vunpack.c.l.b16 %v4706
        %v4999 = vunpack.c.h.b16 %v4706
        %v5000 = vunpack.c.l.b16 %v4707
        %v5001 = vunpack.c.h.b16 %v4707
        %v5002 = vunpack.c.l.b16 %v4708
        %v5003 = vunpack.c.h.b16 %v4708
        %v5004 = vunpack.c.l.b16 %v4709
        %v5005 = vunpack.c.h.b16 %v4709
        %v5006 = vunpack.c.l.b16 %v4710
        %v5007 = vunpack.c.h.b16 %v4710
        %v5008 = vunpack.c.l.b16 %v4711
        %v5009 = vunpack.c.h.b16 %v4711
        %v5010 = vunpack.c.l.b16 %v4712
        %v5011 = vunpack.c.h.b16 %v4712
        %v5012 = vunpack.c.l.b16 %v4713
        %v5013 = vunpack.c.h.b16 %v4713
        %v5014 = vpack.c.b16 %v4824, %v4822
        %v5015 = vpack.c.b16 %v4825, %v4823
        %v5016 = vpack.c.b16 %v4828, %v4826
        %v5017 = vpack.c.b16 %v4829, %v4827
        %v5018 = vpack.c.b16 %v4832, %v4830
        %v5019 = vpack.c.b16 %v4833, %v4831
        %v5020 = vpack.c.b16 %v4836, %v4834
        %v5021 = vpack.c.b16 %v4837, %v4835
        %v5022 = vpack.c.b16 %v4840, %v4838
        %v5023 = vpack.c.b16 %v4841, %v4839
        %v5024 = vpack.c.b16 %v4844, %v4842
        %v5025 = vpack.c.b16 %v4845, %v4843
        %v5026 = vpack.c.b16 %v4848, %v4846
        %v5027 = vpack.c.b16 %v4849, %v4847
        %v5028 = vpack.c.b16 %v4852, %v4850
        %v5029 = vpack.c.b16 %v4853, %v4851
        %v5030 = vpack.c.b16 %v4856, %v4854
        %v5031 = vpack.c.b16 %v4857, %v4855
        %v5032 = vpack.c.b16 %v4860, %v4858
        %v5033 = vpack.c.b16 %v4861, %v4859
        %v5034 = vpack.c.b16 %v4864, %v4862
        %v5035 = vpack.c.b16 %v4865, %v4863
        %v5036 = vpack.c.b16 %v4868, %v4866
        %v5037 = vpack.c.b16 %v4869, %v4867
        %v5038 = vpack.c.b16 %v4872, %v4870
        %v5039 = vpack.c.b16 %v4873, %v4871
        %v5040 = vpack.c.b16 %v4876, %v4874
        %v5041 = vpack.c.b16 %v4877, %v4875
        %v5042 = vpack.c.b16 %v4880, %v4878
        %v5043 = vpack.c.b16 %v4881, %v4879
        %v5044 = vpack.c.b16 %v4884, %v4882
        %v5045 = vpack.c.b16 %v4885, %v4883
        %v5046 = vpack.c.b16 %v4888, %v4886
        %v5047 = vpack.c.b16 %v4889, %v4887
        %v5048 = vpack.c.b16 %v4892, %v4890
        %v5049 = vpack.c.b16 %v4893, %v4891
        %v5050 = vpack.c.b16 %v4896, %v4894
        %v5051 = vpack.c.b16 %v4897, %v4895
        %v5052 = vpack.c.b16 %v4900, %v4898
        %v5053 = vpack.c.b16 %v4901, %v4899
        %v5054 = vpack.c.b16 %v4904, %v4902
        %v5055 = vpack.c.b16 %v4905, %v4903
        %v5056 = vpack.c.b16 %v4908, %v4906
        %v5057 = vpack.c.b16 %v4909, %v4907
        %v5058 = vpack.c.b16 %v4912, %v4910
        %v5059 = vpack.c.b16 %v4913, %v4911
        %v5060 = vpack.c.b16 %v4916, %v4914
        %v5061 = vpack.c.b16 %v4917, %v4915
        %v5062 = vpack.c.b16 %v4920, %v4918
        %v5063 = vpack.c.b16 %v4921, %v4919
        %v5064 = vpack.c.b16 %v4924, %v4922
        %v5065 = vpack.c.b16 %v4925, %v4923
        %v5066 = vpack.c.b16 %v4928, %v4926
        %v5067 = vpack.c.b16 %v4929, %v4927
        %v5068 = vpack.c.b16 %v4932, %v4930
        %v5069 = vpack.c.b16 %v4933, %v4931
        %v5070 = vpack.c.b16 %v4936, %v4934
        %v5071 = vpack.c.b16 %v4937, %v4935
        %v5072 = vpack.c.b16 %v4940, %v4938
        %v5073 = vpack.c.b16 %v4941, %v4939
        %v5074 = vpack.c.b16 %v4944, %v4942
        %v5075 = vpack.c.b16 %v4945, %v4943
        %v5076 = vpack.c.b16 %v4948, %v4946
        %v5077 = vpack.c.b16 %v4949, %v4947
        %v5078 = vpack.c.b16 %v4952, %v4950
        %v5079 = vpack.c.b16 %v4953, %v4951
        %v5080 = vpack.c.b16 %v4956, %v4954
        %v5081 = vpack.c.b16 %v4957, %v4955
        %v5082 = vpack.c.b16 %v4960, %v4958
        %v5083 = vpack.c.b16 %v4961, %v4959
        %v5084 = vpack.c.b16 %v4964, %v4962
        %v5085 = vpack.c.b16 %v4965, %v4963
        %v5086 = vpack.c.b16 %v4968, %v4966
        %v5087 = vpack.c.b16 %v4969, %v4967
        %v5088 = vpack.c.b16 %v4972, %v4970
        %v5089 = vpack.c.b16 %v4973, %v4971
        %v5090 = vpack.c.b16 %v4976, %v4974
        %v5091 = vpack.c.b16 %v4977, %v4975
        %v5092 = vpack.c.b16 %v4980, %v4978
        %v5093 = vpack.c.b16 %v4981, %v4979
        %v5094 = vpack.c.b16 %v4984, %v4982
        %v5095 = vpack.c.b16 %v4985, %v4983
        %v5096 = vpack.c.b16 %v4988, %v4986
        %v5097 = vpack.c.b16 %v4989, %v4987
        %v5098 = vpack.c.b16 %v4992, %v4990
        %v5099 = vpack.c.b16 %v4993, %v4991
        %v5100 = vpack.c.b16 %v4996, %v4994
        %v5101 = vpack.c.b16 %v4997, %v4995
        %v5102 = vpack.c.b16 %v5000, %v4998
        %v5103 = vpack.c.b16 %v5001, %v4999
        %v5104 = vpack.c.b16 %v5004, %v5002
        %v5105 = vpack.c.b16 %v5005, %v5003
        %v5106 = vpack.c.b16 %v5008, %v5006
        %v5107 = vpack.c.b16 %v5009, %v5007
        %v5108 = vpack.c.b16 %v5012, %v5010
        %v5109 = vpack.c.b16 %v5013, %v5011
        %5206 = vmatprep.subr.bf16.mxu0 %v5015
        %5207 = vmatpush1.bf16.msra.mxu0 %v5014
        %5208 = vmatprep.subr.bf16.mxu0 %v5017
        %5209 = vmatpush1.bf16.msra.mxu0 %v5016
        %5210 = vmatprep.subr.bf16.mxu0 %v5019
        %5211 = vmatpush1.bf16.msra.mxu0 %v5018
        %5212 = vmatprep.subr.bf16.mxu0 %v5021
        %5213 = vmatpush1.bf16.msra.mxu0 %v5020
        %5214 = vmatprep.subr.bf16.mxu0 %v5023
        %5215 = vmatpush1.bf16.msra.mxu0 %v5022
        %5216 = vmatprep.subr.bf16.mxu0 %v5025
        %5217 = vmatpush1.bf16.msra.mxu0 %v5024
        %5218 = vmatprep.subr.bf16.mxu0 %v5027
        %5219 = vmatpush1.bf16.msra.mxu0 %v5026
        %5220 = vmatprep.subr.bf16.mxu0 %v5029
        %5221 = vmatpush1.bf16.msra.mxu0 %v5028
        %5222 = vmatprep.subr.bf16.mxu0 %v5031
        %5223 = vmatpush1.bf16.msra.mxu0 %v5030
        %5224 = vmatprep.subr.bf16.mxu0 %v5033
        %5225 = vmatpush1.bf16.msra.mxu0 %v5032
        %5226 = vmatprep.subr.bf16.mxu0 %v5035
        %5227 = vmatpush1.bf16.msra.mxu0 %v5034
        %5228 = vmatprep.subr.bf16.mxu0 %v5037
        %5229 = vmatpush1.bf16.msra.mxu0 %v5036
        %5230 = vmatprep.subr.bf16.mxu0 %v5039
        %5231 = vmatpush1.bf16.msra.mxu0 %v5038
        %5232 = vmatprep.subr.bf16.mxu0 %v5041
        %5233 = vmatpush1.bf16.msra.mxu0 %v5040
        %5234 = vmatprep.subr.bf16.mxu0 %v5043
        %5235 = vmatpush1.bf16.msra.mxu0 %v5042
        %5236 = vmatprep.subr.bf16.mxu0 %v5045
        %5237 = vmatpush1.bf16.msra.mxu0 %v5044
        %5238 = vmatprep.mubr.bf16.mxu0 %v4613
        %5239 = vmatmul.mubr.bf16.gmra.mrb[0].mxu0 %v4612
        %v5240 = vpop.f32.mrb[0].mxu0
        %v5241 = vadd.f32 %v4719, %v5240
        %v5242 = vpop.f32.mrb[0].mxu0
        %v5243 = vadd.f32 %v4723, %v5242
        %v5244 = vpop.f32.mrb[0].mxu0
        %v5245 = vadd.f32 %v4719, %v5244
        %v5246 = vpop.f32.mrb[0].mxu0
        %v5247 = vadd.f32 %v4723, %v5246
        %5248 = vdwg.mxu0
        %5249 = vmatprep.subr.bf16.mxu0 %v5047
        %5250 = vmatpush1.bf16.msra.mxu0 %v5046
        %5251 = vmatprep.subr.bf16.mxu0 %v5049
        %5252 = vmatpush1.bf16.msra.mxu0 %v5048
        %5253 = vmatprep.subr.bf16.mxu0 %v5051
        %5254 = vmatpush1.bf16.msra.mxu0 %v5050
        %5255 = vmatprep.subr.bf16.mxu0 %v5053
        %5256 = vmatpush1.bf16.msra.mxu0 %v5052
        %5257 = vmatprep.subr.bf16.mxu0 %v5055
        %5258 = vmatpush1.bf16.msra.mxu0 %v5054
        %5259 = vmatprep.subr.bf16.mxu0 %v5057
        %5260 = vmatpush1.bf16.msra.mxu0 %v5056
        %5261 = vmatprep.subr.bf16.mxu0 %v5059
        %5262 = vmatpush1.bf16.msra.mxu0 %v5058
        %5263 = vmatprep.subr.bf16.mxu0 %v5061
        %5264 = vmatpush1.bf16.msra.mxu0 %v5060
        %5265 = vmatprep.subr.bf16.mxu0 %v5063
        %5266 = vmatpush1.bf16.msra.mxu0 %v5062
        %5267 = vmatprep.subr.bf16.mxu0 %v5065
        %5268 = vmatpush1.bf16.msra.mxu0 %v5064
        %5269 = vmatprep.subr.bf16.mxu0 %v5067
        %5270 = vmatpush1.bf16.msra.mxu0 %v5066
        %5271 = vmatprep.subr.bf16.mxu0 %v5069
        %5272 = vmatpush1.bf16.msra.mxu0 %v5068
        %5273 = vmatprep.subr.bf16.mxu0 %v5071
        %5274 = vmatpush1.bf16.msra.mxu0 %v5070
        %5275 = vmatprep.subr.bf16.mxu0 %v5073
        %5276 = vmatpush1.bf16.msra.mxu0 %v5072
        %5277 = vmatprep.subr.bf16.mxu0 %v5075
        %5278 = vmatpush1.bf16.msra.mxu0 %v5074
        %5279 = vmatprep.subr.bf16.mxu0 %v5077
        %5280 = vmatpush1.bf16.msra.mxu0 %v5076
        %5281 = vmatprep.mubr.bf16.mxu0 %v4615
        %5282 = vmatmul.mubr.bf16.gmra.mrb[0].mxu0 %v4614
        %v5283 = vpop.f32.mrb[0].mxu0
        %v5284 = vadd.f32 %v5241, %v5283
        %v5285 = vpop.f32.mrb[0].mxu0
        %v5286 = vadd.f32 %v5243, %v5285
        %v5287 = vpop.f32.mrb[0].mxu0
        %v5288 = vadd.f32 %v5245, %v5287
        %v5289 = vpop.f32.mrb[0].mxu0
        %v5290 = vadd.f32 %v5247, %v5289
        %5291 = vdwg.mxu0
        %5292 = vmatprep.subr.bf16.mxu0 %v5079
        %5293 = vmatpush1.bf16.msra.mxu0 %v5078
        %5294 = vmatprep.subr.bf16.mxu0 %v5081
        %5295 = vmatpush1.bf16.msra.mxu0 %v5080
        %5296 = vmatprep.subr.bf16.mxu0 %v5083
        %5297 = vmatpush1.bf16.msra.mxu0 %v5082
        %5298 = vmatprep.subr.bf16.mxu0 %v5085
        %5299 = vmatpush1.bf16.msra.mxu0 %v5084
        %5300 = vmatprep.subr.bf16.mxu0 %v5087
        %5301 = vmatpush1.bf16.msra.mxu0 %v5086
        %5302 = vmatprep.subr.bf16.mxu0 %v5089
        %5303 = vmatpush1.bf16.msra.mxu0 %v5088
        %5304 = vmatprep.subr.bf16.mxu0 %v5091
        %5305 = vmatpush1.bf16.msra.mxu0 %v5090
        %5306 = vmatprep.subr.bf16.mxu0 %v5093
        %5307 = vmatpush1.bf16.msra.mxu0 %v5092
        %5308 = vmatprep.subr.bf16.mxu0 %v5095
        %5309 = vmatpush1.bf16.msra.mxu0 %v5094
        %5310 = vmatprep.subr.bf16.mxu0 %v5097
        %5311 = vmatpush1.bf16.msra.mxu0 %v5096
        %5312 = vmatprep.subr.bf16.mxu0 %v5099
        %5313 = vmatpush1.bf16.msra.mxu0 %v5098
        %5314 = vmatprep.subr.bf16.mxu0 %v5101
        %5315 = vmatpush1.bf16.msra.mxu0 %v5100
        %5316 = vmatprep.subr.bf16.mxu0 %v5103
        %5317 = vmatpush1.bf16.msra.mxu0 %v5102
        %5318 = vmatprep.subr.bf16.mxu0 %v5105
        %5319 = vmatpush1.bf16.msra.mxu0 %v5104
        %5320 = vmatprep.subr.bf16.mxu0 %v5107
        %5321 = vmatpush1.bf16.msra.mxu0 %v5106
        %5322 = vmatprep.subr.bf16.mxu0 %v5109
        %5323 = vmatpush1.bf16.msra.mxu0 %v5108
        %5324 = vmatprep.mubr.bf16.mxu0 %v4617
        %5325 = vmatmul.mubr.bf16.gmra.mrb[0].mxu0 %v4616
        %v5326 = vpop.f32.mrb[0].mxu0
        %v5327 = vadd.f32 %v5284, %v5326
        %v5328 = vpop.f32.mrb[0].mxu0
        %v5329 = vadd.f32 %v5286, %v5328
        %v5330 = vpop.f32.mrb[0].mxu0
        %v5331 = vadd.f32 %v5288, %v5330
        %v5332 = vpop.f32.mrb[0].mxu0
        %v5333 = vadd.f32 %v5290, %v5332
        %5334 = vdwg.mxu0
        %v5335 = vxor.u32 %v5327, 2147483648
        %v5336 = vxor.u32 %v5331, 2147483648
        %v5337 = vmul.f32 %v5335, 1.442695
        %v5338 = vpow.pop %v5337
        %v5339 = vmul.f32 %v5336, 1.442695
        %v5340 = vpow.pop %v5339
        %v5341 = vadd.f32 %v5338, 1.0
        %v5342 = vadd.f32 %v5340, 1.0
        %v5343 = vrcp.pop %v5341
        %v5344 = vmul.f32 1.0, %v5343
        %v5345 = vrcp.pop %v5342
        %v5346 = vmul.f32 1.0, %v5345
        %v5347 = vmul.f32 %v5327, %v5344
        %v5348 = vmul.f32 %v5331, %v5346
        %v5349 = vrot.slane %v5347, 4
        %v5350 = vrot.slane %v5348, 4
        %v5351 = vsel %vm1475, %v5349, %v5350
        %v5352 = vsel %vm1475, %v5350, %v5349
        %v5353 = vsel %vm2216, 0.0, %v5352
        %v5354 = vsel %vm2217, 0.0, %v5351
        %v5355 = vsel %vm2222, 0.0, %v5351
        %v5356 = vsel %vm2223, 0.0, %v5352
        %v5357 = vpack.c.bf16 %v5354, %v5353
        %v5358 = vpack.c.bf16 %v5348, %v5347
        %v5359 = vpack.c.bf16 %v5356, %v5355
        %v5360 = vld [vmem:[#allocation28] sm:$0xf]
        %v5361 = vld [vmem:[#allocation28 + $0x4] sm:$0xf]
        %v5362 = vld [vmem:[#allocation28 + $0x8] sm:$0xf]
        %v5363 = vld [vmem:[#allocation28 + $0xc] sm:$0xf]
        %v5364 = vld [vmem:[#allocation28 + $0x10] sm:$0xf]
        %v5365 = vld [vmem:[#allocation28 + $0x14] sm:$0xf]
        %v5366 = vld [vmem:[#allocation28 + $0x18] sm:$0xf]
        %v5367 = vld [vmem:[#allocation28 + $0x1c] sm:$0xf]
        %v5368 = vld [vmem:[#allocation28 + $0x20] sm:$0xf]
        %v5369 = vld [vmem:[#allocation28 + $0x24] sm:$0xf]
        %v5370 = vld [vmem:[#allocation28 + $0x28] sm:$0xf]
        %v5371 = vld [vmem:[#allocation28 + $0x2c] sm:$0xf]
        %v5372 = vld [vmem:[#allocation28 + $0x30] sm:$0xf]
        %v5373 = vld [vmem:[#allocation28 + $0x34] sm:$0xf]
        %v5374 = vld [vmem:[#allocation28 + $0x38] sm:$0xf]
        %v5375 = vld [vmem:[#allocation28 + $0x3c] sm:$0xf]
        %v5376 = vld [vmem:[#allocation28 + $0x40] sm:$0xf]
        %v5377 = vld [vmem:[#allocation28 + $0x44] sm:$0xf]
        %v5378 = vld [vmem:[#allocation28 + $0x48] sm:$0xf]
        %v5379 = vld [vmem:[#allocation28 + $0x4c] sm:$0xf]
        %v5380 = vld [vmem:[#allocation28 + $0x50] sm:$0xf]
        %v5381 = vld [vmem:[#allocation28 + $0x54] sm:$0xf]
        %v5382 = vld [vmem:[#allocation28 + $0x58] sm:$0xf]
        %v5383 = vld [vmem:[#allocation28 + $0x5c] sm:$0xf]
        %v5384 = vld [vmem:[#allocation28 + $0x60] sm:$0xf]
        %v5385 = vld [vmem:[#allocation28 + $0x64] sm:$0xf]
        %v5386 = vld [vmem:[#allocation28 + $0x68] sm:$0xf]
        %v5387 = vld [vmem:[#allocation28 + $0x6c] sm:$0xf]
        %v5388 = vld [vmem:[#allocation28 + $0x70] sm:$0xf]
        %v5389 = vld [vmem:[#allocation28 + $0x74] sm:$0xf]
        %v5390 = vld [vmem:[#allocation28 + $0x78] sm:$0xf]
        %v5391 = vld [vmem:[#allocation28 + $0x7c] sm:$0xf]
        %v5392 = vld [vmem:[#allocation28 + $0x80] sm:$0xf]
        %v5393 = vld [vmem:[#allocation28 + $0x84] sm:$0xf]
        %v5394 = vld [vmem:[#allocation28 + $0x88] sm:$0xf]
        %v5395 = vld [vmem:[#allocation28 + $0x8c] sm:$0xf]
        %v5396 = vld [vmem:[#allocation28 + $0x90] sm:$0xf]
        %v5397 = vld [vmem:[#allocation28 + $0x94] sm:$0xf]
        %v5398 = vld [vmem:[#allocation28 + $0x98] sm:$0xf]
        %v5399 = vld [vmem:[#allocation28 + $0x9c] sm:$0xf]
        %v5400 = vld [vmem:[#allocation28 + $0xa0] sm:$0xf]
        %v5401 = vld [vmem:[#allocation28 + $0xa4] sm:$0xf]
        %v5402 = vld [vmem:[#allocation28 + $0xa8] sm:$0xf]
        %v5403 = vld [vmem:[#allocation28 + $0xac] sm:$0xf]
        %v5404 = vld [vmem:[#allocation28 + $0xb0] sm:$0xf]
        %v5405 = vld [vmem:[#allocation28 + $0xb4] sm:$0xf]
        %v5406 = vld [vmem:[#allocation28 + $0xb8] sm:$0xf]
        %v5407 = vld [vmem:[#allocation28 + $0xbc] sm:$0xf]
        %v5408 = vld [vmem:[#allocation30] sm:$0x1]
        %v5410 = vlaneseq
        %v5411 = vshrl.u32 %v5410, 7
        %v5412 = vsub.s32 0, %v5411
        %v5413 = vrot.slane %v5408, %v5412
        %v5463 = vunpack.c.l.b16 %v5360
        %v5464 = vunpack.c.l.b16 %v5361
        %v5465 = vunpack.c.l.b16 %v5362
        %v5466 = vunpack.c.l.b16 %v5363
        %v5467 = vunpack.c.l.b16 %v5364
        %v5468 = vunpack.c.l.b16 %v5365
        %v5469 = vunpack.c.l.b16 %v5366
        %v5470 = vunpack.c.l.b16 %v5367
        %v5471 = vunpack.c.l.b16 %v5368
        %v5472 = vunpack.c.l.b16 %v5369
        %v5473 = vunpack.c.l.b16 %v5370
        %v5474 = vunpack.c.l.b16 %v5371
        %v5475 = vunpack.c.l.b16 %v5372
        %v5476 = vunpack.c.l.b16 %v5373
        %v5477 = vunpack.c.l.b16 %v5374
        %v5478 = vunpack.c.l.b16 %v5375
        %v5479 = vunpack.c.l.b16 %v5376
        %v5480 = vunpack.c.l.b16 %v5377
        %v5481 = vunpack.c.l.b16 %v5378
        %v5482 = vunpack.c.l.b16 %v5379
        %v5483 = vunpack.c.l.b16 %v5380
        %v5484 = vunpack.c.l.b16 %v5381
        %v5485 = vunpack.c.l.b16 %v5382
        %v5486 = vunpack.c.l.b16 %v5383
        %v5487 = vunpack.c.l.b16 %v5384
        %v5488 = vunpack.c.l.b16 %v5385
        %v5489 = vunpack.c.l.b16 %v5386
        %v5490 = vunpack.c.l.b16 %v5387
        %v5491 = vunpack.c.l.b16 %v5388
        %v5492 = vunpack.c.l.b16 %v5389
        %v5493 = vunpack.c.l.b16 %v5390
        %v5494 = vunpack.c.l.b16 %v5391
        %v5495 = vunpack.c.l.b16 %v5392
        %v5496 = vunpack.c.l.b16 %v5393
        %v5497 = vunpack.c.l.b16 %v5394
        %v5498 = vunpack.c.l.b16 %v5395
        %v5499 = vunpack.c.l.b16 %v5396
        %v5500 = vunpack.c.l.b16 %v5397
        %v5501 = vunpack.c.l.b16 %v5398
        %v5502 = vunpack.c.l.b16 %v5399
        %v5503 = vunpack.c.l.b16 %v5400
        %v5504 = vunpack.c.l.b16 %v5401
        %v5505 = vunpack.c.l.b16 %v5402
        %v5506 = vunpack.c.l.b16 %v5403
        %v5507 = vunpack.c.l.b16 %v5404
        %v5508 = vunpack.c.l.b16 %v5405
        %v5509 = vunpack.c.l.b16 %v5406
        %v5510 = vunpack.c.l.b16 %v5407
        %v5511 = vpack.c.b16 %v5464, %v5463
        %v5512 = vpack.c.b16 %v5466, %v5465
        %v5513 = vpack.c.b16 %v5468, %v5467
        %v5514 = vpack.c.b16 %v5470, %v5469
        %v5515 = vpack.c.b16 %v5472, %v5471
        %v5516 = vpack.c.b16 %v5474, %v5473
        %v5517 = vpack.c.b16 %v5476, %v5475
        %v5518 = vpack.c.b16 %v5478, %v5477
        %v5519 = vpack.c.b16 %v5480, %v5479
        %v5520 = vpack.c.b16 %v5482, %v5481
        %v5521 = vpack.c.b16 %v5484, %v5483
        %v5522 = vpack.c.b16 %v5486, %v5485
        %v5523 = vpack.c.b16 %v5488, %v5487
        %v5524 = vpack.c.b16 %v5490, %v5489
        %v5525 = vpack.c.b16 %v5492, %v5491
        %v5526 = vpack.c.b16 %v5494, %v5493
        %v5527 = vpack.c.b16 %v5496, %v5495
        %v5528 = vpack.c.b16 %v5498, %v5497
        %v5529 = vpack.c.b16 %v5500, %v5499
        %v5530 = vpack.c.b16 %v5502, %v5501
        %v5531 = vpack.c.b16 %v5504, %v5503
        %v5532 = vpack.c.b16 %v5506, %v5505
        %v5533 = vpack.c.b16 %v5508, %v5507
        %v5534 = vpack.c.b16 %v5510, %v5509
        %5559 = vmatprep.subr.bf16.mxu0 0
        %5560 = vmatpush1.bf16.msra.mxu0 %v5511
        %5561 = vmatprep.subr.bf16.mxu0 0
        %5562 = vmatpush1.bf16.msra.mxu0 %v5512
        %5563 = vmatprep.subr.bf16.mxu0 0
        %5564 = vmatpush1.bf16.msra.mxu0 %v5513
        %5565 = vmatprep.subr.bf16.mxu0 0
        %5566 = vmatpush1.bf16.msra.mxu0 %v5514
        %5567 = vmatprep.subr.bf16.mxu0 0
        %5568 = vmatpush1.bf16.msra.mxu0 %v5515
        %5569 = vmatprep.subr.bf16.mxu0 0
        %5570 = vmatpush1.bf16.msra.mxu0 %v5516
        %5571 = vmatprep.subr.bf16.mxu0 0
        %5572 = vmatpush1.bf16.msra.mxu0 %v5517
        %5573 = vmatprep.subr.bf16.mxu0 0
        %5574 = vmatpush1.bf16.msra.mxu0 %v5518
        %5575 = vmatprep.subr.bf16.mxu0 0
        %5576 = vmatpush1.bf16.msra.mxu0 %v5519
        %5577 = vmatprep.subr.bf16.mxu0 0
        %5578 = vmatpush1.bf16.msra.mxu0 %v5520
        %5579 = vmatprep.subr.bf16.mxu0 0
        %5580 = vmatpush1.bf16.msra.mxu0 %v5521
        %5581 = vmatprep.subr.bf16.mxu0 0
        %5582 = vmatpush1.bf16.msra.mxu0 %v5522
        %5583 = vmatprep.subr.bf16.mxu0 0
        %5584 = vmatpush1.bf16.msra.mxu0 %v5523
        %5585 = vmatprep.subr.bf16.mxu0 0
        %5586 = vmatpush1.bf16.msra.mxu0 %v5524
        %5587 = vmatprep.subr.bf16.mxu0 0
        %5588 = vmatpush1.bf16.msra.mxu0 %v5525
        %5589 = vmatprep.subr.bf16.mxu0 0
        %5590 = vmatpush1.bf16.msra.mxu0 %v5526
        %5591 = vmatprep.mubr.bf16.mxu0 %v5358
        %5592 = vmatmul.mubr.bf16.gmra.mrb[0].mxu0 %v5357
        %v5593 = vpop.f32.mrb[0].mxu0
        %v5594 = vadd.f32 %v5413, %v5593
        %v5595 = vpop.f32.mrb[0].mxu0
        %v5596 = vpop.f32.mrb[0].mxu0
        %v5597 = vadd.f32 %v5413, %v5596
        %v5598 = vpop.f32.mrb[0].mxu0
        %5599 = vdwg.mxu0
        %5600 = vmatprep.subr.bf16.mxu0 0
        %5601 = vmatpush1.bf16.msra.mxu0 %v5527
        %5602 = vmatprep.subr.bf16.mxu0 0
        %5603 = vmatpush1.bf16.msra.mxu0 %v5528
        %5604 = vmatprep.subr.bf16.mxu0 0
        %5605 = vmatpush1.bf16.msra.mxu0 %v5529
        %5606 = vmatprep.subr.bf16.mxu0 0
        %5607 = vmatpush1.bf16.msra.mxu0 %v5530
        %5608 = vmatprep.subr.bf16.mxu0 0
        %5609 = vmatpush1.bf16.msra.mxu0 %v5531
        %5610 = vmatprep.subr.bf16.mxu0 0
        %5611 = vmatpush1.bf16.msra.mxu0 %v5532
        %5612 = vmatprep.subr.bf16.mxu0 0
        %5613 = vmatpush1.bf16.msra.mxu0 %v5533
        %5614 = vmatprep.subr.bf16.mxu0 0
        %5615 = vmatpush1.bf16.msra.mxu0 %v5534
        %5616 = vmatprep.subr.bf16.mxu0 0
        %5617 = vmatpush1.bf16.msra.mxu0 0
        %5618 = vmatprep.subr.bf16.mxu0 0
        %5619 = vmatpush1.bf16.msra.mxu0 0
        %5620 = vmatprep.subr.bf16.mxu0 0
        %5621 = vmatpush1.bf16.msra.mxu0 0
        %5622 = vmatprep.subr.bf16.mxu0 0
        %5623 = vmatpush1.bf16.msra.mxu0 0
        %5624 = vmatprep.subr.bf16.mxu0 0
        %5625 = vmatpush1.bf16.msra.mxu0 0
        %5626 = vmatprep.subr.bf16.mxu0 0
        %5627 = vmatpush1.bf16.msra.mxu0 0
        %5628 = vmatprep.subr.bf16.mxu0 0
        %5629 = vmatpush1.bf16.msra.mxu0 0
        %5630 = vmatprep.subr.bf16.mxu0 0
        %5631 = vmatpush1.bf16.msra.mxu0 0
        %5632 = vmatprep.mubr.bf16.mxu0 0
        %5633 = vmatmul.mubr.bf16.gmra.mrb[0].mxu0 %v5359
        %v5634 = vpop.f32.mrb[0].mxu0
        %v5635 = vadd.f32 %v5594, %v5634
        %v5636 = vpop.f32.mrb[0].mxu0
        %v5637 = vpop.f32.mrb[0].mxu0
        %v5638 = vadd.f32 %v5597, %v5637
        %v5639 = vpop.f32.mrb[0].mxu0
        %5640 = vdwg.mxu0
        %v5641 = vxor.u32 %v5635, 2147483648
        %v5642 = vxor.u32 %v5638, 2147483648
        %v5643 = vmul.f32 %v5641, 1.442695
        %v5644 = vpow.pop %v5643
        %v5645 = vmul.f32 %v5642, 1.442695
        %v5646 = vpow.pop %v5645
        %v5647 = vadd.f32 %v5644, 1.0
        %v5648 = vadd.f32 %v5646, 1.0
        %v5649 = vrcp.pop %v5647
        %v5650 = vmul.f32 1.0, %v5649
        %v5651 = vrcp.pop %v5648
        %v5652 = vmul.f32 1.0, %v5651
        %v5653 = vmul.f32 %v5635, %v5650
        %v5654 = vmul.f32 %v5638, %v5652
        %v5655 = vadd.f32 %v5653, %v5329
        %v5656 = vadd.f32 %v5654, %v5333
        %v5657 = vpack.c.bf16 %v5656, %v5655
        %v5658 = vld [vmem:[#allocation22] sm:$0xf]
        %v5659 = vld [vmem:[#allocation22 + $0x4] sm:$0xf]
        %v5660 = vld [vmem:[#allocation22 + $0x8] sm:$0xf]
        %v5661 = vld [vmem:[#allocation22 + $0xc] sm:$0xf]
        %v5662 = vld [vmem:[#allocation22 + $0x10] sm:$0xf]
        %v5663 = vld [vmem:[#allocation22 + $0x14] sm:$0xf]
        %v5664 = vld [vmem:[#allocation22 + $0x18] sm:$0xf]
        %v5665 = vld [vmem:[#allocation22 + $0x1c] sm:$0xf]
        %v5666 = vld [vmem:[#allocation22 + $0x20] sm:$0xf]
        %v5667 = vld [vmem:[#allocation22 + $0x24] sm:$0xf]
        %v5668 = vld [vmem:[#allocation22 + $0x28] sm:$0xf]
        %v5669 = vld [vmem:[#allocation22 + $0x2c] sm:$0xf]
        %v5670 = vld [vmem:[#allocation22 + $0x30] sm:$0xf]
        %v5671 = vld [vmem:[#allocation22 + $0x34] sm:$0xf]
        %v5672 = vld [vmem:[#allocation22 + $0x38] sm:$0xf]
        %v5673 = vld [vmem:[#allocation22 + $0x3c] sm:$0xf]
        %v5690 = vunpack.c.l.b16 %v5658
        %v5691 = vunpack.c.l.b16 %v5659
        %v5692 = vunpack.c.l.b16 %v5660
        %v5693 = vunpack.c.l.b16 %v5661
        %v5694 = vunpack.c.l.b16 %v5662
        %v5695 = vunpack.c.l.b16 %v5663
        %v5696 = vunpack.c.l.b16 %v5664
        %v5697 = vunpack.c.l.b16 %v5665
        %v5698 = vunpack.c.l.b16 %v5666
        %v5699 = vunpack.c.l.b16 %v5667
        %v5700 = vunpack.c.l.b16 %v5668
        %v5701 = vunpack.c.l.b16 %v5669
        %v5702 = vunpack.c.l.b16 %v5670
        %v5703 = vunpack.c.l.b16 %v5671
        %v5704 = vunpack.c.l.b16 %v5672
        %v5705 = vunpack.c.l.b16 %v5673
        %v5706 = vpack.c.b16 %v5691, %v5690
        %v5707 = vpack.c.b16 %v5693, %v5692
        %v5708 = vpack.c.b16 %v5695, %v5694
        %v5709 = vpack.c.b16 %v5697, %v5696
        %v5710 = vpack.c.b16 %v5699, %v5698
        %v5711 = vpack.c.b16 %v5701, %v5700
        %v5712 = vpack.c.b16 %v5703, %v5702
        %v5713 = vpack.c.b16 %v5705, %v5704
        %5722 = vmatprep.subr.bf16.mxu0 0
        %5723 = vmatpush1.bf16.msra.mxu0 %v5706
        %5724 = vmatprep.subr.bf16.mxu0 0
        %5725 = vmatpush1.bf16.msra.mxu0 %v5707
        %5726 = vmatprep.subr.bf16.mxu0 0
        %5727 = vmatpush1.bf16.msra.mxu0 %v5708
        %5728 = vmatprep.subr.bf16.mxu0 0
        %5729 = vmatpush1.bf16.msra.mxu0 %v5709
        %5730 = vmatprep.subr.bf16.mxu0 0
        %5731 = vmatpush1.bf16.msra.mxu0 %v5710
        %5732 = vmatprep.subr.bf16.mxu0 0
        %5733 = vmatpush1.bf16.msra.mxu0 %v5711
        %5734 = vmatprep.subr.bf16.mxu0 0
        %5735 = vmatpush1.bf16.msra.mxu0 %v5712
        %5736 = vmatprep.subr.bf16.mxu0 0
        %5737 = vmatpush1.bf16.msra.mxu0 %v5713
        %5738 = vmatprep.subr.bf16.mxu0 0
        %5739 = vmatpush1.bf16.msra.mxu0 0
        %5740 = vmatprep.subr.bf16.mxu0 0
        %5741 = vmatpush1.bf16.msra.mxu0 0
        %5742 = vmatprep.subr.bf16.mxu0 0
        %5743 = vmatpush1.bf16.msra.mxu0 0
        %5744 = vmatprep.subr.bf16.mxu0 0
        %5745 = vmatpush1.bf16.msra.mxu0 0
        %5746 = vmatprep.subr.bf16.mxu0 0
        %5747 = vmatpush1.bf16.msra.mxu0 0
        %5748 = vmatprep.subr.bf16.mxu0 0
        %5749 = vmatpush1.bf16.msra.mxu0 0
        %5750 = vmatprep.subr.bf16.mxu0 0
        %5751 = vmatpush1.bf16.msra.mxu0 0
        %5752 = vmatprep.subr.bf16.mxu0 0
        %5753 = vmatpush1.bf16.msra.mxu0 0
        %5754 = vmatprep.mubr.bf16.mxu0 0
        %5755 = vmatmul.mubr.bf16.gmra.mrb[0].mxu0 %v5657
        %v5756 = vpop.f32.mrb[0].mxu0
        %v5757 = vadd.f32 0.0, %v5756
        %v5758 = vpop.f32.mrb[0].mxu0
        %v5759 = vpop.f32.mrb[0].mxu0
        %v5760 = vadd.f32 0.0, %v5759
        %v5761 = vpop.f32.mrb[0].mxu0
        %5762 = vdwg.mxu0
        %5765 = vrot.lane.b32.xlu0 %v5757, 64
        %v5766 = vpop.permute.xlu0 %5765
        %5767 = vrot.lane.b32.xlu0 %v5760, 64
        %v5768 = vpop.permute.xlu0 %5767
        %v5771 = vrot.slane %v5766, 6
        %v5772 = vrot.slane %v5768, 6
        %v5773 = vsel %vm1473, %v5771, %v5772
        %v5774 = vsel %vm1473, %v5772, %v5771
        %v5775 = vsel %vm1537, 1, 0
        %v5776 = vsel %vm1538, 1, 0
        %vm5777 = vcmp.eq.s32.totalorder %v5775, 1
        %vm5778 = vcmp.eq.s32.totalorder %v5776, 1
        %v5779 = vsel %vm5777, %v5757, %v5774
        %v5780 = vsel %vm5778, %v5760, %v5773
        %v5781 = vld [vmem:[%s41] sm:$0x1]
        %v5783 = vlaneseq
        %v5784 = vshrl.u32 %v5783, 7
        %v5785 = vsub.s32 0, %v5784
        %v5786 = vrot.slane %v5781, %v5785
        %v5788 = vadd.f32 %v5779, %v5786
        %v5789 = vadd.f32 %v5780, %v5786
        %5792 = vrot.lane.b32.xlu0 %v2202, 64
        %v5793 = vpop.permute.xlu0 %5792
        %5794 = vrot.lane.b32.xlu0 %v2203, 64
        %v5795 = vpop.permute.xlu0 %5794
        %v5798 = vsel %vm1720, %v5788, %v5793
        %v5799 = vsel %vm1720, %v5789, %v5795
        %v5800 = vrot.slane %v5798, 6
        %v5801 = vrot.slane %v5799, 6
        %v5802 = vsel %vm1473, %v5800, %v5801
        %v5803 = vsel %vm1473, %v5801, %v5800
        %v5804 = vsel %vm1860, 0.0, %v5803
        %v5805 = vsel %vm1861, 0.0, %v5802
        %v5806 = vrot.slane %v5798, 2
        %v5807 = vrot.slane %v5799, 2
        %v5808 = vsel %vm1866, %v5806, %v5807
        %v5809 = vsel %vm1866, %v5807, %v5806
        %v5810 = vsel %vm1871, 0.0, %v5808
        %v5811 = vsel %vm1872, 0.0, %v5809
        %v5812 = vpack.c.bf16 %v5805, %v5804
        %v5813 = vpack.c.bf16 %v5799, %v5798
        %v5814 = vpack.c.bf16 %v5811, %v5810
        %v5815 = vld [vmem:[#allocation31] sm:$0xf]
        %v5816 = vld [vmem:[#allocation31 + $0x4] sm:$0xf]
        %v5817 = vld [vmem:[#allocation31 + $0x8] sm:$0xf]
        %v5818 = vld [vmem:[#allocation31 + $0xc] sm:$0xf]
        %v5819 = vld [vmem:[#allocation31 + $0x10] sm:$0xf]
        %v5820 = vld [vmem:[#allocation31 + $0x14] sm:$0xf]
        %v5821 = vld [vmem:[#allocation31 + $0x18] sm:$0xf]
        %v5822 = vld [vmem:[#allocation31 + $0x1c] sm:$0xf]
        %v5823 = vld [vmem:[#allocation31 + $0x20] sm:$0xf]
        %v5824 = vld [vmem:[#allocation31 + $0x24] sm:$0xf]
        %v5825 = vld [vmem:[#allocation31 + $0x28] sm:$0xf]
        %v5826 = vld [vmem:[#allocation31 + $0x2c] sm:$0xf]
        %v5827 = vld [vmem:[#allocation31 + $0x30] sm:$0xf]
        %v5828 = vld [vmem:[#allocation31 + $0x34] sm:$0xf]
        %v5829 = vld [vmem:[#allocation31 + $0x38] sm:$0xf]
        %v5830 = vld [vmem:[#allocation31 + $0x3c] sm:$0xf]
        %v5831 = vld [vmem:[#allocation31 + $0x40] sm:$0xf]
        %v5832 = vld [vmem:[#allocation31 + $0x44] sm:$0xf]
        %v5833 = vld [vmem:[#allocation31 + $0x48] sm:$0xf]
        %v5834 = vld [vmem:[#allocation31 + $0x4c] sm:$0xf]
        %v5835 = vld [vmem:[#allocation31 + $0x50] sm:$0xf]
        %v5836 = vld [vmem:[#allocation31 + $0x54] sm:$0xf]
        %v5837 = vld [vmem:[#allocation31 + $0x58] sm:$0xf]
        %v5838 = vld [vmem:[#allocation31 + $0x5c] sm:$0xf]
        %v5839 = vld [vmem:[#allocation31 + $0x60] sm:$0xf]
        %v5840 = vld [vmem:[#allocation31 + $0x64] sm:$0xf]
        %v5841 = vld [vmem:[#allocation31 + $0x68] sm:$0xf]
        %v5842 = vld [vmem:[#allocation31 + $0x6c] sm:$0xf]
        %v5843 = vld [vmem:[#allocation31 + $0x70] sm:$0xf]
        %v5844 = vld [vmem:[#allocation31 + $0x74] sm:$0xf]
        %v5845 = vld [vmem:[#allocation31 + $0x78] sm:$0xf]
        %v5846 = vld [vmem:[#allocation31 + $0x7c] sm:$0xf]
        %v5847 = vld [vmem:[#allocation31 + $0x80] sm:$0xf]
        %v5848 = vld [vmem:[#allocation31 + $0x84] sm:$0xf]
        %v5849 = vld [vmem:[#allocation31 + $0x88] sm:$0xf]
        %v5850 = vld [vmem:[#allocation31 + $0x8c] sm:$0xf]
        %v5851 = vld [vmem:[#allocation31 + $0x90] sm:$0xf]
        %v5852 = vld [vmem:[#allocation31 + $0x94] sm:$0xf]
        %v5853 = vld [vmem:[#allocation31 + $0x98] sm:$0xf]
        %v5854 = vld [vmem:[#allocation31 + $0x9c] sm:$0xf]
        %v5855 = vld [vmem:[#allocation31 + $0xa0] sm:$0xf]
        %v5856 = vld [vmem:[#allocation31 + $0xa4] sm:$0xf]
        %v5857 = vld [vmem:[#allocation31 + $0xa8] sm:$0xf]
        %v5858 = vld [vmem:[#allocation31 + $0xac] sm:$0xf]
        %v5859 = vld [vmem:[#allocation31 + $0xb0] sm:$0xf]
        %v5860 = vld [vmem:[#allocation31 + $0xb4] sm:$0xf]
        %v5861 = vld [vmem:[#allocation31 + $0xb8] sm:$0xf]
        %v5862 = vld [vmem:[#allocation31 + $0xbc] sm:$0xf]
        %v5863 = vld [vmem:[#allocation33] sm:$0x1]
        %v5865 = vlaneseq
        %v5866 = vshrl.u32 %v5865, 7
        %v5867 = vsub.s32 0, %v5866
        %v5868 = vrot.slane %v5863, %v5867
        %v5918 = vunpack.c.l.b16 %v5815
        %v5919 = vunpack.c.l.b16 %v5816
        %v5920 = vunpack.c.l.b16 %v5817
        %v5921 = vunpack.c.l.b16 %v5818
        %v5922 = vunpack.c.l.b16 %v5819
        %v5923 = vunpack.c.l.b16 %v5820
        %v5924 = vunpack.c.l.b16 %v5821
        %v5925 = vunpack.c.l.b16 %v5822
        %v5926 = vunpack.c.l.b16 %v5823
        %v5927 = vunpack.c.l.b16 %v5824
        %v5928 = vunpack.c.l.b16 %v5825
        %v5929 = vunpack.c.l.b16 %v5826
        %v5930 = vunpack.c.l.b16 %v5827
        %v5931 = vunpack.c.l.b16 %v5828
        %v5932 = vunpack.c.l.b16 %v5829
        %v5933 = vunpack.c.l.b16 %v5830
        %v5934 = vunpack.c.l.b16 %v5831
        %v5935 = vunpack.c.l.b16 %v5832
        %v5936 = vunpack.c.l.b16 %v5833
        %v5937 = vunpack.c.l.b16 %v5834
        %v5938 = vunpack.c.l.b16 %v5835
        %v5939 = vunpack.c.l.b16 %v5836
        %v5940 = vunpack.c.l.b16 %v5837
        %v5941 = vunpack.c.l.b16 %v5838
        %v5942 = vunpack.c.l.b16 %v5839
        %v5943 = vunpack.c.l.b16 %v5840
        %v5944 = vunpack.c.l.b16 %v5841
        %v5945 = vunpack.c.l.b16 %v5842
        %v5946 = vunpack.c.l.b16 %v5843
        %v5947 = vunpack.c.l.b16 %v5844
        %v5948 = vunpack.c.l.b16 %v5845
        %v5949 = vunpack.c.l.b16 %v5846
        %v5950 = vunpack.c.l.b16 %v5847
        %v5951 = vunpack.c.l.b16 %v5848
        %v5952 = vunpack.c.l.b16 %v5849
        %v5953 = vunpack.c.l.b16 %v5850
        %v5954 = vunpack.c.l.b16 %v5851
        %v5955 = vunpack.c.l.b16 %v5852
        %v5956 = vunpack.c.l.b16 %v5853
        %v5957 = vunpack.c.l.b16 %v5854
        %v5958 = vunpack.c.l.b16 %v5855
        %v5959 = vunpack.c.l.b16 %v5856
        %v5960 = vunpack.c.l.b16 %v5857
        %v5961 = vunpack.c.l.b16 %v5858
        %v5962 = vunpack.c.l.b16 %v5859
        %v5963 = vunpack.c.l.b16 %v5860
        %v5964 = vunpack.c.l.b16 %v5861
        %v5965 = vunpack.c.l.b16 %v5862
        %v5966 = vpack.c.b16 %v5919, %v5918
        %v5967 = vpack.c.b16 %v5921, %v5920
        %v5968 = vpack.c.b16 %v5923, %v5922
        %v5969 = vpack.c.b16 %v5925, %v5924
        %v5970 = vpack.c.b16 %v5927, %v5926
        %v5971 = vpack.c.b16 %v5929, %v5928
        %v5972 = vpack.c.b16 %v5931, %v5930
        %v5973 = vpack.c.b16 %v5933, %v5932
        %v5974 = vpack.c.b16 %v5935, %v5934
        %v5975 = vpack.c.b16 %v5937, %v5936
        %v5976 = vpack.c.b16 %v5939, %v5938
        %v5977 = vpack.c.b16 %v5941, %v5940
        %v5978 = vpack.c.b16 %v5943, %v5942
        %v5979 = vpack.c.b16 %v5945, %v5944
        %v5980 = vpack.c.b16 %v5947, %v5946
        %v5981 = vpack.c.b16 %v5949, %v5948
        %v5982 = vpack.c.b16 %v5951, %v5950
        %v5983 = vpack.c.b16 %v5953, %v5952
        %v5984 = vpack.c.b16 %v5955, %v5954
        %v5985 = vpack.c.b16 %v5957, %v5956
        %v5986 = vpack.c.b16 %v5959, %v5958
        %v5987 = vpack.c.b16 %v5961, %v5960
        %v5988 = vpack.c.b16 %v5963, %v5962
        %v5989 = vpack.c.b16 %v5965, %v5964
        %6014 = vmatprep.subr.bf16.mxu0 0
        %6015 = vmatpush1.bf16.msra.mxu0 %v5966
        %6016 = vmatprep.subr.bf16.mxu0 0
        %6017 = vmatpush1.bf16.msra.mxu0 %v5967
        %6018 = vmatprep.subr.bf16.mxu0 0
        %6019 = vmatpush1.bf16.msra.mxu0 %v5968
        %6020 = vmatprep.subr.bf16.mxu0 0
        %6021 = vmatpush1.bf16.msra.mxu0 %v5969
        %6022 = vmatprep.subr.bf16.mxu0 0
        %6023 = vmatpush1.bf16.msra.mxu0 %v5970
        %6024 = vmatprep.subr.bf16.mxu0 0
        %6025 = vmatpush1.bf16.msra.mxu0 %v5971
        %6026 = vmatprep.subr.bf16.mxu0 0
        %6027 = vmatpush1.bf16.msra.mxu0 %v5972
        %6028 = vmatprep.subr.bf16.mxu0 0
        %6029 = vmatpush1.bf16.msra.mxu0 %v5973
        %6030 = vmatprep.subr.bf16.mxu0 0
        %6031 = vmatpush1.bf16.msra.mxu0 %v5974
        %6032 = vmatprep.subr.bf16.mxu0 0
        %6033 = vmatpush1.bf16.msra.mxu0 %v5975
        %6034 = vmatprep.subr.bf16.mxu0 0
        %6035 = vmatpush1.bf16.msra.mxu0 %v5976
        %6036 = vmatprep.subr.bf16.mxu0 0
        %6037 = vmatpush1.bf16.msra.mxu0 %v5977
        %6038 = vmatprep.subr.bf16.mxu0 0
        %6039 = vmatpush1.bf16.msra.mxu0 %v5978
        %6040 = vmatprep.subr.bf16.mxu0 0
        %6041 = vmatpush1.bf16.msra.mxu0 %v5979
        %6042 = vmatprep.subr.bf16.mxu0 0
        %6043 = vmatpush1.bf16.msra.mxu0 %v5980
        %6044 = vmatprep.subr.bf16.mxu0 0
        %6045 = vmatpush1.bf16.msra.mxu0 %v5981
        %6046 = vmatprep.mubr.bf16.mxu0 %v5813
        %6047 = vmatmul.mubr.bf16.gmra.mrb[0].mxu0 %v5812
        %v6048 = vpop.f32.mrb[0].mxu0
        %v6049 = vadd.f32 %v5868, %v6048
        %v6050 = vpop.f32.mrb[0].mxu0
        %v6051 = vpop.f32.mrb[0].mxu0
        %v6052 = vadd.f32 %v5868, %v6051
        %v6053 = vpop.f32.mrb[0].mxu0
        %6054 = vdwg.mxu0
        %6055 = vmatprep.subr.bf16.mxu0 0
        %6056 = vmatpush1.bf16.msra.mxu0 %v5982
        %6057 = vmatprep.subr.bf16.mxu0 0
        %6058 = vmatpush1.bf16.msra.mxu0 %v5983
        %6059 = vmatprep.subr.bf16.mxu0 0
        %6060 = vmatpush1.bf16.msra.mxu0 %v5984
        %6061 = vmatprep.subr.bf16.mxu0 0
        %6062 = vmatpush1.bf16.msra.mxu0 %v5985
        %6063 = vmatprep.subr.bf16.mxu0 0
        %6064 = vmatpush1.bf16.msra.mxu0 %v5986
        %6065 = vmatprep.subr.bf16.mxu0 0
        %6066 = vmatpush1.bf16.msra.mxu0 %v5987
        %6067 = vmatprep.subr.bf16.mxu0 0
        %6068 = vmatpush1.bf16.msra.mxu0 %v5988
        %6069 = vmatprep.subr.bf16.mxu0 0
        %6070 = vmatpush1.bf16.msra.mxu0 %v5989
        %6071 = vmatprep.subr.bf16.mxu0 0
        %6072 = vmatpush1.bf16.msra.mxu0 0
        %6073 = vmatprep.subr.bf16.mxu0 0
        %6074 = vmatpush1.bf16.msra.mxu0 0
        %6075 = vmatprep.subr.bf16.mxu0 0
        %6076 = vmatpush1.bf16.msra.mxu0 0
        %6077 = vmatprep.subr.bf16.mxu0 0
        %6078 = vmatpush1.bf16.msra.mxu0 0
        %6079 = vmatprep.subr.bf16.mxu0 0
        %6080 = vmatpush1.bf16.msra.mxu0 0
        %6081 = vmatprep.subr.bf16.mxu0 0
        %6082 = vmatpush1.bf16.msra.mxu0 0
        %6083 = vmatprep.subr.bf16.mxu0 0
        %6084 = vmatpush1.bf16.msra.mxu0 0
        %6085 = vmatprep.subr.bf16.mxu0 0
        %6086 = vmatpush1.bf16.msra.mxu0 0
        %6087 = vmatprep.mubr.bf16.mxu0 0
        %6088 = vmatmul.mubr.bf16.gmra.mrb[0].mxu0 %v5814
        %v6089 = vpop.f32.mrb[0].mxu0
        %v6090 = vadd.f32 %v6049, %v6089
        %v6091 = vpop.f32.mrb[0].mxu0
        %v6092 = vpop.f32.mrb[0].mxu0
        %v6093 = vadd.f32 %v6052, %v6092
        %v6094 = vpop.f32.mrb[0].mxu0
        %6095 = vdwg.mxu0
        %v6096 = vxor.u32 %v6090, 2147483648
        %v6097 = vxor.u32 %v6093, 2147483648
        %v6098 = vmul.f32 %v6096, 1.442695
        %v6099 = vpow.pop %v6098
        %v6100 = vmul.f32 %v6097, 1.442695
        %v6101 = vpow.pop %v6100
        %v6102 = vadd.f32 %v6099, 1.0
        %v6103 = vadd.f32 %v6101, 1.0
        %v6104 = vrcp.pop %v6102
        %v6105 = vmul.f32 1.0, %v6104
        %v6106 = vrcp.pop %v6103
        %v6107 = vmul.f32 1.0, %v6106
        %v6108 = vmul.f32 %v6090, %v6105
        %v6109 = vmul.f32 %v6093, %v6107
        %v6110 = vrot.slane %v6108, 6
        %v6111 = vrot.slane %v6109, 6
        %v6112 = vsel %vm1473, %v6110, %v6111
        %v6113 = vsel %vm1473, %v6111, %v6110
        %v6114 = vsel %vm1860, 0.0, %v6113
        %v6115 = vsel %vm1861, 0.0, %v6112
        %v6116 = vrot.slane %v6108, 2
        %v6117 = vrot.slane %v6109, 2
        %v6118 = vsel %vm1866, %v6116, %v6117
        %v6119 = vsel %vm1866, %v6117, %v6116
        %v6120 = vsel %vm1871, 0.0, %v6118
        %v6121 = vsel %vm1872, 0.0, %v6119
        %6124 = vrot.lane.b32.xlu0 %v6108, 64
        %v6125 = vpop.permute.xlu0 %6124
        %6126 = vrot.lane.b32.xlu0 %v6109, 64
        %v6127 = vpop.permute.xlu0 %6126
        %v6130 = vsel %vm1720, %v6114, %v6125
        %v6131 = vsel %vm1720, %v6115, %v6127
        %v6132 = vpack.c.bf16 %v6131, %v6130
        %v6133 = vpack.c.bf16 %v6121, %v6120
        %v6134 = vld [vmem:[%s59] sm:$0xf]
        %v6135 = vld [vmem:[%s59 + $0x4] sm:$0xf]
        %v6136 = vld [vmem:[%s59 + $0x8] sm:$0xf]
        %v6137 = vld [vmem:[%s59 + $0xc] sm:$0xf]
        %v6138 = vld [vmem:[%s59 + $0x10] sm:$0xf]
        %v6139 = vld [vmem:[%s59 + $0x14] sm:$0xf]
        %v6140 = vld [vmem:[%s59 + $0x18] sm:$0xf]
        %v6141 = vld [vmem:[%s59 + $0x1c] sm:$0xf]
        %v6142 = vld [vmem:[%s59 + $0x20] sm:$0xf]
        %v6143 = vld [vmem:[%s59 + $0x24] sm:$0xf]
        %v6144 = vld [vmem:[%s59 + $0x28] sm:$0xf]
        %v6145 = vld [vmem:[%s59 + $0x2c] sm:$0xf]
        %v6146 = vld [vmem:[%s59 + $0x30] sm:$0xf]
        %v6147 = vld [vmem:[%s59 + $0x34] sm:$0xf]
        %v6148 = vld [vmem:[%s59 + $0x38] sm:$0xf]
        %v6149 = vld [vmem:[%s59 + $0x3c] sm:$0xf]
        %v6150 = vld [vmem:[%s59 + $0x40] sm:$0xf]
        %v6151 = vld [vmem:[%s59 + $0x44] sm:$0xf]
        %v6152 = vld [vmem:[%s59 + $0x48] sm:$0xf]
        %v6153 = vld [vmem:[%s59 + $0x4c] sm:$0xf]
        %v6154 = vld [vmem:[%s59 + $0x50] sm:$0xf]
        %v6155 = vld [vmem:[%s59 + $0x54] sm:$0xf]
        %v6156 = vld [vmem:[%s59 + $0x58] sm:$0xf]
        %v6157 = vld [vmem:[%s59 + $0x5c] sm:$0xf]
        %v6158 = vld [vmem:[#allocation34] sm:$0x1]
        %v6160 = vlaneseq
        %v6161 = vshrl.u32 %v6160, 7
        %v6162 = vsub.s32 0, %v6161
        %v6163 = vrot.slane %v6158, %v6162
        %v6189 = vunpack.c.l.b16 %v6134
        %v6190 = vunpack.c.l.b16 %v6135
        %v6191 = vunpack.c.l.b16 %v6136
        %v6192 = vunpack.c.l.b16 %v6137
        %v6193 = vunpack.c.l.b16 %v6138
        %v6194 = vunpack.c.l.b16 %v6139
        %v6195 = vunpack.c.l.b16 %v6140
        %v6196 = vunpack.c.l.b16 %v6141
        %v6197 = vunpack.c.l.b16 %v6142
        %v6198 = vunpack.c.l.b16 %v6143
        %v6199 = vunpack.c.l.b16 %v6144
        %v6200 = vunpack.c.l.b16 %v6145
        %v6201 = vunpack.c.l.b16 %v6146
        %v6202 = vunpack.c.l.b16 %v6147
        %v6203 = vunpack.c.l.b16 %v6148
        %v6204 = vunpack.c.l.b16 %v6149
        %v6205 = vunpack.c.l.b16 %v6150
        %v6206 = vunpack.c.l.b16 %v6151
        %v6207 = vunpack.c.l.b16 %v6152
        %v6208 = vunpack.c.l.b16 %v6153
        %v6209 = vunpack.c.l.b16 %v6154
        %v6210 = vunpack.c.l.b16 %v6155
        %v6211 = vunpack.c.l.b16 %v6156
        %v6212 = vunpack.c.l.b16 %v6157
        %v6213 = vpack.c.b16 %v6190, %v6189
        %v6214 = vpack.c.b16 %v6192, %v6191
        %v6215 = vpack.c.b16 %v6194, %v6193
        %v6216 = vpack.c.b16 %v6196, %v6195
        %v6217 = vpack.c.b16 %v6198, %v6197
        %v6218 = vpack.c.b16 %v6200, %v6199
        %v6219 = vpack.c.b16 %v6202, %v6201
        %v6220 = vpack.c.b16 %v6204, %v6203
        %v6221 = vpack.c.b16 %v6206, %v6205
        %v6222 = vpack.c.b16 %v6208, %v6207
        %v6223 = vpack.c.b16 %v6210, %v6209
        %v6224 = vpack.c.b16 %v6212, %v6211
        %v6238 = vsel %vm1720, %v6133, 0
        %6240 = vmatprep.subr.bf16.mxu0 0
        %6241 = vmatpush1.bf16.msra.mxu0 %v6213
        %6242 = vmatprep.subr.bf16.mxu0 0
        %6243 = vmatpush1.bf16.msra.mxu0 %v6214
        %6244 = vmatprep.subr.bf16.mxu0 0
        %6245 = vmatpush1.bf16.msra.mxu0 %v6215
        %6246 = vmatprep.subr.bf16.mxu0 0
        %6247 = vmatpush1.bf16.msra.mxu0 %v6216
        %6248 = vmatprep.subr.bf16.mxu0 0
        %6249 = vmatpush1.bf16.msra.mxu0 %v6217
        %6250 = vmatprep.subr.bf16.mxu0 0
        %6251 = vmatpush1.bf16.msra.mxu0 %v6218
        %6252 = vmatprep.subr.bf16.mxu0 0
        %6253 = vmatpush1.bf16.msra.mxu0 %v6219
        %6254 = vmatprep.subr.bf16.mxu0 0
        %6255 = vmatpush1.bf16.msra.mxu0 %v6220
        %6256 = vmatprep.subr.bf16.mxu0 0
        %6257 = vmatpush1.bf16.msra.mxu0 %v6221
        %6258 = vmatprep.subr.bf16.mxu0 0
        %6259 = vmatpush1.bf16.msra.mxu0 %v6222
        %6260 = vmatprep.subr.bf16.mxu0 0
        %6261 = vmatpush1.bf16.msra.mxu0 %v6223
        %6262 = vmatprep.subr.bf16.mxu0 0
        %6263 = vmatpush1.bf16.msra.mxu0 %v6224
        %6264 = vmatprep.subr.bf16.mxu0 0
        %6265 = vmatpush1.bf16.msra.mxu0 0
        %6266 = vmatprep.subr.bf16.mxu0 0
        %6267 = vmatpush1.bf16.msra.mxu0 0
        %6268 = vmatprep.subr.bf16.mxu0 0
        %6269 = vmatpush1.bf16.msra.mxu0 0
        %6270 = vmatprep.subr.bf16.mxu0 0
        %6271 = vmatpush1.bf16.msra.mxu0 0
        %6272 = vmatprep.mubr.bf16.mxu0 %v6238
        %6273 = vmatmul.mubr.bf16.gmra.mrb[0].mxu0 %v6132
        %v6274 = vpop.f32.mrb[0].mxu0
        %v6275 = vadd.f32 %v6163, %v6274
        %v6276 = vpop.f32.mrb[0].mxu0
        %v6277 = vpop.f32.mrb[0].mxu0
        %v6278 = vadd.f32 %v6163, %v6277
        %v6279 = vpop.f32.mrb[0].mxu0
        %6280 = vdwg.mxu0
        %v6281 = vxor.u32 %v6275, 2147483648
        %v6282 = vxor.u32 %v6278, 2147483648
        %v6283 = vmul.f32 %v6281, 1.442695
        %v6284 = vpow.pop %v6283
        %v6285 = vmul.f32 %v6282, 1.442695
        %v6286 = vpow.pop %v6285
        %v6287 = vadd.f32 %v6284, 1.0
        %v6288 = vadd.f32 %v6286, 1.0
        %v6289 = vrcp.pop %v6287
        %v6290 = vmul.f32 1.0, %v6289
        %v6291 = vrcp.pop %v6288
        %v6292 = vmul.f32 1.0, %v6291
        %v6293 = vmul.f32 %v6275, %v6290
        %v6294 = vmul.f32 %v6278, %v6292
        %6297 = vrot.lane.b32.xlu0 %v6090, 64
        %v6298 = vpop.permute.xlu0 %6297
        %6299 = vrot.lane.b32.xlu0 %v6093, 64
        %v6300 = vpop.permute.xlu0 %6299
        %v6303 = vadd.f32 %v6293, %v6298
        %v6304 = vadd.f32 %v6294, %v6300
        %v6305 = vpack.c.bf16 %v6304, %v6303
        %v6306 = vld [vmem:[#allocation24] sm:$0xf]
        %v6307 = vld [vmem:[#allocation24 + $0x4] sm:$0xf]
        %v6308 = vld [vmem:[#allocation24 + $0x8] sm:$0xf]
        %v6309 = vld [vmem:[#allocation24 + $0xc] sm:$0xf]
        %v6310 = vld [vmem:[#allocation24 + $0x10] sm:$0xf]
        %v6311 = vld [vmem:[#allocation24 + $0x14] sm:$0xf]
        %v6312 = vld [vmem:[#allocation24 + $0x18] sm:$0xf]
        %v6313 = vld [vmem:[#allocation24 + $0x1c] sm:$0xf]
        %v6322 = vunpack.c.l.b16 %v6306
        %v6323 = vunpack.c.l.b16 %v6307
        %v6324 = vunpack.c.l.b16 %v6308
        %v6325 = vunpack.c.l.b16 %v6309
        %v6326 = vunpack.c.l.b16 %v6310
        %v6327 = vunpack.c.l.b16 %v6311
        %v6328 = vunpack.c.l.b16 %v6312
        %v6329 = vunpack.c.l.b16 %v6313
        %v6330 = vpack.c.b16 %v6323, %v6322
        %v6331 = vpack.c.b16 %v6325, %v6324
        %v6332 = vpack.c.b16 %v6327, %v6326
        %v6333 = vpack.c.b16 %v6329, %v6328
        %v6339 = vsel %vm1720, %v6305, 0
        %6341 = vmatprep.subr.bf16.mxu0 0
        %6342 = vmatpush1.bf16.msra.mxu0 %v6330
        %6343 = vmatprep.subr.bf16.mxu0 0
        %6344 = vmatpush1.bf16.msra.mxu0 %v6331
        %6345 = vmatprep.subr.bf16.mxu0 0
        %6346 = vmatpush1.bf16.msra.mxu0 %v6332
        %6347 = vmatprep.subr.bf16.mxu0 0
        %6348 = vmatpush1.bf16.msra.mxu0 %v6333
        %6349 = vmatprep.subr.bf16.mxu0 0
        %6350 = vmatpush1.bf16.msra.mxu0 0
        %6351 = vmatprep.subr.bf16.mxu0 0
        %6352 = vmatpush1.bf16.msra.mxu0 0
        %6353 = vmatprep.subr.bf16.mxu0 0
        %6354 = vmatpush1.bf16.msra.mxu0 0
        %6355 = vmatprep.subr.bf16.mxu0 0
        %6356 = vmatpush1.bf16.msra.mxu0 0
        %6357 = vmatprep.subr.bf16.mxu0 0
        %6358 = vmatpush1.bf16.msra.mxu0 0
        %6359 = vmatprep.subr.bf16.mxu0 0
        %6360 = vmatpush1.bf16.msra.mxu0 0
        %6361 = vmatprep.subr.bf16.mxu0 0
        %6362 = vmatpush1.bf16.msra.mxu0 0
        %6363 = vmatprep.subr.bf16.mxu0 0
        %6364 = vmatpush1.bf16.msra.mxu0 0
        %6365 = vmatprep.subr.bf16.mxu0 0
        %6366 = vmatpush1.bf16.msra.mxu0 0
        %6367 = vmatprep.subr.bf16.mxu0 0
        %6368 = vmatpush1.bf16.msra.mxu0 0
        %6369 = vmatprep.subr.bf16.mxu0 0
        %6370 = vmatpush1.bf16.msra.mxu0 0
        %6371 = vmatprep.subr.bf16.mxu0 0
        %6372 = vmatpush1.bf16.msra.mxu0 0
        %6373 = vmatprep.mubr.bf16.mxu0 0
        %6374 = vmatmul.mubr.bf16.gmra.mrb[0].mxu0 %v6339
        %v6375 = vpop.f32.mrb[0].mxu0
        %v6376 = vadd.f32 0.0, %v6375
        %v6377 = vpop.f32.mrb[0].mxu0
        %v6378 = vpop.f32.mrb[0].mxu0
        %v6379 = vadd.f32 0.0, %v6378
        %v6380 = vpop.f32.mrb[0].mxu0
        %6381 = vdwg.mxu0
        %6384 = vrot.lane.b32.xlu0 %v6376, 96
        %v6385 = vpop.permute.xlu0 %6384
        %6386 = vrot.lane.b32.xlu0 %v6379, 96
        %v6387 = vpop.permute.xlu0 %6386
        %v6390 = vrot.slane %v6385, 7
        %v6391 = vrot.slane %v6387, 7
        %v6392 = vsel %vm1471, %v6390, %v6391
        %v6393 = vsel %vm1471, %v6391, %v6390
        %v6394 = vsel %vm1511, 1, 0
        %v6395 = vsel %vm1512, 1, 0
        %vm6396 = vcmp.eq.s32.totalorder %v6394, 1
        %vm6397 = vcmp.eq.s32.totalorder %v6395, 1
        %v6398 = vsel %vm6396, %v6376, %v6393
        %v6399 = vsel %vm6397, %v6379, %v6392
        %v6400 = vld [vmem:[%s45] sm:$0x1]
        %v6402 = vlaneseq
        %v6403 = vshrl.u32 %v6402, 7
        %v6404 = vsub.s32 0, %v6403
        %v6405 = vrot.slane %v6400, %v6404
        %v6407 = vadd.f32 %v6398, %v6405
        %v6408 = vadd.f32 %v6399, %v6405
        %6411 = vrot.lane.b32.xlu0 %v1846, 32
        %v6412 = vpop.permute.xlu0 %6411
        %6413 = vrot.lane.b32.xlu0 %v1847, 32
        %v6414 = vpop.permute.xlu0 %6413
        %v6417 = vsel %vm1717, %v6407, %v6412
        %v6418 = vsel %vm1717, %v6408, %v6414
        %v6419 = vrot.slane %v6417, 7
        %v6420 = vrot.slane %v6418, 7
        %v6421 = vsel %vm1471, %v6419, %v6420
        %v6422 = vsel %vm1471, %v6420, %v6419
        %v6423 = vsel %vm1571, 0.0, %v6422
        %v6424 = vsel %vm1572, 0.0, %v6421
        %v6425 = vrot.slane %v6417, 1
        %v6426 = vrot.slane %v6418, 1
        %v6427 = vsel %vm1577, %v6425, %v6426
        %v6428 = vsel %vm1577, %v6426, %v6425
        %v6429 = vsel %vm1582, 0.0, %v6427
        %v6430 = vsel %vm1583, 0.0, %v6428
        %6433 = vrot.lane.b32.xlu0 %v6417, 64
        %v6434 = vpop.permute.xlu0 %6433
        %6435 = vrot.lane.b32.xlu0 %v6418, 64
        %v6436 = vpop.permute.xlu0 %6435
        %v6439 = vsel %vm1720, %v6423, %v6434
        %v6440 = vsel %vm1720, %v6424, %v6436
        %v6441 = vpack.c.bf16 %v6440, %v6439
        %v6442 = vpack.c.bf16 %v6430, %v6429
        %v6443 = vld [vmem:[%s63] sm:$0xf]
        %v6444 = vld [vmem:[%s63 + $0x4] sm:$0xf]
        %v6445 = vld [vmem:[%s63 + $0x8] sm:$0xf]
        %v6446 = vld [vmem:[%s63 + $0xc] sm:$0xf]
        %v6447 = vld [vmem:[%s63 + $0x10] sm:$0xf]
        %v6448 = vld [vmem:[%s63 + $0x14] sm:$0xf]
        %v6449 = vld [vmem:[%s63 + $0x18] sm:$0xf]
        %v6450 = vld [vmem:[%s63 + $0x1c] sm:$0xf]
        %v6451 = vld [vmem:[%s63 + $0x20] sm:$0xf]
        %v6452 = vld [vmem:[%s63 + $0x24] sm:$0xf]
        %v6453 = vld [vmem:[%s63 + $0x28] sm:$0xf]
        %v6454 = vld [vmem:[%s63 + $0x2c] sm:$0xf]
        %v6455 = vld [vmem:[%s63 + $0x30] sm:$0xf]
        %v6456 = vld [vmem:[%s63 + $0x34] sm:$0xf]
        %v6457 = vld [vmem:[%s63 + $0x38] sm:$0xf]
        %v6458 = vld [vmem:[%s63 + $0x3c] sm:$0xf]
        %v6459 = vld [vmem:[%s63 + $0x40] sm:$0xf]
        %v6460 = vld [vmem:[%s63 + $0x44] sm:$0xf]
        %v6461 = vld [vmem:[%s63 + $0x48] sm:$0xf]
        %v6462 = vld [vmem:[%s63 + $0x4c] sm:$0xf]
        %v6463 = vld [vmem:[%s63 + $0x50] sm:$0xf]
        %v6464 = vld [vmem:[%s63 + $0x54] sm:$0xf]
        %v6465 = vld [vmem:[%s63 + $0x58] sm:$0xf]
        %v6466 = vld [vmem:[%s63 + $0x5c] sm:$0xf]
        %v6467 = vld [vmem:[#allocation36] sm:$0x1]
        %v6469 = vlaneseq
        %v6470 = vshrl.u32 %v6469, 7
        %v6471 = vsub.s32 0, %v6470
        %v6472 = vrot.slane %v6467, %v6471
        %v6498 = vunpack.c.l.b16 %v6443
        %v6499 = vunpack.c.l.b16 %v6444
        %v6500 = vunpack.c.l.b16 %v6445
        %v6501 = vunpack.c.l.b16 %v6446
        %v6502 = vunpack.c.l.b16 %v6447
        %v6503 = vunpack.c.l.b16 %v6448
        %v6504 = vunpack.c.l.b16 %v6449
        %v6505 = vunpack.c.l.b16 %v6450
        %v6506 = vunpack.c.l.b16 %v6451
        %v6507 = vunpack.c.l.b16 %v6452
        %v6508 = vunpack.c.l.b16 %v6453
        %v6509 = vunpack.c.l.b16 %v6454
        %v6510 = vunpack.c.l.b16 %v6455
        %v6511 = vunpack.c.l.b16 %v6456
        %v6512 = vunpack.c.l.b16 %v6457
        %v6513 = vunpack.c.l.b16 %v6458
        %v6514 = vunpack.c.l.b16 %v6459
        %v6515 = vunpack.c.l.b16 %v6460
        %v6516 = vunpack.c.l.b16 %v6461
        %v6517 = vunpack.c.l.b16 %v6462
        %v6518 = vunpack.c.l.b16 %v6463
        %v6519 = vunpack.c.l.b16 %v6464
        %v6520 = vunpack.c.l.b16 %v6465
        %v6521 = vunpack.c.l.b16 %v6466
        %v6522 = vpack.c.b16 %v6499, %v6498
        %v6523 = vpack.c.b16 %v6501, %v6500
        %v6524 = vpack.c.b16 %v6503, %v6502
        %v6525 = vpack.c.b16 %v6505, %v6504
        %v6526 = vpack.c.b16 %v6507, %v6506
        %v6527 = vpack.c.b16 %v6509, %v6508
        %v6528 = vpack.c.b16 %v6511, %v6510
        %v6529 = vpack.c.b16 %v6513, %v6512
        %v6530 = vpack.c.b16 %v6515, %v6514
        %v6531 = vpack.c.b16 %v6517, %v6516
        %v6532 = vpack.c.b16 %v6519, %v6518
        %v6533 = vpack.c.b16 %v6521, %v6520
        %v6547 = vsel %vm1720, %v6442, 0
        %6549 = vmatprep.subr.bf16.mxu0 0
        %6550 = vmatpush1.bf16.msra.mxu0 %v6522
        %6551 = vmatprep.subr.bf16.mxu0 0
        %6552 = vmatpush1.bf16.msra.mxu0 %v6523
        %6553 = vmatprep.subr.bf16.mxu0 0
        %6554 = vmatpush1.bf16.msra.mxu0 %v6524
        %6555 = vmatprep.subr.bf16.mxu0 0
        %6556 = vmatpush1.bf16.msra.mxu0 %v6525
        %6557 = vmatprep.subr.bf16.mxu0 0
        %6558 = vmatpush1.bf16.msra.mxu0 %v6526
        %6559 = vmatprep.subr.bf16.mxu0 0
        %6560 = vmatpush1.bf16.msra.mxu0 %v6527
        %6561 = vmatprep.subr.bf16.mxu0 0
        %6562 = vmatpush1.bf16.msra.mxu0 %v6528
        %6563 = vmatprep.subr.bf16.mxu0 0
        %6564 = vmatpush1.bf16.msra.mxu0 %v6529
        %6565 = vmatprep.subr.bf16.mxu0 0
        %6566 = vmatpush1.bf16.msra.mxu0 %v6530
        %6567 = vmatprep.subr.bf16.mxu0 0
        %6568 = vmatpush1.bf16.msra.mxu0 %v6531
        %6569 = vmatprep.subr.bf16.mxu0 0
        %6570 = vmatpush1.bf16.msra.mxu0 %v6532
        %6571 = vmatprep.subr.bf16.mxu0 0
        %6572 = vmatpush1.bf16.msra.mxu0 %v6533
        %6573 = vmatprep.subr.bf16.mxu0 0
        %6574 = vmatpush1.bf16.msra.mxu0 0
        %6575 = vmatprep.subr.bf16.mxu0 0
        %6576 = vmatpush1.bf16.msra.mxu0 0
        %6577 = vmatprep.subr.bf16.mxu0 0
        %6578 = vmatpush1.bf16.msra.mxu0 0
        %6579 = vmatprep.subr.bf16.mxu0 0
        %6580 = vmatpush1.bf16.msra.mxu0 0
        %6581 = vmatprep.mubr.bf16.mxu0 %v6547
        %6582 = vmatmul.mubr.bf16.gmra.mrb[0].mxu0 %v6441
        %v6583 = vpop.f32.mrb[0].mxu0
        %v6584 = vadd.f32 %v6472, %v6583
        %v6585 = vpop.f32.mrb[0].mxu0
        %v6586 = vpop.f32.mrb[0].mxu0
        %v6587 = vadd.f32 %v6472, %v6586
        %v6588 = vpop.f32.mrb[0].mxu0
        %6589 = vdwg.mxu0
        %v6590 = vxor.u32 %v6584, 2147483648
        %v6591 = vxor.u32 %v6587, 2147483648
        %v6592 = vmul.f32 %v6590, 1.442695
        %v6593 = vpow.pop %v6592
        %v6594 = vmul.f32 %v6591, 1.442695
        %v6595 = vpow.pop %v6594
        %v6596 = vadd.f32 %v6593, 1.0
        %v6597 = vadd.f32 %v6595, 1.0
        %v6598 = vrcp.pop %v6596
        %v6599 = vmul.f32 1.0, %v6598
        %v6600 = vrcp.pop %v6597
        %v6601 = vmul.f32 1.0, %v6600
        %v6602 = vmul.f32 %v6584, %v6599
        %v6603 = vmul.f32 %v6587, %v6601
        %v6604 = vrot.slane %v6602, 7
        %v6605 = vrot.slane %v6603, 7
        %v6606 = vsel %vm1471, %v6604, %v6605
        %v6607 = vsel %vm1471, %v6605, %v6604
        %v6608 = vsel %vm1571, 0.0, %v6607
        %v6609 = vsel %vm1572, 0.0, %v6606
        %v6610 = vrot.slane %v6602, 1
        %v6611 = vrot.slane %v6603, 1
        %v6612 = vsel %vm1577, %v6610, %v6611
        %v6613 = vsel %vm1577, %v6611, %v6610
        %v6614 = vsel %vm1582, 0.0, %v6612
        %v6615 = vsel %vm1583, 0.0, %v6613
        %6618 = vrot.lane.b32.xlu0 %v6602, 32
        %v6619 = vpop.permute.xlu0 %6618
        %6620 = vrot.lane.b32.xlu0 %v6603, 32
        %v6621 = vpop.permute.xlu0 %6620
        %6626 = vrot.lane.b32.xlu0 %v6614, 64
        %v6627 = vpop.permute.xlu0 %6626
        %6628 = vrot.lane.b32.xlu0 %v6615, 64
        %v6629 = vpop.permute.xlu0 %6628
        %v6632 = vsel %vm1717, %v6608, %v6619
        %v6633 = vsel %vm1717, %v6609, %v6621
        %v6634 = vsel %vm1720, %v6632, %v6627
        %v6635 = vsel %vm1720, %v6633, %v6629
        %v6636 = vpack.c.bf16 %v6635, %v6634
        %v6637 = vld [vmem:[%s67] sm:$0xf]
        %v6638 = vld [vmem:[%s67 + $0x4] sm:$0xf]
        %v6639 = vld [vmem:[%s67 + $0x8] sm:$0xf]
        %v6640 = vld [vmem:[%s67 + $0xc] sm:$0xf]
        %v6641 = vld [vmem:[%s67 + $0x10] sm:$0xf]
        %v6642 = vld [vmem:[%s67 + $0x14] sm:$0xf]
        %v6643 = vld [vmem:[%s67 + $0x18] sm:$0xf]
        %v6644 = vld [vmem:[%s67 + $0x1c] sm:$0xf]
        %v6645 = vld [vmem:[%s67 + $0x20] sm:$0xf]
        %v6646 = vld [vmem:[%s67 + $0x24] sm:$0xf]
        %v6647 = vld [vmem:[%s67 + $0x28] sm:$0xf]
        %v6648 = vld [vmem:[%s67 + $0x2c] sm:$0xf]
        %v6649 = vld [vmem:[#allocation37] sm:$0x1]
        %v6651 = vlaneseq
        %v6652 = vshrl.u32 %v6651, 7
        %v6653 = vsub.s32 0, %v6652
        %v6654 = vrot.slane %v6649, %v6653
        %v6668 = vunpack.c.l.b16 %v6637
        %v6669 = vunpack.c.l.b16 %v6638
        %v6670 = vunpack.c.l.b16 %v6639
        %v6671 = vunpack.c.l.b16 %v6640
        %v6672 = vunpack.c.l.b16 %v6641
        %v6673 = vunpack.c.l.b16 %v6642
        %v6674 = vunpack.c.l.b16 %v6643
        %v6675 = vunpack.c.l.b16 %v6644
        %v6676 = vunpack.c.l.b16 %v6645
        %v6677 = vunpack.c.l.b16 %v6646
        %v6678 = vunpack.c.l.b16 %v6647
        %v6679 = vunpack.c.l.b16 %v6648
        %v6680 = vpack.c.b16 %v6669, %v6668
        %v6681 = vpack.c.b16 %v6671, %v6670
        %v6682 = vpack.c.b16 %v6673, %v6672
        %v6683 = vpack.c.b16 %v6675, %v6674
        %v6684 = vpack.c.b16 %v6677, %v6676
        %v6685 = vpack.c.b16 %v6679, %v6678
        %v6693 = vsel %vm1779, %v6636, 0
        %6695 = vmatprep.subr.bf16.mxu0 0
        %6696 = vmatpush1.bf16.msra.mxu0 %v6680
        %6697 = vmatprep.subr.bf16.mxu0 0
        %6698 = vmatpush1.bf16.msra.mxu0 %v6681
        %6699 = vmatprep.subr.bf16.mxu0 0
        %6700 = vmatpush1.bf16.msra.mxu0 %v6682
        %6701 = vmatprep.subr.bf16.mxu0 0
        %6702 = vmatpush1.bf16.msra.mxu0 %v6683
        %6703 = vmatprep.subr.bf16.mxu0 0
        %6704 = vmatpush1.bf16.msra.mxu0 %v6684
        %6705 = vmatprep.subr.bf16.mxu0 0
        %6706 = vmatpush1.bf16.msra.mxu0 %v6685
        %6707 = vmatprep.subr.bf16.mxu0 0
        %6708 = vmatpush1.bf16.msra.mxu0 0
        %6709 = vmatprep.subr.bf16.mxu0 0
        %6710 = vmatpush1.bf16.msra.mxu0 0
        %6711 = vmatprep.subr.bf16.mxu0 0
        %6712 = vmatpush1.bf16.msra.mxu0 0
        %6713 = vmatprep.subr.bf16.mxu0 0
        %6714 = vmatpush1.bf16.msra.mxu0 0
        %6715 = vmatprep.subr.bf16.mxu0 0
        %6716 = vmatpush1.bf16.msra.mxu0 0
        %6717 = vmatprep.subr.bf16.mxu0 0
        %6718 = vmatpush1.bf16.msra.mxu0 0
        %6719 = vmatprep.subr.bf16.mxu0 0
        %6720 = vmatpush1.bf16.msra.mxu0 0
        %6721 = vmatprep.subr.bf16.mxu0 0
        %6722 = vmatpush1.bf16.msra.mxu0 0
        %6723 = vmatprep.subr.bf16.mxu0 0
        %6724 = vmatpush1.bf16.msra.mxu0 0
        %6725 = vmatprep.subr.bf16.mxu0 0
        %6726 = vmatpush1.bf16.msra.mxu0 0
        %6727 = vmatprep.mubr.bf16.mxu0 0
        %6728 = vmatmul.mubr.bf16.gmra.mrb[0].mxu0 %v6693
        %v6729 = vpop.f32.mrb[0].mxu0
        %v6730 = vadd.f32 %v6654, %v6729
        %v6731 = vpop.f32.mrb[0].mxu0
        %v6732 = vpop.f32.mrb[0].mxu0
        %v6733 = vadd.f32 %v6654, %v6732
        %v6734 = vpop.f32.mrb[0].mxu0
        %6735 = vdwg.mxu0
        %v6736 = vxor.u32 %v6730, 2147483648
        %v6737 = vxor.u32 %v6733, 2147483648
        %v6738 = vmul.f32 %v6736, 1.442695
        %v6739 = vpow.pop %v6738
        %v6740 = vmul.f32 %v6737, 1.442695
        %v6741 = vpow.pop %v6740
        %v6742 = vadd.f32 %v6739, 1.0
        %v6743 = vadd.f32 %v6741, 1.0
        %v6744 = vrcp.pop %v6742
        %v6745 = vmul.f32 1.0, %v6744
        %v6746 = vrcp.pop %v6743
        %v6747 = vmul.f32 1.0, %v6746
        %v6748 = vmul.f32 %v6730, %v6745
        %v6749 = vmul.f32 %v6733, %v6747
        %6752 = vrot.lane.b32.xlu0 %v6584, 96
        %v6753 = vpop.permute.xlu0 %6752
        %6754 = vrot.lane.b32.xlu0 %v6587, 96
        %v6755 = vpop.permute.xlu0 %6754
        %v6758 = vadd.f32 %v6748, %v6753
        %v6759 = vadd.f32 %v6749, %v6755
        %v6760 = vpack.c.bf16 %v6759, %v6758
        %v6761 = vld [vmem:[%s71] sm:$0xf]
        %v6762 = vld [vmem:[%s71 + $0x4] sm:$0xf]
        %v6763 = vld [vmem:[%s71 + $0x8] sm:$0xf]
        %v6764 = vld [vmem:[%s71 + $0xc] sm:$0xf]
        %v6765 = vld [vmem:[#allocation39] sm:$0x1]
        %v6767 = vlaneseq
        %v6768 = vshrl.u32 %v6767, 7
        %v6769 = vsub.s32 0, %v6768
        %v6770 = vrot.slane %v6765, %v6769
        %v6776 = vunpack.c.l.b16 %v6761
        %v6777 = vunpack.c.l.b16 %v6762
        %v6778 = vunpack.c.l.b16 %v6763
        %v6779 = vunpack.c.l.b16 %v6764
        %v6780 = vpack.c.b16 %v6777, %v6776
        %v6781 = vpack.c.b16 %v6779, %v6778
        %v6785 = vsel %vm1717, %v6760, 0
        %6787 = vmatprep.subr.bf16.mxu0 0
        %6788 = vmatpush1.bf16.msra.mxu0 %v6780
        %6789 = vmatprep.subr.bf16.mxu0 0
        %6790 = vmatpush1.bf16.msra.mxu0 %v6781
        %6791 = vmatprep.subr.bf16.mxu0 0
        %6792 = vmatpush1.bf16.msra.mxu0 0
        %6793 = vmatprep.subr.bf16.mxu0 0
        %6794 = vmatpush1.bf16.msra.mxu0 0
        %6795 = vmatprep.subr.bf16.mxu0 0
        %6796 = vmatpush1.bf16.msra.mxu0 0
        %6797 = vmatprep.subr.bf16.mxu0 0
        %6798 = vmatpush1.bf16.msra.mxu0 0
        %6799 = vmatprep.subr.bf16.mxu0 0
        %6800 = vmatpush1.bf16.msra.mxu0 0
        %6801 = vmatprep.subr.bf16.mxu0 0
        %6802 = vmatpush1.bf16.msra.mxu0 0
        %6803 = vmatprep.subr.bf16.mxu0 0
        %6804 = vmatpush1.bf16.msra.mxu0 0
        %6805 = vmatprep.subr.bf16.mxu0 0
        %6806 = vmatpush1.bf16.msra.mxu0 0
        %6807 = vmatprep.subr.bf16.mxu0 0
        %6808 = vmatpush1.bf16.msra.mxu0 0
        %6809 = vmatprep.subr.bf16.mxu0 0
        %6810 = vmatpush1.bf16.msra.mxu0 0
        %6811 = vmatprep.subr.bf16.mxu0 0
        %6812 = vmatpush1.bf16.msra.mxu0 0
        %6813 = vmatprep.subr.bf16.mxu0 0
        %6814 = vmatpush1.bf16.msra.mxu0 0
        %6815 = vmatprep.subr.bf16.mxu0 0
        %6816 = vmatpush1.bf16.msra.mxu0 0
        %6817 = vmatprep.subr.bf16.mxu0 0
        %6818 = vmatpush1.bf16.msra.mxu0 0
        %6819 = vmatprep.mubr.bf16.mxu0 0
        %6820 = vmatmul.mubr.bf16.gmra.mrb[0].mxu0 %v6785
        %v6821 = vpop.f32.mrb[0].mxu0
        %v6822 = vadd.f32 %v6770, %v6821
        %v6823 = vpop.f32.mrb[0].mxu0
        %v6824 = vpop.f32.mrb[0].mxu0
        %v6825 = vadd.f32 %v6770, %v6824
        %v6826 = vpop.f32.mrb[0].mxu0
        %6827 = vdwg.mxu0
        %v6828 = vadd.f32 %v6822, %v1466
        %v6829 = vadd.f32 %v6825, %v1467
        %6830 = vst.msk [vmem:[%s1463] sm:$0xff] %vm1602, %v6828
        %6831 = vst.msk [vmem:[%s1463 + $0x8] sm:$0xff] %vm1602, %v6829
        %s6832 = smul.u32 2, %s99
        %p6833 = scmp.lt.s32.totalorder %s6832, 3
        %s6834 = scalar_select %p6833, %s6832, 3
        %s6835 = smul.addr %s6834, 8
        %s6836 = scalar_lea.vmem %s75, %s6835
        // Predicated region
        $region269: #{unet_forward.1} parent=167 // pred_check
          %p6837 = pneg %p899
        $region270: #{unet_forward.1} parent=167 // pred_check_branch
          %6839 = sbr.rel (%p6837) target = $region272
        $region271: #{unet_forward.1} parent=167 // pred_region
          %s6840 = smul.u32 2, %s99
        $region272: #{unet_forward.1} parent=167 // pred_fallthru
          _
      $region168: #{unet_forward.1} parent=5 // pred_fallthru
        _
      %p6841 = scmp.le.s32.totalorder 2, %s94
      // Predicated region
      $region273: #{unet_forward.1} parent=5 // pred_check
        %p6842 = pneg %p6841
      $region274: #{unet_forward.1} parent=5 // pred_check_branch
        %6844 = sbr.rel (%p6842) target = $region276
      $region275: #{unet_forward.1} parent=5 // pred_region
        %s6845 = ssub.s32 %s94, 2
        // Predicated region
        $region277: #{unet_forward.1} parent=275 // pred_check
          %p6846 = pneg %p905
        $region278: #{unet_forward.1} parent=275 // pred_check_branch
          %6848 = sbr.rel (%p6846) target = $region280
        $region279: #{unet_forward.1} parent=275 // pred_region
          %s6849 = smul.u32 2, %s100
          %p6850 = scmp.lt.s32.totalorder %s6849, 3
          %s6851 = scalar_select %p6850, %s6849, 3
          %s6852 = smul.addr %s6851, 8
          %s6853 = scalar_lea.vmem %s75, %s6852
        $region280: #{unet_forward.1} parent=275 // pred_fallthru
          _
      $region276: #{unet_forward.1} parent=5 // pred_fallthru
        _
    $region6: #{unet_forward.1} parent=1 // loop_footer
      %s98 = sadd.s32 1, %s94
    $region7: #{unet_forward.1} parent=1 // loop_footer_branch
      %93 = sbr.rel target = $region3
    $region8: #{unet_forward.1} parent=1 // loop_exit
      _
    %6854 = vsyncpa [#allocation3], 1
    %s6855 = scalar_lea.sflag [#allocation3], 1
    %6856 = vsyncpa %s6855, 1
    %6857 = vsyncpa [#allocation5], 1
    %6858 = vsyncpa [#allocation8], 1
    %6859 = vsyncpa [#allocation11], 1
    %6860 = vsyncpa [#allocation14], 1
    %6861 = vsyncpa [#allocation17], 1
    %6862 = vsyncpa [#allocation20], 1
    %6863 = vsyncpa [#allocation23], 1
    %6864 = vsyncpa [#allocation26], 1
    %6865 = vsyncpa [#allocation29], 1
    %6866 = vsyncpa [#allocation32], 1
    %6867 = vsyncpa [#allocation35], 1
    %6868 = vsyncpa [#allocation38], 1

</llo_original>
